<compile_context>
chip_gen: v6e
topology: v6e:2x2x1
jax: 0.10.0
libtpu: 0.0.40
codegen_flags: <defaults>
</compile_context>

<pallas_src>
import functools

import jax
import jax.numpy as jnp
from jax.experimental import pallas as pl
from jax.experimental.pallas import tpu as pltpu

LRELU_SLOPE = 0.2
BN_EPS = 1e-5
ACT_DTYPE = jnp.bfloat16          # storage dtype for inter-layer activations
VMEM_LIMIT = 48 * 1024 * 1024     # explicit cap; safe on v5e/v6e/v7x


# -----------------------------------------------------------------------------
# Pallas kernels
# -----------------------------------------------------------------------------
def _conv_act_kernel(x_ref, w_ref, y_ref, acc_ref, *, n_k, act):
    """K-tiled matmul with optional fused LeakyReLU epilogue."""
    k = pl.program_id(1)

    @pl.when(k == 0)
    def _():
        acc_ref[...] = jnp.zeros_like(acc_ref)

    acc_ref[...] += jnp.dot(x_ref[...], w_ref[...],
                            preferred_element_type=jnp.float32)

    @pl.when(k == n_k - 1)
    def _():
        y = acc_ref[...]
        if act == "lrelu":
            y = jnp.where(y > 0, y, LRELU_SLOPE * y)
        y_ref[...] = y.astype(y_ref.dtype)


def _conv_bn_stats_kernel(x_ref, w_ref, y_ref, sum_ref, sq_ref, acc_ref, *, n_k):
    """K-tiled matmul with BN sum / sum-of-squares fused into the epilogue.

    sum_ref / sq_ref have a constant index_map -> they stay resident in VMEM
    across the whole grid and are written back to HBM once at the end.
    """
    i = pl.program_id(0)
    k = pl.program_id(1)

    @pl.when(jnp.logical_and(i == 0, k == 0))
    def _():
        sum_ref[...] = jnp.zeros_like(sum_ref)
        sq_ref[...] = jnp.zeros_like(sq_ref)

    @pl.when(k == 0)
    def _():
        acc_ref[...] = jnp.zeros_like(acc_ref)

    acc_ref[...] += jnp.dot(x_ref[...], w_ref[...],
                            preferred_element_type=jnp.float32)

    @pl.when(k == n_k - 1)
    def _():
        y = acc_ref[...]
        sum_ref[...] += jnp.sum(y, axis=0, keepdims=True)
        sq_ref[...] += jnp.sum(y * y, axis=0, keepdims=True)
        y_ref[...] = y.astype(y_ref.dtype)


def _bn_lrelu_kernel(x_ref, scale_ref, shift_ref, o_ref):
    """y = x * scale + shift, then LeakyReLU(0.2).  Elementwise math in f32."""
    x = x_ref[...].astype(jnp.float32)
    y = x * scale_ref[...] + shift_ref[...]
    o_ref[...] = jnp.where(y > 0, y, LRELU_SLOPE * y).astype(o_ref.dtype)


# -----------------------------------------------------------------------------
# Tile-size selection
# -----------------------------------------------------------------------------
def _pick_bm(m):
    """Largest tile in {1024..8} dividing M (avoids the bm == M perf cliff)."""
    for bm in (1024, 512, 256, 128, 64, 32, 16, 8):
        if m % bm == 0:
            return bm
    return m  # tiny / irregular M: single full-extent block


def _pick_tk(k):
    """Full K for small K; otherwise a 128-multiple tile to bound VMEM."""
    if k <= 2048:
        return k
    for tk in (2048, 1024, 512, 256, 128):
        if k % tk == 0:
            return tk
    return k


# -----------------------------------------------------------------------------
# Pallas wrappers
# -----------------------------------------------------------------------------
def pallas_conv(x_patches, w_mat, *, act=None, out_dtype=ACT_DTYPE):
    """(M, K) @ (K, Cout) with optional fused LeakyReLU."""
    m, k = x_patches.shape
    cout = w_mat.shape[1]
    bm, tk = _pick_bm(m), _pick_tk(k)
    n_kb = k // tk
    return pl.pallas_call(
        functools.partial(_conv_act_kernel, n_k=n_kb, act=act),
        out_shape=jax.ShapeDtypeStruct((m, cout), out_dtype),
        grid=(m // bm, n_kb),
        in_specs=[
            pl.BlockSpec((bm, tk), lambda i, kk: (i, kk)),
            pl.BlockSpec((tk, cout), lambda i, kk: (kk, 0)),
        ],
        out_specs=pl.BlockSpec((bm, cout), lambda i, kk: (i, 0)),
        scratch_shapes=[pltpu.VMEM((bm, cout), jnp.float32)],
        compiler_params=pltpu.CompilerParams(
            dimension_semantics=("parallel", "arbitrary"),
            vmem_limit_bytes=VMEM_LIMIT),
    )(x_patches, w_mat)


def pallas_conv_bn_stats(x_patches, w_mat, *, out_dtype=ACT_DTYPE):
    """(M, K) @ (K, Cout) returning (y, per-channel sum, per-channel sumsq)."""
    m, k = x_patches.shape
    cout = w_mat.shape[1]
    bm, tk = _pick_bm(m), _pick_tk(k)
    n_kb = k // tk
    return pl.pallas_call(
        functools.partial(_conv_bn_stats_kernel, n_k=n_kb),
        out_shape=(
            jax.ShapeDtypeStruct((m, cout), out_dtype),
            jax.ShapeDtypeStruct((1, cout), jnp.float32),
            jax.ShapeDtypeStruct((1, cout), jnp.float32),
        ),
        grid=(m // bm, n_kb),
        in_specs=[
            pl.BlockSpec((bm, tk), lambda i, kk: (i, kk)),
            pl.BlockSpec((tk, cout), lambda i, kk: (kk, 0)),
        ],
        out_specs=(
            pl.BlockSpec((bm, cout), lambda i, kk: (i, 0)),
            pl.BlockSpec((1, cout), lambda i, kk: (0, 0)),
            pl.BlockSpec((1, cout), lambda i, kk: (0, 0)),
        ),
        scratch_shapes=[pltpu.VMEM((bm, cout), jnp.float32)],
        compiler_params=pltpu.CompilerParams(
            # resident stats accumulators force serial grid order
            dimension_semantics=("arbitrary", "arbitrary"),
            vmem_limit_bytes=VMEM_LIMIT),
    )(x_patches, w_mat)


def pallas_bn_lrelu(x, scale, shift, *, out_dtype=ACT_DTYPE):
    """Fused affine batch-norm (folded scale/shift) + LeakyReLU(0.2) on (M, C)."""
    m, c = x.shape
    bm = _pick_bm(m)
    cvec = pl.BlockSpec((1, c), lambda i: (0, 0))
    return pl.pallas_call(
        _bn_lrelu_kernel,
        out_shape=jax.ShapeDtypeStruct((m, c), out_dtype),
        grid=(m // bm,),
        in_specs=[pl.BlockSpec((bm, c), lambda i: (i, 0)), cvec, cvec],
        out_specs=pl.BlockSpec((bm, c), lambda i: (i, 0)),
        compiler_params=pltpu.CompilerParams(dimension_semantics=("parallel",)),
    )(x, scale, shift)


# -----------------------------------------------------------------------------
# JAX glue: im2col (NHWC), parameters, forward pass
# -----------------------------------------------------------------------------
def im2col_nhwc(x, ksize, stride, pad):
    """x: (N, H, W, C) -> patches (N*OH*OW, KH*KW*C) in (kh, kw, cin) order."""
    # TODO(synk): pull patch gathering into the Pallas kernel (strided loads /
    # Element index_map) to avoid materializing the 16x-duplicated patch tensor.
    n, h, w, c = x.shape
    oh = (h + 2 * pad - ksize) // stride + 1
    ow = (w + 2 * pad - ksize) // stride + 1
    xp = jnp.pad(x, ((0, 0), (pad, pad), (pad, pad), (0, 0)))
    cols = []
    for ki in range(ksize):
        for kj in range(ksize):
            cols.append(
                xp[:, ki:ki + stride * oh:stride, kj:kj + stride * ow:stride, :])
    patches = jnp.stack(cols, axis=3)          # (N, OH, OW, KH*KW, C)
    return patches.reshape(n * oh * ow, ksize * ksize * c), oh, ow


def init_params(key, img_channels=3, fms=8):
    conv_shapes = [
        (fms, img_channels, 4, 4),
        (fms * 2, fms, 4, 4),
        (fms * 4, fms * 2, 4, 4),
        (fms * 8, fms * 4, 4, 4),
        (1, fms * 8, 4, 4),
    ]
    keys = jax.random.split(key, len(conv_shapes) + 3)
    params = {}
    for i, s in enumerate(conv_shapes):
        params[f"w{i}"] = 0.02 * jax.random.normal(keys[i], s, jnp.float32)
    for j, c in enumerate([fms * 2, fms * 4, fms * 8]):
        params[f"gamma{j}"] = 1.0 + 0.02 * jax.random.normal(
            keys[len(conv_shapes) + j], (c,), jnp.float32)
        params[f"beta{j}"] = jnp.zeros((c,), jnp.float32)
    return params


def _w_mat(w, dtype):
    """PyTorch (Cout, Cin, KH, KW) -> (KH*KW*Cin, Cout), matching im2col order."""
    return jnp.transpose(w, (2, 3, 1, 0)).reshape(-1, w.shape[0]).astype(dtype)


def discriminator128_forward(params, x):
    n = x.shape[0]
    # Single layout change: NCHW -> NHWC, stored in bf16 from here on.
    x = jnp.transpose(x, (0, 2, 3, 1)).astype(ACT_DTYPE)

    # layer 1: conv(4, s2, p1) + LeakyReLU (fused in matmul epilogue)
    p, oh, ow = im2col_nhwc(x, 4, 2, 1)
    y = pallas_conv(p, _w_mat(params["w0"], ACT_DTYPE), act="lrelu")
    x = y.reshape(n, oh, ow, -1)

    # layers 2-4: conv(4, s2, p1) with fused BN stats, then folded BN + LeakyReLU
    for j in range(3):
        p, oh, ow = im2col_nhwc(x, 4, 2, 1)
        y, s, sq = pallas_conv_bn_stats(p, _w_mat(params[f"w{j + 1}"], ACT_DTYPE))
        m_tot = y.shape[0]
        mean = s[0] / m_tot
        var = jnp.maximum(sq[0] / m_tot - mean * mean, 0.0)   # biased (train BN)
        invstd = jax.lax.rsqrt(var + BN_EPS)
        scale = params[f"gamma{j}"] * invstd
        shift = params[f"beta{j}"] - mean * scale
        y = pallas_bn_lrelu(y, scale[None, :], shift[None, :])
        x = y.reshape(n, oh, ow, -1)

    # head: conv(4, s1, p0) over a 4x4 map is a dot over the flattened NHWC
    # image; with M == batch and Cout == 1 this is a few hundred FLOPs, so it
    # stays in plain jnp (a Pallas launch would cost more than the work).
    flat = x.reshape(n, -1).astype(jnp.float32)               # (N, 4*4*C)
    logits = flat @ _w_mat(params["w4"], jnp.float32)         # (N, 1)
    return jax.nn.sigmoid(logits).reshape(-1)


if __name__ == "__main__":
    key = jax.random.PRNGKey(0)
    pkey, xkey = jax.random.split(key)

    IMG_CHANNELS = 3
    FEATURE_MAP_SIZE = 8   # small, deterministic stand-in for the default 64
    BATCH = 2
    SPATIAL = 64           # 4 stride-2 convs + final 4x4 conv -> 1x1 output

    params = init_params(pkey, img_channels=IMG_CHANNELS, fms=FEATURE_MAP_SIZE)
    x = jax.random.normal(xkey, (BATCH, IMG_CHANNELS, SPATIAL, SPATIAL), jnp.float32)

    fwd = jax.jit(discriminator128_forward)
    out = fwd(params, x)
    jax.block_until_ready(out)

    assert out.shape == (BATCH,)
    assert bool(jnp.all(jnp.isfinite(out)))
    assert bool(jnp.all((out >= 0.0) & (out <= 1.0)))
    print("KERNEL_OK")
</pallas_src>

<mosaic_0001>
module attributes {stable_mosaic.version = 11 : i64} {
  func.func @_conv_act_kernel(%arg0: i32, %arg1: i32, %arg2: memref<1024x48xbf16, #tpu.memory_space<vmem>>, %arg3: memref<48x8xbf16, #tpu.memory_space<vmem>>, %arg4: memref<1024x8xbf16, #tpu.memory_space<vmem>>, %arg5: memref<1024x8xf32, #tpu.memory_space<vmem>>) attributes {dimension_semantics = [#tpu.dimension_semantics<parallel>, #tpu.dimension_semantics<arbitrary>], iteration_bounds = array<i64: 2, 1>, scalar_prefetch = 0 : i64, scratch_operands = 1 : i64, tpu.core_type = #tpu.core_type<tc>, window_params = [{transform_indices = @transform_0, window_bounds = array<i64: 1024, 48>}, {transform_indices = @transform_1, window_bounds = array<i64: 48, 8>}, {transform_indices = @transform_2, window_bounds = array<i64: 1024, 8>}]} {
    %c0_i32 = arith.constant 0 : i32
    %0 = arith.cmpi eq, %arg1, %c0_i32 : i32
    %1 = arith.extui %0 : i1 to i32
    %c0_i32_0 = arith.constant 0 : i32
    %2 = arith.cmpi ne, %1, %c0_i32_0 : i32
    scf.if %2 {
      %cst_10 = arith.constant 0.000000e+00 : f32
      %12 = vector.broadcast %cst_10 : f32 to vector<1024x8xf32>
      %c0_11 = arith.constant 0 : index
      %c0_12 = arith.constant 0 : index
      %13 = vector.load %arg5[%c0_11, %c0_12] : memref<1024x8xf32, #tpu.memory_space<vmem>>, vector<1024x8xf32>
      tpu.vector_store %arg5[%c0_11, %c0_12], %12 {strides = array<i32>} : memref<1024x8xf32, #tpu.memory_space<vmem>>, vector<1024x8xf32>,
    } else {
    }
    %c0 = arith.constant 0 : index
    %c0_1 = arith.constant 0 : index
    %3 = vector.load %arg5[%c0, %c0_1] : memref<1024x8xf32, #tpu.memory_space<vmem>>, vector<1024x8xf32>
    %c0_2 = arith.constant 0 : index
    %c0_3 = arith.constant 0 : index
    %4 = vector.load %arg2[%c0_2, %c0_3] : memref<1024x48xbf16, #tpu.memory_space<vmem>>, vector<1024x48xbf16>
    %c0_4 = arith.constant 0 : index
    %c0_5 = arith.constant 0 : index
    %5 = vector.load %arg3[%c0_4, %c0_5] : memref<48x8xbf16, #tpu.memory_space<vmem>>, vector<48x8xbf16>
    %cst = arith.constant dense<0.000000e+00> : vector<1024x8xf32>
    %6 = tpu.matmul %4, %5, %cst {dimension_numbers = #tpu.dot_dimension_numbers<[1], [0], [0], [1], [0, 0, 1, 1], [], []>} : vector<1024x48xbf16>, vector<48x8xbf16>, vector<1024x8xf32> -> vector<1024x8xf32>
    %7 = arith.addf %3, %6 : vector<1024x8xf32>
    %c0_6 = arith.constant 0 : index
    %c0_7 = arith.constant 0 : index
    %8 = vector.load %arg5[%c0_6, %c0_7] : memref<1024x8xf32, #tpu.memory_space<vmem>>, vector<1024x8xf32>
    tpu.vector_store %arg5[%c0_6, %c0_7], %7 {strides = array<i32>} : memref<1024x8xf32, #tpu.memory_space<vmem>>, vector<1024x8xf32>,
    %c0_i32_8 = arith.constant 0 : i32
    %9 = arith.cmpi eq, %arg1, %c0_i32_8 : i32
    %10 = arith.extui %9 : i1 to i32
    %c0_i32_9 = arith.constant 0 : i32
    %11 = arith.cmpi ne, %10, %c0_i32_9 : i32
    scf.if %11 {
      %c0_10 = arith.constant 0 : index
      %c0_11 = arith.constant 0 : index
      %12 = vector.load %arg5[%c0_10, %c0_11] : memref<1024x8xf32, #tpu.memory_space<vmem>>, vector<1024x8xf32>
      %cst_12 = arith.constant 0.000000e+00 : f32
      %13 = vector.broadcast %cst_12 : f32 to vector<1024x8xf32>
      %14 = arith.cmpf ogt, %12, %13 : vector<1024x8xf32>
      %cst_13 = arith.constant 2.000000e-01 : f32
      %15 = vector.broadcast %cst_13 : f32 to vector<1024x8xf32>
      %16 = arith.mulf %15, %12 : vector<1024x8xf32>
      %17 = arith.select %14, %12, %16 : vector<1024x8xi1>, vector<1024x8xf32>
      %18 = arith.truncf %17 : vector<1024x8xf32> to vector<1024x8xbf16>
      %c0_14 = arith.constant 0 : index
      %c0_15 = arith.constant 0 : index
      %19 = vector.load %arg4[%c0_14, %c0_15] : memref<1024x8xbf16, #tpu.memory_space<vmem>>, vector<1024x8xbf16>
      tpu.vector_store %arg4[%c0_14, %c0_15], %18 {strides = array<i32>} : memref<1024x8xbf16, #tpu.memory_space<vmem>>, vector<1024x8xbf16>,
    } else {
    }
    return
  }
  func.func @transform_0(%arg0: i32, %arg1: i32) -> (i32, i32) {
    %c0_i32 = arith.constant 0 : i32
    return %arg0, %arg1 : i32, i32
  }
  func.func @transform_1(%arg0: i32, %arg1: i32) -> (i32, i32) {
    %c0_i32 = arith.constant 0 : i32
    %c0_i32_0 = arith.constant 0 : i32
    return %arg1, %c0_i32 : i32, i32
  }
  func.func @transform_2(%arg0: i32, %arg1: i32) -> (i32, i32) {
    %c0_i32 = arith.constant 0 : i32
    %c0_i32_0 = arith.constant 0 : i32
    return %arg0, %c0_i32 : i32, i32
  }
}

module attributes {stable_mosaic.version = 11 : i64} {
  func.func @_conv_bn_stats_kernel(%arg0: i32, %arg1: i32, %arg2: memref<512x128xbf16, #tpu.memory_space<vmem>>, %arg3: memref<128x16xbf16, #tpu.memory_space<vmem>>, %arg4: memref<512x16xbf16, #tpu.memory_space<vmem>>, %arg5: memref<1x16xf32, #tpu.memory_space<vmem>>, %arg6: memref<1x16xf32, #tpu.memory_space<vmem>>, %arg7: memref<512x16xf32, #tpu.memory_space<vmem>>) attributes {dimension_semantics = [#tpu.dimension_semantics<arbitrary>, #tpu.dimension_semantics<arbitrary>], iteration_bounds = array<i64: 1, 1>, scalar_prefetch = 0 : i64, scratch_operands = 1 : i64, tpu.core_type = #tpu.core_type<tc>, window_params = [{transform_indices = @transform_0, window_bounds = array<i64: 512, 128>}, {transform_indices = @transform_1, window_bounds = array<i64: 128, 16>}, {transform_indices = @transform_2, window_bounds = array<i64: 512, 16>}, {pipeline_mode = #tpu.pipeline_mode<synchronous>, transform_indices = @transform_3, window_bounds = array<i64: 1, 16>}, {pipeline_mode = #tpu.pipeline_mode<synchronous>, transform_indices = @transform_4, window_bounds = array<i64: 1, 16>}]} {
    %c0_i32 = arith.constant 0 : i32
    %0 = arith.cmpi eq, %arg0, %c0_i32 : i32
    %c0_i32_0 = arith.constant 0 : i32
    %1 = arith.cmpi eq, %arg1, %c0_i32_0 : i32
    %2 = arith.andi %0, %1 : i1
    %3 = arith.extui %2 : i1 to i32
    %c0_i32_1 = arith.constant 0 : i32
    %4 = arith.cmpi ne, %3, %c0_i32_1 : i32
    scf.if %4 {
      %cst_13 = arith.constant 0.000000e+00 : f32
      %17 = vector.broadcast %cst_13 : f32 to vector<1x16xf32>
      %c0_14 = arith.constant 0 : index
      %c0_15 = arith.constant 0 : index
      %18 = vector.load %arg5[%c0_14, %c0_15] : memref<1x16xf32, #tpu.memory_space<vmem>>, vector<1x16xf32>
      tpu.vector_store %arg5[%c0_14, %c0_15], %17 {strides = array<i32>} : memref<1x16xf32, #tpu.memory_space<vmem>>, vector<1x16xf32>,
      %cst_16 = arith.constant 0.000000e+00 : f32
      %19 = vector.broadcast %cst_16 : f32 to vector<1x16xf32>
      %c0_17 = arith.constant 0 : index
      %c0_18 = arith.constant 0 : index
      %20 = vector.load %arg6[%c0_17, %c0_18] : memref<1x16xf32, #tpu.memory_space<vmem>>, vector<1x16xf32>
      tpu.vector_store %arg6[%c0_17, %c0_18], %19 {strides = array<i32>} : memref<1x16xf32, #tpu.memory_space<vmem>>, vector<1x16xf32>,
    } else {
    }
    %c0_i32_2 = arith.constant 0 : i32
    %5 = arith.cmpi eq, %arg1, %c0_i32_2 : i32
    %6 = arith.extui %5 : i1 to i32
    %c0_i32_3 = arith.constant 0 : i32
    %7 = arith.cmpi ne, %6, %c0_i32_3 : i32
    scf.if %7 {
      %cst_13 = arith.constant 0.000000e+00 : f32
      %17 = vector.broadcast %cst_13 : f32 to vector<512x16xf32>
      %c0_14 = arith.constant 0 : index
      %c0_15 = arith.constant 0 : index
      %18 = vector.load %arg7[%c0_14, %c0_15] : memref<512x16xf32, #tpu.memory_space<vmem>>, vector<512x16xf32>
      tpu.vector_store %arg7[%c0_14, %c0_15], %17 {strides = array<i32>} : memref<512x16xf32, #tpu.memory_space<vmem>>, vector<512x16xf32>,
    } else {
    }
    %c0 = arith.constant 0 : index
    %c0_4 = arith.constant 0 : index
    %8 = vector.load %arg7[%c0, %c0_4] : memref<512x16xf32, #tpu.memory_space<vmem>>, vector<512x16xf32>
    %c0_5 = arith.constant 0 : index
    %c0_6 = arith.constant 0 : index
    %9 = vector.load %arg2[%c0_5, %c0_6] : memref<512x128xbf16, #tpu.memory_space<vmem>>, vector<512x128xbf16>
    %c0_7 = arith.constant 0 : index
    %c0_8 = arith.constant 0 : index
    %10 = vector.load %arg3[%c0_7, %c0_8] : memref<128x16xbf16, #tpu.memory_space<vmem>>, vector<128x16xbf16>
    %cst = arith.constant dense<0.000000e+00> : vector<512x16xf32>
    %11 = tpu.matmul %9, %10, %cst {dimension_numbers = #tpu.dot_dimension_numbers<[1], [0], [0], [1], [0, 0, 1, 1], [], []>} : vector<512x128xbf16>, vector<128x16xbf16>, vector<512x16xf32> -> vector<512x16xf32>
    %12 = arith.addf %8, %11 : vector<512x16xf32>
    %c0_9 = arith.constant 0 : index
    %c0_10 = arith.constant 0 : index
    %13 = vector.load %arg7[%c0_9, %c0_10] : memref<512x16xf32, #tpu.memory_space<vmem>>, vector<512x16xf32>
    tpu.vector_store %arg7[%c0_9, %c0_10], %12 {strides = array<i32>} : memref<512x16xf32, #tpu.memory_space<vmem>>, vector<512x16xf32>,
    %c0_i32_11 = arith.constant 0 : i32
    %14 = arith.cmpi eq, %arg1, %c0_i32_11 : i32
    %15 = arith.extui %14 : i1 to i32
    %c0_i32_12 = arith.constant 0 : i32
    %16 = arith.cmpi ne, %15, %c0_i32_12 : i32
    scf.if %16 {
      %c0_13 = arith.constant 0 : index
      %c0_14 = arith.constant 0 : index
      %17 = vector.load %arg7[%c0_13, %c0_14] : memref<512x16xf32, #tpu.memory_space<vmem>>, vector<512x16xf32>
      %c0_15 = arith.constant 0 : index
      %c0_16 = arith.constant 0 : index
      %18 = vector.load %arg5[%c0_15, %c0_16] : memref<1x16xf32, #tpu.memory_space<vmem>>, vector<1x16xf32>
      %cst_17 = arith.constant dense<0.000000e+00> : vector<16xf32>
      %19 = vector.multi_reduction <add>, %17, %cst_17 [0] : vector<512x16xf32> to vector<16xf32>
      %20 = vector.shape_cast %19 : vector<16xf32> to vector<1x16xf32>
      %21 = arith.addf %18, %20 : vector<1x16xf32>
      %c0_18 = arith.constant 0 : index
      %c0_19 = arith.constant 0 : index
      %22 = vector.load %arg5[%c0_18, %c0_19] : memref<1x16xf32, #tpu.memory_space<vmem>>, vector<1x16xf32>
      tpu.vector_store %arg5[%c0_18, %c0_19], %21 {strides = array<i32>} : memref<1x16xf32, #tpu.memory_space<vmem>>, vector<1x16xf32>,
      %c0_20 = arith.constant 0 : index
      %c0_21 = arith.constant 0 : index
      %23 = vector.load %arg6[%c0_20, %c0_21] : memref<1x16xf32, #tpu.memory_space<vmem>>, vector<1x16xf32>
      %24 = arith.mulf %17, %17 : vector<512x16xf32>
      %cst_22 = arith.constant dense<0.000000e+00> : vector<16xf32>
      %25 = vector.multi_reduction <add>, %24, %cst_22 [0] : vector<512x16xf32> to vector<16xf32>
      %26 = vector.shape_cast %25 : vector<16xf32> to vector<1x16xf32>
      %27 = arith.addf %23, %26 : vector<1x16xf32>
      %c0_23 = arith.constant 0 : index
      %c0_24 = arith.constant 0 : index
      %28 = vector.load %arg6[%c0_23, %c0_24] : memref<1x16xf32, #tpu.memory_space<vmem>>, vector<1x16xf32>
      tpu.vector_store %arg6[%c0_23, %c0_24], %27 {strides = array<i32>} : memref<1x16xf32, #tpu.memory_space<vmem>>, vector<1x16xf32>,
      %29 = arith.truncf %17 : vector<512x16xf32> to vector<512x16xbf16>
      %c0_25 = arith.constant 0 : index
      %c0_26 = arith.constant 0 : index
      %30 = vector.load %arg4[%c0_25, %c0_26] : memref<512x16xbf16, #tpu.memory_space<vmem>>, vector<512x16xbf16>
      tpu.vector_store %arg4[%c0_25, %c0_26], %29 {strides = array<i32>} : memref<512x16xbf16, #tpu.memory_space<vmem>>, vector<512x16xbf16>,
    } else {
    }
    return
  }
  func.func @transform_0(%arg0: i32, %arg1: i32) -> (i32, i32) {
    %c0_i32 = arith.constant 0 : i32
    return %arg0, %arg1 : i32, i32
  }
  func.func @transform_1(%arg0: i32, %arg1: i32) -> (i32, i32) {
    %c0_i32 = arith.constant 0 : i32
    %c0_i32_0 = arith.constant 0 : i32
    return %arg1, %c0_i32 : i32, i32
  }
  func.func @transform_2(%arg0: i32, %arg1: i32) -> (i32, i32) {
    %c0_i32 = arith.constant 0 : i32
    %c0_i32_0 = arith.constant 0 : i32
    return %arg0, %c0_i32 : i32, i32
  }
  func.func @transform_3(%arg0: i32, %arg1: i32) -> (i32, i32) {
    %c0_i32 = arith.constant 0 : i32
    %c0_i32_0 = arith.constant 0 : i32
    %c0_i32_1 = arith.constant 0 : i32
    return %c0_i32, %c0_i32_0 : i32, i32
  }
  func.func @transform_4(%arg0: i32, %arg1: i32) -> (i32, i32) {
    %c0_i32 = arith.constant 0 : i32
    %c0_i32_0 = arith.constant 0 : i32
    %c0_i32_1 = arith.constant 0 : i32
    return %c0_i32, %c0_i32_0 : i32, i32
  }
}

module attributes {stable_mosaic.version = 11 : i64} {
  func.func @_bn_lrelu_kernel(%arg0: i32, %arg1: memref<512x16xbf16, #tpu.memory_space<vmem>>, %arg2: memref<1x16xf32, #tpu.memory_space<vmem>>, %arg3: memref<1x16xf32, #tpu.memory_space<vmem>>, %arg4: memref<512x16xbf16, #tpu.memory_space<vmem>>) attributes {dimension_semantics = [#tpu.dimension_semantics<parallel>], iteration_bounds = array<i64: 1>, scalar_prefetch = 0 : i64, scratch_operands = 0 : i64, tpu.core_type = #tpu.core_type<tc>, window_params = [{transform_indices = @transform_0, window_bounds = array<i64: 512, 16>}, {pipeline_mode = #tpu.pipeline_mode<synchronous>, transform_indices = @transform_1, window_bounds = array<i64: 1, 16>}, {pipeline_mode = #tpu.pipeline_mode<synchronous>, transform_indices = @transform_2, window_bounds = array<i64: 1, 16>}, {transform_indices = @transform_3, window_bounds = array<i64: 512, 16>}]} {
    %c0 = arith.constant 0 : index
    %c0_0 = arith.constant 0 : index
    %0 = vector.load %arg1[%c0, %c0_0] : memref<512x16xbf16, #tpu.memory_space<vmem>>, vector<512x16xbf16>
    %1 = arith.extf %0 : vector<512x16xbf16> to vector<512x16xf32>
    %c0_1 = arith.constant 0 : index
    %c0_2 = arith.constant 0 : index
    %2 = vector.load %arg2[%c0_1, %c0_2] : memref<1x16xf32, #tpu.memory_space<vmem>>, vector<1x16xf32>
    %3 = vector.broadcast %2 : vector<1x16xf32> to vector<512x16xf32>
    %4 = arith.mulf %1, %3 : vector<512x16xf32>
    %c0_3 = arith.constant 0 : index
    %c0_4 = arith.constant 0 : index
    %5 = vector.load %arg3[%c0_3, %c0_4] : memref<1x16xf32, #tpu.memory_space<vmem>>, vector<1x16xf32>
    %6 = vector.broadcast %5 : vector<1x16xf32> to vector<512x16xf32>
    %7 = arith.addf %4, %6 : vector<512x16xf32>
    %cst = arith.constant 0.000000e+00 : f32
    %8 = vector.broadcast %cst : f32 to vector<512x16xf32>
    %9 = arith.cmpf ogt, %7, %8 : vector<512x16xf32>
    %cst_5 = arith.constant 2.000000e-01 : f32
    %10 = vector.broadcast %cst_5 : f32 to vector<512x16xf32>
    %11 = arith.mulf %10, %7 : vector<512x16xf32>
    %12 = arith.select %9, %7, %11 : vector<512x16xi1>, vector<512x16xf32>
    %13 = arith.truncf %12 : vector<512x16xf32> to vector<512x16xbf16>
    %c0_6 = arith.constant 0 : index
    %c0_7 = arith.constant 0 : index
    %14 = vector.load %arg4[%c0_6, %c0_7] : memref<512x16xbf16, #tpu.memory_space<vmem>>, vector<512x16xbf16>
    tpu.vector_store %arg4[%c0_6, %c0_7], %13 {strides = array<i32>} : memref<512x16xbf16, #tpu.memory_space<vmem>>, vector<512x16xbf16>,
    return
  }
  func.func @transform_0(%arg0: i32) -> (i32, i32) {
    %c0_i32 = arith.constant 0 : i32
    %c0_i32_0 = arith.constant 0 : i32
    return %arg0, %c0_i32 : i32, i32
  }
  func.func @transform_1(%arg0: i32) -> (i32, i32) {
    %c0_i32 = arith.constant 0 : i32
    %c0_i32_0 = arith.constant 0 : i32
    %c0_i32_1 = arith.constant 0 : i32
    return %c0_i32, %c0_i32_0 : i32, i32
  }
  func.func @transform_2(%arg0: i32) -> (i32, i32) {
    %c0_i32 = arith.constant 0 : i32
    %c0_i32_0 = arith.constant 0 : i32
    %c0_i32_1 = arith.constant 0 : i32
    return %c0_i32, %c0_i32_0 : i32, i32
  }
  func.func @transform_3(%arg0: i32) -> (i32, i32) {
    %c0_i32 = arith.constant 0 : i32
    %c0_i32_0 = arith.constant 0 : i32
    return %arg0, %c0_i32 : i32, i32
  }
}

module attributes {stable_mosaic.version = 11 : i64} {
  func.func @_conv_bn_stats_kernel(%arg0: i32, %arg1: i32, %arg2: memref<128x256xbf16, #tpu.memory_space<vmem>>, %arg3: memref<256x32xbf16, #tpu.memory_space<vmem>>, %arg4: memref<128x32xbf16, #tpu.memory_space<vmem>>, %arg5: memref<1x32xf32, #tpu.memory_space<vmem>>, %arg6: memref<1x32xf32, #tpu.memory_space<vmem>>, %arg7: memref<128x32xf32, #tpu.memory_space<vmem>>) attributes {dimension_semantics = [#tpu.dimension_semantics<arbitrary>, #tpu.dimension_semantics<arbitrary>], iteration_bounds = array<i64: 1, 1>, scalar_prefetch = 0 : i64, scratch_operands = 1 : i64, tpu.core_type = #tpu.core_type<tc>, window_params = [{transform_indices = @transform_0, window_bounds = array<i64: 128, 256>}, {transform_indices = @transform_1, window_bounds = array<i64: 256, 32>}, {transform_indices = @transform_2, window_bounds = array<i64: 128, 32>}, {pipeline_mode = #tpu.pipeline_mode<synchronous>, transform_indices = @transform_3, window_bounds = array<i64: 1, 32>}, {pipeline_mode = #tpu.pipeline_mode<synchronous>, transform_indices = @transform_4, window_bounds = array<i64: 1, 32>}]} {
    %c0_i32 = arith.constant 0 : i32
    %0 = arith.cmpi eq, %arg0, %c0_i32 : i32
    %c0_i32_0 = arith.constant 0 : i32
    %1 = arith.cmpi eq, %arg1, %c0_i32_0 : i32
    %2 = arith.andi %0, %1 : i1
    %3 = arith.extui %2 : i1 to i32
    %c0_i32_1 = arith.constant 0 : i32
    %4 = arith.cmpi ne, %3, %c0_i32_1 : i32
    scf.if %4 {
      %cst_13 = arith.constant 0.000000e+00 : f32
      %17 = vector.broadcast %cst_13 : f32 to vector<1x32xf32>
      %c0_14 = arith.constant 0 : index
      %c0_15 = arith.constant 0 : index
      %18 = vector.load %arg5[%c0_14, %c0_15] : memref<1x32xf32, #tpu.memory_space<vmem>>, vector<1x32xf32>
      tpu.vector_store %arg5[%c0_14, %c0_15], %17 {strides = array<i32>} : memref<1x32xf32, #tpu.memory_space<vmem>>, vector<1x32xf32>,
      %cst_16 = arith.constant 0.000000e+00 : f32
      %19 = vector.broadcast %cst_16 : f32 to vector<1x32xf32>
      %c0_17 = arith.constant 0 : index
      %c0_18 = arith.constant 0 : index
      %20 = vector.load %arg6[%c0_17, %c0_18] : memref<1x32xf32, #tpu.memory_space<vmem>>, vector<1x32xf32>
      tpu.vector_store %arg6[%c0_17, %c0_18], %19 {strides = array<i32>} : memref<1x32xf32, #tpu.memory_space<vmem>>, vector<1x32xf32>,
    } else {
    }
    %c0_i32_2 = arith.constant 0 : i32
    %5 = arith.cmpi eq, %arg1, %c0_i32_2 : i32
    %6 = arith.extui %5 : i1 to i32
    %c0_i32_3 = arith.constant 0 : i32
    %7 = arith.cmpi ne, %6, %c0_i32_3 : i32
    scf.if %7 {
      %cst_13 = arith.constant 0.000000e+00 : f32
      %17 = vector.broadcast %cst_13 : f32 to vector<128x32xf32>
      %c0_14 = arith.constant 0 : index
      %c0_15 = arith.constant 0 : index
      %18 = vector.load %arg7[%c0_14, %c0_15] : memref<128x32xf32, #tpu.memory_space<vmem>>, vector<128x32xf32>
      tpu.vector_store %arg7[%c0_14, %c0_15], %17 {strides = array<i32>} : memref<128x32xf32, #tpu.memory_space<vmem>>, vector<128x32xf32>,
    } else {
    }
    %c0 = arith.constant 0 : index
    %c0_4 = arith.constant 0 : index
    %8 = vector.load %arg7[%c0, %c0_4] : memref<128x32xf32, #tpu.memory_space<vmem>>, vector<128x32xf32>
    %c0_5 = arith.constant 0 : index
    %c0_6 = arith.constant 0 : index
    %9 = vector.load %arg2[%c0_5, %c0_6] : memref<128x256xbf16, #tpu.memory_space<vmem>>, vector<128x256xbf16>
    %c0_7 = arith.constant 0 : index
    %c0_8 = arith.constant 0 : index
    %10 = vector.load %arg3[%c0_7, %c0_8] : memref<256x32xbf16, #tpu.memory_space<vmem>>, vector<256x32xbf16>
    %cst = arith.constant dense<0.000000e+00> : vector<128x32xf32>
    %11 = tpu.matmul %9, %10, %cst {dimension_numbers = #tpu.dot_dimension_numbers<[1], [0], [0], [1], [0, 0, 1, 1], [], []>} : vector<128x256xbf16>, vector<256x32xbf16>, vector<128x32xf32> -> vector<128x32xf32>
    %12 = arith.addf %8, %11 : vector<128x32xf32>
    %c0_9 = arith.constant 0 : index
    %c0_10 = arith.constant 0 : index
    %13 = vector.load %arg7[%c0_9, %c0_10] : memref<128x32xf32, #tpu.memory_space<vmem>>, vector<128x32xf32>
    tpu.vector_store %arg7[%c0_9, %c0_10], %12 {strides = array<i32>} : memref<128x32xf32, #tpu.memory_space<vmem>>, vector<128x32xf32>,
    %c0_i32_11 = arith.constant 0 : i32
    %14 = arith.cmpi eq, %arg1, %c0_i32_11 : i32
    %15 = arith.extui %14 : i1 to i32
    %c0_i32_12 = arith.constant 0 : i32
    %16 = arith.cmpi ne, %15, %c0_i32_12 : i32
    scf.if %16 {
      %c0_13 = arith.constant 0 : index
      %c0_14 = arith.constant 0 : index
      %17 = vector.load %arg7[%c0_13, %c0_14] : memref<128x32xf32, #tpu.memory_space<vmem>>, vector<128x32xf32>
      %c0_15 = arith.constant 0 : index
      %c0_16 = arith.constant 0 : index
      %18 = vector.load %arg5[%c0_15, %c0_16] : memref<1x32xf32, #tpu.memory_space<vmem>>, vector<1x32xf32>
      %cst_17 = arith.constant dense<0.000000e+00> : vector<32xf32>
      %19 = vector.multi_reduction <add>, %17, %cst_17 [0] : vector<128x32xf32> to vector<32xf32>
      %20 = vector.shape_cast %19 : vector<32xf32> to vector<1x32xf32>
      %21 = arith.addf %18, %20 : vector<1x32xf32>
      %c0_18 = arith.constant 0 : index
      %c0_19 = arith.constant 0 : index
      %22 = vector.load %arg5[%c0_18, %c0_19] : memref<1x32xf32, #tpu.memory_space<vmem>>, vector<1x32xf32>
      tpu.vector_store %arg5[%c0_18, %c0_19], %21 {strides = array<i32>} : memref<1x32xf32, #tpu.memory_space<vmem>>, vector<1x32xf32>,
      %c0_20 = arith.constant 0 : index
      %c0_21 = arith.constant 0 : index
      %23 = vector.load %arg6[%c0_20, %c0_21] : memref<1x32xf32, #tpu.memory_space<vmem>>, vector<1x32xf32>
      %24 = arith.mulf %17, %17 : vector<128x32xf32>
      %cst_22 = arith.constant dense<0.000000e+00> : vector<32xf32>
      %25 = vector.multi_reduction <add>, %24, %cst_22 [0] : vector<128x32xf32> to vector<32xf32>
      %26 = vector.shape_cast %25 : vector<32xf32> to vector<1x32xf32>
      %27 = arith.addf %23, %26 : vector<1x32xf32>
      %c0_23 = arith.constant 0 : index
      %c0_24 = arith.constant 0 : index
      %28 = vector.load %arg6[%c0_23, %c0_24] : memref<1x32xf32, #tpu.memory_space<vmem>>, vector<1x32xf32>
      tpu.vector_store %arg6[%c0_23, %c0_24], %27 {strides = array<i32>} : memref<1x32xf32, #tpu.memory_space<vmem>>, vector<1x32xf32>,
      %29 = arith.truncf %17 : vector<128x32xf32> to vector<128x32xbf16>
      %c0_25 = arith.constant 0 : index
      %c0_26 = arith.constant 0 : index
      %30 = vector.load %arg4[%c0_25, %c0_26] : memref<128x32xbf16, #tpu.memory_space<vmem>>, vector<128x32xbf16>
      tpu.vector_store %arg4[%c0_25, %c0_26], %29 {strides = array<i32>} : memref<128x32xbf16, #tpu.memory_space<vmem>>, vector<128x32xbf16>,
    } else {
    }
    return
  }
  func.func @transform_0(%arg0: i32, %arg1: i32) -> (i32, i32) {
    %c0_i32 = arith.constant 0 : i32
    return %arg0, %arg1 : i32, i32
  }
  func.func @transform_1(%arg0: i32, %arg1: i32) -> (i32, i32) {
    %c0_i32 = arith.constant 0 : i32
    %c0_i32_0 = arith.constant 0 : i32
    return %arg1, %c0_i32 : i32, i32
  }
  func.func @transform_2(%arg0: i32, %arg1: i32) -> (i32, i32) {
    %c0_i32 = arith.constant 0 : i32
    %c0_i32_0 = arith.constant 0 : i32
    return %arg0, %c0_i32 : i32, i32
  }
  func.func @transform_3(%arg0: i32, %arg1: i32) -> (i32, i32) {
    %c0_i32 = arith.constant 0 : i32
    %c0_i32_0 = arith.constant 0 : i32
    %c0_i32_1 = arith.constant 0 : i32
    return %c0_i32, %c0_i32_0 : i32, i32
  }
  func.func @transform_4(%arg0: i32, %arg1: i32) -> (i32, i32) {
    %c0_i32 = arith.constant 0 : i32
    %c0_i32_0 = arith.constant 0 : i32
    %c0_i32_1 = arith.constant 0 : i32
    return %c0_i32, %c0_i32_0 : i32, i32
  }
}

module attributes {stable_mosaic.version = 11 : i64} {
  func.func @_bn_lrelu_kernel(%arg0: i32, %arg1: memref<128x32xbf16, #tpu.memory_space<vmem>>, %arg2: memref<1x32xf32, #tpu.memory_space<vmem>>, %arg3: memref<1x32xf32, #tpu.memory_space<vmem>>, %arg4: memref<128x32xbf16, #tpu.memory_space<vmem>>) attributes {dimension_semantics = [#tpu.dimension_semantics<parallel>], iteration_bounds = array<i64: 1>, scalar_prefetch = 0 : i64, scratch_operands = 0 : i64, tpu.core_type = #tpu.core_type<tc>, window_params = [{transform_indices = @transform_0, window_bounds = array<i64: 128, 32>}, {pipeline_mode = #tpu.pipeline_mode<synchronous>, transform_indices = @transform_1, window_bounds = array<i64: 1, 32>}, {pipeline_mode = #tpu.pipeline_mode<synchronous>, transform_indices = @transform_2, window_bounds = array<i64: 1, 32>}, {transform_indices = @transform_3, window_bounds = array<i64: 128, 32>}]} {
    %c0 = arith.constant 0 : index
    %c0_0 = arith.constant 0 : index
    %0 = vector.load %arg1[%c0, %c0_0] : memref<128x32xbf16, #tpu.memory_space<vmem>>, vector<128x32xbf16>
    %1 = arith.extf %0 : vector<128x32xbf16> to vector<128x32xf32>
    %c0_1 = arith.constant 0 : index
    %c0_2 = arith.constant 0 : index
    %2 = vector.load %arg2[%c0_1, %c0_2] : memref<1x32xf32, #tpu.memory_space<vmem>>, vector<1x32xf32>
    %3 = vector.broadcast %2 : vector<1x32xf32> to vector<128x32xf32>
    %4 = arith.mulf %1, %3 : vector<128x32xf32>
    %c0_3 = arith.constant 0 : index
    %c0_4 = arith.constant 0 : index
    %5 = vector.load %arg3[%c0_3, %c0_4] : memref<1x32xf32, #tpu.memory_space<vmem>>, vector<1x32xf32>
    %6 = vector.broadcast %5 : vector<1x32xf32> to vector<128x32xf32>
    %7 = arith.addf %4, %6 : vector<128x32xf32>
    %cst = arith.constant 0.000000e+00 : f32
    %8 = vector.broadcast %cst : f32 to vector<128x32xf32>
    %9 = arith.cmpf ogt, %7, %8 : vector<128x32xf32>
    %cst_5 = arith.constant 2.000000e-01 : f32
    %10 = vector.broadcast %cst_5 : f32 to vector<128x32xf32>
    %11 = arith.mulf %10, %7 : vector<128x32xf32>
    %12 = arith.select %9, %7, %11 : vector<128x32xi1>, vector<128x32xf32>
    %13 = arith.truncf %12 : vector<128x32xf32> to vector<128x32xbf16>
    %c0_6 = arith.constant 0 : index
    %c0_7 = arith.constant 0 : index
    %14 = vector.load %arg4[%c0_6, %c0_7] : memref<128x32xbf16, #tpu.memory_space<vmem>>, vector<128x32xbf16>
    tpu.vector_store %arg4[%c0_6, %c0_7], %13 {strides = array<i32>} : memref<128x32xbf16, #tpu.memory_space<vmem>>, vector<128x32xbf16>,
    return
  }
  func.func @transform_0(%arg0: i32) -> (i32, i32) {
    %c0_i32 = arith.constant 0 : i32
    %c0_i32_0 = arith.constant 0 : i32
    return %arg0, %c0_i32 : i32, i32
  }
  func.func @transform_1(%arg0: i32) -> (i32, i32) {
    %c0_i32 = arith.constant 0 : i32
    %c0_i32_0 = arith.constant 0 : i32
    %c0_i32_1 = arith.constant 0 : i32
    return %c0_i32, %c0_i32_0 : i32, i32
  }
  func.func @transform_2(%arg0: i32) -> (i32, i32) {
    %c0_i32 = arith.constant 0 : i32
    %c0_i32_0 = arith.constant 0 : i32
    %c0_i32_1 = arith.constant 0 : i32
    return %c0_i32, %c0_i32_0 : i32, i32
  }
  func.func @transform_3(%arg0: i32) -> (i32, i32) {
    %c0_i32 = arith.constant 0 : i32
    %c0_i32_0 = arith.constant 0 : i32
    return %arg0, %c0_i32 : i32, i32
  }
}

module attributes {stable_mosaic.version = 11 : i64} {
  func.func @_conv_bn_stats_kernel(%arg0: i32, %arg1: i32, %arg2: memref<32x512xbf16, #tpu.memory_space<vmem>>, %arg3: memref<512x64xbf16, #tpu.memory_space<vmem>>, %arg4: memref<32x64xbf16, #tpu.memory_space<vmem>>, %arg5: memref<1x64xf32, #tpu.memory_space<vmem>>, %arg6: memref<1x64xf32, #tpu.memory_space<vmem>>, %arg7: memref<32x64xf32, #tpu.memory_space<vmem>>) attributes {dimension_semantics = [#tpu.dimension_semantics<arbitrary>, #tpu.dimension_semantics<arbitrary>], iteration_bounds = array<i64: 1, 1>, scalar_prefetch = 0 : i64, scratch_operands = 1 : i64, tpu.core_type = #tpu.core_type<tc>, window_params = [{transform_indices = @transform_0, window_bounds = array<i64: 32, 512>}, {transform_indices = @transform_1, window_bounds = array<i64: 512, 64>}, {transform_indices = @transform_2, window_bounds = array<i64: 32, 64>}, {pipeline_mode = #tpu.pipeline_mode<synchronous>, transform_indices = @transform_3, window_bounds = array<i64: 1, 64>}, {pipeline_mode = #tpu.pipeline_mode<synchronous>, transform_indices = @transform_4, window_bounds = array<i64: 1, 64>}]} {
    %c0_i32 = arith.constant 0 : i32
    %0 = arith.cmpi eq, %arg0, %c0_i32 : i32
    %c0_i32_0 = arith.constant 0 : i32
    %1 = arith.cmpi eq, %arg1, %c0_i32_0 : i32
    %2 = arith.andi %0, %1 : i1
    %3 = arith.extui %2 : i1 to i32
    %c0_i32_1 = arith.constant 0 : i32
    %4 = arith.cmpi ne, %3, %c0_i32_1 : i32
    scf.if %4 {
      %cst_13 = arith.constant 0.000000e+00 : f32
      %17 = vector.broadcast %cst_13 : f32 to vector<1x64xf32>
      %c0_14 = arith.constant 0 : index
      %c0_15 = arith.constant 0 : index
      %18 = vector.load %arg5[%c0_14, %c0_15] : memref<1x64xf32, #tpu.memory_space<vmem>>, vector<1x64xf32>
      tpu.vector_store %arg5[%c0_14, %c0_15], %17 {strides = array<i32>} : memref<1x64xf32, #tpu.memory_space<vmem>>, vector<1x64xf32>,
      %cst_16 = arith.constant 0.000000e+00 : f32
      %19 = vector.broadcast %cst_16 : f32 to vector<1x64xf32>
      %c0_17 = arith.constant 0 : index
      %c0_18 = arith.constant 0 : index
      %20 = vector.load %arg6[%c0_17, %c0_18] : memref<1x64xf32, #tpu.memory_space<vmem>>, vector<1x64xf32>
      tpu.vector_store %arg6[%c0_17, %c0_18], %19 {strides = array<i32>} : memref<1x64xf32, #tpu.memory_space<vmem>>, vector<1x64xf32>,
    } else {
    }
    %c0_i32_2 = arith.constant 0 : i32
    %5 = arith.cmpi eq, %arg1, %c0_i32_2 : i32
    %6 = arith.extui %5 : i1 to i32
    %c0_i32_3 = arith.constant 0 : i32
    %7 = arith.cmpi ne, %6, %c0_i32_3 : i32
    scf.if %7 {
      %cst_13 = arith.constant 0.000000e+00 : f32
      %17 = vector.broadcast %cst_13 : f32 to vector<32x64xf32>
      %c0_14 = arith.constant 0 : index
      %c0_15 = arith.constant 0 : index
      %18 = vector.load %arg7[%c0_14, %c0_15] : memref<32x64xf32, #tpu.memory_space<vmem>>, vector<32x64xf32>
      tpu.vector_store %arg7[%c0_14, %c0_15], %17 {strides = array<i32>} : memref<32x64xf32, #tpu.memory_space<vmem>>, vector<32x64xf32>,
    } else {
    }
    %c0 = arith.constant 0 : index
    %c0_4 = arith.constant 0 : index
    %8 = vector.load %arg7[%c0, %c0_4] : memref<32x64xf32, #tpu.memory_space<vmem>>, vector<32x64xf32>
    %c0_5 = arith.constant 0 : index
    %c0_6 = arith.constant 0 : index
    %9 = vector.load %arg2[%c0_5, %c0_6] : memref<32x512xbf16, #tpu.memory_space<vmem>>, vector<32x512xbf16>
    %c0_7 = arith.constant 0 : index
    %c0_8 = arith.constant 0 : index
    %10 = vector.load %arg3[%c0_7, %c0_8] : memref<512x64xbf16, #tpu.memory_space<vmem>>, vector<512x64xbf16>
    %cst = arith.constant dense<0.000000e+00> : vector<32x64xf32>
    %11 = tpu.matmul %9, %10, %cst {dimension_numbers = #tpu.dot_dimension_numbers<[1], [0], [0], [1], [0, 0, 1, 1], [], []>} : vector<32x512xbf16>, vector<512x64xbf16>, vector<32x64xf32> -> vector<32x64xf32>
    %12 = arith.addf %8, %11 : vector<32x64xf32>
    %c0_9 = arith.constant 0 : index
    %c0_10 = arith.constant 0 : index
    %13 = vector.load %arg7[%c0_9, %c0_10] : memref<32x64xf32, #tpu.memory_space<vmem>>, vector<32x64xf32>
    tpu.vector_store %arg7[%c0_9, %c0_10], %12 {strides = array<i32>} : memref<32x64xf32, #tpu.memory_space<vmem>>, vector<32x64xf32>,
    %c0_i32_11 = arith.constant 0 : i32
    %14 = arith.cmpi eq, %arg1, %c0_i32_11 : i32
    %15 = arith.extui %14 : i1 to i32
    %c0_i32_12 = arith.constant 0 : i32
    %16 = arith.cmpi ne, %15, %c0_i32_12 : i32
    scf.if %16 {
      %c0_13 = arith.constant 0 : index
      %c0_14 = arith.constant 0 : index
      %17 = vector.load %arg7[%c0_13, %c0_14] : memref<32x64xf32, #tpu.memory_space<vmem>>, vector<32x64xf32>
      %c0_15 = arith.constant 0 : index
      %c0_16 = arith.constant 0 : index
      %18 = vector.load %arg5[%c0_15, %c0_16] : memref<1x64xf32, #tpu.memory_space<vmem>>, vector<1x64xf32>
      %cst_17 = arith.constant dense<0.000000e+00> : vector<64xf32>
      %19 = vector.multi_reduction <add>, %17, %cst_17 [0] : vector<32x64xf32> to vector<64xf32>
      %20 = vector.shape_cast %19 : vector<64xf32> to vector<1x64xf32>
      %21 = arith.addf %18, %20 : vector<1x64xf32>
      %c0_18 = arith.constant 0 : index
      %c0_19 = arith.constant 0 : index
      %22 = vector.load %arg5[%c0_18, %c0_19] : memref<1x64xf32, #tpu.memory_space<vmem>>, vector<1x64xf32>
      tpu.vector_store %arg5[%c0_18, %c0_19], %21 {strides = array<i32>} : memref<1x64xf32, #tpu.memory_space<vmem>>, vector<1x64xf32>,
      %c0_20 = arith.constant 0 : index
      %c0_21 = arith.constant 0 : index
      %23 = vector.load %arg6[%c0_20, %c0_21] : memref<1x64xf32, #tpu.memory_space<vmem>>, vector<1x64xf32>
      %24 = arith.mulf %17, %17 : vector<32x64xf32>
      %cst_22 = arith.constant dense<0.000000e+00> : vector<64xf32>
      %25 = vector.multi_reduction <add>, %24, %cst_22 [0] : vector<32x64xf32> to vector<64xf32>
      %26 = vector.shape_cast %25 : vector<64xf32> to vector<1x64xf32>
      %27 = arith.addf %23, %26 : vector<1x64xf32>
      %c0_23 = arith.constant 0 : index
      %c0_24 = arith.constant 0 : index
      %28 = vector.load %arg6[%c0_23, %c0_24] : memref<1x64xf32, #tpu.memory_space<vmem>>, vector<1x64xf32>
      tpu.vector_store %arg6[%c0_23, %c0_24], %27 {strides = array<i32>} : memref<1x64xf32, #tpu.memory_space<vmem>>, vector<1x64xf32>,
      %29 = arith.truncf %17 : vector<32x64xf32> to vector<32x64xbf16>
      %c0_25 = arith.constant 0 : index
      %c0_26 = arith.constant 0 : index
      %30 = vector.load %arg4[%c0_25, %c0_26] : memref<32x64xbf16, #tpu.memory_space<vmem>>, vector<32x64xbf16>
      tpu.vector_store %arg4[%c0_25, %c0_26], %29 {strides = array<i32>} : memref<32x64xbf16, #tpu.memory_space<vmem>>, vector<32x64xbf16>,
    } else {
    }
    return
  }
  func.func @transform_0(%arg0: i32, %arg1: i32) -> (i32, i32) {
    %c0_i32 = arith.constant 0 : i32
    return %arg0, %arg1 : i32, i32
  }
  func.func @transform_1(%arg0: i32, %arg1: i32) -> (i32, i32) {
    %c0_i32 = arith.constant 0 : i32
    %c0_i32_0 = arith.constant 0 : i32
    return %arg1, %c0_i32 : i32, i32
  }
  func.func @transform_2(%arg0: i32, %arg1: i32) -> (i32, i32) {
    %c0_i32 = arith.constant 0 : i32
    %c0_i32_0 = arith.constant 0 : i32
    return %arg0, %c0_i32 : i32, i32
  }
  func.func @transform_3(%arg0: i32, %arg1: i32) -> (i32, i32) {
    %c0_i32 = arith.constant 0 : i32
    %c0_i32_0 = arith.constant 0 : i32
    %c0_i32_1 = arith.constant 0 : i32
    return %c0_i32, %c0_i32_0 : i32, i32
  }
  func.func @transform_4(%arg0: i32, %arg1: i32) -> (i32, i32) {
    %c0_i32 = arith.constant 0 : i32
    %c0_i32_0 = arith.constant 0 : i32
    %c0_i32_1 = arith.constant 0 : i32
    return %c0_i32, %c0_i32_0 : i32, i32
  }
}

module attributes {stable_mosaic.version = 11 : i64} {
  func.func @_bn_lrelu_kernel(%arg0: i32, %arg1: memref<32x64xbf16, #tpu.memory_space<vmem>>, %arg2: memref<1x64xf32, #tpu.memory_space<vmem>>, %arg3: memref<1x64xf32, #tpu.memory_space<vmem>>, %arg4: memref<32x64xbf16, #tpu.memory_space<vmem>>) attributes {dimension_semantics = [#tpu.dimension_semantics<parallel>], iteration_bounds = array<i64: 1>, scalar_prefetch = 0 : i64, scratch_operands = 0 : i64, tpu.core_type = #tpu.core_type<tc>, window_params = [{transform_indices = @transform_0, window_bounds = array<i64: 32, 64>}, {pipeline_mode = #tpu.pipeline_mode<synchronous>, transform_indices = @transform_1, window_bounds = array<i64: 1, 64>}, {pipeline_mode = #tpu.pipeline_mode<synchronous>, transform_indices = @transform_2, window_bounds = array<i64: 1, 64>}, {transform_indices = @transform_3, window_bounds = array<i64: 32, 64>}]} {
    %c0 = arith.constant 0 : index
    %c0_0 = arith.constant 0 : index
    %0 = vector.load %arg1[%c0, %c0_0] : memref<32x64xbf16, #tpu.memory_space<vmem>>, vector<32x64xbf16>
    %1 = arith.extf %0 : vector<32x64xbf16> to vector<32x64xf32>
    %c0_1 = arith.constant 0 : index
    %c0_2 = arith.constant 0 : index
    %2 = vector.load %arg2[%c0_1, %c0_2] : memref<1x64xf32, #tpu.memory_space<vmem>>, vector<1x64xf32>
    %3 = vector.broadcast %2 : vector<1x64xf32> to vector<32x64xf32>
    %4 = arith.mulf %1, %3 : vector<32x64xf32>
    %c0_3 = arith.constant 0 : index
    %c0_4 = arith.constant 0 : index
    %5 = vector.load %arg3[%c0_3, %c0_4] : memref<1x64xf32, #tpu.memory_space<vmem>>, vector<1x64xf32>
    %6 = vector.broadcast %5 : vector<1x64xf32> to vector<32x64xf32>
    %7 = arith.addf %4, %6 : vector<32x64xf32>
    %cst = arith.constant 0.000000e+00 : f32
    %8 = vector.broadcast %cst : f32 to vector<32x64xf32>
    %9 = arith.cmpf ogt, %7, %8 : vector<32x64xf32>
    %cst_5 = arith.constant 2.000000e-01 : f32
    %10 = vector.broadcast %cst_5 : f32 to vector<32x64xf32>
    %11 = arith.mulf %10, %7 : vector<32x64xf32>
    %12 = arith.select %9, %7, %11 : vector<32x64xi1>, vector<32x64xf32>
    %13 = arith.truncf %12 : vector<32x64xf32> to vector<32x64xbf16>
    %c0_6 = arith.constant 0 : index
    %c0_7 = arith.constant 0 : index
    %14 = vector.load %arg4[%c0_6, %c0_7] : memref<32x64xbf16, #tpu.memory_space<vmem>>, vector<32x64xbf16>
    tpu.vector_store %arg4[%c0_6, %c0_7], %13 {strides = array<i32>} : memref<32x64xbf16, #tpu.memory_space<vmem>>, vector<32x64xbf16>,
    return
  }
  func.func @transform_0(%arg0: i32) -> (i32, i32) {
    %c0_i32 = arith.constant 0 : i32
    %c0_i32_0 = arith.constant 0 : i32
    return %arg0, %c0_i32 : i32, i32
  }
  func.func @transform_1(%arg0: i32) -> (i32, i32) {
    %c0_i32 = arith.constant 0 : i32
    %c0_i32_0 = arith.constant 0 : i32
    %c0_i32_1 = arith.constant 0 : i32
    return %c0_i32, %c0_i32_0 : i32, i32
  }
  func.func @transform_2(%arg0: i32) -> (i32, i32) {
    %c0_i32 = arith.constant 0 : i32
    %c0_i32_0 = arith.constant 0 : i32
    %c0_i32_1 = arith.constant 0 : i32
    return %c0_i32, %c0_i32_0 : i32, i32
  }
  func.func @transform_3(%arg0: i32) -> (i32, i32) {
    %c0_i32 = arith.constant 0 : i32
    %c0_i32_0 = arith.constant 0 : i32
    return %arg0, %c0_i32 : i32, i32
  }
}

</mosaic_0001>

<llo_original>
// kernel: discriminator128_forward.7
$region0: #{discriminator128_forward.7}
  #allocation0 [shape = 'u32[]', space=smem, size = 0x4, offset = 0x4, fixed_abs, tag = 'smem constant byte address 0x4 - core index']
  #allocation1 [shape = 'u32[144,128]{1,0:T(1,128)}', space=vmem, size = 0x12000, scoped, tag = 'internal scratch']
  #allocation2 [shape = 'f32[1024,8]{1,0:T(8,128)}', space=vmem, size = 0x80000, scoped, tag = 'scratch operand']
  %s0 = inlined_call_operand.vmem [shape: bf16[2048,48], index: 0, kind: input, shape index: {}]
  %s1 = inlined_call_operand.vmem [shape: bf16[48,8], index: 1, kind: input, shape index: {}]
  %s2 = inlined_call_operand.vmem [shape: bf16[2048,8], index: 2, kind: output, shape index: {}]
  %s3 = sld [smem:[#allocation0]]
  $region49: #{discriminator128_forward.7} parent=0
    _
  %s5 = ssub.s32 1, %s3
  %s6 = scalar_select 0, %s5, %s3
  loop: start=0, step=1, limit=4
  $region2: #{discriminator128_forward.7} parent=0 // loop_pre_header
    _
  $region3: #{discriminator128_forward.7} parent=0 // loop_header
    %s8 = sphi 0, %s12
    %p9 = scmp.ge.s32.totalorder %s8, 4
    %s15 = sphi 0, %s27
    %s16 = sphi 0, %s23
    %s17 = sphi 0, %s15
    %s18 = sphi 0, %s16
    %s19 = sphi 0, %s17
    %s20 = sphi 0, %s18
    %s32 = sphi 0, %s34
    %s35 = sphi 0, %s32
    %s36 = sphi 0, %s35
    %s52 = sphi 0, %s36
    %s58 = sphi 0, %s60
    %s61 = sphi 0, %s58
    %s62 = sphi 0, %s61
    %s78 = sphi 0, %s62
    %s84 = sphi 0, %s86
    %s87 = sphi 0, %s84
    %s88 = sphi 0, %s87
    %s104 = sphi 0, %s88
  $region4: #{discriminator128_forward.7} parent=0 // loop_header_branch
    %11 = sbr.rel (%p9) target = $region8
  $region5: #{discriminator128_forward.7} parent=0 // loop_body
    %s13 = ssub.s32 %s8, 1
    %s14 = ssub.s32 %s8, 2
    %s21 = sadd.s32 1, %s16
    %p22 = scmp.ge.s32.totalorder %s21, 1
    %s23 = scalar_select %p22, 0, %s21
    %s24 = sadd.s32 1, %s15
    %s25 = scalar_select %p22, %s24, %s15
    %p26 = scmp.ge.s32.totalorder %s25, 2
    %s27 = scalar_select %p26, 0, %s25
    %s28 = ssub.s32 %s15, %s27
    %s29 = ssub.s32 %s16, %s23
    %s30 = sor.u32 %s28, %s29
    %p31 = scmp.eq.s32.totalorder %s30, 0
    %s33 = sadd.s32 %s32, 1
    %s34 = scalar_select %p31, %s32, %s33
    %p37 = pneg %p31
    %p38 = scmp.eq.s32.totalorder %s8, 1
    %p39 = por %p37, %p38
    %p40 = scmp.ne.s32.totalorder %s32, %s35
    %p41 = scmp.eq.s32.totalorder %s8, 0
    %p42 = por %p40, %p41
    %p43 = scmp.ne.s32.totalorder %s32, %s35
    %p44 = scmp.eq.s32.totalorder %s13, 1
    %p45 = por %p43, %p44
    %p46 = scmp.ne.s32.totalorder %s35, %s36
    %p47 = scmp.eq.s32.totalorder %s13, 0
    %p48 = por %p46, %p47
    %p49 = scmp.ne.s32.totalorder %s35, %s36
    %p50 = scmp.eq.s32.totalorder %s14, 1
    %p51 = por %p49, %p50
    %p53 = scmp.ne.s32.totalorder %s36, %s52
    %p54 = scmp.eq.s32.totalorder %s14, 0
    %p55 = por %p53, %p54
    %s56 = ssub.s32 %s16, %s23
    %p57 = scmp.eq.s32.totalorder %s56, 0
    %s59 = sadd.s32 %s58, 1
    %s60 = scalar_select %p57, %s58, %s59
    %p63 = pneg %p57
    %p64 = scmp.eq.s32.totalorder %s8, 1
    %p65 = por %p63, %p64
    %p66 = scmp.ne.s32.totalorder %s58, %s61
    %p67 = scmp.eq.s32.totalorder %s8, 0
    %p68 = por %p66, %p67
    %p69 = scmp.ne.s32.totalorder %s58, %s61
    %p70 = scmp.eq.s32.totalorder %s13, 1
    %p71 = por %p69, %p70
    %p72 = scmp.ne.s32.totalorder %s61, %s62
    %p73 = scmp.eq.s32.totalorder %s13, 0
    %p74 = por %p72, %p73
    %p75 = scmp.ne.s32.totalorder %s61, %s62
    %p76 = scmp.eq.s32.totalorder %s14, 1
    %p77 = por %p75, %p76
    %p79 = scmp.ne.s32.totalorder %s62, %s78
    %p80 = scmp.eq.s32.totalorder %s14, 0
    %p81 = por %p79, %p80
    %s82 = ssub.s32 %s15, %s27
    %p83 = scmp.eq.s32.totalorder %s82, 0
    %s85 = sadd.s32 %s84, 1
    %s86 = scalar_select %p83, %s84, %s85
    %p89 = pneg %p83
    %p90 = scmp.eq.s32.totalorder %s8, 1
    %p91 = por %p89, %p90
    %p92 = scmp.ne.s32.totalorder %s84, %s87
    %p93 = scmp.eq.s32.totalorder %s8, 0
    %p94 = por %p92, %p93
    %p95 = scmp.ne.s32.totalorder %s84, %s87
    %p96 = scmp.eq.s32.totalorder %s13, 1
    %p97 = por %p95, %p96
    %p98 = scmp.ne.s32.totalorder %s87, %s88
    %p99 = scmp.eq.s32.totalorder %s13, 0
    %p100 = por %p98, %p99
    %p101 = scmp.ne.s32.totalorder %s87, %s88
    %p102 = scmp.eq.s32.totalorder %s14, 1
    %p103 = por %p101, %p102
    %p105 = scmp.ne.s32.totalorder %s88, %s104
    %p106 = scmp.eq.s32.totalorder %s14, 0
    %p107 = por %p105, %p106
    %p108 = scmp.le.s32.totalorder 1, %s8
    %p109 = scmp.lt.s32.totalorder %s8, 3
    %p110 = pnand %p108, %p109
    %p111 = pneg %p110
    // Predicated region
    $region9: #{discriminator128_forward.7} parent=5 // pred_check
      _
    $region10: #{discriminator128_forward.7} parent=5 // pred_check_branch
      %113 = sbr.rel (%p110) target = $region12
    $region11: #{discriminator128_forward.7} parent=5 // pred_region
      %s114 = ssub.s32 %s8, 1
      // Predicated region
      $region13: #{discriminator128_forward.7} parent=11 // pred_check
        %p115 = pneg %p74
      $region14: #{discriminator128_forward.7} parent=11 // pred_check_branch
        %117 = sbr.rel (%p115) target = $region16
      $region15: #{discriminator128_forward.7} parent=11 // pred_region
        %s118 = smul.u32 6, %s18
        %p119 = scmp.lt.s32.totalorder %s118, 5
        %s120 = scalar_select %p119, %s118, 5
        %s121 = smul.addr %s120, 4
        %s122 = scalar_lea.vmem %s1, %s121
        %s123 = smul.u32 6, %s18
      $region16: #{discriminator128_forward.7} parent=11 // pred_fallthru
        _
    $region12: #{discriminator128_forward.7} parent=5 // pred_fallthru
      _
    %p124 = scmp.lt.s32.totalorder %s8, 2
    // Predicated region
    $region17: #{discriminator128_forward.7} parent=5 // pred_check
      %p125 = pneg %p124
    $region18: #{discriminator128_forward.7} parent=5 // pred_check_branch
      %127 = sbr.rel (%p125) target = $region20
    $region19: #{discriminator128_forward.7} parent=5 // pred_region
      // Predicated region
      $region21: #{discriminator128_forward.7} parent=19 // pred_check
        %p128 = pneg %p42
      $region22: #{discriminator128_forward.7} parent=19 // pred_check_branch
        %130 = sbr.rel (%p128) target = $region24
      $region23: #{discriminator128_forward.7} parent=19 // pred_region
        %s131 = smul.u32 128, %s15
        %p132 = scmp.lt.s32.totalorder %s131, 255
        %s133 = scalar_select %p132, %s131, 255
        %p134 = scmp.lt.s32.totalorder %s16, 0
        %s135 = scalar_select %p134, %s16, 0
        %s136 = sadd.s32 %s135, %s133
        %s137 = smul.addr %s136, 4
        %s138 = scalar_lea.vmem %s0, %s137
        %s139 = smul.u32 128, %s15
      $region24: #{discriminator128_forward.7} parent=19 // pred_fallthru
        _
    $region20: #{discriminator128_forward.7} parent=5 // pred_fallthru
      _
    %p140 = scmp.le.s32.totalorder 1, %s8
    %p141 = scmp.lt.s32.totalorder %s8, 3
    %p142 = pnand %p140, %p141
    %p143 = pneg %p142
    // Predicated region
    $region25: #{discriminator128_forward.7} parent=5 // pred_check
      _
    $region26: #{discriminator128_forward.7} parent=5 // pred_check_branch
      %145 = sbr.rel (%p142) target = $region28
    $region27: #{discriminator128_forward.7} parent=5 // pred_region
      %s146 = ssub.s32 %s8, 1
      %s147 = smul.u32 128, %s17
      %p148 = scmp.lt.s32.totalorder %s147, 255
      %s149 = scalar_select %p148, %s147, 255
      %p150 = scmp.lt.s32.totalorder %s18, 0
      %s151 = scalar_select %p150, %s18, 0
      %s152 = sadd.s32 %s151, %s149
      %s153 = smul.addr %s152, 4
      %s154 = scalar_lea.vmem %s0, %s153
      %p155 = pneg %p48
      %p156 = pneg %p45
      %s157 = smul.u32 6, %s18
      %p158 = scmp.lt.s32.totalorder %s157, 5
      %s159 = scalar_select %p158, %s157, 5
      %s160 = smul.addr %s159, 4
      %s161 = scalar_lea.vmem %s1, %s160
      %p162 = pneg %p74
      %p163 = pneg %p71
      %p164 = pneg %p100
      %p165 = pneg %p97
      %s166 = smul.u32 128, %s17
      %p167 = scmp.lt.s32.totalorder %s166, 255
      %s168 = scalar_select %p167, %s166, 255
      %s169 = smul.addr %s168, 4
      %s170 = scalar_lea.vmem %s2, %s169
      %s171 = smul.u32 128, %s17
      %p172 = scmp.lt.s32.totalorder %s171, 255
      %s173 = scalar_select %p172, %s171, 255
      %p174 = scmp.lt.s32.totalorder %s18, 0
      %s175 = scalar_select %p174, %s18, 0
      %s176 = sadd.s32 %s175, %s173
      %s177 = smul.addr %s176, 4
      %s178 = scalar_lea.vmem %s0, %s177
      %s179 = smul.u32 128, %s17
      %s180 = smul.u32 6, %s18
      %p181 = scmp.lt.s32.totalorder %s180, 5
      %s182 = scalar_select %p181, %s180, 5
      %s183 = smul.addr %s182, 4
      %s184 = scalar_lea.vmem %s1, %s183
      %s185 = smul.u32 6, %s18
      %s186 = smul.u32 128, %s17
      %p187 = scmp.lt.s32.totalorder %s186, 255
      %s188 = scalar_select %p187, %s186, 255
      %s189 = smul.addr %s188, 4
      %s190 = scalar_lea.vmem %s2, %s189
      %s191 = smul.u32 128, %s17
      %p193 = scmp.eq.s32.totalorder %s18, 0
      // Predicated region
      $region29: #{discriminator128_forward.7} parent=27 // pred_check
        %p194 = pneg %p193
      $region30: #{discriminator128_forward.7} parent=27 // pred_check_branch
        %196 = sbr.rel (%p194) target = $region32
      $region31: #{discriminator128_forward.7} parent=27 // pred_region
        %vm197 = vcmask 64512
        %198 = vst.msk [vmem:[#allocation2] sm:$0xff] %vm197, 0.0
        %199 = vst.msk [vmem:[#allocation2 + $0x8] sm:$0xff] %vm197, 0.0
        %200 = vst.msk [vmem:[#allocation2 + $0x10] sm:$0xff] %vm197, 0.0
        %201 = vst.msk [vmem:[#allocation2 + $0x18] sm:$0xff] %vm197, 0.0
        %202 = vst.msk [vmem:[#allocation2 + $0x20] sm:$0xff] %vm197, 0.0
        %203 = vst.msk [vmem:[#allocation2 + $0x28] sm:$0xff] %vm197, 0.0
        %204 = vst.msk [vmem:[#allocation2 + $0x30] sm:$0xff] %vm197, 0.0
        %205 = vst.msk [vmem:[#allocation2 + $0x38] sm:$0xff] %vm197, 0.0
        %206 = vst.msk [vmem:[#allocation2 + $0x40] sm:$0xff] %vm197, 0.0
        %207 = vst.msk [vmem:[#allocation2 + $0x48] sm:$0xff] %vm197, 0.0
        %208 = vst.msk [vmem:[#allocation2 + $0x50] sm:$0xff] %vm197, 0.0
        %209 = vst.msk [vmem:[#allocation2 + $0x58] sm:$0xff] %vm197, 0.0
        %210 = vst.msk [vmem:[#allocation2 + $0x60] sm:$0xff] %vm197, 0.0
        %211 = vst.msk [vmem:[#allocation2 + $0x68] sm:$0xff] %vm197, 0.0
        %212 = vst.msk [vmem:[#allocation2 + $0x70] sm:$0xff] %vm197, 0.0
        %213 = vst.msk [vmem:[#allocation2 + $0x78] sm:$0xff] %vm197, 0.0
        %214 = vst.msk [vmem:[#allocation2 + $0x80] sm:$0xff] %vm197, 0.0
        %215 = vst.msk [vmem:[#allocation2 + $0x88] sm:$0xff] %vm197, 0.0
        %216 = vst.msk [vmem:[#allocation2 + $0x90] sm:$0xff] %vm197, 0.0
        %217 = vst.msk [vmem:[#allocation2 + $0x98] sm:$0xff] %vm197, 0.0
        %218 = vst.msk [vmem:[#allocation2 + $0xa0] sm:$0xff] %vm197, 0.0
        %219 = vst.msk [vmem:[#allocation2 + $0xa8] sm:$0xff] %vm197, 0.0
        %220 = vst.msk [vmem:[#allocation2 + $0xb0] sm:$0xff] %vm197, 0.0
        %221 = vst.msk [vmem:[#allocation2 + $0xb8] sm:$0xff] %vm197, 0.0
        %222 = vst.msk [vmem:[#allocation2 + $0xc0] sm:$0xff] %vm197, 0.0
        %223 = vst.msk [vmem:[#allocation2 + $0xc8] sm:$0xff] %vm197, 0.0
        %224 = vst.msk [vmem:[#allocation2 + $0xd0] sm:$0xff] %vm197, 0.0
        %225 = vst.msk [vmem:[#allocation2 + $0xd8] sm:$0xff] %vm197, 0.0
        %226 = vst.msk [vmem:[#allocation2 + $0xe0] sm:$0xff] %vm197, 0.0
        %227 = vst.msk [vmem:[#allocation2 + $0xe8] sm:$0xff] %vm197, 0.0
        %228 = vst.msk [vmem:[#allocation2 + $0xf0] sm:$0xff] %vm197, 0.0
        %229 = vst.msk [vmem:[#allocation2 + $0xf8] sm:$0xff] %vm197, 0.0
        %230 = vst.msk [vmem:[#allocation2 + $0x100] sm:$0xff] %vm197, 0.0
        %231 = vst.msk [vmem:[#allocation2 + $0x108] sm:$0xff] %vm197, 0.0
        %232 = vst.msk [vmem:[#allocation2 + $0x110] sm:$0xff] %vm197, 0.0
        %233 = vst.msk [vmem:[#allocation2 + $0x118] sm:$0xff] %vm197, 0.0
        %234 = vst.msk [vmem:[#allocation2 + $0x120] sm:$0xff] %vm197, 0.0
        %235 = vst.msk [vmem:[#allocation2 + $0x128] sm:$0xff] %vm197, 0.0
        %236 = vst.msk [vmem:[#allocation2 + $0x130] sm:$0xff] %vm197, 0.0
        %237 = vst.msk [vmem:[#allocation2 + $0x138] sm:$0xff] %vm197, 0.0
        %238 = vst.msk [vmem:[#allocation2 + $0x140] sm:$0xff] %vm197, 0.0
        %239 = vst.msk [vmem:[#allocation2 + $0x148] sm:$0xff] %vm197, 0.0
        %240 = vst.msk [vmem:[#allocation2 + $0x150] sm:$0xff] %vm197, 0.0
        %241 = vst.msk [vmem:[#allocation2 + $0x158] sm:$0xff] %vm197, 0.0
        %242 = vst.msk [vmem:[#allocation2 + $0x160] sm:$0xff] %vm197, 0.0
        %243 = vst.msk [vmem:[#allocation2 + $0x168] sm:$0xff] %vm197, 0.0
        %244 = vst.msk [vmem:[#allocation2 + $0x170] sm:$0xff] %vm197, 0.0
        %245 = vst.msk [vmem:[#allocation2 + $0x178] sm:$0xff] %vm197, 0.0
        %246 = vst.msk [vmem:[#allocation2 + $0x180] sm:$0xff] %vm197, 0.0
        %247 = vst.msk [vmem:[#allocation2 + $0x188] sm:$0xff] %vm197, 0.0
        %248 = vst.msk [vmem:[#allocation2 + $0x190] sm:$0xff] %vm197, 0.0
        %249 = vst.msk [vmem:[#allocation2 + $0x198] sm:$0xff] %vm197, 0.0
        %250 = vst.msk [vmem:[#allocation2 + $0x1a0] sm:$0xff] %vm197, 0.0
        %251 = vst.msk [vmem:[#allocation2 + $0x1a8] sm:$0xff] %vm197, 0.0
        %252 = vst.msk [vmem:[#allocation2 + $0x1b0] sm:$0xff] %vm197, 0.0
        %253 = vst.msk [vmem:[#allocation2 + $0x1b8] sm:$0xff] %vm197, 0.0
        %254 = vst.msk [vmem:[#allocation2 + $0x1c0] sm:$0xff] %vm197, 0.0
        %255 = vst.msk [vmem:[#allocation2 + $0x1c8] sm:$0xff] %vm197, 0.0
        %256 = vst.msk [vmem:[#allocation2 + $0x1d0] sm:$0xff] %vm197, 0.0
        %257 = vst.msk [vmem:[#allocation2 + $0x1d8] sm:$0xff] %vm197, 0.0
        %258 = vst.msk [vmem:[#allocation2 + $0x1e0] sm:$0xff] %vm197, 0.0
        %259 = vst.msk [vmem:[#allocation2 + $0x1e8] sm:$0xff] %vm197, 0.0
        %260 = vst.msk [vmem:[#allocation2 + $0x1f0] sm:$0xff] %vm197, 0.0
        %261 = vst.msk [vmem:[#allocation2 + $0x1f8] sm:$0xff] %vm197, 0.0
        %262 = vst.msk [vmem:[#allocation2 + $0x200] sm:$0xff] %vm197, 0.0
        %263 = vst.msk [vmem:[#allocation2 + $0x208] sm:$0xff] %vm197, 0.0
        %264 = vst.msk [vmem:[#allocation2 + $0x210] sm:$0xff] %vm197, 0.0
        %265 = vst.msk [vmem:[#allocation2 + $0x218] sm:$0xff] %vm197, 0.0
        %266 = vst.msk [vmem:[#allocation2 + $0x220] sm:$0xff] %vm197, 0.0
        %267 = vst.msk [vmem:[#allocation2 + $0x228] sm:$0xff] %vm197, 0.0
        %268 = vst.msk [vmem:[#allocation2 + $0x230] sm:$0xff] %vm197, 0.0
        %269 = vst.msk [vmem:[#allocation2 + $0x238] sm:$0xff] %vm197, 0.0
        %270 = vst.msk [vmem:[#allocation2 + $0x240] sm:$0xff] %vm197, 0.0
        %271 = vst.msk [vmem:[#allocation2 + $0x248] sm:$0xff] %vm197, 0.0
        %272 = vst.msk [vmem:[#allocation2 + $0x250] sm:$0xff] %vm197, 0.0
        %273 = vst.msk [vmem:[#allocation2 + $0x258] sm:$0xff] %vm197, 0.0
        %274 = vst.msk [vmem:[#allocation2 + $0x260] sm:$0xff] %vm197, 0.0
        %275 = vst.msk [vmem:[#allocation2 + $0x268] sm:$0xff] %vm197, 0.0
        %276 = vst.msk [vmem:[#allocation2 + $0x270] sm:$0xff] %vm197, 0.0
        %277 = vst.msk [vmem:[#allocation2 + $0x278] sm:$0xff] %vm197, 0.0
        %278 = vst.msk [vmem:[#allocation2 + $0x280] sm:$0xff] %vm197, 0.0
        %279 = vst.msk [vmem:[#allocation2 + $0x288] sm:$0xff] %vm197, 0.0
        %280 = vst.msk [vmem:[#allocation2 + $0x290] sm:$0xff] %vm197, 0.0
        %281 = vst.msk [vmem:[#allocation2 + $0x298] sm:$0xff] %vm197, 0.0
        %282 = vst.msk [vmem:[#allocation2 + $0x2a0] sm:$0xff] %vm197, 0.0
        %283 = vst.msk [vmem:[#allocation2 + $0x2a8] sm:$0xff] %vm197, 0.0
        %284 = vst.msk [vmem:[#allocation2 + $0x2b0] sm:$0xff] %vm197, 0.0
        %285 = vst.msk [vmem:[#allocation2 + $0x2b8] sm:$0xff] %vm197, 0.0
        %286 = vst.msk [vmem:[#allocation2 + $0x2c0] sm:$0xff] %vm197, 0.0
        %287 = vst.msk [vmem:[#allocation2 + $0x2c8] sm:$0xff] %vm197, 0.0
        %288 = vst.msk [vmem:[#allocation2 + $0x2d0] sm:$0xff] %vm197, 0.0
        %289 = vst.msk [vmem:[#allocation2 + $0x2d8] sm:$0xff] %vm197, 0.0
        %290 = vst.msk [vmem:[#allocation2 + $0x2e0] sm:$0xff] %vm197, 0.0
        %291 = vst.msk [vmem:[#allocation2 + $0x2e8] sm:$0xff] %vm197, 0.0
        %292 = vst.msk [vmem:[#allocation2 + $0x2f0] sm:$0xff] %vm197, 0.0
        %293 = vst.msk [vmem:[#allocation2 + $0x2f8] sm:$0xff] %vm197, 0.0
        %294 = vst.msk [vmem:[#allocation2 + $0x300] sm:$0xff] %vm197, 0.0
        %295 = vst.msk [vmem:[#allocation2 + $0x308] sm:$0xff] %vm197, 0.0
        %296 = vst.msk [vmem:[#allocation2 + $0x310] sm:$0xff] %vm197, 0.0
        %297 = vst.msk [vmem:[#allocation2 + $0x318] sm:$0xff] %vm197, 0.0
        %298 = vst.msk [vmem:[#allocation2 + $0x320] sm:$0xff] %vm197, 0.0
        %299 = vst.msk [vmem:[#allocation2 + $0x328] sm:$0xff] %vm197, 0.0
        %300 = vst.msk [vmem:[#allocation2 + $0x330] sm:$0xff] %vm197, 0.0
        %301 = vst.msk [vmem:[#allocation2 + $0x338] sm:$0xff] %vm197, 0.0
        %302 = vst.msk [vmem:[#allocation2 + $0x340] sm:$0xff] %vm197, 0.0
        %303 = vst.msk [vmem:[#allocation2 + $0x348] sm:$0xff] %vm197, 0.0
        %304 = vst.msk [vmem:[#allocation2 + $0x350] sm:$0xff] %vm197, 0.0
        %305 = vst.msk [vmem:[#allocation2 + $0x358] sm:$0xff] %vm197, 0.0
        %306 = vst.msk [vmem:[#allocation2 + $0x360] sm:$0xff] %vm197, 0.0
        %307 = vst.msk [vmem:[#allocation2 + $0x368] sm:$0xff] %vm197, 0.0
        %308 = vst.msk [vmem:[#allocation2 + $0x370] sm:$0xff] %vm197, 0.0
        %309 = vst.msk [vmem:[#allocation2 + $0x378] sm:$0xff] %vm197, 0.0
        %310 = vst.msk [vmem:[#allocation2 + $0x380] sm:$0xff] %vm197, 0.0
        %311 = vst.msk [vmem:[#allocation2 + $0x388] sm:$0xff] %vm197, 0.0
        %312 = vst.msk [vmem:[#allocation2 + $0x390] sm:$0xff] %vm197, 0.0
        %313 = vst.msk [vmem:[#allocation2 + $0x398] sm:$0xff] %vm197, 0.0
        %314 = vst.msk [vmem:[#allocation2 + $0x3a0] sm:$0xff] %vm197, 0.0
        %315 = vst.msk [vmem:[#allocation2 + $0x3a8] sm:$0xff] %vm197, 0.0
        %316 = vst.msk [vmem:[#allocation2 + $0x3b0] sm:$0xff] %vm197, 0.0
        %317 = vst.msk [vmem:[#allocation2 + $0x3b8] sm:$0xff] %vm197, 0.0
        %318 = vst.msk [vmem:[#allocation2 + $0x3c0] sm:$0xff] %vm197, 0.0
        %319 = vst.msk [vmem:[#allocation2 + $0x3c8] sm:$0xff] %vm197, 0.0
        %320 = vst.msk [vmem:[#allocation2 + $0x3d0] sm:$0xff] %vm197, 0.0
        %321 = vst.msk [vmem:[#allocation2 + $0x3d8] sm:$0xff] %vm197, 0.0
        %322 = vst.msk [vmem:[#allocation2 + $0x3e0] sm:$0xff] %vm197, 0.0
        %323 = vst.msk [vmem:[#allocation2 + $0x3e8] sm:$0xff] %vm197, 0.0
        %324 = vst.msk [vmem:[#allocation2 + $0x3f0] sm:$0xff] %vm197, 0.0
        %325 = vst.msk [vmem:[#allocation2 + $0x3f8] sm:$0xff] %vm197, 0.0
      $region32: #{discriminator128_forward.7} parent=27 // pred_fallthru
        _
      %v326 = vld [vmem:[#allocation2] sm:$0xff]
      %v327 = vld [vmem:[#allocation2 + $0x8] sm:$0xff]
      %v328 = vld [vmem:[#allocation2 + $0x10] sm:$0xff]
      %v329 = vld [vmem:[#allocation2 + $0x18] sm:$0xff]
      %v330 = vld [vmem:[#allocation2 + $0x20] sm:$0xff]
      %v331 = vld [vmem:[#allocation2 + $0x28] sm:$0xff]
      %v332 = vld [vmem:[#allocation2 + $0x30] sm:$0xff]
      %v333 = vld [vmem:[#allocation2 + $0x38] sm:$0xff]
      %v334 = vld [vmem:[#allocation2 + $0x40] sm:$0xff]
      %v335 = vld [vmem:[#allocation2 + $0x48] sm:$0xff]
      %v336 = vld [vmem:[#allocation2 + $0x50] sm:$0xff]
      %v337 = vld [vmem:[#allocation2 + $0x58] sm:$0xff]
      %v338 = vld [vmem:[#allocation2 + $0x60] sm:$0xff]
      %v339 = vld [vmem:[#allocation2 + $0x68] sm:$0xff]
      %v340 = vld [vmem:[#allocation2 + $0x70] sm:$0xff]
      %v341 = vld [vmem:[#allocation2 + $0x78] sm:$0xff]
      %v342 = vld [vmem:[#allocation2 + $0x80] sm:$0xff]
      %v343 = vld [vmem:[#allocation2 + $0x88] sm:$0xff]
      %v344 = vld [vmem:[#allocation2 + $0x90] sm:$0xff]
      %v345 = vld [vmem:[#allocation2 + $0x98] sm:$0xff]
      %v346 = vld [vmem:[#allocation2 + $0xa0] sm:$0xff]
      %v347 = vld [vmem:[#allocation2 + $0xa8] sm:$0xff]
      %v348 = vld [vmem:[#allocation2 + $0xb0] sm:$0xff]
      %v349 = vld [vmem:[#allocation2 + $0xb8] sm:$0xff]
      %v350 = vld [vmem:[#allocation2 + $0xc0] sm:$0xff]
      %v351 = vld [vmem:[#allocation2 + $0xc8] sm:$0xff]
      %v352 = vld [vmem:[#allocation2 + $0xd0] sm:$0xff]
      %v353 = vld [vmem:[#allocation2 + $0xd8] sm:$0xff]
      %v354 = vld [vmem:[#allocation2 + $0xe0] sm:$0xff]
      %v355 = vld [vmem:[#allocation2 + $0xe8] sm:$0xff]
      %v356 = vld [vmem:[#allocation2 + $0xf0] sm:$0xff]
      %v357 = vld [vmem:[#allocation2 + $0xf8] sm:$0xff]
      %v358 = vld [vmem:[#allocation2 + $0x100] sm:$0xff]
      %v359 = vld [vmem:[#allocation2 + $0x108] sm:$0xff]
      %v360 = vld [vmem:[#allocation2 + $0x110] sm:$0xff]
      %v361 = vld [vmem:[#allocation2 + $0x118] sm:$0xff]
      %v362 = vld [vmem:[#allocation2 + $0x120] sm:$0xff]
      %v363 = vld [vmem:[#allocation2 + $0x128] sm:$0xff]
      %v364 = vld [vmem:[#allocation2 + $0x130] sm:$0xff]
      %v365 = vld [vmem:[#allocation2 + $0x138] sm:$0xff]
      %v366 = vld [vmem:[#allocation2 + $0x140] sm:$0xff]
      %v367 = vld [vmem:[#allocation2 + $0x148] sm:$0xff]
      %v368 = vld [vmem:[#allocation2 + $0x150] sm:$0xff]
      %v369 = vld [vmem:[#allocation2 + $0x158] sm:$0xff]
      %v370 = vld [vmem:[#allocation2 + $0x160] sm:$0xff]
      %v371 = vld [vmem:[#allocation2 + $0x168] sm:$0xff]
      %v372 = vld [vmem:[#allocation2 + $0x170] sm:$0xff]
      %v373 = vld [vmem:[#allocation2 + $0x178] sm:$0xff]
      %v374 = vld [vmem:[#allocation2 + $0x180] sm:$0xff]
      %v375 = vld [vmem:[#allocation2 + $0x188] sm:$0xff]
      %v376 = vld [vmem:[#allocation2 + $0x190] sm:$0xff]
      %v377 = vld [vmem:[#allocation2 + $0x198] sm:$0xff]
      %v378 = vld [vmem:[#allocation2 + $0x1a0] sm:$0xff]
      %v379 = vld [vmem:[#allocation2 + $0x1a8] sm:$0xff]
      %v380 = vld [vmem:[#allocation2 + $0x1b0] sm:$0xff]
      %v381 = vld [vmem:[#allocation2 + $0x1b8] sm:$0xff]
      %v382 = vld [vmem:[#allocation2 + $0x1c0] sm:$0xff]
      %v383 = vld [vmem:[#allocation2 + $0x1c8] sm:$0xff]
      %v384 = vld [vmem:[#allocation2 + $0x1d0] sm:$0xff]
      %v385 = vld [vmem:[#allocation2 + $0x1d8] sm:$0xff]
      %v386 = vld [vmem:[#allocation2 + $0x1e0] sm:$0xff]
      %v387 = vld [vmem:[#allocation2 + $0x1e8] sm:$0xff]
      %v388 = vld [vmem:[#allocation2 + $0x1f0] sm:$0xff]
      %v389 = vld [vmem:[#allocation2 + $0x1f8] sm:$0xff]
      %v390 = vld [vmem:[#allocation2 + $0x200] sm:$0xff]
      %v391 = vld [vmem:[#allocation2 + $0x208] sm:$0xff]
      %v392 = vld [vmem:[#allocation2 + $0x210] sm:$0xff]
      %v393 = vld [vmem:[#allocation2 + $0x218] sm:$0xff]
      %v394 = vld [vmem:[#allocation2 + $0x220] sm:$0xff]
      %v395 = vld [vmem:[#allocation2 + $0x228] sm:$0xff]
      %v396 = vld [vmem:[#allocation2 + $0x230] sm:$0xff]
      %v397 = vld [vmem:[#allocation2 + $0x238] sm:$0xff]
      %v398 = vld [vmem:[#allocation2 + $0x240] sm:$0xff]
      %v399 = vld [vmem:[#allocation2 + $0x248] sm:$0xff]
      %v400 = vld [vmem:[#allocation2 + $0x250] sm:$0xff]
      %v401 = vld [vmem:[#allocation2 + $0x258] sm:$0xff]
      %v402 = vld [vmem:[#allocation2 + $0x260] sm:$0xff]
      %v403 = vld [vmem:[#allocation2 + $0x268] sm:$0xff]
      %v404 = vld [vmem:[#allocation2 + $0x270] sm:$0xff]
      %v405 = vld [vmem:[#allocation2 + $0x278] sm:$0xff]
      %v406 = vld [vmem:[#allocation2 + $0x280] sm:$0xff]
      %v407 = vld [vmem:[#allocation2 + $0x288] sm:$0xff]
      %v408 = vld [vmem:[#allocation2 + $0x290] sm:$0xff]
      %v409 = vld [vmem:[#allocation2 + $0x298] sm:$0xff]
      %v410 = vld [vmem:[#allocation2 + $0x2a0] sm:$0xff]
      %v411 = vld [vmem:[#allocation2 + $0x2a8] sm:$0xff]
      %v412 = vld [vmem:[#allocation2 + $0x2b0] sm:$0xff]
      %v413 = vld [vmem:[#allocation2 + $0x2b8] sm:$0xff]
      %v414 = vld [vmem:[#allocation2 + $0x2c0] sm:$0xff]
      %v415 = vld [vmem:[#allocation2 + $0x2c8] sm:$0xff]
      %v416 = vld [vmem:[#allocation2 + $0x2d0] sm:$0xff]
      %v417 = vld [vmem:[#allocation2 + $0x2d8] sm:$0xff]
      %v418 = vld [vmem:[#allocation2 + $0x2e0] sm:$0xff]
      %v419 = vld [vmem:[#allocation2 + $0x2e8] sm:$0xff]
      %v420 = vld [vmem:[#allocation2 + $0x2f0] sm:$0xff]
      %v421 = vld [vmem:[#allocation2 + $0x2f8] sm:$0xff]
      %v422 = vld [vmem:[#allocation2 + $0x300] sm:$0xff]
      %v423 = vld [vmem:[#allocation2 + $0x308] sm:$0xff]
      %v424 = vld [vmem:[#allocation2 + $0x310] sm:$0xff]
      %v425 = vld [vmem:[#allocation2 + $0x318] sm:$0xff]
      %v426 = vld [vmem:[#allocation2 + $0x320] sm:$0xff]
      %v427 = vld [vmem:[#allocation2 + $0x328] sm:$0xff]
      %v428 = vld [vmem:[#allocation2 + $0x330] sm:$0xff]
      %v429 = vld [vmem:[#allocation2 + $0x338] sm:$0xff]
      %v430 = vld [vmem:[#allocation2 + $0x340] sm:$0xff]
      %v431 = vld [vmem:[#allocation2 + $0x348] sm:$0xff]
      %v432 = vld [vmem:[#allocation2 + $0x350] sm:$0xff]
      %v433 = vld [vmem:[#allocation2 + $0x358] sm:$0xff]
      %v434 = vld [vmem:[#allocation2 + $0x360] sm:$0xff]
      %v435 = vld [vmem:[#allocation2 + $0x368] sm:$0xff]
      %v436 = vld [vmem:[#allocation2 + $0x370] sm:$0xff]
      %v437 = vld [vmem:[#allocation2 + $0x378] sm:$0xff]
      %v438 = vld [vmem:[#allocation2 + $0x380] sm:$0xff]
      %v439 = vld [vmem:[#allocation2 + $0x388] sm:$0xff]
      %v440 = vld [vmem:[#allocation2 + $0x390] sm:$0xff]
      %v441 = vld [vmem:[#allocation2 + $0x398] sm:$0xff]
      %v442 = vld [vmem:[#allocation2 + $0x3a0] sm:$0xff]
      %v443 = vld [vmem:[#allocation2 + $0x3a8] sm:$0xff]
      %v444 = vld [vmem:[#allocation2 + $0x3b0] sm:$0xff]
      %v445 = vld [vmem:[#allocation2 + $0x3b8] sm:$0xff]
      %v446 = vld [vmem:[#allocation2 + $0x3c0] sm:$0xff]
      %v447 = vld [vmem:[#allocation2 + $0x3c8] sm:$0xff]
      %v448 = vld [vmem:[#allocation2 + $0x3d0] sm:$0xff]
      %v449 = vld [vmem:[#allocation2 + $0x3d8] sm:$0xff]
      %v450 = vld [vmem:[#allocation2 + $0x3e0] sm:$0xff]
      %v451 = vld [vmem:[#allocation2 + $0x3e8] sm:$0xff]
      %v452 = vld [vmem:[#allocation2 + $0x3f0] sm:$0xff]
      %v453 = vld [vmem:[#allocation2 + $0x3f8] sm:$0xff]
      %v454 = vld [vmem:[%s178] sm:$0xf]
      %v455 = vld [vmem:[%s178 + $0x4] sm:$0xf]
      %v456 = vld [vmem:[%s178 + $0x8] sm:$0xf]
      %v457 = vld [vmem:[%s178 + $0xc] sm:$0xf]
      %v458 = vld [vmem:[%s178 + $0x10] sm:$0xf]
      %v459 = vld [vmem:[%s178 + $0x14] sm:$0xf]
      %v460 = vld [vmem:[%s178 + $0x18] sm:$0xf]
      %v461 = vld [vmem:[%s178 + $0x1c] sm:$0xf]
      %v462 = vld [vmem:[%s178 + $0x20] sm:$0xf]
      %v463 = vld [vmem:[%s178 + $0x24] sm:$0xf]
      %v464 = vld [vmem:[%s178 + $0x28] sm:$0xf]
      %v465 = vld [vmem:[%s178 + $0x2c] sm:$0xf]
      %v466 = vld [vmem:[%s178 + $0x30] sm:$0xf]
      %v467 = vld [vmem:[%s178 + $0x34] sm:$0xf]
      %v468 = vld [vmem:[%s178 + $0x38] sm:$0xf]
      %v469 = vld [vmem:[%s178 + $0x3c] sm:$0xf]
      %v470 = vld [vmem:[%s178 + $0x40] sm:$0xf]
      %v471 = vld [vmem:[%s178 + $0x44] sm:$0xf]
      %v472 = vld [vmem:[%s178 + $0x48] sm:$0xf]
      %v473 = vld [vmem:[%s178 + $0x4c] sm:$0xf]
      %v474 = vld [vmem:[%s178 + $0x50] sm:$0xf]
      %v475 = vld [vmem:[%s178 + $0x54] sm:$0xf]
      %v476 = vld [vmem:[%s178 + $0x58] sm:$0xf]
      %v477 = vld [vmem:[%s178 + $0x5c] sm:$0xf]
      %v478 = vld [vmem:[%s178 + $0x60] sm:$0xf]
      %v479 = vld [vmem:[%s178 + $0x64] sm:$0xf]
      %v480 = vld [vmem:[%s178 + $0x68] sm:$0xf]
      %v481 = vld [vmem:[%s178 + $0x6c] sm:$0xf]
      %v482 = vld [vmem:[%s178 + $0x70] sm:$0xf]
      %v483 = vld [vmem:[%s178 + $0x74] sm:$0xf]
      %v484 = vld [vmem:[%s178 + $0x78] sm:$0xf]
      %v485 = vld [vmem:[%s178 + $0x7c] sm:$0xf]
      %v486 = vld [vmem:[%s178 + $0x80] sm:$0xf]
      %v487 = vld [vmem:[%s178 + $0x84] sm:$0xf]
      %v488 = vld [vmem:[%s178 + $0x88] sm:$0xf]
      %v489 = vld [vmem:[%s178 + $0x8c] sm:$0xf]
      %v490 = vld [vmem:[%s178 + $0x90] sm:$0xf]
      %v491 = vld [vmem:[%s178 + $0x94] sm:$0xf]
      %v492 = vld [vmem:[%s178 + $0x98] sm:$0xf]
      %v493 = vld [vmem:[%s178 + $0x9c] sm:$0xf]
      %v494 = vld [vmem:[%s178 + $0xa0] sm:$0xf]
      %v495 = vld [vmem:[%s178 + $0xa4] sm:$0xf]
      %v496 = vld [vmem:[%s178 + $0xa8] sm:$0xf]
      %v497 = vld [vmem:[%s178 + $0xac] sm:$0xf]
      %v498 = vld [vmem:[%s178 + $0xb0] sm:$0xf]
      %v499 = vld [vmem:[%s178 + $0xb4] sm:$0xf]
      %v500 = vld [vmem:[%s178 + $0xb8] sm:$0xf]
      %v501 = vld [vmem:[%s178 + $0xbc] sm:$0xf]
      %v502 = vld [vmem:[%s178 + $0xc0] sm:$0xf]
      %v503 = vld [vmem:[%s178 + $0xc4] sm:$0xf]
      %v504 = vld [vmem:[%s178 + $0xc8] sm:$0xf]
      %v505 = vld [vmem:[%s178 + $0xcc] sm:$0xf]
      %v506 = vld [vmem:[%s178 + $0xd0] sm:$0xf]
      %v507 = vld [vmem:[%s178 + $0xd4] sm:$0xf]
      %v508 = vld [vmem:[%s178 + $0xd8] sm:$0xf]
      %v509 = vld [vmem:[%s178 + $0xdc] sm:$0xf]
      %v510 = vld [vmem:[%s178 + $0xe0] sm:$0xf]
      %v511 = vld [vmem:[%s178 + $0xe4] sm:$0xf]
      %v512 = vld [vmem:[%s178 + $0xe8] sm:$0xf]
      %v513 = vld [vmem:[%s178 + $0xec] sm:$0xf]
      %v514 = vld [vmem:[%s178 + $0xf0] sm:$0xf]
      %v515 = vld [vmem:[%s178 + $0xf4] sm:$0xf]
      %v516 = vld [vmem:[%s178 + $0xf8] sm:$0xf]
      %v517 = vld [vmem:[%s178 + $0xfc] sm:$0xf]
      %v518 = vld [vmem:[%s178 + $0x100] sm:$0xf]
      %v519 = vld [vmem:[%s178 + $0x104] sm:$0xf]
      %v520 = vld [vmem:[%s178 + $0x108] sm:$0xf]
      %v521 = vld [vmem:[%s178 + $0x10c] sm:$0xf]
      %v522 = vld [vmem:[%s178 + $0x110] sm:$0xf]
      %v523 = vld [vmem:[%s178 + $0x114] sm:$0xf]
      %v524 = vld [vmem:[%s178 + $0x118] sm:$0xf]
      %v525 = vld [vmem:[%s178 + $0x11c] sm:$0xf]
      %v526 = vld [vmem:[%s178 + $0x120] sm:$0xf]
      %v527 = vld [vmem:[%s178 + $0x124] sm:$0xf]
      %v528 = vld [vmem:[%s178 + $0x128] sm:$0xf]
      %v529 = vld [vmem:[%s178 + $0x12c] sm:$0xf]
      %v530 = vld [vmem:[%s178 + $0x130] sm:$0xf]
      %v531 = vld [vmem:[%s178 + $0x134] sm:$0xf]
      %v532 = vld [vmem:[%s178 + $0x138] sm:$0xf]
      %v533 = vld [vmem:[%s178 + $0x13c] sm:$0xf]
      %v534 = vld [vmem:[%s178 + $0x140] sm:$0xf]
      %v535 = vld [vmem:[%s178 + $0x144] sm:$0xf]
      %v536 = vld [vmem:[%s178 + $0x148] sm:$0xf]
      %v537 = vld [vmem:[%s178 + $0x14c] sm:$0xf]
      %v538 = vld [vmem:[%s178 + $0x150] sm:$0xf]
      %v539 = vld [vmem:[%s178 + $0x154] sm:$0xf]
      %v540 = vld [vmem:[%s178 + $0x158] sm:$0xf]
      %v541 = vld [vmem:[%s178 + $0x15c] sm:$0xf]
      %v542 = vld [vmem:[%s178 + $0x160] sm:$0xf]
      %v543 = vld [vmem:[%s178 + $0x164] sm:$0xf]
      %v544 = vld [vmem:[%s178 + $0x168] sm:$0xf]
      %v545 = vld [vmem:[%s178 + $0x16c] sm:$0xf]
      %v546 = vld [vmem:[%s178 + $0x170] sm:$0xf]
      %v547 = vld [vmem:[%s178 + $0x174] sm:$0xf]
      %v548 = vld [vmem:[%s178 + $0x178] sm:$0xf]
      %v549 = vld [vmem:[%s178 + $0x17c] sm:$0xf]
      %v550 = vld [vmem:[%s178 + $0x180] sm:$0xf]
      %v551 = vld [vmem:[%s178 + $0x184] sm:$0xf]
      %v552 = vld [vmem:[%s178 + $0x188] sm:$0xf]
      %v553 = vld [vmem:[%s178 + $0x18c] sm:$0xf]
      %v554 = vld [vmem:[%s178 + $0x190] sm:$0xf]
      %v555 = vld [vmem:[%s178 + $0x194] sm:$0xf]
      %v556 = vld [vmem:[%s178 + $0x198] sm:$0xf]
      %v557 = vld [vmem:[%s178 + $0x19c] sm:$0xf]
      %v558 = vld [vmem:[%s178 + $0x1a0] sm:$0xf]
      %v559 = vld [vmem:[%s178 + $0x1a4] sm:$0xf]
      %v560 = vld [vmem:[%s178 + $0x1a8] sm:$0xf]
      %v561 = vld [vmem:[%s178 + $0x1ac] sm:$0xf]
      %v562 = vld [vmem:[%s178 + $0x1b0] sm:$0xf]
      %v563 = vld [vmem:[%s178 + $0x1b4] sm:$0xf]
      %v564 = vld [vmem:[%s178 + $0x1b8] sm:$0xf]
      %v565 = vld [vmem:[%s178 + $0x1bc] sm:$0xf]
      %v566 = vld [vmem:[%s178 + $0x1c0] sm:$0xf]
      %v567 = vld [vmem:[%s178 + $0x1c4] sm:$0xf]
      %v568 = vld [vmem:[%s178 + $0x1c8] sm:$0xf]
      %v569 = vld [vmem:[%s178 + $0x1cc] sm:$0xf]
      %v570 = vld [vmem:[%s178 + $0x1d0] sm:$0xf]
      %v571 = vld [vmem:[%s178 + $0x1d4] sm:$0xf]
      %v572 = vld [vmem:[%s178 + $0x1d8] sm:$0xf]
      %v573 = vld [vmem:[%s178 + $0x1dc] sm:$0xf]
      %v574 = vld [vmem:[%s178 + $0x1e0] sm:$0xf]
      %v575 = vld [vmem:[%s178 + $0x1e4] sm:$0xf]
      %v576 = vld [vmem:[%s178 + $0x1e8] sm:$0xf]
      %v577 = vld [vmem:[%s178 + $0x1ec] sm:$0xf]
      %v578 = vld [vmem:[%s178 + $0x1f0] sm:$0xf]
      %v579 = vld [vmem:[%s178 + $0x1f4] sm:$0xf]
      %v580 = vld [vmem:[%s178 + $0x1f8] sm:$0xf]
      %v581 = vld [vmem:[%s178 + $0x1fc] sm:$0xf]
      %v582 = vld [vmem:[%s184] sm:$0xf]
      %v583 = vld [vmem:[%s184 + $0x4] sm:$0xf]
      %v584 = vld [vmem:[%s184 + $0x8] sm:$0xf]
      %v585 = vld [vmem:[%s184 + $0xc] sm:$0xf]
      %v586 = vld [vmem:[%s184 + $0x10] sm:$0xf]
      %v587 = vld [vmem:[%s184 + $0x14] sm:$0xf]
      %v716 = vunpack.c.l.b16 %v454
      %v717 = vunpack.c.l.b16 %v455
      %v718 = vunpack.c.l.b16 %v456
      %v719 = vunpack.c.l.b16 %v457
      %v720 = vunpack.c.l.b16 %v458
      %v721 = vunpack.c.l.b16 %v459
      %v722 = vunpack.c.l.b16 %v460
      %v723 = vunpack.c.l.b16 %v461
      %v724 = vunpack.c.l.b16 %v462
      %v725 = vunpack.c.l.b16 %v463
      %v726 = vunpack.c.l.b16 %v464
      %v727 = vunpack.c.l.b16 %v465
      %v728 = vunpack.c.l.b16 %v466
      %v729 = vunpack.c.l.b16 %v467
      %v730 = vunpack.c.l.b16 %v468
      %v731 = vunpack.c.l.b16 %v469
      %v732 = vunpack.c.l.b16 %v470
      %v733 = vunpack.c.l.b16 %v471
      %v734 = vunpack.c.l.b16 %v472
      %v735 = vunpack.c.l.b16 %v473
      %v736 = vunpack.c.l.b16 %v474
      %v737 = vunpack.c.l.b16 %v475
      %v738 = vunpack.c.l.b16 %v476
      %v739 = vunpack.c.l.b16 %v477
      %v740 = vunpack.c.l.b16 %v478
      %v741 = vunpack.c.l.b16 %v479
      %v742 = vunpack.c.l.b16 %v480
      %v743 = vunpack.c.l.b16 %v481
      %v744 = vunpack.c.l.b16 %v482
      %v745 = vunpack.c.l.b16 %v483
      %v746 = vunpack.c.l.b16 %v484
      %v747 = vunpack.c.l.b16 %v485
      %v748 = vunpack.c.l.b16 %v486
      %v749 = vunpack.c.l.b16 %v487
      %v750 = vunpack.c.l.b16 %v488
      %v751 = vunpack.c.l.b16 %v489
      %v752 = vunpack.c.l.b16 %v490
      %v753 = vunpack.c.l.b16 %v491
      %v754 = vunpack.c.l.b16 %v492
      %v755 = vunpack.c.l.b16 %v493
      %v756 = vunpack.c.l.b16 %v494
      %v757 = vunpack.c.l.b16 %v495
      %v758 = vunpack.c.l.b16 %v496
      %v759 = vunpack.c.l.b16 %v497
      %v760 = vunpack.c.l.b16 %v498
      %v761 = vunpack.c.l.b16 %v499
      %v762 = vunpack.c.l.b16 %v500
      %v763 = vunpack.c.l.b16 %v501
      %v764 = vunpack.c.l.b16 %v502
      %v765 = vunpack.c.l.b16 %v503
      %v766 = vunpack.c.l.b16 %v504
      %v767 = vunpack.c.l.b16 %v505
      %v768 = vunpack.c.l.b16 %v506
      %v769 = vunpack.c.l.b16 %v507
      %v770 = vunpack.c.l.b16 %v508
      %v771 = vunpack.c.l.b16 %v509
      %v772 = vunpack.c.l.b16 %v510
      %v773 = vunpack.c.l.b16 %v511
      %v774 = vunpack.c.l.b16 %v512
      %v775 = vunpack.c.l.b16 %v513
      %v776 = vunpack.c.l.b16 %v514
      %v777 = vunpack.c.l.b16 %v515
      %v778 = vunpack.c.l.b16 %v516
      %v779 = vunpack.c.l.b16 %v517
      %v780 = vunpack.c.l.b16 %v518
      %v781 = vunpack.c.l.b16 %v519
      %v782 = vunpack.c.l.b16 %v520
      %v783 = vunpack.c.l.b16 %v521
      %v784 = vunpack.c.l.b16 %v522
      %v785 = vunpack.c.l.b16 %v523
      %v786 = vunpack.c.l.b16 %v524
      %v787 = vunpack.c.l.b16 %v525
      %v788 = vunpack.c.l.b16 %v526
      %v789 = vunpack.c.l.b16 %v527
      %v790 = vunpack.c.l.b16 %v528
      %v791 = vunpack.c.l.b16 %v529
      %v792 = vunpack.c.l.b16 %v530
      %v793 = vunpack.c.l.b16 %v531
      %v794 = vunpack.c.l.b16 %v532
      %v795 = vunpack.c.l.b16 %v533
      %v796 = vunpack.c.l.b16 %v534
      %v797 = vunpack.c.l.b16 %v535
      %v798 = vunpack.c.l.b16 %v536
      %v799 = vunpack.c.l.b16 %v537
      %v800 = vunpack.c.l.b16 %v538
      %v801 = vunpack.c.l.b16 %v539
      %v802 = vunpack.c.l.b16 %v540
      %v803 = vunpack.c.l.b16 %v541
      %v804 = vunpack.c.l.b16 %v542
      %v805 = vunpack.c.l.b16 %v543
      %v806 = vunpack.c.l.b16 %v544
      %v807 = vunpack.c.l.b16 %v545
      %v808 = vunpack.c.l.b16 %v546
      %v809 = vunpack.c.l.b16 %v547
      %v810 = vunpack.c.l.b16 %v548
      %v811 = vunpack.c.l.b16 %v549
      %v812 = vunpack.c.l.b16 %v550
      %v813 = vunpack.c.l.b16 %v551
      %v814 = vunpack.c.l.b16 %v552
      %v815 = vunpack.c.l.b16 %v553
      %v816 = vunpack.c.l.b16 %v554
      %v817 = vunpack.c.l.b16 %v555
      %v818 = vunpack.c.l.b16 %v556
      %v819 = vunpack.c.l.b16 %v557
      %v820 = vunpack.c.l.b16 %v558
      %v821 = vunpack.c.l.b16 %v559
      %v822 = vunpack.c.l.b16 %v560
      %v823 = vunpack.c.l.b16 %v561
      %v824 = vunpack.c.l.b16 %v562
      %v825 = vunpack.c.l.b16 %v563
      %v826 = vunpack.c.l.b16 %v564
      %v827 = vunpack.c.l.b16 %v565
      %v828 = vunpack.c.l.b16 %v566
      %v829 = vunpack.c.l.b16 %v567
      %v830 = vunpack.c.l.b16 %v568
      %v831 = vunpack.c.l.b16 %v569
      %v832 = vunpack.c.l.b16 %v570
      %v833 = vunpack.c.l.b16 %v571
      %v834 = vunpack.c.l.b16 %v572
      %v835 = vunpack.c.l.b16 %v573
      %v836 = vunpack.c.l.b16 %v574
      %v837 = vunpack.c.l.b16 %v575
      %v838 = vunpack.c.l.b16 %v576
      %v839 = vunpack.c.l.b16 %v577
      %v840 = vunpack.c.l.b16 %v578
      %v841 = vunpack.c.l.b16 %v579
      %v842 = vunpack.c.l.b16 %v580
      %v843 = vunpack.c.l.b16 %v581
      %v844 = vpack.c.b16 %v717, %v716
      %v845 = vpack.c.b16 %v719, %v718
      %v846 = vpack.c.b16 %v721, %v720
      %v847 = vpack.c.b16 %v723, %v722
      %v848 = vpack.c.b16 %v725, %v724
      %v849 = vpack.c.b16 %v727, %v726
      %v850 = vpack.c.b16 %v729, %v728
      %v851 = vpack.c.b16 %v731, %v730
      %v852 = vpack.c.b16 %v733, %v732
      %v853 = vpack.c.b16 %v735, %v734
      %v854 = vpack.c.b16 %v737, %v736
      %v855 = vpack.c.b16 %v739, %v738
      %v856 = vpack.c.b16 %v741, %v740
      %v857 = vpack.c.b16 %v743, %v742
      %v858 = vpack.c.b16 %v745, %v744
      %v859 = vpack.c.b16 %v747, %v746
      %v860 = vpack.c.b16 %v749, %v748
      %v861 = vpack.c.b16 %v751, %v750
      %v862 = vpack.c.b16 %v753, %v752
      %v863 = vpack.c.b16 %v755, %v754
      %v864 = vpack.c.b16 %v757, %v756
      %v865 = vpack.c.b16 %v759, %v758
      %v866 = vpack.c.b16 %v761, %v760
      %v867 = vpack.c.b16 %v763, %v762
      %v868 = vpack.c.b16 %v765, %v764
      %v869 = vpack.c.b16 %v767, %v766
      %v870 = vpack.c.b16 %v769, %v768
      %v871 = vpack.c.b16 %v771, %v770
      %v872 = vpack.c.b16 %v773, %v772
      %v873 = vpack.c.b16 %v775, %v774
      %v874 = vpack.c.b16 %v777, %v776
      %v875 = vpack.c.b16 %v779, %v778
      %v876 = vpack.c.b16 %v781, %v780
      %v877 = vpack.c.b16 %v783, %v782
      %v878 = vpack.c.b16 %v785, %v784
      %v879 = vpack.c.b16 %v787, %v786
      %v880 = vpack.c.b16 %v789, %v788
      %v881 = vpack.c.b16 %v791, %v790
      %v882 = vpack.c.b16 %v793, %v792
      %v883 = vpack.c.b16 %v795, %v794
      %v884 = vpack.c.b16 %v797, %v796
      %v885 = vpack.c.b16 %v799, %v798
      %v886 = vpack.c.b16 %v801, %v800
      %v887 = vpack.c.b16 %v803, %v802
      %v888 = vpack.c.b16 %v805, %v804
      %v889 = vpack.c.b16 %v807, %v806
      %v890 = vpack.c.b16 %v809, %v808
      %v891 = vpack.c.b16 %v811, %v810
      %v892 = vpack.c.b16 %v813, %v812
      %v893 = vpack.c.b16 %v815, %v814
      %v894 = vpack.c.b16 %v817, %v816
      %v895 = vpack.c.b16 %v819, %v818
      %v896 = vpack.c.b16 %v821, %v820
      %v897 = vpack.c.b16 %v823, %v822
      %v898 = vpack.c.b16 %v825, %v824
      %v899 = vpack.c.b16 %v827, %v826
      %v900 = vpack.c.b16 %v829, %v828
      %v901 = vpack.c.b16 %v831, %v830
      %v902 = vpack.c.b16 %v833, %v832
      %v903 = vpack.c.b16 %v835, %v834
      %v904 = vpack.c.b16 %v837, %v836
      %v905 = vpack.c.b16 %v839, %v838
      %v906 = vpack.c.b16 %v841, %v840
      %v907 = vpack.c.b16 %v843, %v842
      %v914 = vunpack.c.l.b16 %v582
      %v915 = vunpack.c.l.b16 %v583
      %v916 = vunpack.c.l.b16 %v584
      %v917 = vunpack.c.l.b16 %v585
      %v918 = vunpack.c.l.b16 %v586
      %v919 = vunpack.c.l.b16 %v587
      %v920 = vpack.c.b16 %v915, %v914
      %v921 = vpack.c.b16 %v917, %v916
      %v922 = vpack.c.b16 %v919, %v918
      %vm926 = vcmask 392192
      %v928 = vsel %vm926, %v844, 0
      %v931 = vsel %vm926, %v845, 0
      %v934 = vsel %vm926, %v846, 0
      %v937 = vsel %vm926, %v847, 0
      %v940 = vsel %vm926, %v848, 0
      %v943 = vsel %vm926, %v849, 0
      %v946 = vsel %vm926, %v850, 0
      %v949 = vsel %vm926, %v851, 0
      %v952 = vsel %vm926, %v852, 0
      %v955 = vsel %vm926, %v853, 0
      %v958 = vsel %vm926, %v854, 0
      %v961 = vsel %vm926, %v855, 0
      %v964 = vsel %vm926, %v856, 0
      %v967 = vsel %vm926, %v857, 0
      %v970 = vsel %vm926, %v858, 0
      %v973 = vsel %vm926, %v859, 0
      %v976 = vsel %vm926, %v860, 0
      %v979 = vsel %vm926, %v861, 0
      %v982 = vsel %vm926, %v862, 0
      %v985 = vsel %vm926, %v863, 0
      %v988 = vsel %vm926, %v864, 0
      %v991 = vsel %vm926, %v865, 0
      %v994 = vsel %vm926, %v866, 0
      %v997 = vsel %vm926, %v867, 0
      %v1000 = vsel %vm926, %v868, 0
      %v1003 = vsel %vm926, %v869, 0
      %v1006 = vsel %vm926, %v870, 0
      %v1009 = vsel %vm926, %v871, 0
      %v1012 = vsel %vm926, %v872, 0
      %v1015 = vsel %vm926, %v873, 0
      %v1018 = vsel %vm926, %v874, 0
      %v1021 = vsel %vm926, %v875, 0
      %v1024 = vsel %vm926, %v876, 0
      %v1027 = vsel %vm926, %v877, 0
      %v1030 = vsel %vm926, %v878, 0
      %v1033 = vsel %vm926, %v879, 0
      %v1036 = vsel %vm926, %v880, 0
      %v1039 = vsel %vm926, %v881, 0
      %v1042 = vsel %vm926, %v882, 0
      %v1045 = vsel %vm926, %v883, 0
      %v1048 = vsel %vm926, %v884, 0
      %v1051 = vsel %vm926, %v885, 0
      %v1054 = vsel %vm926, %v886, 0
      %v1057 = vsel %vm926, %v887, 0
      %v1060 = vsel %vm926, %v888, 0
      %v1063 = vsel %vm926, %v889, 0
      %v1066 = vsel %vm926, %v890, 0
      %v1069 = vsel %vm926, %v891, 0
      %v1072 = vsel %vm926, %v892, 0
      %v1075 = vsel %vm926, %v893, 0
      %v1078 = vsel %vm926, %v894, 0
      %v1081 = vsel %vm926, %v895, 0
      %v1084 = vsel %vm926, %v896, 0
      %v1087 = vsel %vm926, %v897, 0
      %v1090 = vsel %vm926, %v898, 0
      %v1093 = vsel %vm926, %v899, 0
      %v1096 = vsel %vm926, %v900, 0
      %v1099 = vsel %vm926, %v901, 0
      %v1102 = vsel %vm926, %v902, 0
      %v1105 = vsel %vm926, %v903, 0
      %v1108 = vsel %vm926, %v904, 0
      %v1111 = vsel %vm926, %v905, 0
      %v1114 = vsel %vm926, %v906, 0
      %v1117 = vsel %vm926, %v907, 0
      %1119 = vmatprep.subr.bf16.mxu0 0
      %1120 = vmatpush1.bf16.msra.mxu0 0
      %1121 = vmatprep.subr.bf16.mxu0 0
      %1122 = vmatpush1.bf16.msra.mxu0 0
      %1123 = vmatprep.subr.bf16.mxu0 0
      %1124 = vmatpush1.bf16.msra.mxu0 0
      %1125 = vmatprep.subr.bf16.mxu0 0
      %1126 = vmatpush1.bf16.msra.mxu0 0
      %1127 = vmatprep.subr.bf16.mxu0 0
      %1128 = vmatpush1.bf16.msra.mxu0 0
      %1129 = vmatprep.subr.bf16.mxu0 0
      %1130 = vmatpush1.bf16.msra.mxu0 %v922
      %1131 = vmatprep.subr.bf16.mxu0 0
      %1132 = vmatpush1.bf16.msra.mxu0 %v921
      %1133 = vmatprep.subr.bf16.mxu0 0
      %1134 = vmatpush1.bf16.msra.mxu0 %v920
      %1135 = vmatprep.subr.bf16.mxu0 0
      %1136 = vmatpush2.bf16.msra.mxu0 0
      %1137 = vmatprep.subr.bf16.mxu0 0
      %1138 = vmatpush2.bf16.msra.mxu0 0
      %1139 = vmatprep.subr.bf16.mxu0 0
      %1140 = vmatpush2.bf16.msra.mxu0 0
      %1141 = vmatprep.subr.bf16.mxu0 0
      %1142 = vmatpush2.bf16.msra.mxu0 0
      %1143 = vmatprep.subr.bf16.mxu0 0
      %1144 = vmatpush2.bf16.msra.mxu0 0
      %1145 = vmatprep.subr.bf16.mxu0 0
      %1146 = vmatpush2.bf16.msra.mxu0 0
      %1147 = vmatprep.subr.bf16.mxu0 0
      %1148 = vmatpush2.bf16.msra.mxu0 0
      %1149 = vmatprep.subr.bf16.mxu0 0
      %1150 = vmatpush2.bf16.msra.mxu0 0
      %1151 = vmatprep.mubr.bf16.mxu0 0
      %1152 = vmatmul.mubr.bf16.gmra.mxu0 %v928
      %v1153 = vpop.f32.mrf.mxu0
      %v1154 = vadd.f32 0.0, %v1153
      %v1155 = vpop.f32.mrf.mxu0
      %v1156 = vpop.f32.mrf.mxu0
      %v1157 = vadd.f32 0.0, %v1156
      %v1158 = vpop.f32.mrf.mxu0
      %1159 = vmatprep.mubr.bf16.mxu0 0
      %1160 = vmatmul.mubr.bf16.gmra.mxu0 %v931
      %v1161 = vpop.f32.mrf.mxu0
      %v1162 = vadd.f32 0.0, %v1161
      %v1163 = vpop.f32.mrf.mxu0
      %v1164 = vpop.f32.mrf.mxu0
      %v1165 = vadd.f32 0.0, %v1164
      %v1166 = vpop.f32.mrf.mxu0
      %1167 = vmatprep.mubr.bf16.mxu0 0
      %1168 = vmatmul.mubr.bf16.gmra.mxu0 %v934
      %v1169 = vpop.f32.mrf.mxu0
      %v1170 = vadd.f32 0.0, %v1169
      %v1171 = vpop.f32.mrf.mxu0
      %v1172 = vpop.f32.mrf.mxu0
      %v1173 = vadd.f32 0.0, %v1172
      %v1174 = vpop.f32.mrf.mxu0
      %1175 = vmatprep.mubr.bf16.mxu0 0
      %1176 = vmatmul.mubr.bf16.gmra.mxu0 %v937
      %v1177 = vpop.f32.mrf.mxu0
      %v1178 = vadd.f32 0.0, %v1177
      %v1179 = vpop.f32.mrf.mxu0
      %v1180 = vpop.f32.mrf.mxu0
      %v1181 = vadd.f32 0.0, %v1180
      %v1182 = vpop.f32.mrf.mxu0
      %1183 = vmatprep.mubr.bf16.mxu0 0
      %1184 = vmatmul.mubr.bf16.gmra.mxu0 %v940
      %v1185 = vpop.f32.mrf.mxu0
      %v1186 = vadd.f32 0.0, %v1185
      %v1187 = vpop.f32.mrf.mxu0
      %v1188 = vpop.f32.mrf.mxu0
      %v1189 = vadd.f32 0.0, %v1188
      %v1190 = vpop.f32.mrf.mxu0
      %1191 = vmatprep.mubr.bf16.mxu0 0
      %1192 = vmatmul.mubr.bf16.gmra.mxu0 %v943
      %v1193 = vpop.f32.mrf.mxu0
      %v1194 = vadd.f32 0.0, %v1193
      %v1195 = vpop.f32.mrf.mxu0
      %v1196 = vpop.f32.mrf.mxu0
      %v1197 = vadd.f32 0.0, %v1196
      %v1198 = vpop.f32.mrf.mxu0
      %1199 = vmatprep.mubr.bf16.mxu0 0
      %1200 = vmatmul.mubr.bf16.gmra.mxu0 %v946
      %v1201 = vpop.f32.mrf.mxu0
      %v1202 = vadd.f32 0.0, %v1201
      %v1203 = vpop.f32.mrf.mxu0
      %v1204 = vpop.f32.mrf.mxu0
      %v1205 = vadd.f32 0.0, %v1204
      %v1206 = vpop.f32.mrf.mxu0
      %1207 = vmatprep.mubr.bf16.mxu0 0
      %1208 = vmatmul.mubr.bf16.gmra.mxu0 %v949
      %v1209 = vpop.f32.mrf.mxu0
      %v1210 = vadd.f32 0.0, %v1209
      %v1211 = vpop.f32.mrf.mxu0
      %v1212 = vpop.f32.mrf.mxu0
      %v1213 = vadd.f32 0.0, %v1212
      %v1214 = vpop.f32.mrf.mxu0
      %1215 = vmatprep.mubr.bf16.mxu0 0
      %1216 = vmatmul.mubr.bf16.gmra.mxu0 %v952
      %v1217 = vpop.f32.mrf.mxu0
      %v1218 = vadd.f32 0.0, %v1217
      %v1219 = vpop.f32.mrf.mxu0
      %v1220 = vpop.f32.mrf.mxu0
      %v1221 = vadd.f32 0.0, %v1220
      %v1222 = vpop.f32.mrf.mxu0
      %1223 = vmatprep.mubr.bf16.mxu0 0
      %1224 = vmatmul.mubr.bf16.gmra.mxu0 %v955
      %v1225 = vpop.f32.mrf.mxu0
      %v1226 = vadd.f32 0.0, %v1225
      %v1227 = vpop.f32.mrf.mxu0
      %v1228 = vpop.f32.mrf.mxu0
      %v1229 = vadd.f32 0.0, %v1228
      %v1230 = vpop.f32.mrf.mxu0
      %1231 = vmatprep.mubr.bf16.mxu0 0
      %1232 = vmatmul.mubr.bf16.gmra.mxu0 %v958
      %v1233 = vpop.f32.mrf.mxu0
      %v1234 = vadd.f32 0.0, %v1233
      %v1235 = vpop.f32.mrf.mxu0
      %v1236 = vpop.f32.mrf.mxu0
      %v1237 = vadd.f32 0.0, %v1236
      %v1238 = vpop.f32.mrf.mxu0
      %1239 = vmatprep.mubr.bf16.mxu0 0
      %1240 = vmatmul.mubr.bf16.gmra.mxu0 %v961
      %v1241 = vpop.f32.mrf.mxu0
      %v1242 = vadd.f32 0.0, %v1241
      %v1243 = vpop.f32.mrf.mxu0
      %v1244 = vpop.f32.mrf.mxu0
      %v1245 = vadd.f32 0.0, %v1244
      %v1246 = vpop.f32.mrf.mxu0
      %1247 = vmatprep.mubr.bf16.mxu0 0
      %1248 = vmatmul.mubr.bf16.gmra.mxu0 %v964
      %v1249 = vpop.f32.mrf.mxu0
      %v1250 = vadd.f32 0.0, %v1249
      %v1251 = vpop.f32.mrf.mxu0
      %v1252 = vpop.f32.mrf.mxu0
      %v1253 = vadd.f32 0.0, %v1252
      %v1254 = vpop.f32.mrf.mxu0
      %1255 = vmatprep.mubr.bf16.mxu0 0
      %1256 = vmatmul.mubr.bf16.gmra.mxu0 %v967
      %v1257 = vpop.f32.mrf.mxu0
      %v1258 = vadd.f32 0.0, %v1257
      %v1259 = vpop.f32.mrf.mxu0
      %v1260 = vpop.f32.mrf.mxu0
      %v1261 = vadd.f32 0.0, %v1260
      %v1262 = vpop.f32.mrf.mxu0
      %1263 = vmatprep.mubr.bf16.mxu0 0
      %1264 = vmatmul.mubr.bf16.gmra.mxu0 %v970
      %v1265 = vpop.f32.mrf.mxu0
      %v1266 = vadd.f32 0.0, %v1265
      %v1267 = vpop.f32.mrf.mxu0
      %v1268 = vpop.f32.mrf.mxu0
      %v1269 = vadd.f32 0.0, %v1268
      %v1270 = vpop.f32.mrf.mxu0
      %1271 = vmatprep.mubr.bf16.mxu0 0
      %1272 = vmatmul.mubr.bf16.gmra.mxu0 %v973
      %v1273 = vpop.f32.mrf.mxu0
      %v1274 = vadd.f32 0.0, %v1273
      %v1275 = vpop.f32.mrf.mxu0
      %v1276 = vpop.f32.mrf.mxu0
      %v1277 = vadd.f32 0.0, %v1276
      %v1278 = vpop.f32.mrf.mxu0
      %1279 = vmatprep.mubr.bf16.mxu0 0
      %1280 = vmatmul.mubr.bf16.gmra.mxu0 %v976
      %v1281 = vpop.f32.mrf.mxu0
      %v1282 = vadd.f32 0.0, %v1281
      %v1283 = vpop.f32.mrf.mxu0
      %v1284 = vpop.f32.mrf.mxu0
      %v1285 = vadd.f32 0.0, %v1284
      %v1286 = vpop.f32.mrf.mxu0
      %1287 = vmatprep.mubr.bf16.mxu0 0
      %1288 = vmatmul.mubr.bf16.gmra.mxu0 %v979
      %v1289 = vpop.f32.mrf.mxu0
      %v1290 = vadd.f32 0.0, %v1289
      %v1291 = vpop.f32.mrf.mxu0
      %v1292 = vpop.f32.mrf.mxu0
      %v1293 = vadd.f32 0.0, %v1292
      %v1294 = vpop.f32.mrf.mxu0
      %1295 = vmatprep.mubr.bf16.mxu0 0
      %1296 = vmatmul.mubr.bf16.gmra.mxu0 %v982
      %v1297 = vpop.f32.mrf.mxu0
      %v1298 = vadd.f32 0.0, %v1297
      %v1299 = vpop.f32.mrf.mxu0
      %v1300 = vpop.f32.mrf.mxu0
      %v1301 = vadd.f32 0.0, %v1300
      %v1302 = vpop.f32.mrf.mxu0
      %1303 = vmatprep.mubr.bf16.mxu0 0
      %1304 = vmatmul.mubr.bf16.gmra.mxu0 %v985
      %v1305 = vpop.f32.mrf.mxu0
      %v1306 = vadd.f32 0.0, %v1305
      %v1307 = vpop.f32.mrf.mxu0
      %v1308 = vpop.f32.mrf.mxu0
      %v1309 = vadd.f32 0.0, %v1308
      %v1310 = vpop.f32.mrf.mxu0
      %1311 = vmatprep.mubr.bf16.mxu0 0
      %1312 = vmatmul.mubr.bf16.gmra.mxu0 %v988
      %v1313 = vpop.f32.mrf.mxu0
      %v1314 = vadd.f32 0.0, %v1313
      %v1315 = vpop.f32.mrf.mxu0
      %v1316 = vpop.f32.mrf.mxu0
      %v1317 = vadd.f32 0.0, %v1316
      %v1318 = vpop.f32.mrf.mxu0
      %1319 = vmatprep.mubr.bf16.mxu0 0
      %1320 = vmatmul.mubr.bf16.gmra.mxu0 %v991
      %v1321 = vpop.f32.mrf.mxu0
      %v1322 = vadd.f32 0.0, %v1321
      %v1323 = vpop.f32.mrf.mxu0
      %v1324 = vpop.f32.mrf.mxu0
      %v1325 = vadd.f32 0.0, %v1324
      %v1326 = vpop.f32.mrf.mxu0
      %1327 = vmatprep.mubr.bf16.mxu0 0
      %1328 = vmatmul.mubr.bf16.gmra.mxu0 %v994
      %v1329 = vpop.f32.mrf.mxu0
      %v1330 = vadd.f32 0.0, %v1329
      %v1331 = vpop.f32.mrf.mxu0
      %v1332 = vpop.f32.mrf.mxu0
      %v1333 = vadd.f32 0.0, %v1332
      %v1334 = vpop.f32.mrf.mxu0
      %1335 = vmatprep.mubr.bf16.mxu0 0
      %1336 = vmatmul.mubr.bf16.gmra.mxu0 %v997
      %v1337 = vpop.f32.mrf.mxu0
      %v1338 = vadd.f32 0.0, %v1337
      %v1339 = vpop.f32.mrf.mxu0
      %v1340 = vpop.f32.mrf.mxu0
      %v1341 = vadd.f32 0.0, %v1340
      %v1342 = vpop.f32.mrf.mxu0
      %1343 = vmatprep.mubr.bf16.mxu0 0
      %1344 = vmatmul.mubr.bf16.gmra.mxu0 %v1000
      %v1345 = vpop.f32.mrf.mxu0
      %v1346 = vadd.f32 0.0, %v1345
      %v1347 = vpop.f32.mrf.mxu0
      %v1348 = vpop.f32.mrf.mxu0
      %v1349 = vadd.f32 0.0, %v1348
      %v1350 = vpop.f32.mrf.mxu0
      %1351 = vmatprep.mubr.bf16.mxu0 0
      %1352 = vmatmul.mubr.bf16.gmra.mxu0 %v1003
      %v1353 = vpop.f32.mrf.mxu0
      %v1354 = vadd.f32 0.0, %v1353
      %v1355 = vpop.f32.mrf.mxu0
      %v1356 = vpop.f32.mrf.mxu0
      %v1357 = vadd.f32 0.0, %v1356
      %v1358 = vpop.f32.mrf.mxu0
      %1359 = vmatprep.mubr.bf16.mxu0 0
      %1360 = vmatmul.mubr.bf16.gmra.mxu0 %v1006
      %v1361 = vpop.f32.mrf.mxu0
      %v1362 = vadd.f32 0.0, %v1361
      %v1363 = vpop.f32.mrf.mxu0
      %v1364 = vpop.f32.mrf.mxu0
      %v1365 = vadd.f32 0.0, %v1364
      %v1366 = vpop.f32.mrf.mxu0
      %1367 = vmatprep.mubr.bf16.mxu0 0
      %1368 = vmatmul.mubr.bf16.gmra.mxu0 %v1009
      %v1369 = vpop.f32.mrf.mxu0
      %v1370 = vadd.f32 0.0, %v1369
      %v1371 = vpop.f32.mrf.mxu0
      %v1372 = vpop.f32.mrf.mxu0
      %v1373 = vadd.f32 0.0, %v1372
      %v1374 = vpop.f32.mrf.mxu0
      %1375 = vmatprep.mubr.bf16.mxu0 0
      %1376 = vmatmul.mubr.bf16.gmra.mxu0 %v1012
      %v1377 = vpop.f32.mrf.mxu0
      %v1378 = vadd.f32 0.0, %v1377
      %v1379 = vpop.f32.mrf.mxu0
      %v1380 = vpop.f32.mrf.mxu0
      %v1381 = vadd.f32 0.0, %v1380
      %v1382 = vpop.f32.mrf.mxu0
      %1383 = vmatprep.mubr.bf16.mxu0 0
      %1384 = vmatmul.mubr.bf16.gmra.mxu0 %v1015
      %v1385 = vpop.f32.mrf.mxu0
      %v1386 = vadd.f32 0.0, %v1385
      %v1387 = vpop.f32.mrf.mxu0
      %v1388 = vpop.f32.mrf.mxu0
      %v1389 = vadd.f32 0.0, %v1388
      %v1390 = vpop.f32.mrf.mxu0
      %1391 = vmatprep.mubr.bf16.mxu0 0
      %1392 = vmatmul.mubr.bf16.gmra.mxu0 %v1018
      %v1393 = vpop.f32.mrf.mxu0
      %v1394 = vadd.f32 0.0, %v1393
      %v1395 = vpop.f32.mrf.mxu0
      %v1396 = vpop.f32.mrf.mxu0
      %v1397 = vadd.f32 0.0, %v1396
      %v1398 = vpop.f32.mrf.mxu0
      %1399 = vmatprep.mubr.bf16.mxu0 0
      %1400 = vmatmul.mubr.bf16.gmra.mxu0 %v1021
      %v1401 = vpop.f32.mrf.mxu0
      %v1402 = vadd.f32 0.0, %v1401
      %v1403 = vpop.f32.mrf.mxu0
      %v1404 = vpop.f32.mrf.mxu0
      %v1405 = vadd.f32 0.0, %v1404
      %v1406 = vpop.f32.mrf.mxu0
      %1407 = vmatprep.mubr.bf16.mxu0 0
      %1408 = vmatmul.mubr.bf16.gmra.mxu0 %v1024
      %v1409 = vpop.f32.mrf.mxu0
      %v1410 = vadd.f32 0.0, %v1409
      %v1411 = vpop.f32.mrf.mxu0
      %v1412 = vpop.f32.mrf.mxu0
      %v1413 = vadd.f32 0.0, %v1412
      %v1414 = vpop.f32.mrf.mxu0
      %1415 = vmatprep.mubr.bf16.mxu0 0
      %1416 = vmatmul.mubr.bf16.gmra.mxu0 %v1027
      %v1417 = vpop.f32.mrf.mxu0
      %v1418 = vadd.f32 0.0, %v1417
      %v1419 = vpop.f32.mrf.mxu0
      %v1420 = vpop.f32.mrf.mxu0
      %v1421 = vadd.f32 0.0, %v1420
      %v1422 = vpop.f32.mrf.mxu0
      %1423 = vmatprep.mubr.bf16.mxu0 0
      %1424 = vmatmul.mubr.bf16.gmra.mxu0 %v1030
      %v1425 = vpop.f32.mrf.mxu0
      %v1426 = vadd.f32 0.0, %v1425
      %v1427 = vpop.f32.mrf.mxu0
      %v1428 = vpop.f32.mrf.mxu0
      %v1429 = vadd.f32 0.0, %v1428
      %v1430 = vpop.f32.mrf.mxu0
      %1431 = vmatprep.mubr.bf16.mxu0 0
      %1432 = vmatmul.mubr.bf16.gmra.mxu0 %v1033
      %v1433 = vpop.f32.mrf.mxu0
      %v1434 = vadd.f32 0.0, %v1433
      %v1435 = vpop.f32.mrf.mxu0
      %v1436 = vpop.f32.mrf.mxu0
      %v1437 = vadd.f32 0.0, %v1436
      %v1438 = vpop.f32.mrf.mxu0
      %1439 = vmatprep.mubr.bf16.mxu0 0
      %1440 = vmatmul.mubr.bf16.gmra.mxu0 %v1036
      %v1441 = vpop.f32.mrf.mxu0
      %v1442 = vadd.f32 0.0, %v1441
      %v1443 = vpop.f32.mrf.mxu0
      %v1444 = vpop.f32.mrf.mxu0
      %v1445 = vadd.f32 0.0, %v1444
      %v1446 = vpop.f32.mrf.mxu0
      %1447 = vmatprep.mubr.bf16.mxu0 0
      %1448 = vmatmul.mubr.bf16.gmra.mxu0 %v1039
      %v1449 = vpop.f32.mrf.mxu0
      %v1450 = vadd.f32 0.0, %v1449
      %v1451 = vpop.f32.mrf.mxu0
      %v1452 = vpop.f32.mrf.mxu0
      %v1453 = vadd.f32 0.0, %v1452
      %v1454 = vpop.f32.mrf.mxu0
      %1455 = vmatprep.mubr.bf16.mxu0 0
      %1456 = vmatmul.mubr.bf16.gmra.mxu0 %v1042
      %v1457 = vpop.f32.mrf.mxu0
      %v1458 = vadd.f32 0.0, %v1457
      %v1459 = vpop.f32.mrf.mxu0
      %v1460 = vpop.f32.mrf.mxu0
      %v1461 = vadd.f32 0.0, %v1460
      %v1462 = vpop.f32.mrf.mxu0
      %1463 = vmatprep.mubr.bf16.mxu0 0
      %1464 = vmatmul.mubr.bf16.gmra.mxu0 %v1045
      %v1465 = vpop.f32.mrf.mxu0
      %v1466 = vadd.f32 0.0, %v1465
      %v1467 = vpop.f32.mrf.mxu0
      %v1468 = vpop.f32.mrf.mxu0
      %v1469 = vadd.f32 0.0, %v1468
      %v1470 = vpop.f32.mrf.mxu0
      %1471 = vmatprep.mubr.bf16.mxu0 0
      %1472 = vmatmul.mubr.bf16.gmra.mxu0 %v1048
      %v1473 = vpop.f32.mrf.mxu0
      %v1474 = vadd.f32 0.0, %v1473
      %v1475 = vpop.f32.mrf.mxu0
      %v1476 = vpop.f32.mrf.mxu0
      %v1477 = vadd.f32 0.0, %v1476
      %v1478 = vpop.f32.mrf.mxu0
      %1479 = vmatprep.mubr.bf16.mxu0 0
      %1480 = vmatmul.mubr.bf16.gmra.mxu0 %v1051
      %v1481 = vpop.f32.mrf.mxu0
      %v1482 = vadd.f32 0.0, %v1481
      %v1483 = vpop.f32.mrf.mxu0
      %v1484 = vpop.f32.mrf.mxu0
      %v1485 = vadd.f32 0.0, %v1484
      %v1486 = vpop.f32.mrf.mxu0
      %1487 = vmatprep.mubr.bf16.mxu0 0
      %1488 = vmatmul.mubr.bf16.gmra.mxu0 %v1054
      %v1489 = vpop.f32.mrf.mxu0
      %v1490 = vadd.f32 0.0, %v1489
      %v1491 = vpop.f32.mrf.mxu0
      %v1492 = vpop.f32.mrf.mxu0
      %v1493 = vadd.f32 0.0, %v1492
      %v1494 = vpop.f32.mrf.mxu0
      %1495 = vmatprep.mubr.bf16.mxu0 0
      %1496 = vmatmul.mubr.bf16.gmra.mxu0 %v1057
      %v1497 = vpop.f32.mrf.mxu0
      %v1498 = vadd.f32 0.0, %v1497
      %v1499 = vpop.f32.mrf.mxu0
      %v1500 = vpop.f32.mrf.mxu0
      %v1501 = vadd.f32 0.0, %v1500
      %v1502 = vpop.f32.mrf.mxu0
      %1503 = vmatprep.mubr.bf16.mxu0 0
      %1504 = vmatmul.mubr.bf16.gmra.mxu0 %v1060
      %v1505 = vpop.f32.mrf.mxu0
      %v1506 = vadd.f32 0.0, %v1505
      %v1507 = vpop.f32.mrf.mxu0
      %v1508 = vpop.f32.mrf.mxu0
      %v1509 = vadd.f32 0.0, %v1508
      %v1510 = vpop.f32.mrf.mxu0
      %1511 = vmatprep.mubr.bf16.mxu0 0
      %1512 = vmatmul.mubr.bf16.gmra.mxu0 %v1063
      %v1513 = vpop.f32.mrf.mxu0
      %v1514 = vadd.f32 0.0, %v1513
      %v1515 = vpop.f32.mrf.mxu0
      %v1516 = vpop.f32.mrf.mxu0
      %v1517 = vadd.f32 0.0, %v1516
      %v1518 = vpop.f32.mrf.mxu0
      %1519 = vmatprep.mubr.bf16.mxu0 0
      %1520 = vmatmul.mubr.bf16.gmra.mxu0 %v1066
      %v1521 = vpop.f32.mrf.mxu0
      %v1522 = vadd.f32 0.0, %v1521
      %v1523 = vpop.f32.mrf.mxu0
      %v1524 = vpop.f32.mrf.mxu0
      %v1525 = vadd.f32 0.0, %v1524
      %v1526 = vpop.f32.mrf.mxu0
      %1527 = vmatprep.mubr.bf16.mxu0 0
      %1528 = vmatmul.mubr.bf16.gmra.mxu0 %v1069
      %v1529 = vpop.f32.mrf.mxu0
      %v1530 = vadd.f32 0.0, %v1529
      %v1531 = vpop.f32.mrf.mxu0
      %v1532 = vpop.f32.mrf.mxu0
      %v1533 = vadd.f32 0.0, %v1532
      %v1534 = vpop.f32.mrf.mxu0
      %1535 = vmatprep.mubr.bf16.mxu0 0
      %1536 = vmatmul.mubr.bf16.gmra.mxu0 %v1072
      %v1537 = vpop.f32.mrf.mxu0
      %v1538 = vadd.f32 0.0, %v1537
      %v1539 = vpop.f32.mrf.mxu0
      %v1540 = vpop.f32.mrf.mxu0
      %v1541 = vadd.f32 0.0, %v1540
      %v1542 = vpop.f32.mrf.mxu0
      %1543 = vmatprep.mubr.bf16.mxu0 0
      %1544 = vmatmul.mubr.bf16.gmra.mxu0 %v1075
      %v1545 = vpop.f32.mrf.mxu0
      %v1546 = vadd.f32 0.0, %v1545
      %v1547 = vpop.f32.mrf.mxu0
      %v1548 = vpop.f32.mrf.mxu0
      %v1549 = vadd.f32 0.0, %v1548
      %v1550 = vpop.f32.mrf.mxu0
      %1551 = vmatprep.mubr.bf16.mxu0 0
      %1552 = vmatmul.mubr.bf16.gmra.mxu0 %v1078
      %v1553 = vpop.f32.mrf.mxu0
      %v1554 = vadd.f32 0.0, %v1553
      %v1555 = vpop.f32.mrf.mxu0
      %v1556 = vpop.f32.mrf.mxu0
      %v1557 = vadd.f32 0.0, %v1556
      %v1558 = vpop.f32.mrf.mxu0
      %1559 = vmatprep.mubr.bf16.mxu0 0
      %1560 = vmatmul.mubr.bf16.gmra.mxu0 %v1081
      %v1561 = vpop.f32.mrf.mxu0
      %v1562 = vadd.f32 0.0, %v1561
      %v1563 = vpop.f32.mrf.mxu0
      %v1564 = vpop.f32.mrf.mxu0
      %v1565 = vadd.f32 0.0, %v1564
      %v1566 = vpop.f32.mrf.mxu0
      %1567 = vmatprep.mubr.bf16.mxu0 0
      %1568 = vmatmul.mubr.bf16.gmra.mxu0 %v1084
      %v1569 = vpop.f32.mrf.mxu0
      %v1570 = vadd.f32 0.0, %v1569
      %v1571 = vpop.f32.mrf.mxu0
      %v1572 = vpop.f32.mrf.mxu0
      %v1573 = vadd.f32 0.0, %v1572
      %v1574 = vpop.f32.mrf.mxu0
      %1575 = vmatprep.mubr.bf16.mxu0 0
      %1576 = vmatmul.mubr.bf16.gmra.mxu0 %v1087
      %v1577 = vpop.f32.mrf.mxu0
      %v1578 = vadd.f32 0.0, %v1577
      %v1579 = vpop.f32.mrf.mxu0
      %v1580 = vpop.f32.mrf.mxu0
      %v1581 = vadd.f32 0.0, %v1580
      %v1582 = vpop.f32.mrf.mxu0
      %1583 = vmatprep.mubr.bf16.mxu0 0
      %1584 = vmatmul.mubr.bf16.gmra.mxu0 %v1090
      %v1585 = vpop.f32.mrf.mxu0
      %v1586 = vadd.f32 0.0, %v1585
      %v1587 = vpop.f32.mrf.mxu0
      %v1588 = vpop.f32.mrf.mxu0
      %v1589 = vadd.f32 0.0, %v1588
      %v1590 = vpop.f32.mrf.mxu0
      %1591 = vmatprep.mubr.bf16.mxu0 0
      %1592 = vmatmul.mubr.bf16.gmra.mxu0 %v1093
      %v1593 = vpop.f32.mrf.mxu0
      %v1594 = vadd.f32 0.0, %v1593
      %v1595 = vpop.f32.mrf.mxu0
      %v1596 = vpop.f32.mrf.mxu0
      %v1597 = vadd.f32 0.0, %v1596
      %v1598 = vpop.f32.mrf.mxu0
      %1599 = vmatprep.mubr.bf16.mxu0 0
      %1600 = vmatmul.mubr.bf16.gmra.mxu0 %v1096
      %v1601 = vpop.f32.mrf.mxu0
      %v1602 = vadd.f32 0.0, %v1601
      %v1603 = vpop.f32.mrf.mxu0
      %v1604 = vpop.f32.mrf.mxu0
      %v1605 = vadd.f32 0.0, %v1604
      %v1606 = vpop.f32.mrf.mxu0
      %1607 = vmatprep.mubr.bf16.mxu0 0
      %1608 = vmatmul.mubr.bf16.gmra.mxu0 %v1099
      %v1609 = vpop.f32.mrf.mxu0
      %v1610 = vadd.f32 0.0, %v1609
      %v1611 = vpop.f32.mrf.mxu0
      %v1612 = vpop.f32.mrf.mxu0
      %v1613 = vadd.f32 0.0, %v1612
      %v1614 = vpop.f32.mrf.mxu0
      %1615 = vmatprep.mubr.bf16.mxu0 0
      %1616 = vmatmul.mubr.bf16.gmra.mxu0 %v1102
      %v1617 = vpop.f32.mrf.mxu0
      %v1618 = vadd.f32 0.0, %v1617
      %v1619 = vpop.f32.mrf.mxu0
      %v1620 = vpop.f32.mrf.mxu0
      %v1621 = vadd.f32 0.0, %v1620
      %v1622 = vpop.f32.mrf.mxu0
      %1623 = vmatprep.mubr.bf16.mxu0 0
      %1624 = vmatmul.mubr.bf16.gmra.mxu0 %v1105
      %v1625 = vpop.f32.mrf.mxu0
      %v1626 = vadd.f32 0.0, %v1625
      %v1627 = vpop.f32.mrf.mxu0
      %v1628 = vpop.f32.mrf.mxu0
      %v1629 = vadd.f32 0.0, %v1628
      %v1630 = vpop.f32.mrf.mxu0
      %1631 = vmatprep.mubr.bf16.mxu0 0
      %1632 = vmatmul.mubr.bf16.gmra.mxu0 %v1108
      %v1633 = vpop.f32.mrf.mxu0
      %v1634 = vadd.f32 0.0, %v1633
      %v1635 = vpop.f32.mrf.mxu0
      %v1636 = vpop.f32.mrf.mxu0
      %v1637 = vadd.f32 0.0, %v1636
      %v1638 = vpop.f32.mrf.mxu0
      %1639 = vmatprep.mubr.bf16.mxu0 0
      %1640 = vmatmul.mubr.bf16.gmra.mxu0 %v1111
      %v1641 = vpop.f32.mrf.mxu0
      %v1642 = vadd.f32 0.0, %v1641
      %v1643 = vpop.f32.mrf.mxu0
      %v1644 = vpop.f32.mrf.mxu0
      %v1645 = vadd.f32 0.0, %v1644
      %v1646 = vpop.f32.mrf.mxu0
      %1647 = vmatprep.mubr.bf16.mxu0 0
      %1648 = vmatmul.mubr.bf16.gmra.mxu0 %v1114
      %v1649 = vpop.f32.mrf.mxu0
      %v1650 = vadd.f32 0.0, %v1649
      %v1651 = vpop.f32.mrf.mxu0
      %v1652 = vpop.f32.mrf.mxu0
      %v1653 = vadd.f32 0.0, %v1652
      %v1654 = vpop.f32.mrf.mxu0
      %1655 = vmatprep.mubr.bf16.mxu0 0
      %1656 = vmatmul.mubr.bf16.gmra.mxu0 %v1117
      %v1657 = vpop.f32.mrf.mxu0
      %v1658 = vadd.f32 0.0, %v1657
      %v1659 = vpop.f32.mrf.mxu0
      %v1660 = vpop.f32.mrf.mxu0
      %v1661 = vadd.f32 0.0, %v1660
      %v1662 = vpop.f32.mrf.mxu0
      %1663 = vdwg.mxu0
      %v1664 = vadd.f32 %v326, %v1154
      %v1665 = vadd.f32 %v327, %v1157
      %v1666 = vadd.f32 %v328, %v1162
      %v1667 = vadd.f32 %v329, %v1165
      %v1668 = vadd.f32 %v330, %v1170
      %v1669 = vadd.f32 %v331, %v1173
      %v1670 = vadd.f32 %v332, %v1178
      %v1671 = vadd.f32 %v333, %v1181
      %v1672 = vadd.f32 %v334, %v1186
      %v1673 = vadd.f32 %v335, %v1189
      %v1674 = vadd.f32 %v336, %v1194
      %v1675 = vadd.f32 %v337, %v1197
      %v1676 = vadd.f32 %v338, %v1202
      %v1677 = vadd.f32 %v339, %v1205
      %v1678 = vadd.f32 %v340, %v1210
      %v1679 = vadd.f32 %v341, %v1213
      %v1680 = vadd.f32 %v342, %v1218
      %v1681 = vadd.f32 %v343, %v1221
      %v1682 = vadd.f32 %v344, %v1226
      %v1683 = vadd.f32 %v345, %v1229
      %v1684 = vadd.f32 %v346, %v1234
      %v1685 = vadd.f32 %v347, %v1237
      %v1686 = vadd.f32 %v348, %v1242
      %v1687 = vadd.f32 %v349, %v1245
      %v1688 = vadd.f32 %v350, %v1250
      %v1689 = vadd.f32 %v351, %v1253
      %v1690 = vadd.f32 %v352, %v1258
      %v1691 = vadd.f32 %v353, %v1261
      %v1692 = vadd.f32 %v354, %v1266
      %v1693 = vadd.f32 %v355, %v1269
      %v1694 = vadd.f32 %v356, %v1274
      %v1695 = vadd.f32 %v357, %v1277
      %v1696 = vadd.f32 %v358, %v1282
      %v1697 = vadd.f32 %v359, %v1285
      %v1698 = vadd.f32 %v360, %v1290
      %v1699 = vadd.f32 %v361, %v1293
      %v1700 = vadd.f32 %v362, %v1298
      %v1701 = vadd.f32 %v363, %v1301
      %v1702 = vadd.f32 %v364, %v1306
      %v1703 = vadd.f32 %v365, %v1309
      %v1704 = vadd.f32 %v366, %v1314
      %v1705 = vadd.f32 %v367, %v1317
      %v1706 = vadd.f32 %v368, %v1322
      %v1707 = vadd.f32 %v369, %v1325
      %v1708 = vadd.f32 %v370, %v1330
      %v1709 = vadd.f32 %v371, %v1333
      %v1710 = vadd.f32 %v372, %v1338
      %v1711 = vadd.f32 %v373, %v1341
      %v1712 = vadd.f32 %v374, %v1346
      %v1713 = vadd.f32 %v375, %v1349
      %v1714 = vadd.f32 %v376, %v1354
      %v1715 = vadd.f32 %v377, %v1357
      %v1716 = vadd.f32 %v378, %v1362
      %v1717 = vadd.f32 %v379, %v1365
      %v1718 = vadd.f32 %v380, %v1370
      %v1719 = vadd.f32 %v381, %v1373
      %v1720 = vadd.f32 %v382, %v1378
      %v1721 = vadd.f32 %v383, %v1381
      %v1722 = vadd.f32 %v384, %v1386
      %v1723 = vadd.f32 %v385, %v1389
      %v1724 = vadd.f32 %v386, %v1394
      %v1725 = vadd.f32 %v387, %v1397
      %v1726 = vadd.f32 %v388, %v1402
      %v1727 = vadd.f32 %v389, %v1405
      %v1728 = vadd.f32 %v390, %v1410
      %v1729 = vadd.f32 %v391, %v1413
      %v1730 = vadd.f32 %v392, %v1418
      %v1731 = vadd.f32 %v393, %v1421
      %v1732 = vadd.f32 %v394, %v1426
      %v1733 = vadd.f32 %v395, %v1429
      %v1734 = vadd.f32 %v396, %v1434
      %v1735 = vadd.f32 %v397, %v1437
      %v1736 = vadd.f32 %v398, %v1442
      %v1737 = vadd.f32 %v399, %v1445
      %v1738 = vadd.f32 %v400, %v1450
      %v1739 = vadd.f32 %v401, %v1453
      %v1740 = vadd.f32 %v402, %v1458
      %v1741 = vadd.f32 %v403, %v1461
      %v1742 = vadd.f32 %v404, %v1466
      %v1743 = vadd.f32 %v405, %v1469
      %v1744 = vadd.f32 %v406, %v1474
      %v1745 = vadd.f32 %v407, %v1477
      %v1746 = vadd.f32 %v408, %v1482
      %v1747 = vadd.f32 %v409, %v1485
      %v1748 = vadd.f32 %v410, %v1490
      %v1749 = vadd.f32 %v411, %v1493
      %v1750 = vadd.f32 %v412, %v1498
      %v1751 = vadd.f32 %v413, %v1501
      %v1752 = vadd.f32 %v414, %v1506
      %v1753 = vadd.f32 %v415, %v1509
      %v1754 = vadd.f32 %v416, %v1514
      %v1755 = vadd.f32 %v417, %v1517
      %v1756 = vadd.f32 %v418, %v1522
      %v1757 = vadd.f32 %v419, %v1525
      %v1758 = vadd.f32 %v420, %v1530
      %v1759 = vadd.f32 %v421, %v1533
      %v1760 = vadd.f32 %v422, %v1538
      %v1761 = vadd.f32 %v423, %v1541
      %v1762 = vadd.f32 %v424, %v1546
      %v1763 = vadd.f32 %v425, %v1549
      %v1764 = vadd.f32 %v426, %v1554
      %v1765 = vadd.f32 %v427, %v1557
      %v1766 = vadd.f32 %v428, %v1562
      %v1767 = vadd.f32 %v429, %v1565
      %v1768 = vadd.f32 %v430, %v1570
      %v1769 = vadd.f32 %v431, %v1573
      %v1770 = vadd.f32 %v432, %v1578
      %v1771 = vadd.f32 %v433, %v1581
      %v1772 = vadd.f32 %v434, %v1586
      %v1773 = vadd.f32 %v435, %v1589
      %v1774 = vadd.f32 %v436, %v1594
      %v1775 = vadd.f32 %v437, %v1597
      %v1776 = vadd.f32 %v438, %v1602
      %v1777 = vadd.f32 %v439, %v1605
      %v1778 = vadd.f32 %v440, %v1610
      %v1779 = vadd.f32 %v441, %v1613
      %v1780 = vadd.f32 %v442, %v1618
      %v1781 = vadd.f32 %v443, %v1621
      %v1782 = vadd.f32 %v444, %v1626
      %v1783 = vadd.f32 %v445, %v1629
      %v1784 = vadd.f32 %v446, %v1634
      %v1785 = vadd.f32 %v447, %v1637
      %v1786 = vadd.f32 %v448, %v1642
      %v1787 = vadd.f32 %v449, %v1645
      %v1788 = vadd.f32 %v450, %v1650
      %v1789 = vadd.f32 %v451, %v1653
      %v1790 = vadd.f32 %v452, %v1658
      %v1791 = vadd.f32 %v453, %v1661
      %vm1792 = vcmask 64512
      %1793 = vst.msk [vmem:[#allocation2] sm:$0xff] %vm1792, %v1664
      %1794 = vst.msk [vmem:[#allocation2 + $0x8] sm:$0xff] %vm1792, %v1665
      %1795 = vst.msk [vmem:[#allocation2 + $0x10] sm:$0xff] %vm1792, %v1666
      %1796 = vst.msk [vmem:[#allocation2 + $0x18] sm:$0xff] %vm1792, %v1667
      %1797 = vst.msk [vmem:[#allocation2 + $0x20] sm:$0xff] %vm1792, %v1668
      %1798 = vst.msk [vmem:[#allocation2 + $0x28] sm:$0xff] %vm1792, %v1669
      %1799 = vst.msk [vmem:[#allocation2 + $0x30] sm:$0xff] %vm1792, %v1670
      %1800 = vst.msk [vmem:[#allocation2 + $0x38] sm:$0xff] %vm1792, %v1671
      %1801 = vst.msk [vmem:[#allocation2 + $0x40] sm:$0xff] %vm1792, %v1672
      %1802 = vst.msk [vmem:[#allocation2 + $0x48] sm:$0xff] %vm1792, %v1673
      %1803 = vst.msk [vmem:[#allocation2 + $0x50] sm:$0xff] %vm1792, %v1674
      %1804 = vst.msk [vmem:[#allocation2 + $0x58] sm:$0xff] %vm1792, %v1675
      %1805 = vst.msk [vmem:[#allocation2 + $0x60] sm:$0xff] %vm1792, %v1676
      %1806 = vst.msk [vmem:[#allocation2 + $0x68] sm:$0xff] %vm1792, %v1677
      %1807 = vst.msk [vmem:[#allocation2 + $0x70] sm:$0xff] %vm1792, %v1678
      %1808 = vst.msk [vmem:[#allocation2 + $0x78] sm:$0xff] %vm1792, %v1679
      %1809 = vst.msk [vmem:[#allocation2 + $0x80] sm:$0xff] %vm1792, %v1680
      %1810 = vst.msk [vmem:[#allocation2 + $0x88] sm:$0xff] %vm1792, %v1681
      %1811 = vst.msk [vmem:[#allocation2 + $0x90] sm:$0xff] %vm1792, %v1682
      %1812 = vst.msk [vmem:[#allocation2 + $0x98] sm:$0xff] %vm1792, %v1683
      %1813 = vst.msk [vmem:[#allocation2 + $0xa0] sm:$0xff] %vm1792, %v1684
      %1814 = vst.msk [vmem:[#allocation2 + $0xa8] sm:$0xff] %vm1792, %v1685
      %1815 = vst.msk [vmem:[#allocation2 + $0xb0] sm:$0xff] %vm1792, %v1686
      %1816 = vst.msk [vmem:[#allocation2 + $0xb8] sm:$0xff] %vm1792, %v1687
      %1817 = vst.msk [vmem:[#allocation2 + $0xc0] sm:$0xff] %vm1792, %v1688
      %1818 = vst.msk [vmem:[#allocation2 + $0xc8] sm:$0xff] %vm1792, %v1689
      %1819 = vst.msk [vmem:[#allocation2 + $0xd0] sm:$0xff] %vm1792, %v1690
      %1820 = vst.msk [vmem:[#allocation2 + $0xd8] sm:$0xff] %vm1792, %v1691
      %1821 = vst.msk [vmem:[#allocation2 + $0xe0] sm:$0xff] %vm1792, %v1692
      %1822 = vst.msk [vmem:[#allocation2 + $0xe8] sm:$0xff] %vm1792, %v1693
      %1823 = vst.msk [vmem:[#allocation2 + $0xf0] sm:$0xff] %vm1792, %v1694
      %1824 = vst.msk [vmem:[#allocation2 + $0xf8] sm:$0xff] %vm1792, %v1695
      %1825 = vst.msk [vmem:[#allocation2 + $0x100] sm:$0xff] %vm1792, %v1696
      %1826 = vst.msk [vmem:[#allocation2 + $0x108] sm:$0xff] %vm1792, %v1697
      %1827 = vst.msk [vmem:[#allocation2 + $0x110] sm:$0xff] %vm1792, %v1698
      %1828 = vst.msk [vmem:[#allocation2 + $0x118] sm:$0xff] %vm1792, %v1699
      %1829 = vst.msk [vmem:[#allocation2 + $0x120] sm:$0xff] %vm1792, %v1700
      %1830 = vst.msk [vmem:[#allocation2 + $0x128] sm:$0xff] %vm1792, %v1701
      %1831 = vst.msk [vmem:[#allocation2 + $0x130] sm:$0xff] %vm1792, %v1702
      %1832 = vst.msk [vmem:[#allocation2 + $0x138] sm:$0xff] %vm1792, %v1703
      %1833 = vst.msk [vmem:[#allocation2 + $0x140] sm:$0xff] %vm1792, %v1704
      %1834 = vst.msk [vmem:[#allocation2 + $0x148] sm:$0xff] %vm1792, %v1705
      %1835 = vst.msk [vmem:[#allocation2 + $0x150] sm:$0xff] %vm1792, %v1706
      %1836 = vst.msk [vmem:[#allocation2 + $0x158] sm:$0xff] %vm1792, %v1707
      %1837 = vst.msk [vmem:[#allocation2 + $0x160] sm:$0xff] %vm1792, %v1708
      %1838 = vst.msk [vmem:[#allocation2 + $0x168] sm:$0xff] %vm1792, %v1709
      %1839 = vst.msk [vmem:[#allocation2 + $0x170] sm:$0xff] %vm1792, %v1710
      %1840 = vst.msk [vmem:[#allocation2 + $0x178] sm:$0xff] %vm1792, %v1711
      %1841 = vst.msk [vmem:[#allocation2 + $0x180] sm:$0xff] %vm1792, %v1712
      %1842 = vst.msk [vmem:[#allocation2 + $0x188] sm:$0xff] %vm1792, %v1713
      %1843 = vst.msk [vmem:[#allocation2 + $0x190] sm:$0xff] %vm1792, %v1714
      %1844 = vst.msk [vmem:[#allocation2 + $0x198] sm:$0xff] %vm1792, %v1715
      %1845 = vst.msk [vmem:[#allocation2 + $0x1a0] sm:$0xff] %vm1792, %v1716
      %1846 = vst.msk [vmem:[#allocation2 + $0x1a8] sm:$0xff] %vm1792, %v1717
      %1847 = vst.msk [vmem:[#allocation2 + $0x1b0] sm:$0xff] %vm1792, %v1718
      %1848 = vst.msk [vmem:[#allocation2 + $0x1b8] sm:$0xff] %vm1792, %v1719
      %1849 = vst.msk [vmem:[#allocation2 + $0x1c0] sm:$0xff] %vm1792, %v1720
      %1850 = vst.msk [vmem:[#allocation2 + $0x1c8] sm:$0xff] %vm1792, %v1721
      %1851 = vst.msk [vmem:[#allocation2 + $0x1d0] sm:$0xff] %vm1792, %v1722
      %1852 = vst.msk [vmem:[#allocation2 + $0x1d8] sm:$0xff] %vm1792, %v1723
      %1853 = vst.msk [vmem:[#allocation2 + $0x1e0] sm:$0xff] %vm1792, %v1724
      %1854 = vst.msk [vmem:[#allocation2 + $0x1e8] sm:$0xff] %vm1792, %v1725
      %1855 = vst.msk [vmem:[#allocation2 + $0x1f0] sm:$0xff] %vm1792, %v1726
      %1856 = vst.msk [vmem:[#allocation2 + $0x1f8] sm:$0xff] %vm1792, %v1727
      %1857 = vst.msk [vmem:[#allocation2 + $0x200] sm:$0xff] %vm1792, %v1728
      %1858 = vst.msk [vmem:[#allocation2 + $0x208] sm:$0xff] %vm1792, %v1729
      %1859 = vst.msk [vmem:[#allocation2 + $0x210] sm:$0xff] %vm1792, %v1730
      %1860 = vst.msk [vmem:[#allocation2 + $0x218] sm:$0xff] %vm1792, %v1731
      %1861 = vst.msk [vmem:[#allocation2 + $0x220] sm:$0xff] %vm1792, %v1732
      %1862 = vst.msk [vmem:[#allocation2 + $0x228] sm:$0xff] %vm1792, %v1733
      %1863 = vst.msk [vmem:[#allocation2 + $0x230] sm:$0xff] %vm1792, %v1734
      %1864 = vst.msk [vmem:[#allocation2 + $0x238] sm:$0xff] %vm1792, %v1735
      %1865 = vst.msk [vmem:[#allocation2 + $0x240] sm:$0xff] %vm1792, %v1736
      %1866 = vst.msk [vmem:[#allocation2 + $0x248] sm:$0xff] %vm1792, %v1737
      %1867 = vst.msk [vmem:[#allocation2 + $0x250] sm:$0xff] %vm1792, %v1738
      %1868 = vst.msk [vmem:[#allocation2 + $0x258] sm:$0xff] %vm1792, %v1739
      %1869 = vst.msk [vmem:[#allocation2 + $0x260] sm:$0xff] %vm1792, %v1740
      %1870 = vst.msk [vmem:[#allocation2 + $0x268] sm:$0xff] %vm1792, %v1741
      %1871 = vst.msk [vmem:[#allocation2 + $0x270] sm:$0xff] %vm1792, %v1742
      %1872 = vst.msk [vmem:[#allocation2 + $0x278] sm:$0xff] %vm1792, %v1743
      %1873 = vst.msk [vmem:[#allocation2 + $0x280] sm:$0xff] %vm1792, %v1744
      %1874 = vst.msk [vmem:[#allocation2 + $0x288] sm:$0xff] %vm1792, %v1745
      %1875 = vst.msk [vmem:[#allocation2 + $0x290] sm:$0xff] %vm1792, %v1746
      %1876 = vst.msk [vmem:[#allocation2 + $0x298] sm:$0xff] %vm1792, %v1747
      %1877 = vst.msk [vmem:[#allocation2 + $0x2a0] sm:$0xff] %vm1792, %v1748
      %1878 = vst.msk [vmem:[#allocation2 + $0x2a8] sm:$0xff] %vm1792, %v1749
      %1879 = vst.msk [vmem:[#allocation2 + $0x2b0] sm:$0xff] %vm1792, %v1750
      %1880 = vst.msk [vmem:[#allocation2 + $0x2b8] sm:$0xff] %vm1792, %v1751
      %1881 = vst.msk [vmem:[#allocation2 + $0x2c0] sm:$0xff] %vm1792, %v1752
      %1882 = vst.msk [vmem:[#allocation2 + $0x2c8] sm:$0xff] %vm1792, %v1753
      %1883 = vst.msk [vmem:[#allocation2 + $0x2d0] sm:$0xff] %vm1792, %v1754
      %1884 = vst.msk [vmem:[#allocation2 + $0x2d8] sm:$0xff] %vm1792, %v1755
      %1885 = vst.msk [vmem:[#allocation2 + $0x2e0] sm:$0xff] %vm1792, %v1756
      %1886 = vst.msk [vmem:[#allocation2 + $0x2e8] sm:$0xff] %vm1792, %v1757
      %1887 = vst.msk [vmem:[#allocation2 + $0x2f0] sm:$0xff] %vm1792, %v1758
      %1888 = vst.msk [vmem:[#allocation2 + $0x2f8] sm:$0xff] %vm1792, %v1759
      %1889 = vst.msk [vmem:[#allocation2 + $0x300] sm:$0xff] %vm1792, %v1760
      %1890 = vst.msk [vmem:[#allocation2 + $0x308] sm:$0xff] %vm1792, %v1761
      %1891 = vst.msk [vmem:[#allocation2 + $0x310] sm:$0xff] %vm1792, %v1762
      %1892 = vst.msk [vmem:[#allocation2 + $0x318] sm:$0xff] %vm1792, %v1763
      %1893 = vst.msk [vmem:[#allocation2 + $0x320] sm:$0xff] %vm1792, %v1764
      %1894 = vst.msk [vmem:[#allocation2 + $0x328] sm:$0xff] %vm1792, %v1765
      %1895 = vst.msk [vmem:[#allocation2 + $0x330] sm:$0xff] %vm1792, %v1766
      %1896 = vst.msk [vmem:[#allocation2 + $0x338] sm:$0xff] %vm1792, %v1767
      %1897 = vst.msk [vmem:[#allocation2 + $0x340] sm:$0xff] %vm1792, %v1768
      %1898 = vst.msk [vmem:[#allocation2 + $0x348] sm:$0xff] %vm1792, %v1769
      %1899 = vst.msk [vmem:[#allocation2 + $0x350] sm:$0xff] %vm1792, %v1770
      %1900 = vst.msk [vmem:[#allocation2 + $0x358] sm:$0xff] %vm1792, %v1771
      %1901 = vst.msk [vmem:[#allocation2 + $0x360] sm:$0xff] %vm1792, %v1772
      %1902 = vst.msk [vmem:[#allocation2 + $0x368] sm:$0xff] %vm1792, %v1773
      %1903 = vst.msk [vmem:[#allocation2 + $0x370] sm:$0xff] %vm1792, %v1774
      %1904 = vst.msk [vmem:[#allocation2 + $0x378] sm:$0xff] %vm1792, %v1775
      %1905 = vst.msk [vmem:[#allocation2 + $0x380] sm:$0xff] %vm1792, %v1776
      %1906 = vst.msk [vmem:[#allocation2 + $0x388] sm:$0xff] %vm1792, %v1777
      %1907 = vst.msk [vmem:[#allocation2 + $0x390] sm:$0xff] %vm1792, %v1778
      %1908 = vst.msk [vmem:[#allocation2 + $0x398] sm:$0xff] %vm1792, %v1779
      %1909 = vst.msk [vmem:[#allocation2 + $0x3a0] sm:$0xff] %vm1792, %v1780
      %1910 = vst.msk [vmem:[#allocation2 + $0x3a8] sm:$0xff] %vm1792, %v1781
      %1911 = vst.msk [vmem:[#allocation2 + $0x3b0] sm:$0xff] %vm1792, %v1782
      %1912 = vst.msk [vmem:[#allocation2 + $0x3b8] sm:$0xff] %vm1792, %v1783
      %1913 = vst.msk [vmem:[#allocation2 + $0x3c0] sm:$0xff] %vm1792, %v1784
      %1914 = vst.msk [vmem:[#allocation2 + $0x3c8] sm:$0xff] %vm1792, %v1785
      %1915 = vst.msk [vmem:[#allocation2 + $0x3d0] sm:$0xff] %vm1792, %v1786
      %1916 = vst.msk [vmem:[#allocation2 + $0x3d8] sm:$0xff] %vm1792, %v1787
      %1917 = vst.msk [vmem:[#allocation2 + $0x3e0] sm:$0xff] %vm1792, %v1788
      %1918 = vst.msk [vmem:[#allocation2 + $0x3e8] sm:$0xff] %vm1792, %v1789
      %1919 = vst.msk [vmem:[#allocation2 + $0x3f0] sm:$0xff] %vm1792, %v1790
      %1920 = vst.msk [vmem:[#allocation2 + $0x3f8] sm:$0xff] %vm1792, %v1791
      // Predicated region
      $region33: #{discriminator128_forward.7} parent=27 // pred_check
        %p1921 = pneg %p193
      $region34: #{discriminator128_forward.7} parent=27 // pred_check_branch
        %1923 = sbr.rel (%p1921) target = $region36
      $region35: #{discriminator128_forward.7} parent=27 // pred_region
        %v1924 = vld [vmem:[#allocation2] sm:$0xff]
        %v1925 = vld [vmem:[#allocation2 + $0x8] sm:$0xff]
        %v1926 = vld [vmem:[#allocation2 + $0x10] sm:$0xff]
        %v1927 = vld [vmem:[#allocation2 + $0x18] sm:$0xff]
        %v1928 = vld [vmem:[#allocation2 + $0x20] sm:$0xff]
        %v1929 = vld [vmem:[#allocation2 + $0x28] sm:$0xff]
        %v1930 = vld [vmem:[#allocation2 + $0x30] sm:$0xff]
        %v1931 = vld [vmem:[#allocation2 + $0x38] sm:$0xff]
        %v1932 = vld [vmem:[#allocation2 + $0x40] sm:$0xff]
        %v1933 = vld [vmem:[#allocation2 + $0x48] sm:$0xff]
        %v1934 = vld [vmem:[#allocation2 + $0x50] sm:$0xff]
        %v1935 = vld [vmem:[#allocation2 + $0x58] sm:$0xff]
        %v1936 = vld [vmem:[#allocation2 + $0x60] sm:$0xff]
        %v1937 = vld [vmem:[#allocation2 + $0x68] sm:$0xff]
        %v1938 = vld [vmem:[#allocation2 + $0x70] sm:$0xff]
        %v1939 = vld [vmem:[#allocation2 + $0x78] sm:$0xff]
        %v1940 = vld [vmem:[#allocation2 + $0x80] sm:$0xff]
        %v1941 = vld [vmem:[#allocation2 + $0x88] sm:$0xff]
        %v1942 = vld [vmem:[#allocation2 + $0x90] sm:$0xff]
        %v1943 = vld [vmem:[#allocation2 + $0x98] sm:$0xff]
        %v1944 = vld [vmem:[#allocation2 + $0xa0] sm:$0xff]
        %v1945 = vld [vmem:[#allocation2 + $0xa8] sm:$0xff]
        %v1946 = vld [vmem:[#allocation2 + $0xb0] sm:$0xff]
        %v1947 = vld [vmem:[#allocation2 + $0xb8] sm:$0xff]
        %v1948 = vld [vmem:[#allocation2 + $0xc0] sm:$0xff]
        %v1949 = vld [vmem:[#allocation2 + $0xc8] sm:$0xff]
        %v1950 = vld [vmem:[#allocation2 + $0xd0] sm:$0xff]
        %v1951 = vld [vmem:[#allocation2 + $0xd8] sm:$0xff]
        %v1952 = vld [vmem:[#allocation2 + $0xe0] sm:$0xff]
        %v1953 = vld [vmem:[#allocation2 + $0xe8] sm:$0xff]
        %v1954 = vld [vmem:[#allocation2 + $0xf0] sm:$0xff]
        %v1955 = vld [vmem:[#allocation2 + $0xf8] sm:$0xff]
        %v1956 = vld [vmem:[#allocation2 + $0x100] sm:$0xff]
        %v1957 = vld [vmem:[#allocation2 + $0x108] sm:$0xff]
        %v1958 = vld [vmem:[#allocation2 + $0x110] sm:$0xff]
        %v1959 = vld [vmem:[#allocation2 + $0x118] sm:$0xff]
        %v1960 = vld [vmem:[#allocation2 + $0x120] sm:$0xff]
        %v1961 = vld [vmem:[#allocation2 + $0x128] sm:$0xff]
        %v1962 = vld [vmem:[#allocation2 + $0x130] sm:$0xff]
        %v1963 = vld [vmem:[#allocation2 + $0x138] sm:$0xff]
        %v1964 = vld [vmem:[#allocation2 + $0x140] sm:$0xff]
        %v1965 = vld [vmem:[#allocation2 + $0x148] sm:$0xff]
        %v1966 = vld [vmem:[#allocation2 + $0x150] sm:$0xff]
        %v1967 = vld [vmem:[#allocation2 + $0x158] sm:$0xff]
        %v1968 = vld [vmem:[#allocation2 + $0x160] sm:$0xff]
        %v1969 = vld [vmem:[#allocation2 + $0x168] sm:$0xff]
        %v1970 = vld [vmem:[#allocation2 + $0x170] sm:$0xff]
        %v1971 = vld [vmem:[#allocation2 + $0x178] sm:$0xff]
        %v1972 = vld [vmem:[#allocation2 + $0x180] sm:$0xff]
        %v1973 = vld [vmem:[#allocation2 + $0x188] sm:$0xff]
        %v1974 = vld [vmem:[#allocation2 + $0x190] sm:$0xff]
        %v1975 = vld [vmem:[#allocation2 + $0x198] sm:$0xff]
        %v1976 = vld [vmem:[#allocation2 + $0x1a0] sm:$0xff]
        %v1977 = vld [vmem:[#allocation2 + $0x1a8] sm:$0xff]
        %v1978 = vld [vmem:[#allocation2 + $0x1b0] sm:$0xff]
        %v1979 = vld [vmem:[#allocation2 + $0x1b8] sm:$0xff]
        %v1980 = vld [vmem:[#allocation2 + $0x1c0] sm:$0xff]
        %v1981 = vld [vmem:[#allocation2 + $0x1c8] sm:$0xff]
        %v1982 = vld [vmem:[#allocation2 + $0x1d0] sm:$0xff]
        %v1983 = vld [vmem:[#allocation2 + $0x1d8] sm:$0xff]
        %v1984 = vld [vmem:[#allocation2 + $0x1e0] sm:$0xff]
        %v1985 = vld [vmem:[#allocation2 + $0x1e8] sm:$0xff]
        %v1986 = vld [vmem:[#allocation2 + $0x1f0] sm:$0xff]
        %v1987 = vld [vmem:[#allocation2 + $0x1f8] sm:$0xff]
        %v1988 = vld [vmem:[#allocation2 + $0x200] sm:$0xff]
        %v1989 = vld [vmem:[#allocation2 + $0x208] sm:$0xff]
        %v1990 = vld [vmem:[#allocation2 + $0x210] sm:$0xff]
        %v1991 = vld [vmem:[#allocation2 + $0x218] sm:$0xff]
        %v1992 = vld [vmem:[#allocation2 + $0x220] sm:$0xff]
        %v1993 = vld [vmem:[#allocation2 + $0x228] sm:$0xff]
        %v1994 = vld [vmem:[#allocation2 + $0x230] sm:$0xff]
        %v1995 = vld [vmem:[#allocation2 + $0x238] sm:$0xff]
        %v1996 = vld [vmem:[#allocation2 + $0x240] sm:$0xff]
        %v1997 = vld [vmem:[#allocation2 + $0x248] sm:$0xff]
        %v1998 = vld [vmem:[#allocation2 + $0x250] sm:$0xff]
        %v1999 = vld [vmem:[#allocation2 + $0x258] sm:$0xff]
        %v2000 = vld [vmem:[#allocation2 + $0x260] sm:$0xff]
        %v2001 = vld [vmem:[#allocation2 + $0x268] sm:$0xff]
        %v2002 = vld [vmem:[#allocation2 + $0x270] sm:$0xff]
        %v2003 = vld [vmem:[#allocation2 + $0x278] sm:$0xff]
        %v2004 = vld [vmem:[#allocation2 + $0x280] sm:$0xff]
        %v2005 = vld [vmem:[#allocation2 + $0x288] sm:$0xff]
        %v2006 = vld [vmem:[#allocation2 + $0x290] sm:$0xff]
        %v2007 = vld [vmem:[#allocation2 + $0x298] sm:$0xff]
        %v2008 = vld [vmem:[#allocation2 + $0x2a0] sm:$0xff]
        %v2009 = vld [vmem:[#allocation2 + $0x2a8] sm:$0xff]
        %v2010 = vld [vmem:[#allocation2 + $0x2b0] sm:$0xff]
        %v2011 = vld [vmem:[#allocation2 + $0x2b8] sm:$0xff]
        %v2012 = vld [vmem:[#allocation2 + $0x2c0] sm:$0xff]
        %v2013 = vld [vmem:[#allocation2 + $0x2c8] sm:$0xff]
        %v2014 = vld [vmem:[#allocation2 + $0x2d0] sm:$0xff]
        %v2015 = vld [vmem:[#allocation2 + $0x2d8] sm:$0xff]
        %v2016 = vld [vmem:[#allocation2 + $0x2e0] sm:$0xff]
        %v2017 = vld [vmem:[#allocation2 + $0x2e8] sm:$0xff]
        %v2018 = vld [vmem:[#allocation2 + $0x2f0] sm:$0xff]
        %v2019 = vld [vmem:[#allocation2 + $0x2f8] sm:$0xff]
        %v2020 = vld [vmem:[#allocation2 + $0x300] sm:$0xff]
        %v2021 = vld [vmem:[#allocation2 + $0x308] sm:$0xff]
        %v2022 = vld [vmem:[#allocation2 + $0x310] sm:$0xff]
        %v2023 = vld [vmem:[#allocation2 + $0x318] sm:$0xff]
        %v2024 = vld [vmem:[#allocation2 + $0x320] sm:$0xff]
        %v2025 = vld [vmem:[#allocation2 + $0x328] sm:$0xff]
        %v2026 = vld [vmem:[#allocation2 + $0x330] sm:$0xff]
        %v2027 = vld [vmem:[#allocation2 + $0x338] sm:$0xff]
        %v2028 = vld [vmem:[#allocation2 + $0x340] sm:$0xff]
        %v2029 = vld [vmem:[#allocation2 + $0x348] sm:$0xff]
        %v2030 = vld [vmem:[#allocation2 + $0x350] sm:$0xff]
        %v2031 = vld [vmem:[#allocation2 + $0x358] sm:$0xff]
        %v2032 = vld [vmem:[#allocation2 + $0x360] sm:$0xff]
        %v2033 = vld [vmem:[#allocation2 + $0x368] sm:$0xff]
        %v2034 = vld [vmem:[#allocation2 + $0x370] sm:$0xff]
        %v2035 = vld [vmem:[#allocation2 + $0x378] sm:$0xff]
        %v2036 = vld [vmem:[#allocation2 + $0x380] sm:$0xff]
        %v2037 = vld [vmem:[#allocation2 + $0x388] sm:$0xff]
        %v2038 = vld [vmem:[#allocation2 + $0x390] sm:$0xff]
        %v2039 = vld [vmem:[#allocation2 + $0x398] sm:$0xff]
        %v2040 = vld [vmem:[#allocation2 + $0x3a0] sm:$0xff]
        %v2041 = vld [vmem:[#allocation2 + $0x3a8] sm:$0xff]
        %v2042 = vld [vmem:[#allocation2 + $0x3b0] sm:$0xff]
        %v2043 = vld [vmem:[#allocation2 + $0x3b8] sm:$0xff]
        %v2044 = vld [vmem:[#allocation2 + $0x3c0] sm:$0xff]
        %v2045 = vld [vmem:[#allocation2 + $0x3c8] sm:$0xff]
        %v2046 = vld [vmem:[#allocation2 + $0x3d0] sm:$0xff]
        %v2047 = vld [vmem:[#allocation2 + $0x3d8] sm:$0xff]
        %v2048 = vld [vmem:[#allocation2 + $0x3e0] sm:$0xff]
        %v2049 = vld [vmem:[#allocation2 + $0x3e8] sm:$0xff]
        %v2050 = vld [vmem:[#allocation2 + $0x3f0] sm:$0xff]
        %v2051 = vld [vmem:[#allocation2 + $0x3f8] sm:$0xff]
        %vm2052 = vcmp.gt.f32.partialorder %v1924, 0.0
        %vm2053 = vcmp.gt.f32.partialorder %v1925, 0.0
        %vm2054 = vcmp.gt.f32.partialorder %v1926, 0.0
        %vm2055 = vcmp.gt.f32.partialorder %v1927, 0.0
        %vm2056 = vcmp.gt.f32.partialorder %v1928, 0.0
        %vm2057 = vcmp.gt.f32.partialorder %v1929, 0.0
        %vm2058 = vcmp.gt.f32.partialorder %v1930, 0.0
        %vm2059 = vcmp.gt.f32.partialorder %v1931, 0.0
        %vm2060 = vcmp.gt.f32.partialorder %v1932, 0.0
        %vm2061 = vcmp.gt.f32.partialorder %v1933, 0.0
        %vm2062 = vcmp.gt.f32.partialorder %v1934, 0.0
        %vm2063 = vcmp.gt.f32.partialorder %v1935, 0.0
        %vm2064 = vcmp.gt.f32.partialorder %v1936, 0.0
        %vm2065 = vcmp.gt.f32.partialorder %v1937, 0.0
        %vm2066 = vcmp.gt.f32.partialorder %v1938, 0.0
        %vm2067 = vcmp.gt.f32.partialorder %v1939, 0.0
        %vm2068 = vcmp.gt.f32.partialorder %v1940, 0.0
        %vm2069 = vcmp.gt.f32.partialorder %v1941, 0.0
        %vm2070 = vcmp.gt.f32.partialorder %v1942, 0.0
        %vm2071 = vcmp.gt.f32.partialorder %v1943, 0.0
        %vm2072 = vcmp.gt.f32.partialorder %v1944, 0.0
        %vm2073 = vcmp.gt.f32.partialorder %v1945, 0.0
        %vm2074 = vcmp.gt.f32.partialorder %v1946, 0.0
        %vm2075 = vcmp.gt.f32.partialorder %v1947, 0.0
        %vm2076 = vcmp.gt.f32.partialorder %v1948, 0.0
        %vm2077 = vcmp.gt.f32.partialorder %v1949, 0.0
        %vm2078 = vcmp.gt.f32.partialorder %v1950, 0.0
        %vm2079 = vcmp.gt.f32.partialorder %v1951, 0.0
        %vm2080 = vcmp.gt.f32.partialorder %v1952, 0.0
        %vm2081 = vcmp.gt.f32.partialorder %v1953, 0.0
        %vm2082 = vcmp.gt.f32.partialorder %v1954, 0.0
        %vm2083 = vcmp.gt.f32.partialorder %v1955, 0.0
        %vm2084 = vcmp.gt.f32.partialorder %v1956, 0.0
        %vm2085 = vcmp.gt.f32.partialorder %v1957, 0.0
        %vm2086 = vcmp.gt.f32.partialorder %v1958, 0.0
        %vm2087 = vcmp.gt.f32.partialorder %v1959, 0.0
        %vm2088 = vcmp.gt.f32.partialorder %v1960, 0.0
        %vm2089 = vcmp.gt.f32.partialorder %v1961, 0.0
        %vm2090 = vcmp.gt.f32.partialorder %v1962, 0.0
        %vm2091 = vcmp.gt.f32.partialorder %v1963, 0.0
        %vm2092 = vcmp.gt.f32.partialorder %v1964, 0.0
        %vm2093 = vcmp.gt.f32.partialorder %v1965, 0.0
        %vm2094 = vcmp.gt.f32.partialorder %v1966, 0.0
        %vm2095 = vcmp.gt.f32.partialorder %v1967, 0.0
        %vm2096 = vcmp.gt.f32.partialorder %v1968, 0.0
        %vm2097 = vcmp.gt.f32.partialorder %v1969, 0.0
        %vm2098 = vcmp.gt.f32.partialorder %v1970, 0.0
        %vm2099 = vcmp.gt.f32.partialorder %v1971, 0.0
        %vm2100 = vcmp.gt.f32.partialorder %v1972, 0.0
        %vm2101 = vcmp.gt.f32.partialorder %v1973, 0.0
        %vm2102 = vcmp.gt.f32.partialorder %v1974, 0.0
        %vm2103 = vcmp.gt.f32.partialorder %v1975, 0.0
        %vm2104 = vcmp.gt.f32.partialorder %v1976, 0.0
        %vm2105 = vcmp.gt.f32.partialorder %v1977, 0.0
        %vm2106 = vcmp.gt.f32.partialorder %v1978, 0.0
        %vm2107 = vcmp.gt.f32.partialorder %v1979, 0.0
        %vm2108 = vcmp.gt.f32.partialorder %v1980, 0.0
        %vm2109 = vcmp.gt.f32.partialorder %v1981, 0.0
        %vm2110 = vcmp.gt.f32.partialorder %v1982, 0.0
        %vm2111 = vcmp.gt.f32.partialorder %v1983, 0.0
        %vm2112 = vcmp.gt.f32.partialorder %v1984, 0.0
        %vm2113 = vcmp.gt.f32.partialorder %v1985, 0.0
        %vm2114 = vcmp.gt.f32.partialorder %v1986, 0.0
        %vm2115 = vcmp.gt.f32.partialorder %v1987, 0.0
        %vm2116 = vcmp.gt.f32.partialorder %v1988, 0.0
        %vm2117 = vcmp.gt.f32.partialorder %v1989, 0.0
        %vm2118 = vcmp.gt.f32.partialorder %v1990, 0.0
        %vm2119 = vcmp.gt.f32.partialorder %v1991, 0.0
        %vm2120 = vcmp.gt.f32.partialorder %v1992, 0.0
        %vm2121 = vcmp.gt.f32.partialorder %v1993, 0.0
        %vm2122 = vcmp.gt.f32.partialorder %v1994, 0.0
        %vm2123 = vcmp.gt.f32.partialorder %v1995, 0.0
        %vm2124 = vcmp.gt.f32.partialorder %v1996, 0.0
        %vm2125 = vcmp.gt.f32.partialorder %v1997, 0.0
        %vm2126 = vcmp.gt.f32.partialorder %v1998, 0.0
        %vm2127 = vcmp.gt.f32.partialorder %v1999, 0.0
        %vm2128 = vcmp.gt.f32.partialorder %v2000, 0.0
        %vm2129 = vcmp.gt.f32.partialorder %v2001, 0.0
        %vm2130 = vcmp.gt.f32.partialorder %v2002, 0.0
        %vm2131 = vcmp.gt.f32.partialorder %v2003, 0.0
        %vm2132 = vcmp.gt.f32.partialorder %v2004, 0.0
        %vm2133 = vcmp.gt.f32.partialorder %v2005, 0.0
        %vm2134 = vcmp.gt.f32.partialorder %v2006, 0.0
        %vm2135 = vcmp.gt.f32.partialorder %v2007, 0.0
        %vm2136 = vcmp.gt.f32.partialorder %v2008, 0.0
        %vm2137 = vcmp.gt.f32.partialorder %v2009, 0.0
        %vm2138 = vcmp.gt.f32.partialorder %v2010, 0.0
        %vm2139 = vcmp.gt.f32.partialorder %v2011, 0.0
        %vm2140 = vcmp.gt.f32.partialorder %v2012, 0.0
        %vm2141 = vcmp.gt.f32.partialorder %v2013, 0.0
        %vm2142 = vcmp.gt.f32.partialorder %v2014, 0.0
        %vm2143 = vcmp.gt.f32.partialorder %v2015, 0.0
        %vm2144 = vcmp.gt.f32.partialorder %v2016, 0.0
        %vm2145 = vcmp.gt.f32.partialorder %v2017, 0.0
        %vm2146 = vcmp.gt.f32.partialorder %v2018, 0.0
        %vm2147 = vcmp.gt.f32.partialorder %v2019, 0.0
        %vm2148 = vcmp.gt.f32.partialorder %v2020, 0.0
        %vm2149 = vcmp.gt.f32.partialorder %v2021, 0.0
        %vm2150 = vcmp.gt.f32.partialorder %v2022, 0.0
        %vm2151 = vcmp.gt.f32.partialorder %v2023, 0.0
        %vm2152 = vcmp.gt.f32.partialorder %v2024, 0.0
        %vm2153 = vcmp.gt.f32.partialorder %v2025, 0.0
        %vm2154 = vcmp.gt.f32.partialorder %v2026, 0.0
        %vm2155 = vcmp.gt.f32.partialorder %v2027, 0.0
        %vm2156 = vcmp.gt.f32.partialorder %v2028, 0.0
        %vm2157 = vcmp.gt.f32.partialorder %v2029, 0.0
        %vm2158 = vcmp.gt.f32.partialorder %v2030, 0.0
        %vm2159 = vcmp.gt.f32.partialorder %v2031, 0.0
        %vm2160 = vcmp.gt.f32.partialorder %v2032, 0.0
        %vm2161 = vcmp.gt.f32.partialorder %v2033, 0.0
        %vm2162 = vcmp.gt.f32.partialorder %v2034, 0.0
        %vm2163 = vcmp.gt.f32.partialorder %v2035, 0.0
        %vm2164 = vcmp.gt.f32.partialorder %v2036, 0.0
        %vm2165 = vcmp.gt.f32.partialorder %v2037, 0.0
        %vm2166 = vcmp.gt.f32.partialorder %v2038, 0.0
        %vm2167 = vcmp.gt.f32.partialorder %v2039, 0.0
        %vm2168 = vcmp.gt.f32.partialorder %v2040, 0.0
        %vm2169 = vcmp.gt.f32.partialorder %v2041, 0.0
        %vm2170 = vcmp.gt.f32.partialorder %v2042, 0.0
        %vm2171 = vcmp.gt.f32.partialorder %v2043, 0.0
        %vm2172 = vcmp.gt.f32.partialorder %v2044, 0.0
        %vm2173 = vcmp.gt.f32.partialorder %v2045, 0.0
        %vm2174 = vcmp.gt.f32.partialorder %v2046, 0.0
        %vm2175 = vcmp.gt.f32.partialorder %v2047, 0.0
        %vm2176 = vcmp.gt.f32.partialorder %v2048, 0.0
        %vm2177 = vcmp.gt.f32.partialorder %v2049, 0.0
        %vm2178 = vcmp.gt.f32.partialorder %v2050, 0.0
        %vm2179 = vcmp.gt.f32.partialorder %v2051, 0.0
        %v2180 = vmul.f32 %v1924, 0.2
        %v2181 = vmul.f32 %v1925, 0.2
        %v2182 = vmul.f32 %v1926, 0.2
        %v2183 = vmul.f32 %v1927, 0.2
        %v2184 = vmul.f32 %v1928, 0.2
        %v2185 = vmul.f32 %v1929, 0.2
        %v2186 = vmul.f32 %v1930, 0.2
        %v2187 = vmul.f32 %v1931, 0.2
        %v2188 = vmul.f32 %v1932, 0.2
        %v2189 = vmul.f32 %v1933, 0.2
        %v2190 = vmul.f32 %v1934, 0.2
        %v2191 = vmul.f32 %v1935, 0.2
        %v2192 = vmul.f32 %v1936, 0.2
        %v2193 = vmul.f32 %v1937, 0.2
        %v2194 = vmul.f32 %v1938, 0.2
        %v2195 = vmul.f32 %v1939, 0.2
        %v2196 = vmul.f32 %v1940, 0.2
        %v2197 = vmul.f32 %v1941, 0.2
        %v2198 = vmul.f32 %v1942, 0.2
        %v2199 = vmul.f32 %v1943, 0.2
        %v2200 = vmul.f32 %v1944, 0.2
        %v2201 = vmul.f32 %v1945, 0.2
        %v2202 = vmul.f32 %v1946, 0.2
        %v2203 = vmul.f32 %v1947, 0.2
        %v2204 = vmul.f32 %v1948, 0.2
        %v2205 = vmul.f32 %v1949, 0.2
        %v2206 = vmul.f32 %v1950, 0.2
        %v2207 = vmul.f32 %v1951, 0.2
        %v2208 = vmul.f32 %v1952, 0.2
        %v2209 = vmul.f32 %v1953, 0.2
        %v2210 = vmul.f32 %v1954, 0.2
        %v2211 = vmul.f32 %v1955, 0.2
        %v2212 = vmul.f32 %v1956, 0.2
        %v2213 = vmul.f32 %v1957, 0.2
        %v2214 = vmul.f32 %v1958, 0.2
        %v2215 = vmul.f32 %v1959, 0.2
        %v2216 = vmul.f32 %v1960, 0.2
        %v2217 = vmul.f32 %v1961, 0.2
        %v2218 = vmul.f32 %v1962, 0.2
        %v2219 = vmul.f32 %v1963, 0.2
        %v2220 = vmul.f32 %v1964, 0.2
        %v2221 = vmul.f32 %v1965, 0.2
        %v2222 = vmul.f32 %v1966, 0.2
        %v2223 = vmul.f32 %v1967, 0.2
        %v2224 = vmul.f32 %v1968, 0.2
        %v2225 = vmul.f32 %v1969, 0.2
        %v2226 = vmul.f32 %v1970, 0.2
        %v2227 = vmul.f32 %v1971, 0.2
        %v2228 = vmul.f32 %v1972, 0.2
        %v2229 = vmul.f32 %v1973, 0.2
        %v2230 = vmul.f32 %v1974, 0.2
        %v2231 = vmul.f32 %v1975, 0.2
        %v2232 = vmul.f32 %v1976, 0.2
        %v2233 = vmul.f32 %v1977, 0.2
        %v2234 = vmul.f32 %v1978, 0.2
        %v2235 = vmul.f32 %v1979, 0.2
        %v2236 = vmul.f32 %v1980, 0.2
        %v2237 = vmul.f32 %v1981, 0.2
        %v2238 = vmul.f32 %v1982, 0.2
        %v2239 = vmul.f32 %v1983, 0.2
        %v2240 = vmul.f32 %v1984, 0.2
        %v2241 = vmul.f32 %v1985, 0.2
        %v2242 = vmul.f32 %v1986, 0.2
        %v2243 = vmul.f32 %v1987, 0.2
        %v2244 = vmul.f32 %v1988, 0.2
        %v2245 = vmul.f32 %v1989, 0.2
        %v2246 = vmul.f32 %v1990, 0.2
        %v2247 = vmul.f32 %v1991, 0.2
        %v2248 = vmul.f32 %v1992, 0.2
        %v2249 = vmul.f32 %v1993, 0.2
        %v2250 = vmul.f32 %v1994, 0.2
        %v2251 = vmul.f32 %v1995, 0.2
        %v2252 = vmul.f32 %v1996, 0.2
        %v2253 = vmul.f32 %v1997, 0.2
        %v2254 = vmul.f32 %v1998, 0.2
        %v2255 = vmul.f32 %v1999, 0.2
        %v2256 = vmul.f32 %v2000, 0.2
        %v2257 = vmul.f32 %v2001, 0.2
        %v2258 = vmul.f32 %v2002, 0.2
        %v2259 = vmul.f32 %v2003, 0.2
        %v2260 = vmul.f32 %v2004, 0.2
        %v2261 = vmul.f32 %v2005, 0.2
        %v2262 = vmul.f32 %v2006, 0.2
        %v2263 = vmul.f32 %v2007, 0.2
        %v2264 = vmul.f32 %v2008, 0.2
        %v2265 = vmul.f32 %v2009, 0.2
        %v2266 = vmul.f32 %v2010, 0.2
        %v2267 = vmul.f32 %v2011, 0.2
        %v2268 = vmul.f32 %v2012, 0.2
        %v2269 = vmul.f32 %v2013, 0.2
        %v2270 = vmul.f32 %v2014, 0.2
        %v2271 = vmul.f32 %v2015, 0.2
        %v2272 = vmul.f32 %v2016, 0.2
        %v2273 = vmul.f32 %v2017, 0.2
        %v2274 = vmul.f32 %v2018, 0.2
        %v2275 = vmul.f32 %v2019, 0.2
        %v2276 = vmul.f32 %v2020, 0.2
        %v2277 = vmul.f32 %v2021, 0.2
        %v2278 = vmul.f32 %v2022, 0.2
        %v2279 = vmul.f32 %v2023, 0.2
        %v2280 = vmul.f32 %v2024, 0.2
        %v2281 = vmul.f32 %v2025, 0.2
        %v2282 = vmul.f32 %v2026, 0.2
        %v2283 = vmul.f32 %v2027, 0.2
        %v2284 = vmul.f32 %v2028, 0.2
        %v2285 = vmul.f32 %v2029, 0.2
        %v2286 = vmul.f32 %v2030, 0.2
        %v2287 = vmul.f32 %v2031, 0.2
        %v2288 = vmul.f32 %v2032, 0.2
        %v2289 = vmul.f32 %v2033, 0.2
        %v2290 = vmul.f32 %v2034, 0.2
        %v2291 = vmul.f32 %v2035, 0.2
        %v2292 = vmul.f32 %v2036, 0.2
        %v2293 = vmul.f32 %v2037, 0.2
        %v2294 = vmul.f32 %v2038, 0.2
        %v2295 = vmul.f32 %v2039, 0.2
        %v2296 = vmul.f32 %v2040, 0.2
        %v2297 = vmul.f32 %v2041, 0.2
        %v2298 = vmul.f32 %v2042, 0.2
        %v2299 = vmul.f32 %v2043, 0.2
        %v2300 = vmul.f32 %v2044, 0.2
        %v2301 = vmul.f32 %v2045, 0.2
        %v2302 = vmul.f32 %v2046, 0.2
        %v2303 = vmul.f32 %v2047, 0.2
        %v2304 = vmul.f32 %v2048, 0.2
        %v2305 = vmul.f32 %v2049, 0.2
        %v2306 = vmul.f32 %v2050, 0.2
        %v2307 = vmul.f32 %v2051, 0.2
        %v2308 = vsel %vm2052, %v1924, %v2180
        %v2309 = vsel %vm2053, %v1925, %v2181
        %v2310 = vsel %vm2054, %v1926, %v2182
        %v2311 = vsel %vm2055, %v1927, %v2183
        %v2312 = vsel %vm2056, %v1928, %v2184
        %v2313 = vsel %vm2057, %v1929, %v2185
        %v2314 = vsel %vm2058, %v1930, %v2186
        %v2315 = vsel %vm2059, %v1931, %v2187
        %v2316 = vsel %vm2060, %v1932, %v2188
        %v2317 = vsel %vm2061, %v1933, %v2189
        %v2318 = vsel %vm2062, %v1934, %v2190
        %v2319 = vsel %vm2063, %v1935, %v2191
        %v2320 = vsel %vm2064, %v1936, %v2192
        %v2321 = vsel %vm2065, %v1937, %v2193
        %v2322 = vsel %vm2066, %v1938, %v2194
        %v2323 = vsel %vm2067, %v1939, %v2195
        %v2324 = vsel %vm2068, %v1940, %v2196
        %v2325 = vsel %vm2069, %v1941, %v2197
        %v2326 = vsel %vm2070, %v1942, %v2198
        %v2327 = vsel %vm2071, %v1943, %v2199
        %v2328 = vsel %vm2072, %v1944, %v2200
        %v2329 = vsel %vm2073, %v1945, %v2201
        %v2330 = vsel %vm2074, %v1946, %v2202
        %v2331 = vsel %vm2075, %v1947, %v2203
        %v2332 = vsel %vm2076, %v1948, %v2204
        %v2333 = vsel %vm2077, %v1949, %v2205
        %v2334 = vsel %vm2078, %v1950, %v2206
        %v2335 = vsel %vm2079, %v1951, %v2207
        %v2336 = vsel %vm2080, %v1952, %v2208
        %v2337 = vsel %vm2081, %v1953, %v2209
        %v2338 = vsel %vm2082, %v1954, %v2210
        %v2339 = vsel %vm2083, %v1955, %v2211
        %v2340 = vsel %vm2084, %v1956, %v2212
        %v2341 = vsel %vm2085, %v1957, %v2213
        %v2342 = vsel %vm2086, %v1958, %v2214
        %v2343 = vsel %vm2087, %v1959, %v2215
        %v2344 = vsel %vm2088, %v1960, %v2216
        %v2345 = vsel %vm2089, %v1961, %v2217
        %v2346 = vsel %vm2090, %v1962, %v2218
        %v2347 = vsel %vm2091, %v1963, %v2219
        %v2348 = vsel %vm2092, %v1964, %v2220
        %v2349 = vsel %vm2093, %v1965, %v2221
        %v2350 = vsel %vm2094, %v1966, %v2222
        %v2351 = vsel %vm2095, %v1967, %v2223
        %v2352 = vsel %vm2096, %v1968, %v2224
        %v2353 = vsel %vm2097, %v1969, %v2225
        %v2354 = vsel %vm2098, %v1970, %v2226
        %v2355 = vsel %vm2099, %v1971, %v2227
        %v2356 = vsel %vm2100, %v1972, %v2228
        %v2357 = vsel %vm2101, %v1973, %v2229
        %v2358 = vsel %vm2102, %v1974, %v2230
        %v2359 = vsel %vm2103, %v1975, %v2231
        %v2360 = vsel %vm2104, %v1976, %v2232
        %v2361 = vsel %vm2105, %v1977, %v2233
        %v2362 = vsel %vm2106, %v1978, %v2234
        %v2363 = vsel %vm2107, %v1979, %v2235
        %v2364 = vsel %vm2108, %v1980, %v2236
        %v2365 = vsel %vm2109, %v1981, %v2237
        %v2366 = vsel %vm2110, %v1982, %v2238
        %v2367 = vsel %vm2111, %v1983, %v2239
        %v2368 = vsel %vm2112, %v1984, %v2240
        %v2369 = vsel %vm2113, %v1985, %v2241
        %v2370 = vsel %vm2114, %v1986, %v2242
        %v2371 = vsel %vm2115, %v1987, %v2243
        %v2372 = vsel %vm2116, %v1988, %v2244
        %v2373 = vsel %vm2117, %v1989, %v2245
        %v2374 = vsel %vm2118, %v1990, %v2246
        %v2375 = vsel %vm2119, %v1991, %v2247
        %v2376 = vsel %vm2120, %v1992, %v2248
        %v2377 = vsel %vm2121, %v1993, %v2249
        %v2378 = vsel %vm2122, %v1994, %v2250
        %v2379 = vsel %vm2123, %v1995, %v2251
        %v2380 = vsel %vm2124, %v1996, %v2252
        %v2381 = vsel %vm2125, %v1997, %v2253
        %v2382 = vsel %vm2126, %v1998, %v2254
        %v2383 = vsel %vm2127, %v1999, %v2255
        %v2384 = vsel %vm2128, %v2000, %v2256
        %v2385 = vsel %vm2129, %v2001, %v2257
        %v2386 = vsel %vm2130, %v2002, %v2258
        %v2387 = vsel %vm2131, %v2003, %v2259
        %v2388 = vsel %vm2132, %v2004, %v2260
        %v2389 = vsel %vm2133, %v2005, %v2261
        %v2390 = vsel %vm2134, %v2006, %v2262
        %v2391 = vsel %vm2135, %v2007, %v2263
        %v2392 = vsel %vm2136, %v2008, %v2264
        %v2393 = vsel %vm2137, %v2009, %v2265
        %v2394 = vsel %vm2138, %v2010, %v2266
        %v2395 = vsel %vm2139, %v2011, %v2267
        %v2396 = vsel %vm2140, %v2012, %v2268
        %v2397 = vsel %vm2141, %v2013, %v2269
        %v2398 = vsel %vm2142, %v2014, %v2270
        %v2399 = vsel %vm2143, %v2015, %v2271
        %v2400 = vsel %vm2144, %v2016, %v2272
        %v2401 = vsel %vm2145, %v2017, %v2273
        %v2402 = vsel %vm2146, %v2018, %v2274
        %v2403 = vsel %vm2147, %v2019, %v2275
        %v2404 = vsel %vm2148, %v2020, %v2276
        %v2405 = vsel %vm2149, %v2021, %v2277
        %v2406 = vsel %vm2150, %v2022, %v2278
        %v2407 = vsel %vm2151, %v2023, %v2279
        %v2408 = vsel %vm2152, %v2024, %v2280
        %v2409 = vsel %vm2153, %v2025, %v2281
        %v2410 = vsel %vm2154, %v2026, %v2282
        %v2411 = vsel %vm2155, %v2027, %v2283
        %v2412 = vsel %vm2156, %v2028, %v2284
        %v2413 = vsel %vm2157, %v2029, %v2285
        %v2414 = vsel %vm2158, %v2030, %v2286
        %v2415 = vsel %vm2159, %v2031, %v2287
        %v2416 = vsel %vm2160, %v2032, %v2288
        %v2417 = vsel %vm2161, %v2033, %v2289
        %v2418 = vsel %vm2162, %v2034, %v2290
        %v2419 = vsel %vm2163, %v2035, %v2291
        %v2420 = vsel %vm2164, %v2036, %v2292
        %v2421 = vsel %vm2165, %v2037, %v2293
        %v2422 = vsel %vm2166, %v2038, %v2294
        %v2423 = vsel %vm2167, %v2039, %v2295
        %v2424 = vsel %vm2168, %v2040, %v2296
        %v2425 = vsel %vm2169, %v2041, %v2297
        %v2426 = vsel %vm2170, %v2042, %v2298
        %v2427 = vsel %vm2171, %v2043, %v2299
        %v2428 = vsel %vm2172, %v2044, %v2300
        %v2429 = vsel %vm2173, %v2045, %v2301
        %v2430 = vsel %vm2174, %v2046, %v2302
        %v2431 = vsel %vm2175, %v2047, %v2303
        %v2432 = vsel %vm2176, %v2048, %v2304
        %v2433 = vsel %vm2177, %v2049, %v2305
        %v2434 = vsel %vm2178, %v2050, %v2306
        %v2435 = vsel %vm2179, %v2051, %v2307
        %v2436 = vpack.c.bf16 %v2309, %v2308
        %v2437 = vpack.c.bf16 %v2311, %v2310
        %v2438 = vpack.c.bf16 %v2313, %v2312
        %v2439 = vpack.c.bf16 %v2315, %v2314
        %v2440 = vpack.c.bf16 %v2317, %v2316
        %v2441 = vpack.c.bf16 %v2319, %v2318
        %v2442 = vpack.c.bf16 %v2321, %v2320
        %v2443 = vpack.c.bf16 %v2323, %v2322
        %v2444 = vpack.c.bf16 %v2325, %v2324
        %v2445 = vpack.c.bf16 %v2327, %v2326
        %v2446 = vpack.c.bf16 %v2329, %v2328
        %v2447 = vpack.c.bf16 %v2331, %v2330
        %v2448 = vpack.c.bf16 %v2333, %v2332
        %v2449 = vpack.c.bf16 %v2335, %v2334
        %v2450 = vpack.c.bf16 %v2337, %v2336
        %v2451 = vpack.c.bf16 %v2339, %v2338
        %v2452 = vpack.c.bf16 %v2341, %v2340
        %v2453 = vpack.c.bf16 %v2343, %v2342
        %v2454 = vpack.c.bf16 %v2345, %v2344
        %v2455 = vpack.c.bf16 %v2347, %v2346
        %v2456 = vpack.c.bf16 %v2349, %v2348
        %v2457 = vpack.c.bf16 %v2351, %v2350
        %v2458 = vpack.c.bf16 %v2353, %v2352
        %v2459 = vpack.c.bf16 %v2355, %v2354
        %v2460 = vpack.c.bf16 %v2357, %v2356
        %v2461 = vpack.c.bf16 %v2359, %v2358
        %v2462 = vpack.c.bf16 %v2361, %v2360
        %v2463 = vpack.c.bf16 %v2363, %v2362
        %v2464 = vpack.c.bf16 %v2365, %v2364
        %v2465 = vpack.c.bf16 %v2367, %v2366
        %v2466 = vpack.c.bf16 %v2369, %v2368
        %v2467 = vpack.c.bf16 %v2371, %v2370
        %v2468 = vpack.c.bf16 %v2373, %v2372
        %v2469 = vpack.c.bf16 %v2375, %v2374
        %v2470 = vpack.c.bf16 %v2377, %v2376
        %v2471 = vpack.c.bf16 %v2379, %v2378
        %v2472 = vpack.c.bf16 %v2381, %v2380
        %v2473 = vpack.c.bf16 %v2383, %v2382
        %v2474 = vpack.c.bf16 %v2385, %v2384
        %v2475 = vpack.c.bf16 %v2387, %v2386
        %v2476 = vpack.c.bf16 %v2389, %v2388
        %v2477 = vpack.c.bf16 %v2391, %v2390
        %v2478 = vpack.c.bf16 %v2393, %v2392
        %v2479 = vpack.c.bf16 %v2395, %v2394
        %v2480 = vpack.c.bf16 %v2397, %v2396
        %v2481 = vpack.c.bf16 %v2399, %v2398
        %v2482 = vpack.c.bf16 %v2401, %v2400
        %v2483 = vpack.c.bf16 %v2403, %v2402
        %v2484 = vpack.c.bf16 %v2405, %v2404
        %v2485 = vpack.c.bf16 %v2407, %v2406
        %v2486 = vpack.c.bf16 %v2409, %v2408
        %v2487 = vpack.c.bf16 %v2411, %v2410
        %v2488 = vpack.c.bf16 %v2413, %v2412
        %v2489 = vpack.c.bf16 %v2415, %v2414
        %v2490 = vpack.c.bf16 %v2417, %v2416
        %v2491 = vpack.c.bf16 %v2419, %v2418
        %v2492 = vpack.c.bf16 %v2421, %v2420
        %v2493 = vpack.c.bf16 %v2423, %v2422
        %v2494 = vpack.c.bf16 %v2425, %v2424
        %v2495 = vpack.c.bf16 %v2427, %v2426
        %v2496 = vpack.c.bf16 %v2429, %v2428
        %v2497 = vpack.c.bf16 %v2431, %v2430
        %v2498 = vpack.c.bf16 %v2433, %v2432
        %v2499 = vpack.c.bf16 %v2435, %v2434
        %v2564 = vunpack.c.l.b16 %v2436
        %v2565 = vunpack.c.h.b16 %v2436
        %v2566 = vunpack.c.l.b16 %v2437
        %v2567 = vunpack.c.h.b16 %v2437
        %v2568 = vunpack.c.l.b16 %v2438
        %v2569 = vunpack.c.h.b16 %v2438
        %v2570 = vunpack.c.l.b16 %v2439
        %v2571 = vunpack.c.h.b16 %v2439
        %v2572 = vunpack.c.l.b16 %v2440
        %v2573 = vunpack.c.h.b16 %v2440
        %v2574 = vunpack.c.l.b16 %v2441
        %v2575 = vunpack.c.h.b16 %v2441
        %v2576 = vunpack.c.l.b16 %v2442
        %v2577 = vunpack.c.h.b16 %v2442
        %v2578 = vunpack.c.l.b16 %v2443
        %v2579 = vunpack.c.h.b16 %v2443
        %v2580 = vunpack.c.l.b16 %v2444
        %v2581 = vunpack.c.h.b16 %v2444
        %v2582 = vunpack.c.l.b16 %v2445
        %v2583 = vunpack.c.h.b16 %v2445
        %v2584 = vunpack.c.l.b16 %v2446
        %v2585 = vunpack.c.h.b16 %v2446
        %v2586 = vunpack.c.l.b16 %v2447
        %v2587 = vunpack.c.h.b16 %v2447
        %v2588 = vunpack.c.l.b16 %v2448
        %v2589 = vunpack.c.h.b16 %v2448
        %v2590 = vunpack.c.l.b16 %v2449
        %v2591 = vunpack.c.h.b16 %v2449
        %v2592 = vunpack.c.l.b16 %v2450
        %v2593 = vunpack.c.h.b16 %v2450
        %v2594 = vunpack.c.l.b16 %v2451
        %v2595 = vunpack.c.h.b16 %v2451
        %v2596 = vunpack.c.l.b16 %v2452
        %v2597 = vunpack.c.h.b16 %v2452
        %v2598 = vunpack.c.l.b16 %v2453
        %v2599 = vunpack.c.h.b16 %v2453
        %v2600 = vunpack.c.l.b16 %v2454
        %v2601 = vunpack.c.h.b16 %v2454
        %v2602 = vunpack.c.l.b16 %v2455
        %v2603 = vunpack.c.h.b16 %v2455
        %v2604 = vunpack.c.l.b16 %v2456
        %v2605 = vunpack.c.h.b16 %v2456
        %v2606 = vunpack.c.l.b16 %v2457
        %v2607 = vunpack.c.h.b16 %v2457
        %v2608 = vunpack.c.l.b16 %v2458
        %v2609 = vunpack.c.h.b16 %v2458
        %v2610 = vunpack.c.l.b16 %v2459
        %v2611 = vunpack.c.h.b16 %v2459
        %v2612 = vunpack.c.l.b16 %v2460
        %v2613 = vunpack.c.h.b16 %v2460
        %v2614 = vunpack.c.l.b16 %v2461
        %v2615 = vunpack.c.h.b16 %v2461
        %v2616 = vunpack.c.l.b16 %v2462
        %v2617 = vunpack.c.h.b16 %v2462
        %v2618 = vunpack.c.l.b16 %v2463
        %v2619 = vunpack.c.h.b16 %v2463
        %v2620 = vunpack.c.l.b16 %v2464
        %v2621 = vunpack.c.h.b16 %v2464
        %v2622 = vunpack.c.l.b16 %v2465
        %v2623 = vunpack.c.h.b16 %v2465
        %v2624 = vunpack.c.l.b16 %v2466
        %v2625 = vunpack.c.h.b16 %v2466
        %v2626 = vunpack.c.l.b16 %v2467
        %v2627 = vunpack.c.h.b16 %v2467
        %v2628 = vunpack.c.l.b16 %v2468
        %v2629 = vunpack.c.h.b16 %v2468
        %v2630 = vunpack.c.l.b16 %v2469
        %v2631 = vunpack.c.h.b16 %v2469
        %v2632 = vunpack.c.l.b16 %v2470
        %v2633 = vunpack.c.h.b16 %v2470
        %v2634 = vunpack.c.l.b16 %v2471
        %v2635 = vunpack.c.h.b16 %v2471
        %v2636 = vunpack.c.l.b16 %v2472
        %v2637 = vunpack.c.h.b16 %v2472
        %v2638 = vunpack.c.l.b16 %v2473
        %v2639 = vunpack.c.h.b16 %v2473
        %v2640 = vunpack.c.l.b16 %v2474
        %v2641 = vunpack.c.h.b16 %v2474
        %v2642 = vunpack.c.l.b16 %v2475
        %v2643 = vunpack.c.h.b16 %v2475
        %v2644 = vunpack.c.l.b16 %v2476
        %v2645 = vunpack.c.h.b16 %v2476
        %v2646 = vunpack.c.l.b16 %v2477
        %v2647 = vunpack.c.h.b16 %v2477
        %v2648 = vunpack.c.l.b16 %v2478
        %v2649 = vunpack.c.h.b16 %v2478
        %v2650 = vunpack.c.l.b16 %v2479
        %v2651 = vunpack.c.h.b16 %v2479
        %v2652 = vunpack.c.l.b16 %v2480
        %v2653 = vunpack.c.h.b16 %v2480
        %v2654 = vunpack.c.l.b16 %v2481
        %v2655 = vunpack.c.h.b16 %v2481
        %v2656 = vunpack.c.l.b16 %v2482
        %v2657 = vunpack.c.h.b16 %v2482
        %v2658 = vunpack.c.l.b16 %v2483
        %v2659 = vunpack.c.h.b16 %v2483
        %v2660 = vunpack.c.l.b16 %v2484
        %v2661 = vunpack.c.h.b16 %v2484
        %v2662 = vunpack.c.l.b16 %v2485
        %v2663 = vunpack.c.h.b16 %v2485
        %v2664 = vunpack.c.l.b16 %v2486
        %v2665 = vunpack.c.h.b16 %v2486
        %v2666 = vunpack.c.l.b16 %v2487
        %v2667 = vunpack.c.h.b16 %v2487
        %v2668 = vunpack.c.l.b16 %v2488
        %v2669 = vunpack.c.h.b16 %v2488
        %v2670 = vunpack.c.l.b16 %v2489
        %v2671 = vunpack.c.h.b16 %v2489
        %v2672 = vunpack.c.l.b16 %v2490
        %v2673 = vunpack.c.h.b16 %v2490
        %v2674 = vunpack.c.l.b16 %v2491
        %v2675 = vunpack.c.h.b16 %v2491
        %v2676 = vunpack.c.l.b16 %v2492
        %v2677 = vunpack.c.h.b16 %v2492
        %v2678 = vunpack.c.l.b16 %v2493
        %v2679 = vunpack.c.h.b16 %v2493
        %v2680 = vunpack.c.l.b16 %v2494
        %v2681 = vunpack.c.h.b16 %v2494
        %v2682 = vunpack.c.l.b16 %v2495
        %v2683 = vunpack.c.h.b16 %v2495
        %v2684 = vunpack.c.l.b16 %v2496
        %v2685 = vunpack.c.h.b16 %v2496
        %v2686 = vunpack.c.l.b16 %v2497
        %v2687 = vunpack.c.h.b16 %v2497
        %v2688 = vunpack.c.l.b16 %v2498
        %v2689 = vunpack.c.h.b16 %v2498
        %v2690 = vunpack.c.l.b16 %v2499
        %v2691 = vunpack.c.h.b16 %v2499
        %v2692 = vpack.c.b16 %v2564, %v2564
        %v2693 = vpack.c.b16 %v2565, %v2565
        %v2694 = vpack.c.b16 %v2566, %v2566
        %v2695 = vpack.c.b16 %v2567, %v2567
        %v2696 = vpack.c.b16 %v2568, %v2568
        %v2697 = vpack.c.b16 %v2569, %v2569
        %v2698 = vpack.c.b16 %v2570, %v2570
        %v2699 = vpack.c.b16 %v2571, %v2571
        %v2700 = vpack.c.b16 %v2572, %v2572
        %v2701 = vpack.c.b16 %v2573, %v2573
        %v2702 = vpack.c.b16 %v2574, %v2574
        %v2703 = vpack.c.b16 %v2575, %v2575
        %v2704 = vpack.c.b16 %v2576, %v2576
        %v2705 = vpack.c.b16 %v2577, %v2577
        %v2706 = vpack.c.b16 %v2578, %v2578
        %v2707 = vpack.c.b16 %v2579, %v2579
        %v2708 = vpack.c.b16 %v2580, %v2580
        %v2709 = vpack.c.b16 %v2581, %v2581
        %v2710 = vpack.c.b16 %v2582, %v2582
        %v2711 = vpack.c.b16 %v2583, %v2583
        %v2712 = vpack.c.b16 %v2584, %v2584
        %v2713 = vpack.c.b16 %v2585, %v2585
        %v2714 = vpack.c.b16 %v2586, %v2586
        %v2715 = vpack.c.b16 %v2587, %v2587
        %v2716 = vpack.c.b16 %v2588, %v2588
        %v2717 = vpack.c.b16 %v2589, %v2589
        %v2718 = vpack.c.b16 %v2590, %v2590
        %v2719 = vpack.c.b16 %v2591, %v2591
        %v2720 = vpack.c.b16 %v2592, %v2592
        %v2721 = vpack.c.b16 %v2593, %v2593
        %v2722 = vpack.c.b16 %v2594, %v2594
        %v2723 = vpack.c.b16 %v2595, %v2595
        %v2724 = vpack.c.b16 %v2596, %v2596
        %v2725 = vpack.c.b16 %v2597, %v2597
        %v2726 = vpack.c.b16 %v2598, %v2598
        %v2727 = vpack.c.b16 %v2599, %v2599
        %v2728 = vpack.c.b16 %v2600, %v2600
        %v2729 = vpack.c.b16 %v2601, %v2601
        %v2730 = vpack.c.b16 %v2602, %v2602
        %v2731 = vpack.c.b16 %v2603, %v2603
        %v2732 = vpack.c.b16 %v2604, %v2604
        %v2733 = vpack.c.b16 %v2605, %v2605
        %v2734 = vpack.c.b16 %v2606, %v2606
        %v2735 = vpack.c.b16 %v2607, %v2607
        %v2736 = vpack.c.b16 %v2608, %v2608
        %v2737 = vpack.c.b16 %v2609, %v2609
        %v2738 = vpack.c.b16 %v2610, %v2610
        %v2739 = vpack.c.b16 %v2611, %v2611
        %v2740 = vpack.c.b16 %v2612, %v2612
        %v2741 = vpack.c.b16 %v2613, %v2613
        %v2742 = vpack.c.b16 %v2614, %v2614
        %v2743 = vpack.c.b16 %v2615, %v2615
        %v2744 = vpack.c.b16 %v2616, %v2616
        %v2745 = vpack.c.b16 %v2617, %v2617
        %v2746 = vpack.c.b16 %v2618, %v2618
        %v2747 = vpack.c.b16 %v2619, %v2619
        %v2748 = vpack.c.b16 %v2620, %v2620
        %v2749 = vpack.c.b16 %v2621, %v2621
        %v2750 = vpack.c.b16 %v2622, %v2622
        %v2751 = vpack.c.b16 %v2623, %v2623
        %v2752 = vpack.c.b16 %v2624, %v2624
        %v2753 = vpack.c.b16 %v2625, %v2625
        %v2754 = vpack.c.b16 %v2626, %v2626
        %v2755 = vpack.c.b16 %v2627, %v2627
        %v2756 = vpack.c.b16 %v2628, %v2628
        %v2757 = vpack.c.b16 %v2629, %v2629
        %v2758 = vpack.c.b16 %v2630, %v2630
        %v2759 = vpack.c.b16 %v2631, %v2631
        %v2760 = vpack.c.b16 %v2632, %v2632
        %v2761 = vpack.c.b16 %v2633, %v2633
        %v2762 = vpack.c.b16 %v2634, %v2634
        %v2763 = vpack.c.b16 %v2635, %v2635
        %v2764 = vpack.c.b16 %v2636, %v2636
        %v2765 = vpack.c.b16 %v2637, %v2637
        %v2766 = vpack.c.b16 %v2638, %v2638
        %v2767 = vpack.c.b16 %v2639, %v2639
        %v2768 = vpack.c.b16 %v2640, %v2640
        %v2769 = vpack.c.b16 %v2641, %v2641
        %v2770 = vpack.c.b16 %v2642, %v2642
        %v2771 = vpack.c.b16 %v2643, %v2643
        %v2772 = vpack.c.b16 %v2644, %v2644
        %v2773 = vpack.c.b16 %v2645, %v2645
        %v2774 = vpack.c.b16 %v2646, %v2646
        %v2775 = vpack.c.b16 %v2647, %v2647
        %v2776 = vpack.c.b16 %v2648, %v2648
        %v2777 = vpack.c.b16 %v2649, %v2649
        %v2778 = vpack.c.b16 %v2650, %v2650
        %v2779 = vpack.c.b16 %v2651, %v2651
        %v2780 = vpack.c.b16 %v2652, %v2652
        %v2781 = vpack.c.b16 %v2653, %v2653
        %v2782 = vpack.c.b16 %v2654, %v2654
        %v2783 = vpack.c.b16 %v2655, %v2655
        %v2784 = vpack.c.b16 %v2656, %v2656
        %v2785 = vpack.c.b16 %v2657, %v2657
        %v2786 = vpack.c.b16 %v2658, %v2658
        %v2787 = vpack.c.b16 %v2659, %v2659
        %v2788 = vpack.c.b16 %v2660, %v2660
        %v2789 = vpack.c.b16 %v2661, %v2661
        %v2790 = vpack.c.b16 %v2662, %v2662
        %v2791 = vpack.c.b16 %v2663, %v2663
        %v2792 = vpack.c.b16 %v2664, %v2664
        %v2793 = vpack.c.b16 %v2665, %v2665
        %v2794 = vpack.c.b16 %v2666, %v2666
        %v2795 = vpack.c.b16 %v2667, %v2667
        %v2796 = vpack.c.b16 %v2668, %v2668
        %v2797 = vpack.c.b16 %v2669, %v2669
        %v2798 = vpack.c.b16 %v2670, %v2670
        %v2799 = vpack.c.b16 %v2671, %v2671
        %v2800 = vpack.c.b16 %v2672, %v2672
        %v2801 = vpack.c.b16 %v2673, %v2673
        %v2802 = vpack.c.b16 %v2674, %v2674
        %v2803 = vpack.c.b16 %v2675, %v2675
        %v2804 = vpack.c.b16 %v2676, %v2676
        %v2805 = vpack.c.b16 %v2677, %v2677
        %v2806 = vpack.c.b16 %v2678, %v2678
        %v2807 = vpack.c.b16 %v2679, %v2679
        %v2808 = vpack.c.b16 %v2680, %v2680
        %v2809 = vpack.c.b16 %v2681, %v2681
        %v2810 = vpack.c.b16 %v2682, %v2682
        %v2811 = vpack.c.b16 %v2683, %v2683
        %v2812 = vpack.c.b16 %v2684, %v2684
        %v2813 = vpack.c.b16 %v2685, %v2685
        %v2814 = vpack.c.b16 %v2686, %v2686
        %v2815 = vpack.c.b16 %v2687, %v2687
        %v2816 = vpack.c.b16 %v2688, %v2688
        %v2817 = vpack.c.b16 %v2689, %v2689
        %v2818 = vpack.c.b16 %v2690, %v2690
        %v2819 = vpack.c.b16 %v2691, %v2691
        %vm2948 = vcmask 60416
        %2949 = vst.msk [vmem:[%s190] sm:$0xf] %vm2948, %v2692
        %2950 = vst.msk [vmem:[%s190 + $0x4] sm:$0xf] %vm2948, %v2693
        %2951 = vst.msk [vmem:[%s190 + $0x8] sm:$0xf] %vm2948, %v2694
        %2952 = vst.msk [vmem:[%s190 + $0xc] sm:$0xf] %vm2948, %v2695
        %2953 = vst.msk [vmem:[%s190 + $0x10] sm:$0xf] %vm2948, %v2696
        %2954 = vst.msk [vmem:[%s190 + $0x14] sm:$0xf] %vm2948, %v2697
        %2955 = vst.msk [vmem:[%s190 + $0x18] sm:$0xf] %vm2948, %v2698
        %2956 = vst.msk [vmem:[%s190 + $0x1c] sm:$0xf] %vm2948, %v2699
        %2957 = vst.msk [vmem:[%s190 + $0x20] sm:$0xf] %vm2948, %v2700
        %2958 = vst.msk [vmem:[%s190 + $0x24] sm:$0xf] %vm2948, %v2701
        %2959 = vst.msk [vmem:[%s190 + $0x28] sm:$0xf] %vm2948, %v2702
        %2960 = vst.msk [vmem:[%s190 + $0x2c] sm:$0xf] %vm2948, %v2703
        %2961 = vst.msk [vmem:[%s190 + $0x30] sm:$0xf] %vm2948, %v2704
        %2962 = vst.msk [vmem:[%s190 + $0x34] sm:$0xf] %vm2948, %v2705
        %2963 = vst.msk [vmem:[%s190 + $0x38] sm:$0xf] %vm2948, %v2706
        %2964 = vst.msk [vmem:[%s190 + $0x3c] sm:$0xf] %vm2948, %v2707
        %2965 = vst.msk [vmem:[%s190 + $0x40] sm:$0xf] %vm2948, %v2708
        %2966 = vst.msk [vmem:[%s190 + $0x44] sm:$0xf] %vm2948, %v2709
        %2967 = vst.msk [vmem:[%s190 + $0x48] sm:$0xf] %vm2948, %v2710
        %2968 = vst.msk [vmem:[%s190 + $0x4c] sm:$0xf] %vm2948, %v2711
        %2969 = vst.msk [vmem:[%s190 + $0x50] sm:$0xf] %vm2948, %v2712
        %2970 = vst.msk [vmem:[%s190 + $0x54] sm:$0xf] %vm2948, %v2713
        %2971 = vst.msk [vmem:[%s190 + $0x58] sm:$0xf] %vm2948, %v2714
        %2972 = vst.msk [vmem:[%s190 + $0x5c] sm:$0xf] %vm2948, %v2715
        %2973 = vst.msk [vmem:[%s190 + $0x60] sm:$0xf] %vm2948, %v2716
        %2974 = vst.msk [vmem:[%s190 + $0x64] sm:$0xf] %vm2948, %v2717
        %2975 = vst.msk [vmem:[%s190 + $0x68] sm:$0xf] %vm2948, %v2718
        %2976 = vst.msk [vmem:[%s190 + $0x6c] sm:$0xf] %vm2948, %v2719
        %2977 = vst.msk [vmem:[%s190 + $0x70] sm:$0xf] %vm2948, %v2720
        %2978 = vst.msk [vmem:[%s190 + $0x74] sm:$0xf] %vm2948, %v2721
        %2979 = vst.msk [vmem:[%s190 + $0x78] sm:$0xf] %vm2948, %v2722
        %2980 = vst.msk [vmem:[%s190 + $0x7c] sm:$0xf] %vm2948, %v2723
        %2981 = vst.msk [vmem:[%s190 + $0x80] sm:$0xf] %vm2948, %v2724
        %2982 = vst.msk [vmem:[%s190 + $0x84] sm:$0xf] %vm2948, %v2725
        %2983 = vst.msk [vmem:[%s190 + $0x88] sm:$0xf] %vm2948, %v2726
        %2984 = vst.msk [vmem:[%s190 + $0x8c] sm:$0xf] %vm2948, %v2727
        %2985 = vst.msk [vmem:[%s190 + $0x90] sm:$0xf] %vm2948, %v2728
        %2986 = vst.msk [vmem:[%s190 + $0x94] sm:$0xf] %vm2948, %v2729
        %2987 = vst.msk [vmem:[%s190 + $0x98] sm:$0xf] %vm2948, %v2730
        %2988 = vst.msk [vmem:[%s190 + $0x9c] sm:$0xf] %vm2948, %v2731
        %2989 = vst.msk [vmem:[%s190 + $0xa0] sm:$0xf] %vm2948, %v2732
        %2990 = vst.msk [vmem:[%s190 + $0xa4] sm:$0xf] %vm2948, %v2733
        %2991 = vst.msk [vmem:[%s190 + $0xa8] sm:$0xf] %vm2948, %v2734
        %2992 = vst.msk [vmem:[%s190 + $0xac] sm:$0xf] %vm2948, %v2735
        %2993 = vst.msk [vmem:[%s190 + $0xb0] sm:$0xf] %vm2948, %v2736
        %2994 = vst.msk [vmem:[%s190 + $0xb4] sm:$0xf] %vm2948, %v2737
        %2995 = vst.msk [vmem:[%s190 + $0xb8] sm:$0xf] %vm2948, %v2738
        %2996 = vst.msk [vmem:[%s190 + $0xbc] sm:$0xf] %vm2948, %v2739
        %2997 = vst.msk [vmem:[%s190 + $0xc0] sm:$0xf] %vm2948, %v2740
        %2998 = vst.msk [vmem:[%s190 + $0xc4] sm:$0xf] %vm2948, %v2741
        %2999 = vst.msk [vmem:[%s190 + $0xc8] sm:$0xf] %vm2948, %v2742
        %3000 = vst.msk [vmem:[%s190 + $0xcc] sm:$0xf] %vm2948, %v2743
        %3001 = vst.msk [vmem:[%s190 + $0xd0] sm:$0xf] %vm2948, %v2744
        %3002 = vst.msk [vmem:[%s190 + $0xd4] sm:$0xf] %vm2948, %v2745
        %3003 = vst.msk [vmem:[%s190 + $0xd8] sm:$0xf] %vm2948, %v2746
        %3004 = vst.msk [vmem:[%s190 + $0xdc] sm:$0xf] %vm2948, %v2747
        %3005 = vst.msk [vmem:[%s190 + $0xe0] sm:$0xf] %vm2948, %v2748
        %3006 = vst.msk [vmem:[%s190 + $0xe4] sm:$0xf] %vm2948, %v2749
        %3007 = vst.msk [vmem:[%s190 + $0xe8] sm:$0xf] %vm2948, %v2750
        %3008 = vst.msk [vmem:[%s190 + $0xec] sm:$0xf] %vm2948, %v2751
        %3009 = vst.msk [vmem:[%s190 + $0xf0] sm:$0xf] %vm2948, %v2752
        %3010 = vst.msk [vmem:[%s190 + $0xf4] sm:$0xf] %vm2948, %v2753
        %3011 = vst.msk [vmem:[%s190 + $0xf8] sm:$0xf] %vm2948, %v2754
        %3012 = vst.msk [vmem:[%s190 + $0xfc] sm:$0xf] %vm2948, %v2755
        %3013 = vst.msk [vmem:[%s190 + $0x100] sm:$0xf] %vm2948, %v2756
        %3014 = vst.msk [vmem:[%s190 + $0x104] sm:$0xf] %vm2948, %v2757
        %3015 = vst.msk [vmem:[%s190 + $0x108] sm:$0xf] %vm2948, %v2758
        %3016 = vst.msk [vmem:[%s190 + $0x10c] sm:$0xf] %vm2948, %v2759
        %3017 = vst.msk [vmem:[%s190 + $0x110] sm:$0xf] %vm2948, %v2760
        %3018 = vst.msk [vmem:[%s190 + $0x114] sm:$0xf] %vm2948, %v2761
        %3019 = vst.msk [vmem:[%s190 + $0x118] sm:$0xf] %vm2948, %v2762
        %3020 = vst.msk [vmem:[%s190 + $0x11c] sm:$0xf] %vm2948, %v2763
        %3021 = vst.msk [vmem:[%s190 + $0x120] sm:$0xf] %vm2948, %v2764
        %3022 = vst.msk [vmem:[%s190 + $0x124] sm:$0xf] %vm2948, %v2765
        %3023 = vst.msk [vmem:[%s190 + $0x128] sm:$0xf] %vm2948, %v2766
        %3024 = vst.msk [vmem:[%s190 + $0x12c] sm:$0xf] %vm2948, %v2767
        %3025 = vst.msk [vmem:[%s190 + $0x130] sm:$0xf] %vm2948, %v2768
        %3026 = vst.msk [vmem:[%s190 + $0x134] sm:$0xf] %vm2948, %v2769
        %3027 = vst.msk [vmem:[%s190 + $0x138] sm:$0xf] %vm2948, %v2770
        %3028 = vst.msk [vmem:[%s190 + $0x13c] sm:$0xf] %vm2948, %v2771
        %3029 = vst.msk [vmem:[%s190 + $0x140] sm:$0xf] %vm2948, %v2772
        %3030 = vst.msk [vmem:[%s190 + $0x144] sm:$0xf] %vm2948, %v2773
        %3031 = vst.msk [vmem:[%s190 + $0x148] sm:$0xf] %vm2948, %v2774
        %3032 = vst.msk [vmem:[%s190 + $0x14c] sm:$0xf] %vm2948, %v2775
        %3033 = vst.msk [vmem:[%s190 + $0x150] sm:$0xf] %vm2948, %v2776
        %3034 = vst.msk [vmem:[%s190 + $0x154] sm:$0xf] %vm2948, %v2777
        %3035 = vst.msk [vmem:[%s190 + $0x158] sm:$0xf] %vm2948, %v2778
        %3036 = vst.msk [vmem:[%s190 + $0x15c] sm:$0xf] %vm2948, %v2779
        %3037 = vst.msk [vmem:[%s190 + $0x160] sm:$0xf] %vm2948, %v2780
        %3038 = vst.msk [vmem:[%s190 + $0x164] sm:$0xf] %vm2948, %v2781
        %3039 = vst.msk [vmem:[%s190 + $0x168] sm:$0xf] %vm2948, %v2782
        %3040 = vst.msk [vmem:[%s190 + $0x16c] sm:$0xf] %vm2948, %v2783
        %3041 = vst.msk [vmem:[%s190 + $0x170] sm:$0xf] %vm2948, %v2784
        %3042 = vst.msk [vmem:[%s190 + $0x174] sm:$0xf] %vm2948, %v2785
        %3043 = vst.msk [vmem:[%s190 + $0x178] sm:$0xf] %vm2948, %v2786
        %3044 = vst.msk [vmem:[%s190 + $0x17c] sm:$0xf] %vm2948, %v2787
        %3045 = vst.msk [vmem:[%s190 + $0x180] sm:$0xf] %vm2948, %v2788
        %3046 = vst.msk [vmem:[%s190 + $0x184] sm:$0xf] %vm2948, %v2789
        %3047 = vst.msk [vmem:[%s190 + $0x188] sm:$0xf] %vm2948, %v2790
        %3048 = vst.msk [vmem:[%s190 + $0x18c] sm:$0xf] %vm2948, %v2791
        %3049 = vst.msk [vmem:[%s190 + $0x190] sm:$0xf] %vm2948, %v2792
        %3050 = vst.msk [vmem:[%s190 + $0x194] sm:$0xf] %vm2948, %v2793
        %3051 = vst.msk [vmem:[%s190 + $0x198] sm:$0xf] %vm2948, %v2794
        %3052 = vst.msk [vmem:[%s190 + $0x19c] sm:$0xf] %vm2948, %v2795
        %3053 = vst.msk [vmem:[%s190 + $0x1a0] sm:$0xf] %vm2948, %v2796
        %3054 = vst.msk [vmem:[%s190 + $0x1a4] sm:$0xf] %vm2948, %v2797
        %3055 = vst.msk [vmem:[%s190 + $0x1a8] sm:$0xf] %vm2948, %v2798
        %3056 = vst.msk [vmem:[%s190 + $0x1ac] sm:$0xf] %vm2948, %v2799
        %3057 = vst.msk [vmem:[%s190 + $0x1b0] sm:$0xf] %vm2948, %v2800
        %3058 = vst.msk [vmem:[%s190 + $0x1b4] sm:$0xf] %vm2948, %v2801
        %3059 = vst.msk [vmem:[%s190 + $0x1b8] sm:$0xf] %vm2948, %v2802
        %3060 = vst.msk [vmem:[%s190 + $0x1bc] sm:$0xf] %vm2948, %v2803
        %3061 = vst.msk [vmem:[%s190 + $0x1c0] sm:$0xf] %vm2948, %v2804
        %3062 = vst.msk [vmem:[%s190 + $0x1c4] sm:$0xf] %vm2948, %v2805
        %3063 = vst.msk [vmem:[%s190 + $0x1c8] sm:$0xf] %vm2948, %v2806
        %3064 = vst.msk [vmem:[%s190 + $0x1cc] sm:$0xf] %vm2948, %v2807
        %3065 = vst.msk [vmem:[%s190 + $0x1d0] sm:$0xf] %vm2948, %v2808
        %3066 = vst.msk [vmem:[%s190 + $0x1d4] sm:$0xf] %vm2948, %v2809
        %3067 = vst.msk [vmem:[%s190 + $0x1d8] sm:$0xf] %vm2948, %v2810
        %3068 = vst.msk [vmem:[%s190 + $0x1dc] sm:$0xf] %vm2948, %v2811
        %3069 = vst.msk [vmem:[%s190 + $0x1e0] sm:$0xf] %vm2948, %v2812
        %3070 = vst.msk [vmem:[%s190 + $0x1e4] sm:$0xf] %vm2948, %v2813
        %3071 = vst.msk [vmem:[%s190 + $0x1e8] sm:$0xf] %vm2948, %v2814
        %3072 = vst.msk [vmem:[%s190 + $0x1ec] sm:$0xf] %vm2948, %v2815
        %3073 = vst.msk [vmem:[%s190 + $0x1f0] sm:$0xf] %vm2948, %v2816
        %3074 = vst.msk [vmem:[%s190 + $0x1f4] sm:$0xf] %vm2948, %v2817
        %3075 = vst.msk [vmem:[%s190 + $0x1f8] sm:$0xf] %vm2948, %v2818
        %3076 = vst.msk [vmem:[%s190 + $0x1fc] sm:$0xf] %vm2948, %v2819
      $region36: #{discriminator128_forward.7} parent=27 // pred_fallthru
        _
      %s3077 = smul.u32 128, %s17
      %p3078 = scmp.lt.s32.totalorder %s3077, 255
      %s3079 = scalar_select %p3078, %s3077, 255
      %s3080 = smul.addr %s3079, 4
      %s3081 = scalar_lea.vmem %s2, %s3080
      // Predicated region
      $region37: #{discriminator128_forward.7} parent=27 // pred_check
        %p3082 = pneg %p97
      $region38: #{discriminator128_forward.7} parent=27 // pred_check_branch
        %3084 = sbr.rel (%p3082) target = $region40
      $region39: #{discriminator128_forward.7} parent=27 // pred_region
        %s3085 = smul.u32 128, %s17
      $region40: #{discriminator128_forward.7} parent=27 // pred_fallthru
        _
    $region28: #{discriminator128_forward.7} parent=5 // pred_fallthru
      _
    %p3086 = scmp.le.s32.totalorder 2, %s8
    // Predicated region
    $region41: #{discriminator128_forward.7} parent=5 // pred_check
      %p3087 = pneg %p3086
    $region42: #{discriminator128_forward.7} parent=5 // pred_check_branch
      %3089 = sbr.rel (%p3087) target = $region44
    $region43: #{discriminator128_forward.7} parent=5 // pred_region
      %s3090 = ssub.s32 %s8, 2
      // Predicated region
      $region45: #{discriminator128_forward.7} parent=43 // pred_check
        %p3091 = pneg %p103
      $region46: #{discriminator128_forward.7} parent=43 // pred_check_branch
        %3093 = sbr.rel (%p3091) target = $region48
      $region47: #{discriminator128_forward.7} parent=43 // pred_region
        %s3094 = smul.u32 128, %s19
        %p3095 = scmp.lt.s32.totalorder %s3094, 255
        %s3096 = scalar_select %p3095, %s3094, 255
        %s3097 = smul.addr %s3096, 4
        %s3098 = scalar_lea.vmem %s2, %s3097
      $region48: #{discriminator128_forward.7} parent=43 // pred_fallthru
        _
    $region44: #{discriminator128_forward.7} parent=5 // pred_fallthru
      _
  $region6: #{discriminator128_forward.7} parent=0 // loop_footer
    %s12 = sadd.s32 1, %s8
  $region7: #{discriminator128_forward.7} parent=0 // loop_footer_branch
    %7 = sbr.rel target = $region3
  $region8: #{discriminator128_forward.7} parent=0 // loop_exit
    _

// kernel: discriminator128_forward.8
$region0: #{discriminator128_forward.8}
  #allocation0 [shape = 'u32[]', space=smem, size = 0x4, offset = 0x4, fixed_abs, tag = 'smem constant byte address 0x4 - core index']
  #allocation1 [shape = 'u32[144,128]{1,0:T(1,128)}', space=vmem, size = 0x12000, scoped, tag = 'internal scratch']
  #allocation2 [shape = 'f32[512,16]{1,0:T(8,128)}', space=vmem, size = 0x40000, scoped, tag = 'scratch operand']
  %s0 = inlined_call_operand.vmem [shape: bf16[512,128], index: 0, kind: input, shape index: {}]
  %s1 = inlined_call_operand.vmem [shape: bf16[128,16], index: 1, kind: input, shape index: {}]
  %s2 = inlined_call_operand.vmem [shape: bf16[512,16], index: 2, kind: output, shape index: {0}]
  %s3 = inlined_call_operand.vmem [shape: f32[1,16], index: 3, kind: output, shape index: {1}]
  %s4 = inlined_call_operand.vmem [shape: f32[1,16], index: 4, kind: output, shape index: {2}]
  %5 = xla_tuple %s2, %s3, %s4
  %s6 = sld [smem:[#allocation0]]
  $region46: #{discriminator128_forward.8} parent=0
    _
  %s8 = ssub.s32 1, %s6
  %s9 = scalar_select 0, %s8, %s6
  // Predicated region
  $region2: #{discriminator128_forward.8} parent=0 // pred_check
    _
  $region3: #{discriminator128_forward.8} parent=0 // pred_check_branch
    %11 = sbr.rel (0) target = $region5
  $region4: #{discriminator128_forward.8} parent=0 // pred_region
    _
  $region5: #{discriminator128_forward.8} parent=0 // pred_fallthru
    _
  // Predicated region
  $region6: #{discriminator128_forward.8} parent=0 // pred_check
    _
  $region7: #{discriminator128_forward.8} parent=0 // pred_check_branch
    %13 = sbr.rel (0) target = $region9
  $region8: #{discriminator128_forward.8} parent=0 // pred_region
    _
  $region9: #{discriminator128_forward.8} parent=0 // pred_fallthru
    _
  %p15 = scmp.eq.s32.totalorder 0, 0
  %p16 = scmp.eq.s32.totalorder 0, 0
  %p17 = pnand %p15, %p16
  %p18 = pneg %p17
  // Predicated region
  $region10: #{discriminator128_forward.8} parent=0 // pred_check
    _
  $region11: #{discriminator128_forward.8} parent=0 // pred_check_branch
    %20 = sbr.rel (%p17) target = $region13
  $region12: #{discriminator128_forward.8} parent=0 // pred_region
    %vm21 = vcmask 122880
    %22 = vst.msk [vmem:[%s3] sm:$0x1] %vm21, 0.0
    %23 = vst.msk [vmem:[%s4] sm:$0x1] %vm21, 0.0
  $region13: #{discriminator128_forward.8} parent=0 // pred_fallthru
    _
  // Predicated region
  $region14: #{discriminator128_forward.8} parent=0 // pred_check
    %p24 = pneg %p16
  $region15: #{discriminator128_forward.8} parent=0 // pred_check_branch
    %26 = sbr.rel (%p24) target = $region17
  $region16: #{discriminator128_forward.8} parent=0 // pred_region
    %vm27 = vcmask 130048
    %28 = vst.msk [vmem:[#allocation2] sm:$0xff] %vm27, 0.0
    %29 = vst.msk [vmem:[#allocation2 + $0x8] sm:$0xff] %vm27, 0.0
    %30 = vst.msk [vmem:[#allocation2 + $0x10] sm:$0xff] %vm27, 0.0
    %31 = vst.msk [vmem:[#allocation2 + $0x18] sm:$0xff] %vm27, 0.0
    %32 = vst.msk [vmem:[#allocation2 + $0x20] sm:$0xff] %vm27, 0.0
    %33 = vst.msk [vmem:[#allocation2 + $0x28] sm:$0xff] %vm27, 0.0
    %34 = vst.msk [vmem:[#allocation2 + $0x30] sm:$0xff] %vm27, 0.0
    %35 = vst.msk [vmem:[#allocation2 + $0x38] sm:$0xff] %vm27, 0.0
    %36 = vst.msk [vmem:[#allocation2 + $0x40] sm:$0xff] %vm27, 0.0
    %37 = vst.msk [vmem:[#allocation2 + $0x48] sm:$0xff] %vm27, 0.0
    %38 = vst.msk [vmem:[#allocation2 + $0x50] sm:$0xff] %vm27, 0.0
    %39 = vst.msk [vmem:[#allocation2 + $0x58] sm:$0xff] %vm27, 0.0
    %40 = vst.msk [vmem:[#allocation2 + $0x60] sm:$0xff] %vm27, 0.0
    %41 = vst.msk [vmem:[#allocation2 + $0x68] sm:$0xff] %vm27, 0.0
    %42 = vst.msk [vmem:[#allocation2 + $0x70] sm:$0xff] %vm27, 0.0
    %43 = vst.msk [vmem:[#allocation2 + $0x78] sm:$0xff] %vm27, 0.0
    %44 = vst.msk [vmem:[#allocation2 + $0x80] sm:$0xff] %vm27, 0.0
    %45 = vst.msk [vmem:[#allocation2 + $0x88] sm:$0xff] %vm27, 0.0
    %46 = vst.msk [vmem:[#allocation2 + $0x90] sm:$0xff] %vm27, 0.0
    %47 = vst.msk [vmem:[#allocation2 + $0x98] sm:$0xff] %vm27, 0.0
    %48 = vst.msk [vmem:[#allocation2 + $0xa0] sm:$0xff] %vm27, 0.0
    %49 = vst.msk [vmem:[#allocation2 + $0xa8] sm:$0xff] %vm27, 0.0
    %50 = vst.msk [vmem:[#allocation2 + $0xb0] sm:$0xff] %vm27, 0.0
    %51 = vst.msk [vmem:[#allocation2 + $0xb8] sm:$0xff] %vm27, 0.0
    %52 = vst.msk [vmem:[#allocation2 + $0xc0] sm:$0xff] %vm27, 0.0
    %53 = vst.msk [vmem:[#allocation2 + $0xc8] sm:$0xff] %vm27, 0.0
    %54 = vst.msk [vmem:[#allocation2 + $0xd0] sm:$0xff] %vm27, 0.0
    %55 = vst.msk [vmem:[#allocation2 + $0xd8] sm:$0xff] %vm27, 0.0
    %56 = vst.msk [vmem:[#allocation2 + $0xe0] sm:$0xff] %vm27, 0.0
    %57 = vst.msk [vmem:[#allocation2 + $0xe8] sm:$0xff] %vm27, 0.0
    %58 = vst.msk [vmem:[#allocation2 + $0xf0] sm:$0xff] %vm27, 0.0
    %59 = vst.msk [vmem:[#allocation2 + $0xf8] sm:$0xff] %vm27, 0.0
    %60 = vst.msk [vmem:[#allocation2 + $0x100] sm:$0xff] %vm27, 0.0
    %61 = vst.msk [vmem:[#allocation2 + $0x108] sm:$0xff] %vm27, 0.0
    %62 = vst.msk [vmem:[#allocation2 + $0x110] sm:$0xff] %vm27, 0.0
    %63 = vst.msk [vmem:[#allocation2 + $0x118] sm:$0xff] %vm27, 0.0
    %64 = vst.msk [vmem:[#allocation2 + $0x120] sm:$0xff] %vm27, 0.0
    %65 = vst.msk [vmem:[#allocation2 + $0x128] sm:$0xff] %vm27, 0.0
    %66 = vst.msk [vmem:[#allocation2 + $0x130] sm:$0xff] %vm27, 0.0
    %67 = vst.msk [vmem:[#allocation2 + $0x138] sm:$0xff] %vm27, 0.0
    %68 = vst.msk [vmem:[#allocation2 + $0x140] sm:$0xff] %vm27, 0.0
    %69 = vst.msk [vmem:[#allocation2 + $0x148] sm:$0xff] %vm27, 0.0
    %70 = vst.msk [vmem:[#allocation2 + $0x150] sm:$0xff] %vm27, 0.0
    %71 = vst.msk [vmem:[#allocation2 + $0x158] sm:$0xff] %vm27, 0.0
    %72 = vst.msk [vmem:[#allocation2 + $0x160] sm:$0xff] %vm27, 0.0
    %73 = vst.msk [vmem:[#allocation2 + $0x168] sm:$0xff] %vm27, 0.0
    %74 = vst.msk [vmem:[#allocation2 + $0x170] sm:$0xff] %vm27, 0.0
    %75 = vst.msk [vmem:[#allocation2 + $0x178] sm:$0xff] %vm27, 0.0
    %76 = vst.msk [vmem:[#allocation2 + $0x180] sm:$0xff] %vm27, 0.0
    %77 = vst.msk [vmem:[#allocation2 + $0x188] sm:$0xff] %vm27, 0.0
    %78 = vst.msk [vmem:[#allocation2 + $0x190] sm:$0xff] %vm27, 0.0
    %79 = vst.msk [vmem:[#allocation2 + $0x198] sm:$0xff] %vm27, 0.0
    %80 = vst.msk [vmem:[#allocation2 + $0x1a0] sm:$0xff] %vm27, 0.0
    %81 = vst.msk [vmem:[#allocation2 + $0x1a8] sm:$0xff] %vm27, 0.0
    %82 = vst.msk [vmem:[#allocation2 + $0x1b0] sm:$0xff] %vm27, 0.0
    %83 = vst.msk [vmem:[#allocation2 + $0x1b8] sm:$0xff] %vm27, 0.0
    %84 = vst.msk [vmem:[#allocation2 + $0x1c0] sm:$0xff] %vm27, 0.0
    %85 = vst.msk [vmem:[#allocation2 + $0x1c8] sm:$0xff] %vm27, 0.0
    %86 = vst.msk [vmem:[#allocation2 + $0x1d0] sm:$0xff] %vm27, 0.0
    %87 = vst.msk [vmem:[#allocation2 + $0x1d8] sm:$0xff] %vm27, 0.0
    %88 = vst.msk [vmem:[#allocation2 + $0x1e0] sm:$0xff] %vm27, 0.0
    %89 = vst.msk [vmem:[#allocation2 + $0x1e8] sm:$0xff] %vm27, 0.0
    %90 = vst.msk [vmem:[#allocation2 + $0x1f0] sm:$0xff] %vm27, 0.0
    %91 = vst.msk [vmem:[#allocation2 + $0x1f8] sm:$0xff] %vm27, 0.0
  $region17: #{discriminator128_forward.8} parent=0 // pred_fallthru
    _
  %v92 = vld [vmem:[#allocation2] sm:$0xff]
  %v93 = vld [vmem:[#allocation2 + $0x8] sm:$0xff]
  %v94 = vld [vmem:[#allocation2 + $0x10] sm:$0xff]
  %v95 = vld [vmem:[#allocation2 + $0x18] sm:$0xff]
  %v96 = vld [vmem:[#allocation2 + $0x20] sm:$0xff]
  %v97 = vld [vmem:[#allocation2 + $0x28] sm:$0xff]
  %v98 = vld [vmem:[#allocation2 + $0x30] sm:$0xff]
  %v99 = vld [vmem:[#allocation2 + $0x38] sm:$0xff]
  %v100 = vld [vmem:[#allocation2 + $0x40] sm:$0xff]
  %v101 = vld [vmem:[#allocation2 + $0x48] sm:$0xff]
  %v102 = vld [vmem:[#allocation2 + $0x50] sm:$0xff]
  %v103 = vld [vmem:[#allocation2 + $0x58] sm:$0xff]
  %v104 = vld [vmem:[#allocation2 + $0x60] sm:$0xff]
  %v105 = vld [vmem:[#allocation2 + $0x68] sm:$0xff]
  %v106 = vld [vmem:[#allocation2 + $0x70] sm:$0xff]
  %v107 = vld [vmem:[#allocation2 + $0x78] sm:$0xff]
  %v108 = vld [vmem:[#allocation2 + $0x80] sm:$0xff]
  %v109 = vld [vmem:[#allocation2 + $0x88] sm:$0xff]
  %v110 = vld [vmem:[#allocation2 + $0x90] sm:$0xff]
  %v111 = vld [vmem:[#allocation2 + $0x98] sm:$0xff]
  %v112 = vld [vmem:[#allocation2 + $0xa0] sm:$0xff]
  %v113 = vld [vmem:[#allocation2 + $0xa8] sm:$0xff]
  %v114 = vld [vmem:[#allocation2 + $0xb0] sm:$0xff]
  %v115 = vld [vmem:[#allocation2 + $0xb8] sm:$0xff]
  %v116 = vld [vmem:[#allocation2 + $0xc0] sm:$0xff]
  %v117 = vld [vmem:[#allocation2 + $0xc8] sm:$0xff]
  %v118 = vld [vmem:[#allocation2 + $0xd0] sm:$0xff]
  %v119 = vld [vmem:[#allocation2 + $0xd8] sm:$0xff]
  %v120 = vld [vmem:[#allocation2 + $0xe0] sm:$0xff]
  %v121 = vld [vmem:[#allocation2 + $0xe8] sm:$0xff]
  %v122 = vld [vmem:[#allocation2 + $0xf0] sm:$0xff]
  %v123 = vld [vmem:[#allocation2 + $0xf8] sm:$0xff]
  %v124 = vld [vmem:[#allocation2 + $0x100] sm:$0xff]
  %v125 = vld [vmem:[#allocation2 + $0x108] sm:$0xff]
  %v126 = vld [vmem:[#allocation2 + $0x110] sm:$0xff]
  %v127 = vld [vmem:[#allocation2 + $0x118] sm:$0xff]
  %v128 = vld [vmem:[#allocation2 + $0x120] sm:$0xff]
  %v129 = vld [vmem:[#allocation2 + $0x128] sm:$0xff]
  %v130 = vld [vmem:[#allocation2 + $0x130] sm:$0xff]
  %v131 = vld [vmem:[#allocation2 + $0x138] sm:$0xff]
  %v132 = vld [vmem:[#allocation2 + $0x140] sm:$0xff]
  %v133 = vld [vmem:[#allocation2 + $0x148] sm:$0xff]
  %v134 = vld [vmem:[#allocation2 + $0x150] sm:$0xff]
  %v135 = vld [vmem:[#allocation2 + $0x158] sm:$0xff]
  %v136 = vld [vmem:[#allocation2 + $0x160] sm:$0xff]
  %v137 = vld [vmem:[#allocation2 + $0x168] sm:$0xff]
  %v138 = vld [vmem:[#allocation2 + $0x170] sm:$0xff]
  %v139 = vld [vmem:[#allocation2 + $0x178] sm:$0xff]
  %v140 = vld [vmem:[#allocation2 + $0x180] sm:$0xff]
  %v141 = vld [vmem:[#allocation2 + $0x188] sm:$0xff]
  %v142 = vld [vmem:[#allocation2 + $0x190] sm:$0xff]
  %v143 = vld [vmem:[#allocation2 + $0x198] sm:$0xff]
  %v144 = vld [vmem:[#allocation2 + $0x1a0] sm:$0xff]
  %v145 = vld [vmem:[#allocation2 + $0x1a8] sm:$0xff]
  %v146 = vld [vmem:[#allocation2 + $0x1b0] sm:$0xff]
  %v147 = vld [vmem:[#allocation2 + $0x1b8] sm:$0xff]
  %v148 = vld [vmem:[#allocation2 + $0x1c0] sm:$0xff]
  %v149 = vld [vmem:[#allocation2 + $0x1c8] sm:$0xff]
  %v150 = vld [vmem:[#allocation2 + $0x1d0] sm:$0xff]
  %v151 = vld [vmem:[#allocation2 + $0x1d8] sm:$0xff]
  %v152 = vld [vmem:[#allocation2 + $0x1e0] sm:$0xff]
  %v153 = vld [vmem:[#allocation2 + $0x1e8] sm:$0xff]
  %v154 = vld [vmem:[#allocation2 + $0x1f0] sm:$0xff]
  %v155 = vld [vmem:[#allocation2 + $0x1f8] sm:$0xff]
  %v156 = vld [vmem:[%s0] sm:$0xf]
  %v157 = vld [vmem:[%s0 + $0x4] sm:$0xf]
  %v158 = vld [vmem:[%s0 + $0x8] sm:$0xf]
  %v159 = vld [vmem:[%s0 + $0xc] sm:$0xf]
  %v160 = vld [vmem:[%s0 + $0x10] sm:$0xf]
  %v161 = vld [vmem:[%s0 + $0x14] sm:$0xf]
  %v162 = vld [vmem:[%s0 + $0x18] sm:$0xf]
  %v163 = vld [vmem:[%s0 + $0x1c] sm:$0xf]
  %v164 = vld [vmem:[%s0 + $0x20] sm:$0xf]
  %v165 = vld [vmem:[%s0 + $0x24] sm:$0xf]
  %v166 = vld [vmem:[%s0 + $0x28] sm:$0xf]
  %v167 = vld [vmem:[%s0 + $0x2c] sm:$0xf]
  %v168 = vld [vmem:[%s0 + $0x30] sm:$0xf]
  %v169 = vld [vmem:[%s0 + $0x34] sm:$0xf]
  %v170 = vld [vmem:[%s0 + $0x38] sm:$0xf]
  %v171 = vld [vmem:[%s0 + $0x3c] sm:$0xf]
  %v172 = vld [vmem:[%s0 + $0x40] sm:$0xf]
  %v173 = vld [vmem:[%s0 + $0x44] sm:$0xf]
  %v174 = vld [vmem:[%s0 + $0x48] sm:$0xf]
  %v175 = vld [vmem:[%s0 + $0x4c] sm:$0xf]
  %v176 = vld [vmem:[%s0 + $0x50] sm:$0xf]
  %v177 = vld [vmem:[%s0 + $0x54] sm:$0xf]
  %v178 = vld [vmem:[%s0 + $0x58] sm:$0xf]
  %v179 = vld [vmem:[%s0 + $0x5c] sm:$0xf]
  %v180 = vld [vmem:[%s0 + $0x60] sm:$0xf]
  %v181 = vld [vmem:[%s0 + $0x64] sm:$0xf]
  %v182 = vld [vmem:[%s0 + $0x68] sm:$0xf]
  %v183 = vld [vmem:[%s0 + $0x6c] sm:$0xf]
  %v184 = vld [vmem:[%s0 + $0x70] sm:$0xf]
  %v185 = vld [vmem:[%s0 + $0x74] sm:$0xf]
  %v186 = vld [vmem:[%s0 + $0x78] sm:$0xf]
  %v187 = vld [vmem:[%s0 + $0x7c] sm:$0xf]
  %v188 = vld [vmem:[%s0 + $0x80] sm:$0xf]
  %v189 = vld [vmem:[%s0 + $0x84] sm:$0xf]
  %v190 = vld [vmem:[%s0 + $0x88] sm:$0xf]
  %v191 = vld [vmem:[%s0 + $0x8c] sm:$0xf]
  %v192 = vld [vmem:[%s0 + $0x90] sm:$0xf]
  %v193 = vld [vmem:[%s0 + $0x94] sm:$0xf]
  %v194 = vld [vmem:[%s0 + $0x98] sm:$0xf]
  %v195 = vld [vmem:[%s0 + $0x9c] sm:$0xf]
  %v196 = vld [vmem:[%s0 + $0xa0] sm:$0xf]
  %v197 = vld [vmem:[%s0 + $0xa4] sm:$0xf]
  %v198 = vld [vmem:[%s0 + $0xa8] sm:$0xf]
  %v199 = vld [vmem:[%s0 + $0xac] sm:$0xf]
  %v200 = vld [vmem:[%s0 + $0xb0] sm:$0xf]
  %v201 = vld [vmem:[%s0 + $0xb4] sm:$0xf]
  %v202 = vld [vmem:[%s0 + $0xb8] sm:$0xf]
  %v203 = vld [vmem:[%s0 + $0xbc] sm:$0xf]
  %v204 = vld [vmem:[%s0 + $0xc0] sm:$0xf]
  %v205 = vld [vmem:[%s0 + $0xc4] sm:$0xf]
  %v206 = vld [vmem:[%s0 + $0xc8] sm:$0xf]
  %v207 = vld [vmem:[%s0 + $0xcc] sm:$0xf]
  %v208 = vld [vmem:[%s0 + $0xd0] sm:$0xf]
  %v209 = vld [vmem:[%s0 + $0xd4] sm:$0xf]
  %v210 = vld [vmem:[%s0 + $0xd8] sm:$0xf]
  %v211 = vld [vmem:[%s0 + $0xdc] sm:$0xf]
  %v212 = vld [vmem:[%s0 + $0xe0] sm:$0xf]
  %v213 = vld [vmem:[%s0 + $0xe4] sm:$0xf]
  %v214 = vld [vmem:[%s0 + $0xe8] sm:$0xf]
  %v215 = vld [vmem:[%s0 + $0xec] sm:$0xf]
  %v216 = vld [vmem:[%s0 + $0xf0] sm:$0xf]
  %v217 = vld [vmem:[%s0 + $0xf4] sm:$0xf]
  %v218 = vld [vmem:[%s0 + $0xf8] sm:$0xf]
  %v219 = vld [vmem:[%s0 + $0xfc] sm:$0xf]
  %v220 = vld [vmem:[%s1] sm:$0xf]
  %v221 = vld [vmem:[%s1 + $0x4] sm:$0xf]
  %v222 = vld [vmem:[%s1 + $0x8] sm:$0xf]
  %v223 = vld [vmem:[%s1 + $0xc] sm:$0xf]
  %v224 = vld [vmem:[%s1 + $0x10] sm:$0xf]
  %v225 = vld [vmem:[%s1 + $0x14] sm:$0xf]
  %v226 = vld [vmem:[%s1 + $0x18] sm:$0xf]
  %v227 = vld [vmem:[%s1 + $0x1c] sm:$0xf]
  %v228 = vld [vmem:[%s1 + $0x20] sm:$0xf]
  %v229 = vld [vmem:[%s1 + $0x24] sm:$0xf]
  %v230 = vld [vmem:[%s1 + $0x28] sm:$0xf]
  %v231 = vld [vmem:[%s1 + $0x2c] sm:$0xf]
  %v232 = vld [vmem:[%s1 + $0x30] sm:$0xf]
  %v233 = vld [vmem:[%s1 + $0x34] sm:$0xf]
  %v234 = vld [vmem:[%s1 + $0x38] sm:$0xf]
  %v235 = vld [vmem:[%s1 + $0x3c] sm:$0xf]
  %v300 = vunpack.c.l.b16 %v156
  %v301 = vunpack.c.l.b16 %v157
  %v302 = vunpack.c.l.b16 %v158
  %v303 = vunpack.c.l.b16 %v159
  %v304 = vunpack.c.l.b16 %v160
  %v305 = vunpack.c.l.b16 %v161
  %v306 = vunpack.c.l.b16 %v162
  %v307 = vunpack.c.l.b16 %v163
  %v308 = vunpack.c.l.b16 %v164
  %v309 = vunpack.c.l.b16 %v165
  %v310 = vunpack.c.l.b16 %v166
  %v311 = vunpack.c.l.b16 %v167
  %v312 = vunpack.c.l.b16 %v168
  %v313 = vunpack.c.l.b16 %v169
  %v314 = vunpack.c.l.b16 %v170
  %v315 = vunpack.c.l.b16 %v171
  %v316 = vunpack.c.l.b16 %v172
  %v317 = vunpack.c.l.b16 %v173
  %v318 = vunpack.c.l.b16 %v174
  %v319 = vunpack.c.l.b16 %v175
  %v320 = vunpack.c.l.b16 %v176
  %v321 = vunpack.c.l.b16 %v177
  %v322 = vunpack.c.l.b16 %v178
  %v323 = vunpack.c.l.b16 %v179
  %v324 = vunpack.c.l.b16 %v180
  %v325 = vunpack.c.l.b16 %v181
  %v326 = vunpack.c.l.b16 %v182
  %v327 = vunpack.c.l.b16 %v183
  %v328 = vunpack.c.l.b16 %v184
  %v329 = vunpack.c.l.b16 %v185
  %v330 = vunpack.c.l.b16 %v186
  %v331 = vunpack.c.l.b16 %v187
  %v332 = vunpack.c.l.b16 %v188
  %v333 = vunpack.c.l.b16 %v189
  %v334 = vunpack.c.l.b16 %v190
  %v335 = vunpack.c.l.b16 %v191
  %v336 = vunpack.c.l.b16 %v192
  %v337 = vunpack.c.l.b16 %v193
  %v338 = vunpack.c.l.b16 %v194
  %v339 = vunpack.c.l.b16 %v195
  %v340 = vunpack.c.l.b16 %v196
  %v341 = vunpack.c.l.b16 %v197
  %v342 = vunpack.c.l.b16 %v198
  %v343 = vunpack.c.l.b16 %v199
  %v344 = vunpack.c.l.b16 %v200
  %v345 = vunpack.c.l.b16 %v201
  %v346 = vunpack.c.l.b16 %v202
  %v347 = vunpack.c.l.b16 %v203
  %v348 = vunpack.c.l.b16 %v204
  %v349 = vunpack.c.l.b16 %v205
  %v350 = vunpack.c.l.b16 %v206
  %v351 = vunpack.c.l.b16 %v207
  %v352 = vunpack.c.l.b16 %v208
  %v353 = vunpack.c.l.b16 %v209
  %v354 = vunpack.c.l.b16 %v210
  %v355 = vunpack.c.l.b16 %v211
  %v356 = vunpack.c.l.b16 %v212
  %v357 = vunpack.c.l.b16 %v213
  %v358 = vunpack.c.l.b16 %v214
  %v359 = vunpack.c.l.b16 %v215
  %v360 = vunpack.c.l.b16 %v216
  %v361 = vunpack.c.l.b16 %v217
  %v362 = vunpack.c.l.b16 %v218
  %v363 = vunpack.c.l.b16 %v219
  %v364 = vpack.c.b16 %v301, %v300
  %v365 = vpack.c.b16 %v303, %v302
  %v366 = vpack.c.b16 %v305, %v304
  %v367 = vpack.c.b16 %v307, %v306
  %v368 = vpack.c.b16 %v309, %v308
  %v369 = vpack.c.b16 %v311, %v310
  %v370 = vpack.c.b16 %v313, %v312
  %v371 = vpack.c.b16 %v315, %v314
  %v372 = vpack.c.b16 %v317, %v316
  %v373 = vpack.c.b16 %v319, %v318
  %v374 = vpack.c.b16 %v321, %v320
  %v375 = vpack.c.b16 %v323, %v322
  %v376 = vpack.c.b16 %v325, %v324
  %v377 = vpack.c.b16 %v327, %v326
  %v378 = vpack.c.b16 %v329, %v328
  %v379 = vpack.c.b16 %v331, %v330
  %v380 = vpack.c.b16 %v333, %v332
  %v381 = vpack.c.b16 %v335, %v334
  %v382 = vpack.c.b16 %v337, %v336
  %v383 = vpack.c.b16 %v339, %v338
  %v384 = vpack.c.b16 %v341, %v340
  %v385 = vpack.c.b16 %v343, %v342
  %v386 = vpack.c.b16 %v345, %v344
  %v387 = vpack.c.b16 %v347, %v346
  %v388 = vpack.c.b16 %v349, %v348
  %v389 = vpack.c.b16 %v351, %v350
  %v390 = vpack.c.b16 %v353, %v352
  %v391 = vpack.c.b16 %v355, %v354
  %v392 = vpack.c.b16 %v357, %v356
  %v393 = vpack.c.b16 %v359, %v358
  %v394 = vpack.c.b16 %v361, %v360
  %v395 = vpack.c.b16 %v363, %v362
  %v444 = vunpack.c.l.b16 %v220
  %v445 = vunpack.c.l.b16 %v221
  %v446 = vunpack.c.l.b16 %v222
  %v447 = vunpack.c.l.b16 %v223
  %v448 = vunpack.c.l.b16 %v224
  %v449 = vunpack.c.l.b16 %v225
  %v450 = vunpack.c.l.b16 %v226
  %v451 = vunpack.c.l.b16 %v227
  %v452 = vunpack.c.l.b16 %v228
  %v453 = vunpack.c.l.b16 %v229
  %v454 = vunpack.c.l.b16 %v230
  %v455 = vunpack.c.l.b16 %v231
  %v456 = vunpack.c.l.b16 %v232
  %v457 = vunpack.c.l.b16 %v233
  %v458 = vunpack.c.l.b16 %v234
  %v459 = vunpack.c.l.b16 %v235
  %v460 = vpack.c.b16 %v445, %v444
  %v461 = vpack.c.b16 %v447, %v446
  %v462 = vpack.c.b16 %v449, %v448
  %v463 = vpack.c.b16 %v451, %v450
  %v464 = vpack.c.b16 %v453, %v452
  %v465 = vpack.c.b16 %v455, %v454
  %v466 = vpack.c.b16 %v457, %v456
  %v467 = vpack.c.b16 %v459, %v458
  %476 = vmatprep.subr.bf16.mxu0 0
  %477 = vmatpush1.bf16.msra.mxu0 %v467
  %478 = vmatprep.subr.bf16.mxu0 0
  %479 = vmatpush1.bf16.msra.mxu0 %v466
  %480 = vmatprep.subr.bf16.mxu0 0
  %481 = vmatpush1.bf16.msra.mxu0 %v465
  %482 = vmatprep.subr.bf16.mxu0 0
  %483 = vmatpush1.bf16.msra.mxu0 %v464
  %484 = vmatprep.subr.bf16.mxu0 0
  %485 = vmatpush1.bf16.msra.mxu0 %v463
  %486 = vmatprep.subr.bf16.mxu0 0
  %487 = vmatpush1.bf16.msra.mxu0 %v462
  %488 = vmatprep.subr.bf16.mxu0 0
  %489 = vmatpush1.bf16.msra.mxu0 %v461
  %490 = vmatprep.subr.bf16.mxu0 0
  %491 = vmatpush1.bf16.msra.mxu0 %v460
  %492 = vmatprep.subr.bf16.mxu0 0
  %493 = vmatpush2.bf16.msra.mxu0 0
  %494 = vmatprep.subr.bf16.mxu0 0
  %495 = vmatpush2.bf16.msra.mxu0 0
  %496 = vmatprep.subr.bf16.mxu0 0
  %497 = vmatpush2.bf16.msra.mxu0 0
  %498 = vmatprep.subr.bf16.mxu0 0
  %499 = vmatpush2.bf16.msra.mxu0 0
  %500 = vmatprep.subr.bf16.mxu0 0
  %501 = vmatpush2.bf16.msra.mxu0 0
  %502 = vmatprep.subr.bf16.mxu0 0
  %503 = vmatpush2.bf16.msra.mxu0 0
  %504 = vmatprep.subr.bf16.mxu0 0
  %505 = vmatpush2.bf16.msra.mxu0 0
  %506 = vmatprep.subr.bf16.mxu0 0
  %507 = vmatpush2.bf16.msra.mxu0 0
  %508 = vmatprep.mubr.bf16.mxu0 0
  %509 = vmatmul.mubr.bf16.gmra.mxu0 %v364
  %v510 = vpop.f32.mrf.mxu0
  %v511 = vadd.f32 0.0, %v510
  %v512 = vpop.f32.mrf.mxu0
  %v513 = vpop.f32.mrf.mxu0
  %v514 = vadd.f32 0.0, %v513
  %v515 = vpop.f32.mrf.mxu0
  %516 = vmatprep.mubr.bf16.mxu0 0
  %517 = vmatmul.mubr.bf16.gmra.mxu0 %v365
  %v518 = vpop.f32.mrf.mxu0
  %v519 = vadd.f32 0.0, %v518
  %v520 = vpop.f32.mrf.mxu0
  %v521 = vpop.f32.mrf.mxu0
  %v522 = vadd.f32 0.0, %v521
  %v523 = vpop.f32.mrf.mxu0
  %524 = vmatprep.mubr.bf16.mxu0 0
  %525 = vmatmul.mubr.bf16.gmra.mxu0 %v366
  %v526 = vpop.f32.mrf.mxu0
  %v527 = vadd.f32 0.0, %v526
  %v528 = vpop.f32.mrf.mxu0
  %v529 = vpop.f32.mrf.mxu0
  %v530 = vadd.f32 0.0, %v529
  %v531 = vpop.f32.mrf.mxu0
  %532 = vmatprep.mubr.bf16.mxu0 0
  %533 = vmatmul.mubr.bf16.gmra.mxu0 %v367
  %v534 = vpop.f32.mrf.mxu0
  %v535 = vadd.f32 0.0, %v534
  %v536 = vpop.f32.mrf.mxu0
  %v537 = vpop.f32.mrf.mxu0
  %v538 = vadd.f32 0.0, %v537
  %v539 = vpop.f32.mrf.mxu0
  %540 = vmatprep.mubr.bf16.mxu0 0
  %541 = vmatmul.mubr.bf16.gmra.mxu0 %v368
  %v542 = vpop.f32.mrf.mxu0
  %v543 = vadd.f32 0.0, %v542
  %v544 = vpop.f32.mrf.mxu0
  %v545 = vpop.f32.mrf.mxu0
  %v546 = vadd.f32 0.0, %v545
  %v547 = vpop.f32.mrf.mxu0
  %548 = vmatprep.mubr.bf16.mxu0 0
  %549 = vmatmul.mubr.bf16.gmra.mxu0 %v369
  %v550 = vpop.f32.mrf.mxu0
  %v551 = vadd.f32 0.0, %v550
  %v552 = vpop.f32.mrf.mxu0
  %v553 = vpop.f32.mrf.mxu0
  %v554 = vadd.f32 0.0, %v553
  %v555 = vpop.f32.mrf.mxu0
  %556 = vmatprep.mubr.bf16.mxu0 0
  %557 = vmatmul.mubr.bf16.gmra.mxu0 %v370
  %v558 = vpop.f32.mrf.mxu0
  %v559 = vadd.f32 0.0, %v558
  %v560 = vpop.f32.mrf.mxu0
  %v561 = vpop.f32.mrf.mxu0
  %v562 = vadd.f32 0.0, %v561
  %v563 = vpop.f32.mrf.mxu0
  %564 = vmatprep.mubr.bf16.mxu0 0
  %565 = vmatmul.mubr.bf16.gmra.mxu0 %v371
  %v566 = vpop.f32.mrf.mxu0
  %v567 = vadd.f32 0.0, %v566
  %v568 = vpop.f32.mrf.mxu0
  %v569 = vpop.f32.mrf.mxu0
  %v570 = vadd.f32 0.0, %v569
  %v571 = vpop.f32.mrf.mxu0
  %572 = vmatprep.mubr.bf16.mxu0 0
  %573 = vmatmul.mubr.bf16.gmra.mxu0 %v372
  %v574 = vpop.f32.mrf.mxu0
  %v575 = vadd.f32 0.0, %v574
  %v576 = vpop.f32.mrf.mxu0
  %v577 = vpop.f32.mrf.mxu0
  %v578 = vadd.f32 0.0, %v577
  %v579 = vpop.f32.mrf.mxu0
  %580 = vmatprep.mubr.bf16.mxu0 0
  %581 = vmatmul.mubr.bf16.gmra.mxu0 %v373
  %v582 = vpop.f32.mrf.mxu0
  %v583 = vadd.f32 0.0, %v582
  %v584 = vpop.f32.mrf.mxu0
  %v585 = vpop.f32.mrf.mxu0
  %v586 = vadd.f32 0.0, %v585
  %v587 = vpop.f32.mrf.mxu0
  %588 = vmatprep.mubr.bf16.mxu0 0
  %589 = vmatmul.mubr.bf16.gmra.mxu0 %v374
  %v590 = vpop.f32.mrf.mxu0
  %v591 = vadd.f32 0.0, %v590
  %v592 = vpop.f32.mrf.mxu0
  %v593 = vpop.f32.mrf.mxu0
  %v594 = vadd.f32 0.0, %v593
  %v595 = vpop.f32.mrf.mxu0
  %596 = vmatprep.mubr.bf16.mxu0 0
  %597 = vmatmul.mubr.bf16.gmra.mxu0 %v375
  %v598 = vpop.f32.mrf.mxu0
  %v599 = vadd.f32 0.0, %v598
  %v600 = vpop.f32.mrf.mxu0
  %v601 = vpop.f32.mrf.mxu0
  %v602 = vadd.f32 0.0, %v601
  %v603 = vpop.f32.mrf.mxu0
  %604 = vmatprep.mubr.bf16.mxu0 0
  %605 = vmatmul.mubr.bf16.gmra.mxu0 %v376
  %v606 = vpop.f32.mrf.mxu0
  %v607 = vadd.f32 0.0, %v606
  %v608 = vpop.f32.mrf.mxu0
  %v609 = vpop.f32.mrf.mxu0
  %v610 = vadd.f32 0.0, %v609
  %v611 = vpop.f32.mrf.mxu0
  %612 = vmatprep.mubr.bf16.mxu0 0
  %613 = vmatmul.mubr.bf16.gmra.mxu0 %v377
  %v614 = vpop.f32.mrf.mxu0
  %v615 = vadd.f32 0.0, %v614
  %v616 = vpop.f32.mrf.mxu0
  %v617 = vpop.f32.mrf.mxu0
  %v618 = vadd.f32 0.0, %v617
  %v619 = vpop.f32.mrf.mxu0
  %620 = vmatprep.mubr.bf16.mxu0 0
  %621 = vmatmul.mubr.bf16.gmra.mxu0 %v378
  %v622 = vpop.f32.mrf.mxu0
  %v623 = vadd.f32 0.0, %v622
  %v624 = vpop.f32.mrf.mxu0
  %v625 = vpop.f32.mrf.mxu0
  %v626 = vadd.f32 0.0, %v625
  %v627 = vpop.f32.mrf.mxu0
  %628 = vmatprep.mubr.bf16.mxu0 0
  %629 = vmatmul.mubr.bf16.gmra.mxu0 %v379
  %v630 = vpop.f32.mrf.mxu0
  %v631 = vadd.f32 0.0, %v630
  %v632 = vpop.f32.mrf.mxu0
  %v633 = vpop.f32.mrf.mxu0
  %v634 = vadd.f32 0.0, %v633
  %v635 = vpop.f32.mrf.mxu0
  %636 = vmatprep.mubr.bf16.mxu0 0
  %637 = vmatmul.mubr.bf16.gmra.mxu0 %v380
  %v638 = vpop.f32.mrf.mxu0
  %v639 = vadd.f32 0.0, %v638
  %v640 = vpop.f32.mrf.mxu0
  %v641 = vpop.f32.mrf.mxu0
  %v642 = vadd.f32 0.0, %v641
  %v643 = vpop.f32.mrf.mxu0
  %644 = vmatprep.mubr.bf16.mxu0 0
  %645 = vmatmul.mubr.bf16.gmra.mxu0 %v381
  %v646 = vpop.f32.mrf.mxu0
  %v647 = vadd.f32 0.0, %v646
  %v648 = vpop.f32.mrf.mxu0
  %v649 = vpop.f32.mrf.mxu0
  %v650 = vadd.f32 0.0, %v649
  %v651 = vpop.f32.mrf.mxu0
  %652 = vmatprep.mubr.bf16.mxu0 0
  %653 = vmatmul.mubr.bf16.gmra.mxu0 %v382
  %v654 = vpop.f32.mrf.mxu0
  %v655 = vadd.f32 0.0, %v654
  %v656 = vpop.f32.mrf.mxu0
  %v657 = vpop.f32.mrf.mxu0
  %v658 = vadd.f32 0.0, %v657
  %v659 = vpop.f32.mrf.mxu0
  %660 = vmatprep.mubr.bf16.mxu0 0
  %661 = vmatmul.mubr.bf16.gmra.mxu0 %v383
  %v662 = vpop.f32.mrf.mxu0
  %v663 = vadd.f32 0.0, %v662
  %v664 = vpop.f32.mrf.mxu0
  %v665 = vpop.f32.mrf.mxu0
  %v666 = vadd.f32 0.0, %v665
  %v667 = vpop.f32.mrf.mxu0
  %668 = vmatprep.mubr.bf16.mxu0 0
  %669 = vmatmul.mubr.bf16.gmra.mxu0 %v384
  %v670 = vpop.f32.mrf.mxu0
  %v671 = vadd.f32 0.0, %v670
  %v672 = vpop.f32.mrf.mxu0
  %v673 = vpop.f32.mrf.mxu0
  %v674 = vadd.f32 0.0, %v673
  %v675 = vpop.f32.mrf.mxu0
  %676 = vmatprep.mubr.bf16.mxu0 0
  %677 = vmatmul.mubr.bf16.gmra.mxu0 %v385
  %v678 = vpop.f32.mrf.mxu0
  %v679 = vadd.f32 0.0, %v678
  %v680 = vpop.f32.mrf.mxu0
  %v681 = vpop.f32.mrf.mxu0
  %v682 = vadd.f32 0.0, %v681
  %v683 = vpop.f32.mrf.mxu0
  %684 = vmatprep.mubr.bf16.mxu0 0
  %685 = vmatmul.mubr.bf16.gmra.mxu0 %v386
  %v686 = vpop.f32.mrf.mxu0
  %v687 = vadd.f32 0.0, %v686
  %v688 = vpop.f32.mrf.mxu0
  %v689 = vpop.f32.mrf.mxu0
  %v690 = vadd.f32 0.0, %v689
  %v691 = vpop.f32.mrf.mxu0
  %692 = vmatprep.mubr.bf16.mxu0 0
  %693 = vmatmul.mubr.bf16.gmra.mxu0 %v387
  %v694 = vpop.f32.mrf.mxu0
  %v695 = vadd.f32 0.0, %v694
  %v696 = vpop.f32.mrf.mxu0
  %v697 = vpop.f32.mrf.mxu0
  %v698 = vadd.f32 0.0, %v697
  %v699 = vpop.f32.mrf.mxu0
  %700 = vmatprep.mubr.bf16.mxu0 0
  %701 = vmatmul.mubr.bf16.gmra.mxu0 %v388
  %v702 = vpop.f32.mrf.mxu0
  %v703 = vadd.f32 0.0, %v702
  %v704 = vpop.f32.mrf.mxu0
  %v705 = vpop.f32.mrf.mxu0
  %v706 = vadd.f32 0.0, %v705
  %v707 = vpop.f32.mrf.mxu0
  %708 = vmatprep.mubr.bf16.mxu0 0
  %709 = vmatmul.mubr.bf16.gmra.mxu0 %v389
  %v710 = vpop.f32.mrf.mxu0
  %v711 = vadd.f32 0.0, %v710
  %v712 = vpop.f32.mrf.mxu0
  %v713 = vpop.f32.mrf.mxu0
  %v714 = vadd.f32 0.0, %v713
  %v715 = vpop.f32.mrf.mxu0
  %716 = vmatprep.mubr.bf16.mxu0 0
  %717 = vmatmul.mubr.bf16.gmra.mxu0 %v390
  %v718 = vpop.f32.mrf.mxu0
  %v719 = vadd.f32 0.0, %v718
  %v720 = vpop.f32.mrf.mxu0
  %v721 = vpop.f32.mrf.mxu0
  %v722 = vadd.f32 0.0, %v721
  %v723 = vpop.f32.mrf.mxu0
  %724 = vmatprep.mubr.bf16.mxu0 0
  %725 = vmatmul.mubr.bf16.gmra.mxu0 %v391
  %v726 = vpop.f32.mrf.mxu0
  %v727 = vadd.f32 0.0, %v726
  %v728 = vpop.f32.mrf.mxu0
  %v729 = vpop.f32.mrf.mxu0
  %v730 = vadd.f32 0.0, %v729
  %v731 = vpop.f32.mrf.mxu0
  %732 = vmatprep.mubr.bf16.mxu0 0
  %733 = vmatmul.mubr.bf16.gmra.mxu0 %v392
  %v734 = vpop.f32.mrf.mxu0
  %v735 = vadd.f32 0.0, %v734
  %v736 = vpop.f32.mrf.mxu0
  %v737 = vpop.f32.mrf.mxu0
  %v738 = vadd.f32 0.0, %v737
  %v739 = vpop.f32.mrf.mxu0
  %740 = vmatprep.mubr.bf16.mxu0 0
  %741 = vmatmul.mubr.bf16.gmra.mxu0 %v393
  %v742 = vpop.f32.mrf.mxu0
  %v743 = vadd.f32 0.0, %v742
  %v744 = vpop.f32.mrf.mxu0
  %v745 = vpop.f32.mrf.mxu0
  %v746 = vadd.f32 0.0, %v745
  %v747 = vpop.f32.mrf.mxu0
  %748 = vmatprep.mubr.bf16.mxu0 0
  %749 = vmatmul.mubr.bf16.gmra.mxu0 %v394
  %v750 = vpop.f32.mrf.mxu0
  %v751 = vadd.f32 0.0, %v750
  %v752 = vpop.f32.mrf.mxu0
  %v753 = vpop.f32.mrf.mxu0
  %v754 = vadd.f32 0.0, %v753
  %v755 = vpop.f32.mrf.mxu0
  %756 = vmatprep.mubr.bf16.mxu0 0
  %757 = vmatmul.mubr.bf16.gmra.mxu0 %v395
  %v758 = vpop.f32.mrf.mxu0
  %v759 = vadd.f32 0.0, %v758
  %v760 = vpop.f32.mrf.mxu0
  %v761 = vpop.f32.mrf.mxu0
  %v762 = vadd.f32 0.0, %v761
  %v763 = vpop.f32.mrf.mxu0
  %764 = vdwg.mxu0
  %v765 = vadd.f32 %v92, %v511
  %v766 = vadd.f32 %v93, %v514
  %v767 = vadd.f32 %v94, %v519
  %v768 = vadd.f32 %v95, %v522
  %v769 = vadd.f32 %v96, %v527
  %v770 = vadd.f32 %v97, %v530
  %v771 = vadd.f32 %v98, %v535
  %v772 = vadd.f32 %v99, %v538
  %v773 = vadd.f32 %v100, %v543
  %v774 = vadd.f32 %v101, %v546
  %v775 = vadd.f32 %v102, %v551
  %v776 = vadd.f32 %v103, %v554
  %v777 = vadd.f32 %v104, %v559
  %v778 = vadd.f32 %v105, %v562
  %v779 = vadd.f32 %v106, %v567
  %v780 = vadd.f32 %v107, %v570
  %v781 = vadd.f32 %v108, %v575
  %v782 = vadd.f32 %v109, %v578
  %v783 = vadd.f32 %v110, %v583
  %v784 = vadd.f32 %v111, %v586
  %v785 = vadd.f32 %v112, %v591
  %v786 = vadd.f32 %v113, %v594
  %v787 = vadd.f32 %v114, %v599
  %v788 = vadd.f32 %v115, %v602
  %v789 = vadd.f32 %v116, %v607
  %v790 = vadd.f32 %v117, %v610
  %v791 = vadd.f32 %v118, %v615
  %v792 = vadd.f32 %v119, %v618
  %v793 = vadd.f32 %v120, %v623
  %v794 = vadd.f32 %v121, %v626
  %v795 = vadd.f32 %v122, %v631
  %v796 = vadd.f32 %v123, %v634
  %v797 = vadd.f32 %v124, %v639
  %v798 = vadd.f32 %v125, %v642
  %v799 = vadd.f32 %v126, %v647
  %v800 = vadd.f32 %v127, %v650
  %v801 = vadd.f32 %v128, %v655
  %v802 = vadd.f32 %v129, %v658
  %v803 = vadd.f32 %v130, %v663
  %v804 = vadd.f32 %v131, %v666
  %v805 = vadd.f32 %v132, %v671
  %v806 = vadd.f32 %v133, %v674
  %v807 = vadd.f32 %v134, %v679
  %v808 = vadd.f32 %v135, %v682
  %v809 = vadd.f32 %v136, %v687
  %v810 = vadd.f32 %v137, %v690
  %v811 = vadd.f32 %v138, %v695
  %v812 = vadd.f32 %v139, %v698
  %v813 = vadd.f32 %v140, %v703
  %v814 = vadd.f32 %v141, %v706
  %v815 = vadd.f32 %v142, %v711
  %v816 = vadd.f32 %v143, %v714
  %v817 = vadd.f32 %v144, %v719
  %v818 = vadd.f32 %v145, %v722
  %v819 = vadd.f32 %v146, %v727
  %v820 = vadd.f32 %v147, %v730
  %v821 = vadd.f32 %v148, %v735
  %v822 = vadd.f32 %v149, %v738
  %v823 = vadd.f32 %v150, %v743
  %v824 = vadd.f32 %v151, %v746
  %v825 = vadd.f32 %v152, %v751
  %v826 = vadd.f32 %v153, %v754
  %v827 = vadd.f32 %v154, %v759
  %v828 = vadd.f32 %v155, %v762
  %vm829 = vcmask 130048
  %830 = vst.msk [vmem:[#allocation2] sm:$0xff] %vm829, %v765
  %831 = vst.msk [vmem:[#allocation2 + $0x8] sm:$0xff] %vm829, %v766
  %832 = vst.msk [vmem:[#allocation2 + $0x10] sm:$0xff] %vm829, %v767
  %833 = vst.msk [vmem:[#allocation2 + $0x18] sm:$0xff] %vm829, %v768
  %834 = vst.msk [vmem:[#allocation2 + $0x20] sm:$0xff] %vm829, %v769
  %835 = vst.msk [vmem:[#allocation2 + $0x28] sm:$0xff] %vm829, %v770
  %836 = vst.msk [vmem:[#allocation2 + $0x30] sm:$0xff] %vm829, %v771
  %837 = vst.msk [vmem:[#allocation2 + $0x38] sm:$0xff] %vm829, %v772
  %838 = vst.msk [vmem:[#allocation2 + $0x40] sm:$0xff] %vm829, %v773
  %839 = vst.msk [vmem:[#allocation2 + $0x48] sm:$0xff] %vm829, %v774
  %840 = vst.msk [vmem:[#allocation2 + $0x50] sm:$0xff] %vm829, %v775
  %841 = vst.msk [vmem:[#allocation2 + $0x58] sm:$0xff] %vm829, %v776
  %842 = vst.msk [vmem:[#allocation2 + $0x60] sm:$0xff] %vm829, %v777
  %843 = vst.msk [vmem:[#allocation2 + $0x68] sm:$0xff] %vm829, %v778
  %844 = vst.msk [vmem:[#allocation2 + $0x70] sm:$0xff] %vm829, %v779
  %845 = vst.msk [vmem:[#allocation2 + $0x78] sm:$0xff] %vm829, %v780
  %846 = vst.msk [vmem:[#allocation2 + $0x80] sm:$0xff] %vm829, %v781
  %847 = vst.msk [vmem:[#allocation2 + $0x88] sm:$0xff] %vm829, %v782
  %848 = vst.msk [vmem:[#allocation2 + $0x90] sm:$0xff] %vm829, %v783
  %849 = vst.msk [vmem:[#allocation2 + $0x98] sm:$0xff] %vm829, %v784
  %850 = vst.msk [vmem:[#allocation2 + $0xa0] sm:$0xff] %vm829, %v785
  %851 = vst.msk [vmem:[#allocation2 + $0xa8] sm:$0xff] %vm829, %v786
  %852 = vst.msk [vmem:[#allocation2 + $0xb0] sm:$0xff] %vm829, %v787
  %853 = vst.msk [vmem:[#allocation2 + $0xb8] sm:$0xff] %vm829, %v788
  %854 = vst.msk [vmem:[#allocation2 + $0xc0] sm:$0xff] %vm829, %v789
  %855 = vst.msk [vmem:[#allocation2 + $0xc8] sm:$0xff] %vm829, %v790
  %856 = vst.msk [vmem:[#allocation2 + $0xd0] sm:$0xff] %vm829, %v791
  %857 = vst.msk [vmem:[#allocation2 + $0xd8] sm:$0xff] %vm829, %v792
  %858 = vst.msk [vmem:[#allocation2 + $0xe0] sm:$0xff] %vm829, %v793
  %859 = vst.msk [vmem:[#allocation2 + $0xe8] sm:$0xff] %vm829, %v794
  %860 = vst.msk [vmem:[#allocation2 + $0xf0] sm:$0xff] %vm829, %v795
  %861 = vst.msk [vmem:[#allocation2 + $0xf8] sm:$0xff] %vm829, %v796
  %862 = vst.msk [vmem:[#allocation2 + $0x100] sm:$0xff] %vm829, %v797
  %863 = vst.msk [vmem:[#allocation2 + $0x108] sm:$0xff] %vm829, %v798
  %864 = vst.msk [vmem:[#allocation2 + $0x110] sm:$0xff] %vm829, %v799
  %865 = vst.msk [vmem:[#allocation2 + $0x118] sm:$0xff] %vm829, %v800
  %866 = vst.msk [vmem:[#allocation2 + $0x120] sm:$0xff] %vm829, %v801
  %867 = vst.msk [vmem:[#allocation2 + $0x128] sm:$0xff] %vm829, %v802
  %868 = vst.msk [vmem:[#allocation2 + $0x130] sm:$0xff] %vm829, %v803
  %869 = vst.msk [vmem:[#allocation2 + $0x138] sm:$0xff] %vm829, %v804
  %870 = vst.msk [vmem:[#allocation2 + $0x140] sm:$0xff] %vm829, %v805
  %871 = vst.msk [vmem:[#allocation2 + $0x148] sm:$0xff] %vm829, %v806
  %872 = vst.msk [vmem:[#allocation2 + $0x150] sm:$0xff] %vm829, %v807
  %873 = vst.msk [vmem:[#allocation2 + $0x158] sm:$0xff] %vm829, %v808
  %874 = vst.msk [vmem:[#allocation2 + $0x160] sm:$0xff] %vm829, %v809
  %875 = vst.msk [vmem:[#allocation2 + $0x168] sm:$0xff] %vm829, %v810
  %876 = vst.msk [vmem:[#allocation2 + $0x170] sm:$0xff] %vm829, %v811
  %877 = vst.msk [vmem:[#allocation2 + $0x178] sm:$0xff] %vm829, %v812
  %878 = vst.msk [vmem:[#allocation2 + $0x180] sm:$0xff] %vm829, %v813
  %879 = vst.msk [vmem:[#allocation2 + $0x188] sm:$0xff] %vm829, %v814
  %880 = vst.msk [vmem:[#allocation2 + $0x190] sm:$0xff] %vm829, %v815
  %881 = vst.msk [vmem:[#allocation2 + $0x198] sm:$0xff] %vm829, %v816
  %882 = vst.msk [vmem:[#allocation2 + $0x1a0] sm:$0xff] %vm829, %v817
  %883 = vst.msk [vmem:[#allocation2 + $0x1a8] sm:$0xff] %vm829, %v818
  %884 = vst.msk [vmem:[#allocation2 + $0x1b0] sm:$0xff] %vm829, %v819
  %885 = vst.msk [vmem:[#allocation2 + $0x1b8] sm:$0xff] %vm829, %v820
  %886 = vst.msk [vmem:[#allocation2 + $0x1c0] sm:$0xff] %vm829, %v821
  %887 = vst.msk [vmem:[#allocation2 + $0x1c8] sm:$0xff] %vm829, %v822
  %888 = vst.msk [vmem:[#allocation2 + $0x1d0] sm:$0xff] %vm829, %v823
  %889 = vst.msk [vmem:[#allocation2 + $0x1d8] sm:$0xff] %vm829, %v824
  %890 = vst.msk [vmem:[#allocation2 + $0x1e0] sm:$0xff] %vm829, %v825
  %891 = vst.msk [vmem:[#allocation2 + $0x1e8] sm:$0xff] %vm829, %v826
  %892 = vst.msk [vmem:[#allocation2 + $0x1f0] sm:$0xff] %vm829, %v827
  %893 = vst.msk [vmem:[#allocation2 + $0x1f8] sm:$0xff] %vm829, %v828
  // Predicated region
  $region18: #{discriminator128_forward.8} parent=0 // pred_check
    %p894 = pneg %p16
  $region19: #{discriminator128_forward.8} parent=0 // pred_check_branch
    %896 = sbr.rel (%p894) target = $region21
  $region20: #{discriminator128_forward.8} parent=0 // pred_region
    %v897 = vld [vmem:[#allocation2] sm:$0xff]
    %v898 = vld [vmem:[#allocation2 + $0x8] sm:$0xff]
    %v899 = vld [vmem:[#allocation2 + $0x10] sm:$0xff]
    %v900 = vld [vmem:[#allocation2 + $0x18] sm:$0xff]
    %v901 = vld [vmem:[#allocation2 + $0x20] sm:$0xff]
    %v902 = vld [vmem:[#allocation2 + $0x28] sm:$0xff]
    %v903 = vld [vmem:[#allocation2 + $0x30] sm:$0xff]
    %v904 = vld [vmem:[#allocation2 + $0x38] sm:$0xff]
    %v905 = vld [vmem:[#allocation2 + $0x40] sm:$0xff]
    %v906 = vld [vmem:[#allocation2 + $0x48] sm:$0xff]
    %v907 = vld [vmem:[#allocation2 + $0x50] sm:$0xff]
    %v908 = vld [vmem:[#allocation2 + $0x58] sm:$0xff]
    %v909 = vld [vmem:[#allocation2 + $0x60] sm:$0xff]
    %v910 = vld [vmem:[#allocation2 + $0x68] sm:$0xff]
    %v911 = vld [vmem:[#allocation2 + $0x70] sm:$0xff]
    %v912 = vld [vmem:[#allocation2 + $0x78] sm:$0xff]
    %v913 = vld [vmem:[#allocation2 + $0x80] sm:$0xff]
    %v914 = vld [vmem:[#allocation2 + $0x88] sm:$0xff]
    %v915 = vld [vmem:[#allocation2 + $0x90] sm:$0xff]
    %v916 = vld [vmem:[#allocation2 + $0x98] sm:$0xff]
    %v917 = vld [vmem:[#allocation2 + $0xa0] sm:$0xff]
    %v918 = vld [vmem:[#allocation2 + $0xa8] sm:$0xff]
    %v919 = vld [vmem:[#allocation2 + $0xb0] sm:$0xff]
    %v920 = vld [vmem:[#allocation2 + $0xb8] sm:$0xff]
    %v921 = vld [vmem:[#allocation2 + $0xc0] sm:$0xff]
    %v922 = vld [vmem:[#allocation2 + $0xc8] sm:$0xff]
    %v923 = vld [vmem:[#allocation2 + $0xd0] sm:$0xff]
    %v924 = vld [vmem:[#allocation2 + $0xd8] sm:$0xff]
    %v925 = vld [vmem:[#allocation2 + $0xe0] sm:$0xff]
    %v926 = vld [vmem:[#allocation2 + $0xe8] sm:$0xff]
    %v927 = vld [vmem:[#allocation2 + $0xf0] sm:$0xff]
    %v928 = vld [vmem:[#allocation2 + $0xf8] sm:$0xff]
    %v929 = vld [vmem:[#allocation2 + $0x100] sm:$0xff]
    %v930 = vld [vmem:[#allocation2 + $0x108] sm:$0xff]
    %v931 = vld [vmem:[#allocation2 + $0x110] sm:$0xff]
    %v932 = vld [vmem:[#allocation2 + $0x118] sm:$0xff]
    %v933 = vld [vmem:[#allocation2 + $0x120] sm:$0xff]
    %v934 = vld [vmem:[#allocation2 + $0x128] sm:$0xff]
    %v935 = vld [vmem:[#allocation2 + $0x130] sm:$0xff]
    %v936 = vld [vmem:[#allocation2 + $0x138] sm:$0xff]
    %v937 = vld [vmem:[#allocation2 + $0x140] sm:$0xff]
    %v938 = vld [vmem:[#allocation2 + $0x148] sm:$0xff]
    %v939 = vld [vmem:[#allocation2 + $0x150] sm:$0xff]
    %v940 = vld [vmem:[#allocation2 + $0x158] sm:$0xff]
    %v941 = vld [vmem:[#allocation2 + $0x160] sm:$0xff]
    %v942 = vld [vmem:[#allocation2 + $0x168] sm:$0xff]
    %v943 = vld [vmem:[#allocation2 + $0x170] sm:$0xff]
    %v944 = vld [vmem:[#allocation2 + $0x178] sm:$0xff]
    %v945 = vld [vmem:[#allocation2 + $0x180] sm:$0xff]
    %v946 = vld [vmem:[#allocation2 + $0x188] sm:$0xff]
    %v947 = vld [vmem:[#allocation2 + $0x190] sm:$0xff]
    %v948 = vld [vmem:[#allocation2 + $0x198] sm:$0xff]
    %v949 = vld [vmem:[#allocation2 + $0x1a0] sm:$0xff]
    %v950 = vld [vmem:[#allocation2 + $0x1a8] sm:$0xff]
    %v951 = vld [vmem:[#allocation2 + $0x1b0] sm:$0xff]
    %v952 = vld [vmem:[#allocation2 + $0x1b8] sm:$0xff]
    %v953 = vld [vmem:[#allocation2 + $0x1c0] sm:$0xff]
    %v954 = vld [vmem:[#allocation2 + $0x1c8] sm:$0xff]
    %v955 = vld [vmem:[#allocation2 + $0x1d0] sm:$0xff]
    %v956 = vld [vmem:[#allocation2 + $0x1d8] sm:$0xff]
    %v957 = vld [vmem:[#allocation2 + $0x1e0] sm:$0xff]
    %v958 = vld [vmem:[#allocation2 + $0x1e8] sm:$0xff]
    %v959 = vld [vmem:[#allocation2 + $0x1f0] sm:$0xff]
    %v960 = vld [vmem:[#allocation2 + $0x1f8] sm:$0xff]
    %v961 = vld [vmem:[%s3] sm:$0x1]
    %v962 = vsel %vm829, %v897, 0.0
    %v963 = vsel %vm829, %v898, 0.0
    %v964 = vadd.f32 %v962, %v963
    %v965 = vsel %vm829, %v899, 0.0
    %v966 = vadd.f32 %v964, %v965
    %v967 = vsel %vm829, %v900, 0.0
    %v968 = vadd.f32 %v966, %v967
    %v969 = vsel %vm829, %v901, 0.0
    %v970 = vadd.f32 %v968, %v969
    %v971 = vsel %vm829, %v902, 0.0
    %v972 = vadd.f32 %v970, %v971
    %v973 = vsel %vm829, %v903, 0.0
    %v974 = vadd.f32 %v972, %v973
    %v975 = vsel %vm829, %v904, 0.0
    %v976 = vadd.f32 %v974, %v975
    %v977 = vsel %vm829, %v905, 0.0
    %v978 = vadd.f32 %v976, %v977
    %v979 = vsel %vm829, %v906, 0.0
    %v980 = vadd.f32 %v978, %v979
    %v981 = vsel %vm829, %v907, 0.0
    %v982 = vadd.f32 %v980, %v981
    %v983 = vsel %vm829, %v908, 0.0
    %v984 = vadd.f32 %v982, %v983
    %v985 = vsel %vm829, %v909, 0.0
    %v986 = vadd.f32 %v984, %v985
    %v987 = vsel %vm829, %v910, 0.0
    %v988 = vadd.f32 %v986, %v987
    %v989 = vsel %vm829, %v911, 0.0
    %v990 = vadd.f32 %v988, %v989
    %v991 = vsel %vm829, %v912, 0.0
    %v992 = vadd.f32 %v990, %v991
    %v993 = vsel %vm829, %v913, 0.0
    %v994 = vadd.f32 %v992, %v993
    %v995 = vsel %vm829, %v914, 0.0
    %v996 = vadd.f32 %v994, %v995
    %v997 = vsel %vm829, %v915, 0.0
    %v998 = vadd.f32 %v996, %v997
    %v999 = vsel %vm829, %v916, 0.0
    %v1000 = vadd.f32 %v998, %v999
    %v1001 = vsel %vm829, %v917, 0.0
    %v1002 = vadd.f32 %v1000, %v1001
    %v1003 = vsel %vm829, %v918, 0.0
    %v1004 = vadd.f32 %v1002, %v1003
    %v1005 = vsel %vm829, %v919, 0.0
    %v1006 = vadd.f32 %v1004, %v1005
    %v1007 = vsel %vm829, %v920, 0.0
    %v1008 = vadd.f32 %v1006, %v1007
    %v1009 = vsel %vm829, %v921, 0.0
    %v1010 = vadd.f32 %v1008, %v1009
    %v1011 = vsel %vm829, %v922, 0.0
    %v1012 = vadd.f32 %v1010, %v1011
    %v1013 = vsel %vm829, %v923, 0.0
    %v1014 = vadd.f32 %v1012, %v1013
    %v1015 = vsel %vm829, %v924, 0.0
    %v1016 = vadd.f32 %v1014, %v1015
    %v1017 = vsel %vm829, %v925, 0.0
    %v1018 = vadd.f32 %v1016, %v1017
    %v1019 = vsel %vm829, %v926, 0.0
    %v1020 = vadd.f32 %v1018, %v1019
    %v1021 = vsel %vm829, %v927, 0.0
    %v1022 = vadd.f32 %v1020, %v1021
    %v1023 = vsel %vm829, %v928, 0.0
    %v1024 = vadd.f32 %v1022, %v1023
    %v1025 = vsel %vm829, %v929, 0.0
    %v1026 = vadd.f32 %v1024, %v1025
    %v1027 = vsel %vm829, %v930, 0.0
    %v1028 = vadd.f32 %v1026, %v1027
    %v1029 = vsel %vm829, %v931, 0.0
    %v1030 = vadd.f32 %v1028, %v1029
    %v1031 = vsel %vm829, %v932, 0.0
    %v1032 = vadd.f32 %v1030, %v1031
    %v1033 = vsel %vm829, %v933, 0.0
    %v1034 = vadd.f32 %v1032, %v1033
    %v1035 = vsel %vm829, %v934, 0.0
    %v1036 = vadd.f32 %v1034, %v1035
    %v1037 = vsel %vm829, %v935, 0.0
    %v1038 = vadd.f32 %v1036, %v1037
    %v1039 = vsel %vm829, %v936, 0.0
    %v1040 = vadd.f32 %v1038, %v1039
    %v1041 = vsel %vm829, %v937, 0.0
    %v1042 = vadd.f32 %v1040, %v1041
    %v1043 = vsel %vm829, %v938, 0.0
    %v1044 = vadd.f32 %v1042, %v1043
    %v1045 = vsel %vm829, %v939, 0.0
    %v1046 = vadd.f32 %v1044, %v1045
    %v1047 = vsel %vm829, %v940, 0.0
    %v1048 = vadd.f32 %v1046, %v1047
    %v1049 = vsel %vm829, %v941, 0.0
    %v1050 = vadd.f32 %v1048, %v1049
    %v1051 = vsel %vm829, %v942, 0.0
    %v1052 = vadd.f32 %v1050, %v1051
    %v1053 = vsel %vm829, %v943, 0.0
    %v1054 = vadd.f32 %v1052, %v1053
    %v1055 = vsel %vm829, %v944, 0.0
    %v1056 = vadd.f32 %v1054, %v1055
    %v1057 = vsel %vm829, %v945, 0.0
    %v1058 = vadd.f32 %v1056, %v1057
    %v1059 = vsel %vm829, %v946, 0.0
    %v1060 = vadd.f32 %v1058, %v1059
    %v1061 = vsel %vm829, %v947, 0.0
    %v1062 = vadd.f32 %v1060, %v1061
    %v1063 = vsel %vm829, %v948, 0.0
    %v1064 = vadd.f32 %v1062, %v1063
    %v1065 = vsel %vm829, %v949, 0.0
    %v1066 = vadd.f32 %v1064, %v1065
    %v1067 = vsel %vm829, %v950, 0.0
    %v1068 = vadd.f32 %v1066, %v1067
    %v1069 = vsel %vm829, %v951, 0.0
    %v1070 = vadd.f32 %v1068, %v1069
    %v1071 = vsel %vm829, %v952, 0.0
    %v1072 = vadd.f32 %v1070, %v1071
    %v1073 = vsel %vm829, %v953, 0.0
    %v1074 = vadd.f32 %v1072, %v1073
    %v1075 = vsel %vm829, %v954, 0.0
    %v1076 = vadd.f32 %v1074, %v1075
    %v1077 = vsel %vm829, %v955, 0.0
    %v1078 = vadd.f32 %v1076, %v1077
    %v1079 = vsel %vm829, %v956, 0.0
    %v1080 = vadd.f32 %v1078, %v1079
    %v1081 = vsel %vm829, %v957, 0.0
    %v1082 = vadd.f32 %v1080, %v1081
    %v1083 = vsel %vm829, %v958, 0.0
    %v1084 = vadd.f32 %v1082, %v1083
    %v1085 = vsel %vm829, %v959, 0.0
    %v1086 = vadd.f32 %v1084, %v1085
    %v1087 = vsel %vm829, %v960, 0.0
    %v1088 = vadd.f32 %v1086, %v1087
    %v1089 = vrot.slane %v1088, 4
    %v1090 = vadd.f32 %v1088, %v1089
    %v1091 = vrot.slane %v1090, 2
    %v1092 = vadd.f32 %v1090, %v1091
    %v1093 = vrot.slane %v1092, 1
    %v1094 = vadd.f32 %v1092, %v1093
    %v1095 = vadd.f32 %v961, %v1094
    %vm1096 = vcmask 122880
    %1097 = vst.msk [vmem:[%s3] sm:$0x1] %vm1096, %v1095
    %v1098 = vld [vmem:[%s4] sm:$0x1]
    %v1099 = vmul.f32 %v897, %v897
    %v1100 = vmul.f32 %v898, %v898
    %v1101 = vmul.f32 %v899, %v899
    %v1102 = vmul.f32 %v900, %v900
    %v1103 = vmul.f32 %v901, %v901
    %v1104 = vmul.f32 %v902, %v902
    %v1105 = vmul.f32 %v903, %v903
    %v1106 = vmul.f32 %v904, %v904
    %v1107 = vmul.f32 %v905, %v905
    %v1108 = vmul.f32 %v906, %v906
    %v1109 = vmul.f32 %v907, %v907
    %v1110 = vmul.f32 %v908, %v908
    %v1111 = vmul.f32 %v909, %v909
    %v1112 = vmul.f32 %v910, %v910
    %v1113 = vmul.f32 %v911, %v911
    %v1114 = vmul.f32 %v912, %v912
    %v1115 = vmul.f32 %v913, %v913
    %v1116 = vmul.f32 %v914, %v914
    %v1117 = vmul.f32 %v915, %v915
    %v1118 = vmul.f32 %v916, %v916
    %v1119 = vmul.f32 %v917, %v917
    %v1120 = vmul.f32 %v918, %v918
    %v1121 = vmul.f32 %v919, %v919
    %v1122 = vmul.f32 %v920, %v920
    %v1123 = vmul.f32 %v921, %v921
    %v1124 = vmul.f32 %v922, %v922
    %v1125 = vmul.f32 %v923, %v923
    %v1126 = vmul.f32 %v924, %v924
    %v1127 = vmul.f32 %v925, %v925
    %v1128 = vmul.f32 %v926, %v926
    %v1129 = vmul.f32 %v927, %v927
    %v1130 = vmul.f32 %v928, %v928
    %v1131 = vmul.f32 %v929, %v929
    %v1132 = vmul.f32 %v930, %v930
    %v1133 = vmul.f32 %v931, %v931
    %v1134 = vmul.f32 %v932, %v932
    %v1135 = vmul.f32 %v933, %v933
    %v1136 = vmul.f32 %v934, %v934
    %v1137 = vmul.f32 %v935, %v935
    %v1138 = vmul.f32 %v936, %v936
    %v1139 = vmul.f32 %v937, %v937
    %v1140 = vmul.f32 %v938, %v938
    %v1141 = vmul.f32 %v939, %v939
    %v1142 = vmul.f32 %v940, %v940
    %v1143 = vmul.f32 %v941, %v941
    %v1144 = vmul.f32 %v942, %v942
    %v1145 = vmul.f32 %v943, %v943
    %v1146 = vmul.f32 %v944, %v944
    %v1147 = vmul.f32 %v945, %v945
    %v1148 = vmul.f32 %v946, %v946
    %v1149 = vmul.f32 %v947, %v947
    %v1150 = vmul.f32 %v948, %v948
    %v1151 = vmul.f32 %v949, %v949
    %v1152 = vmul.f32 %v950, %v950
    %v1153 = vmul.f32 %v951, %v951
    %v1154 = vmul.f32 %v952, %v952
    %v1155 = vmul.f32 %v953, %v953
    %v1156 = vmul.f32 %v954, %v954
    %v1157 = vmul.f32 %v955, %v955
    %v1158 = vmul.f32 %v956, %v956
    %v1159 = vmul.f32 %v957, %v957
    %v1160 = vmul.f32 %v958, %v958
    %v1161 = vmul.f32 %v959, %v959
    %v1162 = vmul.f32 %v960, %v960
    %v1163 = vsel %vm829, %v1099, 0.0
    %v1164 = vsel %vm829, %v1100, 0.0
    %v1165 = vadd.f32 %v1163, %v1164
    %v1166 = vsel %vm829, %v1101, 0.0
    %v1167 = vadd.f32 %v1165, %v1166
    %v1168 = vsel %vm829, %v1102, 0.0
    %v1169 = vadd.f32 %v1167, %v1168
    %v1170 = vsel %vm829, %v1103, 0.0
    %v1171 = vadd.f32 %v1169, %v1170
    %v1172 = vsel %vm829, %v1104, 0.0
    %v1173 = vadd.f32 %v1171, %v1172
    %v1174 = vsel %vm829, %v1105, 0.0
    %v1175 = vadd.f32 %v1173, %v1174
    %v1176 = vsel %vm829, %v1106, 0.0
    %v1177 = vadd.f32 %v1175, %v1176
    %v1178 = vsel %vm829, %v1107, 0.0
    %v1179 = vadd.f32 %v1177, %v1178
    %v1180 = vsel %vm829, %v1108, 0.0
    %v1181 = vadd.f32 %v1179, %v1180
    %v1182 = vsel %vm829, %v1109, 0.0
    %v1183 = vadd.f32 %v1181, %v1182
    %v1184 = vsel %vm829, %v1110, 0.0
    %v1185 = vadd.f32 %v1183, %v1184
    %v1186 = vsel %vm829, %v1111, 0.0
    %v1187 = vadd.f32 %v1185, %v1186
    %v1188 = vsel %vm829, %v1112, 0.0
    %v1189 = vadd.f32 %v1187, %v1188
    %v1190 = vsel %vm829, %v1113, 0.0
    %v1191 = vadd.f32 %v1189, %v1190
    %v1192 = vsel %vm829, %v1114, 0.0
    %v1193 = vadd.f32 %v1191, %v1192
    %v1194 = vsel %vm829, %v1115, 0.0
    %v1195 = vadd.f32 %v1193, %v1194
    %v1196 = vsel %vm829, %v1116, 0.0
    %v1197 = vadd.f32 %v1195, %v1196
    %v1198 = vsel %vm829, %v1117, 0.0
    %v1199 = vadd.f32 %v1197, %v1198
    %v1200 = vsel %vm829, %v1118, 0.0
    %v1201 = vadd.f32 %v1199, %v1200
    %v1202 = vsel %vm829, %v1119, 0.0
    %v1203 = vadd.f32 %v1201, %v1202
    %v1204 = vsel %vm829, %v1120, 0.0
    %v1205 = vadd.f32 %v1203, %v1204
    %v1206 = vsel %vm829, %v1121, 0.0
    %v1207 = vadd.f32 %v1205, %v1206
    %v1208 = vsel %vm829, %v1122, 0.0
    %v1209 = vadd.f32 %v1207, %v1208
    %v1210 = vsel %vm829, %v1123, 0.0
    %v1211 = vadd.f32 %v1209, %v1210
    %v1212 = vsel %vm829, %v1124, 0.0
    %v1213 = vadd.f32 %v1211, %v1212
    %v1214 = vsel %vm829, %v1125, 0.0
    %v1215 = vadd.f32 %v1213, %v1214
    %v1216 = vsel %vm829, %v1126, 0.0
    %v1217 = vadd.f32 %v1215, %v1216
    %v1218 = vsel %vm829, %v1127, 0.0
    %v1219 = vadd.f32 %v1217, %v1218
    %v1220 = vsel %vm829, %v1128, 0.0
    %v1221 = vadd.f32 %v1219, %v1220
    %v1222 = vsel %vm829, %v1129, 0.0
    %v1223 = vadd.f32 %v1221, %v1222
    %v1224 = vsel %vm829, %v1130, 0.0
    %v1225 = vadd.f32 %v1223, %v1224
    %v1226 = vsel %vm829, %v1131, 0.0
    %v1227 = vadd.f32 %v1225, %v1226
    %v1228 = vsel %vm829, %v1132, 0.0
    %v1229 = vadd.f32 %v1227, %v1228
    %v1230 = vsel %vm829, %v1133, 0.0
    %v1231 = vadd.f32 %v1229, %v1230
    %v1232 = vsel %vm829, %v1134, 0.0
    %v1233 = vadd.f32 %v1231, %v1232
    %v1234 = vsel %vm829, %v1135, 0.0
    %v1235 = vadd.f32 %v1233, %v1234
    %v1236 = vsel %vm829, %v1136, 0.0
    %v1237 = vadd.f32 %v1235, %v1236
    %v1238 = vsel %vm829, %v1137, 0.0
    %v1239 = vadd.f32 %v1237, %v1238
    %v1240 = vsel %vm829, %v1138, 0.0
    %v1241 = vadd.f32 %v1239, %v1240
    %v1242 = vsel %vm829, %v1139, 0.0
    %v1243 = vadd.f32 %v1241, %v1242
    %v1244 = vsel %vm829, %v1140, 0.0
    %v1245 = vadd.f32 %v1243, %v1244
    %v1246 = vsel %vm829, %v1141, 0.0
    %v1247 = vadd.f32 %v1245, %v1246
    %v1248 = vsel %vm829, %v1142, 0.0
    %v1249 = vadd.f32 %v1247, %v1248
    %v1250 = vsel %vm829, %v1143, 0.0
    %v1251 = vadd.f32 %v1249, %v1250
    %v1252 = vsel %vm829, %v1144, 0.0
    %v1253 = vadd.f32 %v1251, %v1252
    %v1254 = vsel %vm829, %v1145, 0.0
    %v1255 = vadd.f32 %v1253, %v1254
    %v1256 = vsel %vm829, %v1146, 0.0
    %v1257 = vadd.f32 %v1255, %v1256
    %v1258 = vsel %vm829, %v1147, 0.0
    %v1259 = vadd.f32 %v1257, %v1258
    %v1260 = vsel %vm829, %v1148, 0.0
    %v1261 = vadd.f32 %v1259, %v1260
    %v1262 = vsel %vm829, %v1149, 0.0
    %v1263 = vadd.f32 %v1261, %v1262
    %v1264 = vsel %vm829, %v1150, 0.0
    %v1265 = vadd.f32 %v1263, %v1264
    %v1266 = vsel %vm829, %v1151, 0.0
    %v1267 = vadd.f32 %v1265, %v1266
    %v1268 = vsel %vm829, %v1152, 0.0
    %v1269 = vadd.f32 %v1267, %v1268
    %v1270 = vsel %vm829, %v1153, 0.0
    %v1271 = vadd.f32 %v1269, %v1270
    %v1272 = vsel %vm829, %v1154, 0.0
    %v1273 = vadd.f32 %v1271, %v1272
    %v1274 = vsel %vm829, %v1155, 0.0
    %v1275 = vadd.f32 %v1273, %v1274
    %v1276 = vsel %vm829, %v1156, 0.0
    %v1277 = vadd.f32 %v1275, %v1276
    %v1278 = vsel %vm829, %v1157, 0.0
    %v1279 = vadd.f32 %v1277, %v1278
    %v1280 = vsel %vm829, %v1158, 0.0
    %v1281 = vadd.f32 %v1279, %v1280
    %v1282 = vsel %vm829, %v1159, 0.0
    %v1283 = vadd.f32 %v1281, %v1282
    %v1284 = vsel %vm829, %v1160, 0.0
    %v1285 = vadd.f32 %v1283, %v1284
    %v1286 = vsel %vm829, %v1161, 0.0
    %v1287 = vadd.f32 %v1285, %v1286
    %v1288 = vsel %vm829, %v1162, 0.0
    %v1289 = vadd.f32 %v1287, %v1288
    %v1290 = vrot.slane %v1289, 4
    %v1291 = vadd.f32 %v1289, %v1290
    %v1292 = vrot.slane %v1291, 2
    %v1293 = vadd.f32 %v1291, %v1292
    %v1294 = vrot.slane %v1293, 1
    %v1295 = vadd.f32 %v1293, %v1294
    %v1296 = vadd.f32 %v1098, %v1295
    %1297 = vst.msk [vmem:[%s4] sm:$0x1] %vm1096, %v1296
    %v1298 = vpack.c.bf16 %v898, %v897
    %v1299 = vpack.c.bf16 %v900, %v899
    %v1300 = vpack.c.bf16 %v902, %v901
    %v1301 = vpack.c.bf16 %v904, %v903
    %v1302 = vpack.c.bf16 %v906, %v905
    %v1303 = vpack.c.bf16 %v908, %v907
    %v1304 = vpack.c.bf16 %v910, %v909
    %v1305 = vpack.c.bf16 %v912, %v911
    %v1306 = vpack.c.bf16 %v914, %v913
    %v1307 = vpack.c.bf16 %v916, %v915
    %v1308 = vpack.c.bf16 %v918, %v917
    %v1309 = vpack.c.bf16 %v920, %v919
    %v1310 = vpack.c.bf16 %v922, %v921
    %v1311 = vpack.c.bf16 %v924, %v923
    %v1312 = vpack.c.bf16 %v926, %v925
    %v1313 = vpack.c.bf16 %v928, %v927
    %v1314 = vpack.c.bf16 %v930, %v929
    %v1315 = vpack.c.bf16 %v932, %v931
    %v1316 = vpack.c.bf16 %v934, %v933
    %v1317 = vpack.c.bf16 %v936, %v935
    %v1318 = vpack.c.bf16 %v938, %v937
    %v1319 = vpack.c.bf16 %v940, %v939
    %v1320 = vpack.c.bf16 %v942, %v941
    %v1321 = vpack.c.bf16 %v944, %v943
    %v1322 = vpack.c.bf16 %v946, %v945
    %v1323 = vpack.c.bf16 %v948, %v947
    %v1324 = vpack.c.bf16 %v950, %v949
    %v1325 = vpack.c.bf16 %v952, %v951
    %v1326 = vpack.c.bf16 %v954, %v953
    %v1327 = vpack.c.bf16 %v956, %v955
    %v1328 = vpack.c.bf16 %v958, %v957
    %v1329 = vpack.c.bf16 %v960, %v959
    %v1362 = vunpack.c.l.b16 %v1298
    %v1363 = vunpack.c.h.b16 %v1298
    %v1364 = vunpack.c.l.b16 %v1299
    %v1365 = vunpack.c.h.b16 %v1299
    %v1366 = vunpack.c.l.b16 %v1300
    %v1367 = vunpack.c.h.b16 %v1300
    %v1368 = vunpack.c.l.b16 %v1301
    %v1369 = vunpack.c.h.b16 %v1301
    %v1370 = vunpack.c.l.b16 %v1302
    %v1371 = vunpack.c.h.b16 %v1302
    %v1372 = vunpack.c.l.b16 %v1303
    %v1373 = vunpack.c.h.b16 %v1303
    %v1374 = vunpack.c.l.b16 %v1304
    %v1375 = vunpack.c.h.b16 %v1304
    %v1376 = vunpack.c.l.b16 %v1305
    %v1377 = vunpack.c.h.b16 %v1305
    %v1378 = vunpack.c.l.b16 %v1306
    %v1379 = vunpack.c.h.b16 %v1306
    %v1380 = vunpack.c.l.b16 %v1307
    %v1381 = vunpack.c.h.b16 %v1307
    %v1382 = vunpack.c.l.b16 %v1308
    %v1383 = vunpack.c.h.b16 %v1308
    %v1384 = vunpack.c.l.b16 %v1309
    %v1385 = vunpack.c.h.b16 %v1309
    %v1386 = vunpack.c.l.b16 %v1310
    %v1387 = vunpack.c.h.b16 %v1310
    %v1388 = vunpack.c.l.b16 %v1311
    %v1389 = vunpack.c.h.b16 %v1311
    %v1390 = vunpack.c.l.b16 %v1312
    %v1391 = vunpack.c.h.b16 %v1312
    %v1392 = vunpack.c.l.b16 %v1313
    %v1393 = vunpack.c.h.b16 %v1313
    %v1394 = vunpack.c.l.b16 %v1314
    %v1395 = vunpack.c.h.b16 %v1314
    %v1396 = vunpack.c.l.b16 %v1315
    %v1397 = vunpack.c.h.b16 %v1315
    %v1398 = vunpack.c.l.b16 %v1316
    %v1399 = vunpack.c.h.b16 %v1316
    %v1400 = vunpack.c.l.b16 %v1317
    %v1401 = vunpack.c.h.b16 %v1317
    %v1402 = vunpack.c.l.b16 %v1318
    %v1403 = vunpack.c.h.b16 %v1318
    %v1404 = vunpack.c.l.b16 %v1319
    %v1405 = vunpack.c.h.b16 %v1319
    %v1406 = vunpack.c.l.b16 %v1320
    %v1407 = vunpack.c.h.b16 %v1320
    %v1408 = vunpack.c.l.b16 %v1321
    %v1409 = vunpack.c.h.b16 %v1321
    %v1410 = vunpack.c.l.b16 %v1322
    %v1411 = vunpack.c.h.b16 %v1322
    %v1412 = vunpack.c.l.b16 %v1323
    %v1413 = vunpack.c.h.b16 %v1323
    %v1414 = vunpack.c.l.b16 %v1324
    %v1415 = vunpack.c.h.b16 %v1324
    %v1416 = vunpack.c.l.b16 %v1325
    %v1417 = vunpack.c.h.b16 %v1325
    %v1418 = vunpack.c.l.b16 %v1326
    %v1419 = vunpack.c.h.b16 %v1326
    %v1420 = vunpack.c.l.b16 %v1327
    %v1421 = vunpack.c.h.b16 %v1327
    %v1422 = vunpack.c.l.b16 %v1328
    %v1423 = vunpack.c.h.b16 %v1328
    %v1424 = vunpack.c.l.b16 %v1329
    %v1425 = vunpack.c.h.b16 %v1329
    %v1426 = vpack.c.b16 %v1362, %v1362
    %v1427 = vpack.c.b16 %v1363, %v1363
    %v1428 = vpack.c.b16 %v1364, %v1364
    %v1429 = vpack.c.b16 %v1365, %v1365
    %v1430 = vpack.c.b16 %v1366, %v1366
    %v1431 = vpack.c.b16 %v1367, %v1367
    %v1432 = vpack.c.b16 %v1368, %v1368
    %v1433 = vpack.c.b16 %v1369, %v1369
    %v1434 = vpack.c.b16 %v1370, %v1370
    %v1435 = vpack.c.b16 %v1371, %v1371
    %v1436 = vpack.c.b16 %v1372, %v1372
    %v1437 = vpack.c.b16 %v1373, %v1373
    %v1438 = vpack.c.b16 %v1374, %v1374
    %v1439 = vpack.c.b16 %v1375, %v1375
    %v1440 = vpack.c.b16 %v1376, %v1376
    %v1441 = vpack.c.b16 %v1377, %v1377
    %v1442 = vpack.c.b16 %v1378, %v1378
    %v1443 = vpack.c.b16 %v1379, %v1379
    %v1444 = vpack.c.b16 %v1380, %v1380
    %v1445 = vpack.c.b16 %v1381, %v1381
    %v1446 = vpack.c.b16 %v1382, %v1382
    %v1447 = vpack.c.b16 %v1383, %v1383
    %v1448 = vpack.c.b16 %v1384, %v1384
    %v1449 = vpack.c.b16 %v1385, %v1385
    %v1450 = vpack.c.b16 %v1386, %v1386
    %v1451 = vpack.c.b16 %v1387, %v1387
    %v1452 = vpack.c.b16 %v1388, %v1388
    %v1453 = vpack.c.b16 %v1389, %v1389
    %v1454 = vpack.c.b16 %v1390, %v1390
    %v1455 = vpack.c.b16 %v1391, %v1391
    %v1456 = vpack.c.b16 %v1392, %v1392
    %v1457 = vpack.c.b16 %v1393, %v1393
    %v1458 = vpack.c.b16 %v1394, %v1394
    %v1459 = vpack.c.b16 %v1395, %v1395
    %v1460 = vpack.c.b16 %v1396, %v1396
    %v1461 = vpack.c.b16 %v1397, %v1397
    %v1462 = vpack.c.b16 %v1398, %v1398
    %v1463 = vpack.c.b16 %v1399, %v1399
    %v1464 = vpack.c.b16 %v1400, %v1400
    %v1465 = vpack.c.b16 %v1401, %v1401
    %v1466 = vpack.c.b16 %v1402, %v1402
    %v1467 = vpack.c.b16 %v1403, %v1403
    %v1468 = vpack.c.b16 %v1404, %v1404
    %v1469 = vpack.c.b16 %v1405, %v1405
    %v1470 = vpack.c.b16 %v1406, %v1406
    %v1471 = vpack.c.b16 %v1407, %v1407
    %v1472 = vpack.c.b16 %v1408, %v1408
    %v1473 = vpack.c.b16 %v1409, %v1409
    %v1474 = vpack.c.b16 %v1410, %v1410
    %v1475 = vpack.c.b16 %v1411, %v1411
    %v1476 = vpack.c.b16 %v1412, %v1412
    %v1477 = vpack.c.b16 %v1413, %v1413
    %v1478 = vpack.c.b16 %v1414, %v1414
    %v1479 = vpack.c.b16 %v1415, %v1415
    %v1480 = vpack.c.b16 %v1416, %v1416
    %v1481 = vpack.c.b16 %v1417, %v1417
    %v1482 = vpack.c.b16 %v1418, %v1418
    %v1483 = vpack.c.b16 %v1419, %v1419
    %v1484 = vpack.c.b16 %v1420, %v1420
    %v1485 = vpack.c.b16 %v1421, %v1421
    %v1486 = vpack.c.b16 %v1422, %v1422
    %v1487 = vpack.c.b16 %v1423, %v1423
    %v1488 = vpack.c.b16 %v1424, %v1424
    %v1489 = vpack.c.b16 %v1425, %v1425
    %vm1554 = vcmask 125952
    %1555 = vst.msk [vmem:[%s2] sm:$0xf] %vm1554, %v1426
    %1556 = vst.msk [vmem:[%s2 + $0x4] sm:$0xf] %vm1554, %v1427
    %1557 = vst.msk [vmem:[%s2 + $0x8] sm:$0xf] %vm1554, %v1428
    %1558 = vst.msk [vmem:[%s2 + $0xc] sm:$0xf] %vm1554, %v1429
    %1559 = vst.msk [vmem:[%s2 + $0x10] sm:$0xf] %vm1554, %v1430
    %1560 = vst.msk [vmem:[%s2 + $0x14] sm:$0xf] %vm1554, %v1431
    %1561 = vst.msk [vmem:[%s2 + $0x18] sm:$0xf] %vm1554, %v1432
    %1562 = vst.msk [vmem:[%s2 + $0x1c] sm:$0xf] %vm1554, %v1433
    %1563 = vst.msk [vmem:[%s2 + $0x20] sm:$0xf] %vm1554, %v1434
    %1564 = vst.msk [vmem:[%s2 + $0x24] sm:$0xf] %vm1554, %v1435
    %1565 = vst.msk [vmem:[%s2 + $0x28] sm:$0xf] %vm1554, %v1436
    %1566 = vst.msk [vmem:[%s2 + $0x2c] sm:$0xf] %vm1554, %v1437
    %1567 = vst.msk [vmem:[%s2 + $0x30] sm:$0xf] %vm1554, %v1438
    %1568 = vst.msk [vmem:[%s2 + $0x34] sm:$0xf] %vm1554, %v1439
    %1569 = vst.msk [vmem:[%s2 + $0x38] sm:$0xf] %vm1554, %v1440
    %1570 = vst.msk [vmem:[%s2 + $0x3c] sm:$0xf] %vm1554, %v1441
    %1571 = vst.msk [vmem:[%s2 + $0x40] sm:$0xf] %vm1554, %v1442
    %1572 = vst.msk [vmem:[%s2 + $0x44] sm:$0xf] %vm1554, %v1443
    %1573 = vst.msk [vmem:[%s2 + $0x48] sm:$0xf] %vm1554, %v1444
    %1574 = vst.msk [vmem:[%s2 + $0x4c] sm:$0xf] %vm1554, %v1445
    %1575 = vst.msk [vmem:[%s2 + $0x50] sm:$0xf] %vm1554, %v1446
    %1576 = vst.msk [vmem:[%s2 + $0x54] sm:$0xf] %vm1554, %v1447
    %1577 = vst.msk [vmem:[%s2 + $0x58] sm:$0xf] %vm1554, %v1448
    %1578 = vst.msk [vmem:[%s2 + $0x5c] sm:$0xf] %vm1554, %v1449
    %1579 = vst.msk [vmem:[%s2 + $0x60] sm:$0xf] %vm1554, %v1450
    %1580 = vst.msk [vmem:[%s2 + $0x64] sm:$0xf] %vm1554, %v1451
    %1581 = vst.msk [vmem:[%s2 + $0x68] sm:$0xf] %vm1554, %v1452
    %1582 = vst.msk [vmem:[%s2 + $0x6c] sm:$0xf] %vm1554, %v1453
    %1583 = vst.msk [vmem:[%s2 + $0x70] sm:$0xf] %vm1554, %v1454
    %1584 = vst.msk [vmem:[%s2 + $0x74] sm:$0xf] %vm1554, %v1455
    %1585 = vst.msk [vmem:[%s2 + $0x78] sm:$0xf] %vm1554, %v1456
    %1586 = vst.msk [vmem:[%s2 + $0x7c] sm:$0xf] %vm1554, %v1457
    %1587 = vst.msk [vmem:[%s2 + $0x80] sm:$0xf] %vm1554, %v1458
    %1588 = vst.msk [vmem:[%s2 + $0x84] sm:$0xf] %vm1554, %v1459
    %1589 = vst.msk [vmem:[%s2 + $0x88] sm:$0xf] %vm1554, %v1460
    %1590 = vst.msk [vmem:[%s2 + $0x8c] sm:$0xf] %vm1554, %v1461
    %1591 = vst.msk [vmem:[%s2 + $0x90] sm:$0xf] %vm1554, %v1462
    %1592 = vst.msk [vmem:[%s2 + $0x94] sm:$0xf] %vm1554, %v1463
    %1593 = vst.msk [vmem:[%s2 + $0x98] sm:$0xf] %vm1554, %v1464
    %1594 = vst.msk [vmem:[%s2 + $0x9c] sm:$0xf] %vm1554, %v1465
    %1595 = vst.msk [vmem:[%s2 + $0xa0] sm:$0xf] %vm1554, %v1466
    %1596 = vst.msk [vmem:[%s2 + $0xa4] sm:$0xf] %vm1554, %v1467
    %1597 = vst.msk [vmem:[%s2 + $0xa8] sm:$0xf] %vm1554, %v1468
    %1598 = vst.msk [vmem:[%s2 + $0xac] sm:$0xf] %vm1554, %v1469
    %1599 = vst.msk [vmem:[%s2 + $0xb0] sm:$0xf] %vm1554, %v1470
    %1600 = vst.msk [vmem:[%s2 + $0xb4] sm:$0xf] %vm1554, %v1471
    %1601 = vst.msk [vmem:[%s2 + $0xb8] sm:$0xf] %vm1554, %v1472
    %1602 = vst.msk [vmem:[%s2 + $0xbc] sm:$0xf] %vm1554, %v1473
    %1603 = vst.msk [vmem:[%s2 + $0xc0] sm:$0xf] %vm1554, %v1474
    %1604 = vst.msk [vmem:[%s2 + $0xc4] sm:$0xf] %vm1554, %v1475
    %1605 = vst.msk [vmem:[%s2 + $0xc8] sm:$0xf] %vm1554, %v1476
    %1606 = vst.msk [vmem:[%s2 + $0xcc] sm:$0xf] %vm1554, %v1477
    %1607 = vst.msk [vmem:[%s2 + $0xd0] sm:$0xf] %vm1554, %v1478
    %1608 = vst.msk [vmem:[%s2 + $0xd4] sm:$0xf] %vm1554, %v1479
    %1609 = vst.msk [vmem:[%s2 + $0xd8] sm:$0xf] %vm1554, %v1480
    %1610 = vst.msk [vmem:[%s2 + $0xdc] sm:$0xf] %vm1554, %v1481
    %1611 = vst.msk [vmem:[%s2 + $0xe0] sm:$0xf] %vm1554, %v1482
    %1612 = vst.msk [vmem:[%s2 + $0xe4] sm:$0xf] %vm1554, %v1483
    %1613 = vst.msk [vmem:[%s2 + $0xe8] sm:$0xf] %vm1554, %v1484
    %1614 = vst.msk [vmem:[%s2 + $0xec] sm:$0xf] %vm1554, %v1485
    %1615 = vst.msk [vmem:[%s2 + $0xf0] sm:$0xf] %vm1554, %v1486
    %1616 = vst.msk [vmem:[%s2 + $0xf4] sm:$0xf] %vm1554, %v1487
    %1617 = vst.msk [vmem:[%s2 + $0xf8] sm:$0xf] %vm1554, %v1488
    %1618 = vst.msk [vmem:[%s2 + $0xfc] sm:$0xf] %vm1554, %v1489
  $region21: #{discriminator128_forward.8} parent=0 // pred_fallthru
    _
  // Predicated region
  $region22: #{discriminator128_forward.8} parent=0 // pred_check
    _
  $region23: #{discriminator128_forward.8} parent=0 // pred_check_branch
    %1620 = sbr.rel (0) target = $region25
  $region24: #{discriminator128_forward.8} parent=0 // pred_region
    _
  $region25: #{discriminator128_forward.8} parent=0 // pred_fallthru
    _
  // Predicated region
  $region26: #{discriminator128_forward.8} parent=0 // pred_check
    _
  $region27: #{discriminator128_forward.8} parent=0 // pred_check_branch
    %1622 = sbr.rel (0) target = $region29
  $region28: #{discriminator128_forward.8} parent=0 // pred_region
    _
  $region29: #{discriminator128_forward.8} parent=0 // pred_fallthru
    _
  // Predicated region
  $region30: #{discriminator128_forward.8} parent=0 // pred_check
    _
  $region31: #{discriminator128_forward.8} parent=0 // pred_check_branch
    %1624 = sbr.rel (0) target = $region33
  $region32: #{discriminator128_forward.8} parent=0 // pred_region
    _
  $region33: #{discriminator128_forward.8} parent=0 // pred_fallthru
    _
  // Predicated region
  $region34: #{discriminator128_forward.8} parent=0 // pred_check
    _
  $region35: #{discriminator128_forward.8} parent=0 // pred_check_branch
    %1626 = sbr.rel (0) target = $region37
  $region36: #{discriminator128_forward.8} parent=0 // pred_region
    _
  $region37: #{discriminator128_forward.8} parent=0 // pred_fallthru
    _
  // Predicated region
  $region38: #{discriminator128_forward.8} parent=0 // pred_check
    _
  $region39: #{discriminator128_forward.8} parent=0 // pred_check_branch
    %1628 = sbr.rel (0) target = $region41
  $region40: #{discriminator128_forward.8} parent=0 // pred_region
    _
  $region41: #{discriminator128_forward.8} parent=0 // pred_fallthru
    _
  // Predicated region
  $region42: #{discriminator128_forward.8} parent=0 // pred_check
    _
  $region43: #{discriminator128_forward.8} parent=0 // pred_check_branch
    %1630 = sbr.rel (0) target = $region45
  $region44: #{discriminator128_forward.8} parent=0 // pred_region
    _
  $region45: #{discriminator128_forward.8} parent=0 // pred_fallthru
    _

// kernel: discriminator128_forward.9
$region0: #{discriminator128_forward.9}
  #allocation0 [shape = 'u32[]', space=smem, size = 0x4, offset = 0x4, fixed_abs, tag = 'smem constant byte address 0x4 - core index']
  #allocation1 [shape = 'u32[144,128]{1,0:T(1,128)}', space=vmem, size = 0x12000, scoped, tag = 'internal scratch']
  %s0 = inlined_call_operand.vmem [shape: bf16[512,16], index: 0, kind: input, shape index: {}]
  %s1 = inlined_call_operand.vmem [shape: f32[1,16], index: 1, kind: input, shape index: {}]
  %s2 = inlined_call_operand.vmem [shape: f32[1,16], index: 2, kind: input, shape index: {}]
  %s3 = inlined_call_operand.vmem [shape: bf16[512,16], index: 3, kind: output, shape index: {}]
  %s4 = sld [smem:[#allocation0]]
  $region22: #{discriminator128_forward.9} parent=0
    _
  %s6 = ssub.s32 1, %s4
  %s7 = scalar_select 0, %s6, %s4
  // Predicated region
  $region2: #{discriminator128_forward.9} parent=0 // pred_check
    _
  $region3: #{discriminator128_forward.9} parent=0 // pred_check_branch
    %9 = sbr.rel (0) target = $region5
  $region4: #{discriminator128_forward.9} parent=0 // pred_region
    _
  $region5: #{discriminator128_forward.9} parent=0 // pred_fallthru
    _
  // Predicated region
  $region6: #{discriminator128_forward.9} parent=0 // pred_check
    _
  $region7: #{discriminator128_forward.9} parent=0 // pred_check_branch
    %11 = sbr.rel (0) target = $region9
  $region8: #{discriminator128_forward.9} parent=0 // pred_region
    _
  $region9: #{discriminator128_forward.9} parent=0 // pred_fallthru
    _
  // Predicated region
  $region10: #{discriminator128_forward.9} parent=0 // pred_check
    _
  $region11: #{discriminator128_forward.9} parent=0 // pred_check_branch
    %13 = sbr.rel (0) target = $region13
  $region12: #{discriminator128_forward.9} parent=0 // pred_region
    _
  $region13: #{discriminator128_forward.9} parent=0 // pred_fallthru
    _
  %v14 = vld [vmem:[%s0] sm:$0xf]
  %v15 = vld [vmem:[%s0 + $0x4] sm:$0xf]
  %v16 = vld [vmem:[%s0 + $0x8] sm:$0xf]
  %v17 = vld [vmem:[%s0 + $0xc] sm:$0xf]
  %v18 = vld [vmem:[%s0 + $0x10] sm:$0xf]
  %v19 = vld [vmem:[%s0 + $0x14] sm:$0xf]
  %v20 = vld [vmem:[%s0 + $0x18] sm:$0xf]
  %v21 = vld [vmem:[%s0 + $0x1c] sm:$0xf]
  %v22 = vld [vmem:[%s0 + $0x20] sm:$0xf]
  %v23 = vld [vmem:[%s0 + $0x24] sm:$0xf]
  %v24 = vld [vmem:[%s0 + $0x28] sm:$0xf]
  %v25 = vld [vmem:[%s0 + $0x2c] sm:$0xf]
  %v26 = vld [vmem:[%s0 + $0x30] sm:$0xf]
  %v27 = vld [vmem:[%s0 + $0x34] sm:$0xf]
  %v28 = vld [vmem:[%s0 + $0x38] sm:$0xf]
  %v29 = vld [vmem:[%s0 + $0x3c] sm:$0xf]
  %v30 = vld [vmem:[%s0 + $0x40] sm:$0xf]
  %v31 = vld [vmem:[%s0 + $0x44] sm:$0xf]
  %v32 = vld [vmem:[%s0 + $0x48] sm:$0xf]
  %v33 = vld [vmem:[%s0 + $0x4c] sm:$0xf]
  %v34 = vld [vmem:[%s0 + $0x50] sm:$0xf]
  %v35 = vld [vmem:[%s0 + $0x54] sm:$0xf]
  %v36 = vld [vmem:[%s0 + $0x58] sm:$0xf]
  %v37 = vld [vmem:[%s0 + $0x5c] sm:$0xf]
  %v38 = vld [vmem:[%s0 + $0x60] sm:$0xf]
  %v39 = vld [vmem:[%s0 + $0x64] sm:$0xf]
  %v40 = vld [vmem:[%s0 + $0x68] sm:$0xf]
  %v41 = vld [vmem:[%s0 + $0x6c] sm:$0xf]
  %v42 = vld [vmem:[%s0 + $0x70] sm:$0xf]
  %v43 = vld [vmem:[%s0 + $0x74] sm:$0xf]
  %v44 = vld [vmem:[%s0 + $0x78] sm:$0xf]
  %v45 = vld [vmem:[%s0 + $0x7c] sm:$0xf]
  %v46 = vld [vmem:[%s0 + $0x80] sm:$0xf]
  %v47 = vld [vmem:[%s0 + $0x84] sm:$0xf]
  %v48 = vld [vmem:[%s0 + $0x88] sm:$0xf]
  %v49 = vld [vmem:[%s0 + $0x8c] sm:$0xf]
  %v50 = vld [vmem:[%s0 + $0x90] sm:$0xf]
  %v51 = vld [vmem:[%s0 + $0x94] sm:$0xf]
  %v52 = vld [vmem:[%s0 + $0x98] sm:$0xf]
  %v53 = vld [vmem:[%s0 + $0x9c] sm:$0xf]
  %v54 = vld [vmem:[%s0 + $0xa0] sm:$0xf]
  %v55 = vld [vmem:[%s0 + $0xa4] sm:$0xf]
  %v56 = vld [vmem:[%s0 + $0xa8] sm:$0xf]
  %v57 = vld [vmem:[%s0 + $0xac] sm:$0xf]
  %v58 = vld [vmem:[%s0 + $0xb0] sm:$0xf]
  %v59 = vld [vmem:[%s0 + $0xb4] sm:$0xf]
  %v60 = vld [vmem:[%s0 + $0xb8] sm:$0xf]
  %v61 = vld [vmem:[%s0 + $0xbc] sm:$0xf]
  %v62 = vld [vmem:[%s0 + $0xc0] sm:$0xf]
  %v63 = vld [vmem:[%s0 + $0xc4] sm:$0xf]
  %v64 = vld [vmem:[%s0 + $0xc8] sm:$0xf]
  %v65 = vld [vmem:[%s0 + $0xcc] sm:$0xf]
  %v66 = vld [vmem:[%s0 + $0xd0] sm:$0xf]
  %v67 = vld [vmem:[%s0 + $0xd4] sm:$0xf]
  %v68 = vld [vmem:[%s0 + $0xd8] sm:$0xf]
  %v69 = vld [vmem:[%s0 + $0xdc] sm:$0xf]
  %v70 = vld [vmem:[%s0 + $0xe0] sm:$0xf]
  %v71 = vld [vmem:[%s0 + $0xe4] sm:$0xf]
  %v72 = vld [vmem:[%s0 + $0xe8] sm:$0xf]
  %v73 = vld [vmem:[%s0 + $0xec] sm:$0xf]
  %v74 = vld [vmem:[%s0 + $0xf0] sm:$0xf]
  %v75 = vld [vmem:[%s0 + $0xf4] sm:$0xf]
  %v76 = vld [vmem:[%s0 + $0xf8] sm:$0xf]
  %v77 = vld [vmem:[%s0 + $0xfc] sm:$0xf]
  %v78 = vunpack.c.l.bf16 %v14
  %v79 = vunpack.c.l.bf16 %v15
  %v80 = vunpack.c.l.bf16 %v16
  %v81 = vunpack.c.l.bf16 %v17
  %v82 = vunpack.c.l.bf16 %v18
  %v83 = vunpack.c.l.bf16 %v19
  %v84 = vunpack.c.l.bf16 %v20
  %v85 = vunpack.c.l.bf16 %v21
  %v86 = vunpack.c.l.bf16 %v22
  %v87 = vunpack.c.l.bf16 %v23
  %v88 = vunpack.c.l.bf16 %v24
  %v89 = vunpack.c.l.bf16 %v25
  %v90 = vunpack.c.l.bf16 %v26
  %v91 = vunpack.c.l.bf16 %v27
  %v92 = vunpack.c.l.bf16 %v28
  %v93 = vunpack.c.l.bf16 %v29
  %v94 = vunpack.c.l.bf16 %v30
  %v95 = vunpack.c.l.bf16 %v31
  %v96 = vunpack.c.l.bf16 %v32
  %v97 = vunpack.c.l.bf16 %v33
  %v98 = vunpack.c.l.bf16 %v34
  %v99 = vunpack.c.l.bf16 %v35
  %v100 = vunpack.c.l.bf16 %v36
  %v101 = vunpack.c.l.bf16 %v37
  %v102 = vunpack.c.l.bf16 %v38
  %v103 = vunpack.c.l.bf16 %v39
  %v104 = vunpack.c.l.bf16 %v40
  %v105 = vunpack.c.l.bf16 %v41
  %v106 = vunpack.c.l.bf16 %v42
  %v107 = vunpack.c.l.bf16 %v43
  %v108 = vunpack.c.l.bf16 %v44
  %v109 = vunpack.c.l.bf16 %v45
  %v110 = vunpack.c.l.bf16 %v46
  %v111 = vunpack.c.l.bf16 %v47
  %v112 = vunpack.c.l.bf16 %v48
  %v113 = vunpack.c.l.bf16 %v49
  %v114 = vunpack.c.l.bf16 %v50
  %v115 = vunpack.c.l.bf16 %v51
  %v116 = vunpack.c.l.bf16 %v52
  %v117 = vunpack.c.l.bf16 %v53
  %v118 = vunpack.c.l.bf16 %v54
  %v119 = vunpack.c.l.bf16 %v55
  %v120 = vunpack.c.l.bf16 %v56
  %v121 = vunpack.c.l.bf16 %v57
  %v122 = vunpack.c.l.bf16 %v58
  %v123 = vunpack.c.l.bf16 %v59
  %v124 = vunpack.c.l.bf16 %v60
  %v125 = vunpack.c.l.bf16 %v61
  %v126 = vunpack.c.l.bf16 %v62
  %v127 = vunpack.c.l.bf16 %v63
  %v128 = vunpack.c.l.bf16 %v64
  %v129 = vunpack.c.l.bf16 %v65
  %v130 = vunpack.c.l.bf16 %v66
  %v131 = vunpack.c.l.bf16 %v67
  %v132 = vunpack.c.l.bf16 %v68
  %v133 = vunpack.c.l.bf16 %v69
  %v134 = vunpack.c.l.bf16 %v70
  %v135 = vunpack.c.l.bf16 %v71
  %v136 = vunpack.c.l.bf16 %v72
  %v137 = vunpack.c.l.bf16 %v73
  %v138 = vunpack.c.l.bf16 %v74
  %v139 = vunpack.c.l.bf16 %v75
  %v140 = vunpack.c.l.bf16 %v76
  %v141 = vunpack.c.l.bf16 %v77
  %v142 = vld [vmem:[%s1] sm:$0x1]
  %v144 = vlaneseq
  %v145 = vshrl.u32 %v144, 7
  %v146 = vsub.s32 0, %v145
  %v147 = vrot.slane %v142, %v146
  %v149 = vmul.f32 %v78, %v147
  %v150 = vmul.f32 %v79, %v147
  %v151 = vmul.f32 %v80, %v147
  %v152 = vmul.f32 %v81, %v147
  %v153 = vmul.f32 %v82, %v147
  %v154 = vmul.f32 %v83, %v147
  %v155 = vmul.f32 %v84, %v147
  %v156 = vmul.f32 %v85, %v147
  %v157 = vmul.f32 %v86, %v147
  %v158 = vmul.f32 %v87, %v147
  %v159 = vmul.f32 %v88, %v147
  %v160 = vmul.f32 %v89, %v147
  %v161 = vmul.f32 %v90, %v147
  %v162 = vmul.f32 %v91, %v147
  %v163 = vmul.f32 %v92, %v147
  %v164 = vmul.f32 %v93, %v147
  %v165 = vmul.f32 %v94, %v147
  %v166 = vmul.f32 %v95, %v147
  %v167 = vmul.f32 %v96, %v147
  %v168 = vmul.f32 %v97, %v147
  %v169 = vmul.f32 %v98, %v147
  %v170 = vmul.f32 %v99, %v147
  %v171 = vmul.f32 %v100, %v147
  %v172 = vmul.f32 %v101, %v147
  %v173 = vmul.f32 %v102, %v147
  %v174 = vmul.f32 %v103, %v147
  %v175 = vmul.f32 %v104, %v147
  %v176 = vmul.f32 %v105, %v147
  %v177 = vmul.f32 %v106, %v147
  %v178 = vmul.f32 %v107, %v147
  %v179 = vmul.f32 %v108, %v147
  %v180 = vmul.f32 %v109, %v147
  %v181 = vmul.f32 %v110, %v147
  %v182 = vmul.f32 %v111, %v147
  %v183 = vmul.f32 %v112, %v147
  %v184 = vmul.f32 %v113, %v147
  %v185 = vmul.f32 %v114, %v147
  %v186 = vmul.f32 %v115, %v147
  %v187 = vmul.f32 %v116, %v147
  %v188 = vmul.f32 %v117, %v147
  %v189 = vmul.f32 %v118, %v147
  %v190 = vmul.f32 %v119, %v147
  %v191 = vmul.f32 %v120, %v147
  %v192 = vmul.f32 %v121, %v147
  %v193 = vmul.f32 %v122, %v147
  %v194 = vmul.f32 %v123, %v147
  %v195 = vmul.f32 %v124, %v147
  %v196 = vmul.f32 %v125, %v147
  %v197 = vmul.f32 %v126, %v147
  %v198 = vmul.f32 %v127, %v147
  %v199 = vmul.f32 %v128, %v147
  %v200 = vmul.f32 %v129, %v147
  %v201 = vmul.f32 %v130, %v147
  %v202 = vmul.f32 %v131, %v147
  %v203 = vmul.f32 %v132, %v147
  %v204 = vmul.f32 %v133, %v147
  %v205 = vmul.f32 %v134, %v147
  %v206 = vmul.f32 %v135, %v147
  %v207 = vmul.f32 %v136, %v147
  %v208 = vmul.f32 %v137, %v147
  %v209 = vmul.f32 %v138, %v147
  %v210 = vmul.f32 %v139, %v147
  %v211 = vmul.f32 %v140, %v147
  %v212 = vmul.f32 %v141, %v147
  %v213 = vld [vmem:[%s2] sm:$0x1]
  %v215 = vlaneseq
  %v216 = vshrl.u32 %v215, 7
  %v217 = vsub.s32 0, %v216
  %v218 = vrot.slane %v213, %v217
  %v220 = vadd.f32 %v149, %v218
  %v221 = vadd.f32 %v150, %v218
  %v222 = vadd.f32 %v151, %v218
  %v223 = vadd.f32 %v152, %v218
  %v224 = vadd.f32 %v153, %v218
  %v225 = vadd.f32 %v154, %v218
  %v226 = vadd.f32 %v155, %v218
  %v227 = vadd.f32 %v156, %v218
  %v228 = vadd.f32 %v157, %v218
  %v229 = vadd.f32 %v158, %v218
  %v230 = vadd.f32 %v159, %v218
  %v231 = vadd.f32 %v160, %v218
  %v232 = vadd.f32 %v161, %v218
  %v233 = vadd.f32 %v162, %v218
  %v234 = vadd.f32 %v163, %v218
  %v235 = vadd.f32 %v164, %v218
  %v236 = vadd.f32 %v165, %v218
  %v237 = vadd.f32 %v166, %v218
  %v238 = vadd.f32 %v167, %v218
  %v239 = vadd.f32 %v168, %v218
  %v240 = vadd.f32 %v169, %v218
  %v241 = vadd.f32 %v170, %v218
  %v242 = vadd.f32 %v171, %v218
  %v243 = vadd.f32 %v172, %v218
  %v244 = vadd.f32 %v173, %v218
  %v245 = vadd.f32 %v174, %v218
  %v246 = vadd.f32 %v175, %v218
  %v247 = vadd.f32 %v176, %v218
  %v248 = vadd.f32 %v177, %v218
  %v249 = vadd.f32 %v178, %v218
  %v250 = vadd.f32 %v179, %v218
  %v251 = vadd.f32 %v180, %v218
  %v252 = vadd.f32 %v181, %v218
  %v253 = vadd.f32 %v182, %v218
  %v254 = vadd.f32 %v183, %v218
  %v255 = vadd.f32 %v184, %v218
  %v256 = vadd.f32 %v185, %v218
  %v257 = vadd.f32 %v186, %v218
  %v258 = vadd.f32 %v187, %v218
  %v259 = vadd.f32 %v188, %v218
  %v260 = vadd.f32 %v189, %v218
  %v261 = vadd.f32 %v190, %v218
  %v262 = vadd.f32 %v191, %v218
  %v263 = vadd.f32 %v192, %v218
  %v264 = vadd.f32 %v193, %v218
  %v265 = vadd.f32 %v194, %v218
  %v266 = vadd.f32 %v195, %v218
  %v267 = vadd.f32 %v196, %v218
  %v268 = vadd.f32 %v197, %v218
  %v269 = vadd.f32 %v198, %v218
  %v270 = vadd.f32 %v199, %v218
  %v271 = vadd.f32 %v200, %v218
  %v272 = vadd.f32 %v201, %v218
  %v273 = vadd.f32 %v202, %v218
  %v274 = vadd.f32 %v203, %v218
  %v275 = vadd.f32 %v204, %v218
  %v276 = vadd.f32 %v205, %v218
  %v277 = vadd.f32 %v206, %v218
  %v278 = vadd.f32 %v207, %v218
  %v279 = vadd.f32 %v208, %v218
  %v280 = vadd.f32 %v209, %v218
  %v281 = vadd.f32 %v210, %v218
  %v282 = vadd.f32 %v211, %v218
  %v283 = vadd.f32 %v212, %v218
  %vm284 = vcmp.gt.f32.partialorder %v220, 0.0
  %vm285 = vcmp.gt.f32.partialorder %v221, 0.0
  %vm286 = vcmp.gt.f32.partialorder %v222, 0.0
  %vm287 = vcmp.gt.f32.partialorder %v223, 0.0
  %vm288 = vcmp.gt.f32.partialorder %v224, 0.0
  %vm289 = vcmp.gt.f32.partialorder %v225, 0.0
  %vm290 = vcmp.gt.f32.partialorder %v226, 0.0
  %vm291 = vcmp.gt.f32.partialorder %v227, 0.0
  %vm292 = vcmp.gt.f32.partialorder %v228, 0.0
  %vm293 = vcmp.gt.f32.partialorder %v229, 0.0
  %vm294 = vcmp.gt.f32.partialorder %v230, 0.0
  %vm295 = vcmp.gt.f32.partialorder %v231, 0.0
  %vm296 = vcmp.gt.f32.partialorder %v232, 0.0
  %vm297 = vcmp.gt.f32.partialorder %v233, 0.0
  %vm298 = vcmp.gt.f32.partialorder %v234, 0.0
  %vm299 = vcmp.gt.f32.partialorder %v235, 0.0
  %vm300 = vcmp.gt.f32.partialorder %v236, 0.0
  %vm301 = vcmp.gt.f32.partialorder %v237, 0.0
  %vm302 = vcmp.gt.f32.partialorder %v238, 0.0
  %vm303 = vcmp.gt.f32.partialorder %v239, 0.0
  %vm304 = vcmp.gt.f32.partialorder %v240, 0.0
  %vm305 = vcmp.gt.f32.partialorder %v241, 0.0
  %vm306 = vcmp.gt.f32.partialorder %v242, 0.0
  %vm307 = vcmp.gt.f32.partialorder %v243, 0.0
  %vm308 = vcmp.gt.f32.partialorder %v244, 0.0
  %vm309 = vcmp.gt.f32.partialorder %v245, 0.0
  %vm310 = vcmp.gt.f32.partialorder %v246, 0.0
  %vm311 = vcmp.gt.f32.partialorder %v247, 0.0
  %vm312 = vcmp.gt.f32.partialorder %v248, 0.0
  %vm313 = vcmp.gt.f32.partialorder %v249, 0.0
  %vm314 = vcmp.gt.f32.partialorder %v250, 0.0
  %vm315 = vcmp.gt.f32.partialorder %v251, 0.0
  %vm316 = vcmp.gt.f32.partialorder %v252, 0.0
  %vm317 = vcmp.gt.f32.partialorder %v253, 0.0
  %vm318 = vcmp.gt.f32.partialorder %v254, 0.0
  %vm319 = vcmp.gt.f32.partialorder %v255, 0.0
  %vm320 = vcmp.gt.f32.partialorder %v256, 0.0
  %vm321 = vcmp.gt.f32.partialorder %v257, 0.0
  %vm322 = vcmp.gt.f32.partialorder %v258, 0.0
  %vm323 = vcmp.gt.f32.partialorder %v259, 0.0
  %vm324 = vcmp.gt.f32.partialorder %v260, 0.0
  %vm325 = vcmp.gt.f32.partialorder %v261, 0.0
  %vm326 = vcmp.gt.f32.partialorder %v262, 0.0
  %vm327 = vcmp.gt.f32.partialorder %v263, 0.0
  %vm328 = vcmp.gt.f32.partialorder %v264, 0.0
  %vm329 = vcmp.gt.f32.partialorder %v265, 0.0
  %vm330 = vcmp.gt.f32.partialorder %v266, 0.0
  %vm331 = vcmp.gt.f32.partialorder %v267, 0.0
  %vm332 = vcmp.gt.f32.partialorder %v268, 0.0
  %vm333 = vcmp.gt.f32.partialorder %v269, 0.0
  %vm334 = vcmp.gt.f32.partialorder %v270, 0.0
  %vm335 = vcmp.gt.f32.partialorder %v271, 0.0
  %vm336 = vcmp.gt.f32.partialorder %v272, 0.0
  %vm337 = vcmp.gt.f32.partialorder %v273, 0.0
  %vm338 = vcmp.gt.f32.partialorder %v274, 0.0
  %vm339 = vcmp.gt.f32.partialorder %v275, 0.0
  %vm340 = vcmp.gt.f32.partialorder %v276, 0.0
  %vm341 = vcmp.gt.f32.partialorder %v277, 0.0
  %vm342 = vcmp.gt.f32.partialorder %v278, 0.0
  %vm343 = vcmp.gt.f32.partialorder %v279, 0.0
  %vm344 = vcmp.gt.f32.partialorder %v280, 0.0
  %vm345 = vcmp.gt.f32.partialorder %v281, 0.0
  %vm346 = vcmp.gt.f32.partialorder %v282, 0.0
  %vm347 = vcmp.gt.f32.partialorder %v283, 0.0
  %v348 = vmul.f32 %v220, 0.2
  %v349 = vmul.f32 %v221, 0.2
  %v350 = vmul.f32 %v222, 0.2
  %v351 = vmul.f32 %v223, 0.2
  %v352 = vmul.f32 %v224, 0.2
  %v353 = vmul.f32 %v225, 0.2
  %v354 = vmul.f32 %v226, 0.2
  %v355 = vmul.f32 %v227, 0.2
  %v356 = vmul.f32 %v228, 0.2
  %v357 = vmul.f32 %v229, 0.2
  %v358 = vmul.f32 %v230, 0.2
  %v359 = vmul.f32 %v231, 0.2
  %v360 = vmul.f32 %v232, 0.2
  %v361 = vmul.f32 %v233, 0.2
  %v362 = vmul.f32 %v234, 0.2
  %v363 = vmul.f32 %v235, 0.2
  %v364 = vmul.f32 %v236, 0.2
  %v365 = vmul.f32 %v237, 0.2
  %v366 = vmul.f32 %v238, 0.2
  %v367 = vmul.f32 %v239, 0.2
  %v368 = vmul.f32 %v240, 0.2
  %v369 = vmul.f32 %v241, 0.2
  %v370 = vmul.f32 %v242, 0.2
  %v371 = vmul.f32 %v243, 0.2
  %v372 = vmul.f32 %v244, 0.2
  %v373 = vmul.f32 %v245, 0.2
  %v374 = vmul.f32 %v246, 0.2
  %v375 = vmul.f32 %v247, 0.2
  %v376 = vmul.f32 %v248, 0.2
  %v377 = vmul.f32 %v249, 0.2
  %v378 = vmul.f32 %v250, 0.2
  %v379 = vmul.f32 %v251, 0.2
  %v380 = vmul.f32 %v252, 0.2
  %v381 = vmul.f32 %v253, 0.2
  %v382 = vmul.f32 %v254, 0.2
  %v383 = vmul.f32 %v255, 0.2
  %v384 = vmul.f32 %v256, 0.2
  %v385 = vmul.f32 %v257, 0.2
  %v386 = vmul.f32 %v258, 0.2
  %v387 = vmul.f32 %v259, 0.2
  %v388 = vmul.f32 %v260, 0.2
  %v389 = vmul.f32 %v261, 0.2
  %v390 = vmul.f32 %v262, 0.2
  %v391 = vmul.f32 %v263, 0.2
  %v392 = vmul.f32 %v264, 0.2
  %v393 = vmul.f32 %v265, 0.2
  %v394 = vmul.f32 %v266, 0.2
  %v395 = vmul.f32 %v267, 0.2
  %v396 = vmul.f32 %v268, 0.2
  %v397 = vmul.f32 %v269, 0.2
  %v398 = vmul.f32 %v270, 0.2
  %v399 = vmul.f32 %v271, 0.2
  %v400 = vmul.f32 %v272, 0.2
  %v401 = vmul.f32 %v273, 0.2
  %v402 = vmul.f32 %v274, 0.2
  %v403 = vmul.f32 %v275, 0.2
  %v404 = vmul.f32 %v276, 0.2
  %v405 = vmul.f32 %v277, 0.2
  %v406 = vmul.f32 %v278, 0.2
  %v407 = vmul.f32 %v279, 0.2
  %v408 = vmul.f32 %v280, 0.2
  %v409 = vmul.f32 %v281, 0.2
  %v410 = vmul.f32 %v282, 0.2
  %v411 = vmul.f32 %v283, 0.2
  %v412 = vsel %vm284, %v220, %v348
  %v413 = vsel %vm285, %v221, %v349
  %v414 = vsel %vm286, %v222, %v350
  %v415 = vsel %vm287, %v223, %v351
  %v416 = vsel %vm288, %v224, %v352
  %v417 = vsel %vm289, %v225, %v353
  %v418 = vsel %vm290, %v226, %v354
  %v419 = vsel %vm291, %v227, %v355
  %v420 = vsel %vm292, %v228, %v356
  %v421 = vsel %vm293, %v229, %v357
  %v422 = vsel %vm294, %v230, %v358
  %v423 = vsel %vm295, %v231, %v359
  %v424 = vsel %vm296, %v232, %v360
  %v425 = vsel %vm297, %v233, %v361
  %v426 = vsel %vm298, %v234, %v362
  %v427 = vsel %vm299, %v235, %v363
  %v428 = vsel %vm300, %v236, %v364
  %v429 = vsel %vm301, %v237, %v365
  %v430 = vsel %vm302, %v238, %v366
  %v431 = vsel %vm303, %v239, %v367
  %v432 = vsel %vm304, %v240, %v368
  %v433 = vsel %vm305, %v241, %v369
  %v434 = vsel %vm306, %v242, %v370
  %v435 = vsel %vm307, %v243, %v371
  %v436 = vsel %vm308, %v244, %v372
  %v437 = vsel %vm309, %v245, %v373
  %v438 = vsel %vm310, %v246, %v374
  %v439 = vsel %vm311, %v247, %v375
  %v440 = vsel %vm312, %v248, %v376
  %v441 = vsel %vm313, %v249, %v377
  %v442 = vsel %vm314, %v250, %v378
  %v443 = vsel %vm315, %v251, %v379
  %v444 = vsel %vm316, %v252, %v380
  %v445 = vsel %vm317, %v253, %v381
  %v446 = vsel %vm318, %v254, %v382
  %v447 = vsel %vm319, %v255, %v383
  %v448 = vsel %vm320, %v256, %v384
  %v449 = vsel %vm321, %v257, %v385
  %v450 = vsel %vm322, %v258, %v386
  %v451 = vsel %vm323, %v259, %v387
  %v452 = vsel %vm324, %v260, %v388
  %v453 = vsel %vm325, %v261, %v389
  %v454 = vsel %vm326, %v262, %v390
  %v455 = vsel %vm327, %v263, %v391
  %v456 = vsel %vm328, %v264, %v392
  %v457 = vsel %vm329, %v265, %v393
  %v458 = vsel %vm330, %v266, %v394
  %v459 = vsel %vm331, %v267, %v395
  %v460 = vsel %vm332, %v268, %v396
  %v461 = vsel %vm333, %v269, %v397
  %v462 = vsel %vm334, %v270, %v398
  %v463 = vsel %vm335, %v271, %v399
  %v464 = vsel %vm336, %v272, %v400
  %v465 = vsel %vm337, %v273, %v401
  %v466 = vsel %vm338, %v274, %v402
  %v467 = vsel %vm339, %v275, %v403
  %v468 = vsel %vm340, %v276, %v404
  %v469 = vsel %vm341, %v277, %v405
  %v470 = vsel %vm342, %v278, %v406
  %v471 = vsel %vm343, %v279, %v407
  %v472 = vsel %vm344, %v280, %v408
  %v473 = vsel %vm345, %v281, %v409
  %v474 = vsel %vm346, %v282, %v410
  %v475 = vsel %vm347, %v283, %v411
  %v476 = vpack.c.bf16 %v413, %v412
  %v477 = vpack.c.bf16 %v415, %v414
  %v478 = vpack.c.bf16 %v417, %v416
  %v479 = vpack.c.bf16 %v419, %v418
  %v480 = vpack.c.bf16 %v421, %v420
  %v481 = vpack.c.bf16 %v423, %v422
  %v482 = vpack.c.bf16 %v425, %v424
  %v483 = vpack.c.bf16 %v427, %v426
  %v484 = vpack.c.bf16 %v429, %v428
  %v485 = vpack.c.bf16 %v431, %v430
  %v486 = vpack.c.bf16 %v433, %v432
  %v487 = vpack.c.bf16 %v435, %v434
  %v488 = vpack.c.bf16 %v437, %v436
  %v489 = vpack.c.bf16 %v439, %v438
  %v490 = vpack.c.bf16 %v441, %v440
  %v491 = vpack.c.bf16 %v443, %v442
  %v492 = vpack.c.bf16 %v445, %v444
  %v493 = vpack.c.bf16 %v447, %v446
  %v494 = vpack.c.bf16 %v449, %v448
  %v495 = vpack.c.bf16 %v451, %v450
  %v496 = vpack.c.bf16 %v453, %v452
  %v497 = vpack.c.bf16 %v455, %v454
  %v498 = vpack.c.bf16 %v457, %v456
  %v499 = vpack.c.bf16 %v459, %v458
  %v500 = vpack.c.bf16 %v461, %v460
  %v501 = vpack.c.bf16 %v463, %v462
  %v502 = vpack.c.bf16 %v465, %v464
  %v503 = vpack.c.bf16 %v467, %v466
  %v504 = vpack.c.bf16 %v469, %v468
  %v505 = vpack.c.bf16 %v471, %v470
  %v506 = vpack.c.bf16 %v473, %v472
  %v507 = vpack.c.bf16 %v475, %v474
  %v540 = vunpack.c.l.b16 %v476
  %v541 = vunpack.c.h.b16 %v476
  %v542 = vunpack.c.l.b16 %v477
  %v543 = vunpack.c.h.b16 %v477
  %v544 = vunpack.c.l.b16 %v478
  %v545 = vunpack.c.h.b16 %v478
  %v546 = vunpack.c.l.b16 %v479
  %v547 = vunpack.c.h.b16 %v479
  %v548 = vunpack.c.l.b16 %v480
  %v549 = vunpack.c.h.b16 %v480
  %v550 = vunpack.c.l.b16 %v481
  %v551 = vunpack.c.h.b16 %v481
  %v552 = vunpack.c.l.b16 %v482
  %v553 = vunpack.c.h.b16 %v482
  %v554 = vunpack.c.l.b16 %v483
  %v555 = vunpack.c.h.b16 %v483
  %v556 = vunpack.c.l.b16 %v484
  %v557 = vunpack.c.h.b16 %v484
  %v558 = vunpack.c.l.b16 %v485
  %v559 = vunpack.c.h.b16 %v485
  %v560 = vunpack.c.l.b16 %v486
  %v561 = vunpack.c.h.b16 %v486
  %v562 = vunpack.c.l.b16 %v487
  %v563 = vunpack.c.h.b16 %v487
  %v564 = vunpack.c.l.b16 %v488
  %v565 = vunpack.c.h.b16 %v488
  %v566 = vunpack.c.l.b16 %v489
  %v567 = vunpack.c.h.b16 %v489
  %v568 = vunpack.c.l.b16 %v490
  %v569 = vunpack.c.h.b16 %v490
  %v570 = vunpack.c.l.b16 %v491
  %v571 = vunpack.c.h.b16 %v491
  %v572 = vunpack.c.l.b16 %v492
  %v573 = vunpack.c.h.b16 %v492
  %v574 = vunpack.c.l.b16 %v493
  %v575 = vunpack.c.h.b16 %v493
  %v576 = vunpack.c.l.b16 %v494
  %v577 = vunpack.c.h.b16 %v494
  %v578 = vunpack.c.l.b16 %v495
  %v579 = vunpack.c.h.b16 %v495
  %v580 = vunpack.c.l.b16 %v496
  %v581 = vunpack.c.h.b16 %v496
  %v582 = vunpack.c.l.b16 %v497
  %v583 = vunpack.c.h.b16 %v497
  %v584 = vunpack.c.l.b16 %v498
  %v585 = vunpack.c.h.b16 %v498
  %v586 = vunpack.c.l.b16 %v499
  %v587 = vunpack.c.h.b16 %v499
  %v588 = vunpack.c.l.b16 %v500
  %v589 = vunpack.c.h.b16 %v500
  %v590 = vunpack.c.l.b16 %v501
  %v591 = vunpack.c.h.b16 %v501
  %v592 = vunpack.c.l.b16 %v502
  %v593 = vunpack.c.h.b16 %v502
  %v594 = vunpack.c.l.b16 %v503
  %v595 = vunpack.c.h.b16 %v503
  %v596 = vunpack.c.l.b16 %v504
  %v597 = vunpack.c.h.b16 %v504
  %v598 = vunpack.c.l.b16 %v505
  %v599 = vunpack.c.h.b16 %v505
  %v600 = vunpack.c.l.b16 %v506
  %v601 = vunpack.c.h.b16 %v506
  %v602 = vunpack.c.l.b16 %v507
  %v603 = vunpack.c.h.b16 %v507
  %v604 = vpack.c.b16 %v540, %v540
  %v605 = vpack.c.b16 %v541, %v541
  %v606 = vpack.c.b16 %v542, %v542
  %v607 = vpack.c.b16 %v543, %v543
  %v608 = vpack.c.b16 %v544, %v544
  %v609 = vpack.c.b16 %v545, %v545
  %v610 = vpack.c.b16 %v546, %v546
  %v611 = vpack.c.b16 %v547, %v547
  %v612 = vpack.c.b16 %v548, %v548
  %v613 = vpack.c.b16 %v549, %v549
  %v614 = vpack.c.b16 %v550, %v550
  %v615 = vpack.c.b16 %v551, %v551
  %v616 = vpack.c.b16 %v552, %v552
  %v617 = vpack.c.b16 %v553, %v553
  %v618 = vpack.c.b16 %v554, %v554
  %v619 = vpack.c.b16 %v555, %v555
  %v620 = vpack.c.b16 %v556, %v556
  %v621 = vpack.c.b16 %v557, %v557
  %v622 = vpack.c.b16 %v558, %v558
  %v623 = vpack.c.b16 %v559, %v559
  %v624 = vpack.c.b16 %v560, %v560
  %v625 = vpack.c.b16 %v561, %v561
  %v626 = vpack.c.b16 %v562, %v562
  %v627 = vpack.c.b16 %v563, %v563
  %v628 = vpack.c.b16 %v564, %v564
  %v629 = vpack.c.b16 %v565, %v565
  %v630 = vpack.c.b16 %v566, %v566
  %v631 = vpack.c.b16 %v567, %v567
  %v632 = vpack.c.b16 %v568, %v568
  %v633 = vpack.c.b16 %v569, %v569
  %v634 = vpack.c.b16 %v570, %v570
  %v635 = vpack.c.b16 %v571, %v571
  %v636 = vpack.c.b16 %v572, %v572
  %v637 = vpack.c.b16 %v573, %v573
  %v638 = vpack.c.b16 %v574, %v574
  %v639 = vpack.c.b16 %v575, %v575
  %v640 = vpack.c.b16 %v576, %v576
  %v641 = vpack.c.b16 %v577, %v577
  %v642 = vpack.c.b16 %v578, %v578
  %v643 = vpack.c.b16 %v579, %v579
  %v644 = vpack.c.b16 %v580, %v580
  %v645 = vpack.c.b16 %v581, %v581
  %v646 = vpack.c.b16 %v582, %v582
  %v647 = vpack.c.b16 %v583, %v583
  %v648 = vpack.c.b16 %v584, %v584
  %v649 = vpack.c.b16 %v585, %v585
  %v650 = vpack.c.b16 %v586, %v586
  %v651 = vpack.c.b16 %v587, %v587
  %v652 = vpack.c.b16 %v588, %v588
  %v653 = vpack.c.b16 %v589, %v589
  %v654 = vpack.c.b16 %v590, %v590
  %v655 = vpack.c.b16 %v591, %v591
  %v656 = vpack.c.b16 %v592, %v592
  %v657 = vpack.c.b16 %v593, %v593
  %v658 = vpack.c.b16 %v594, %v594
  %v659 = vpack.c.b16 %v595, %v595
  %v660 = vpack.c.b16 %v596, %v596
  %v661 = vpack.c.b16 %v597, %v597
  %v662 = vpack.c.b16 %v598, %v598
  %v663 = vpack.c.b16 %v599, %v599
  %v664 = vpack.c.b16 %v600, %v600
  %v665 = vpack.c.b16 %v601, %v601
  %v666 = vpack.c.b16 %v602, %v602
  %v667 = vpack.c.b16 %v603, %v603
  %vm732 = vcmask 125952
  %733 = vst.msk [vmem:[%s3] sm:$0xf] %vm732, %v604
  %734 = vst.msk [vmem:[%s3 + $0x4] sm:$0xf] %vm732, %v605
  %735 = vst.msk [vmem:[%s3 + $0x8] sm:$0xf] %vm732, %v606
  %736 = vst.msk [vmem:[%s3 + $0xc] sm:$0xf] %vm732, %v607
  %737 = vst.msk [vmem:[%s3 + $0x10] sm:$0xf] %vm732, %v608
  %738 = vst.msk [vmem:[%s3 + $0x14] sm:$0xf] %vm732, %v609
  %739 = vst.msk [vmem:[%s3 + $0x18] sm:$0xf] %vm732, %v610
  %740 = vst.msk [vmem:[%s3 + $0x1c] sm:$0xf] %vm732, %v611
  %741 = vst.msk [vmem:[%s3 + $0x20] sm:$0xf] %vm732, %v612
  %742 = vst.msk [vmem:[%s3 + $0x24] sm:$0xf] %vm732, %v613
  %743 = vst.msk [vmem:[%s3 + $0x28] sm:$0xf] %vm732, %v614
  %744 = vst.msk [vmem:[%s3 + $0x2c] sm:$0xf] %vm732, %v615
  %745 = vst.msk [vmem:[%s3 + $0x30] sm:$0xf] %vm732, %v616
  %746 = vst.msk [vmem:[%s3 + $0x34] sm:$0xf] %vm732, %v617
  %747 = vst.msk [vmem:[%s3 + $0x38] sm:$0xf] %vm732, %v618
  %748 = vst.msk [vmem:[%s3 + $0x3c] sm:$0xf] %vm732, %v619
  %749 = vst.msk [vmem:[%s3 + $0x40] sm:$0xf] %vm732, %v620
  %750 = vst.msk [vmem:[%s3 + $0x44] sm:$0xf] %vm732, %v621
  %751 = vst.msk [vmem:[%s3 + $0x48] sm:$0xf] %vm732, %v622
  %752 = vst.msk [vmem:[%s3 + $0x4c] sm:$0xf] %vm732, %v623
  %753 = vst.msk [vmem:[%s3 + $0x50] sm:$0xf] %vm732, %v624
  %754 = vst.msk [vmem:[%s3 + $0x54] sm:$0xf] %vm732, %v625
  %755 = vst.msk [vmem:[%s3 + $0x58] sm:$0xf] %vm732, %v626
  %756 = vst.msk [vmem:[%s3 + $0x5c] sm:$0xf] %vm732, %v627
  %757 = vst.msk [vmem:[%s3 + $0x60] sm:$0xf] %vm732, %v628
  %758 = vst.msk [vmem:[%s3 + $0x64] sm:$0xf] %vm732, %v629
  %759 = vst.msk [vmem:[%s3 + $0x68] sm:$0xf] %vm732, %v630
  %760 = vst.msk [vmem:[%s3 + $0x6c] sm:$0xf] %vm732, %v631
  %761 = vst.msk [vmem:[%s3 + $0x70] sm:$0xf] %vm732, %v632
  %762 = vst.msk [vmem:[%s3 + $0x74] sm:$0xf] %vm732, %v633
  %763 = vst.msk [vmem:[%s3 + $0x78] sm:$0xf] %vm732, %v634
  %764 = vst.msk [vmem:[%s3 + $0x7c] sm:$0xf] %vm732, %v635
  %765 = vst.msk [vmem:[%s3 + $0x80] sm:$0xf] %vm732, %v636
  %766 = vst.msk [vmem:[%s3 + $0x84] sm:$0xf] %vm732, %v637
  %767 = vst.msk [vmem:[%s3 + $0x88] sm:$0xf] %vm732, %v638
  %768 = vst.msk [vmem:[%s3 + $0x8c] sm:$0xf] %vm732, %v639
  %769 = vst.msk [vmem:[%s3 + $0x90] sm:$0xf] %vm732, %v640
  %770 = vst.msk [vmem:[%s3 + $0x94] sm:$0xf] %vm732, %v641
  %771 = vst.msk [vmem:[%s3 + $0x98] sm:$0xf] %vm732, %v642
  %772 = vst.msk [vmem:[%s3 + $0x9c] sm:$0xf] %vm732, %v643
  %773 = vst.msk [vmem:[%s3 + $0xa0] sm:$0xf] %vm732, %v644
  %774 = vst.msk [vmem:[%s3 + $0xa4] sm:$0xf] %vm732, %v645
  %775 = vst.msk [vmem:[%s3 + $0xa8] sm:$0xf] %vm732, %v646
  %776 = vst.msk [vmem:[%s3 + $0xac] sm:$0xf] %vm732, %v647
  %777 = vst.msk [vmem:[%s3 + $0xb0] sm:$0xf] %vm732, %v648
  %778 = vst.msk [vmem:[%s3 + $0xb4] sm:$0xf] %vm732, %v649
  %779 = vst.msk [vmem:[%s3 + $0xb8] sm:$0xf] %vm732, %v650
  %780 = vst.msk [vmem:[%s3 + $0xbc] sm:$0xf] %vm732, %v651
  %781 = vst.msk [vmem:[%s3 + $0xc0] sm:$0xf] %vm732, %v652
  %782 = vst.msk [vmem:[%s3 + $0xc4] sm:$0xf] %vm732, %v653
  %783 = vst.msk [vmem:[%s3 + $0xc8] sm:$0xf] %vm732, %v654
  %784 = vst.msk [vmem:[%s3 + $0xcc] sm:$0xf] %vm732, %v655
  %785 = vst.msk [vmem:[%s3 + $0xd0] sm:$0xf] %vm732, %v656
  %786 = vst.msk [vmem:[%s3 + $0xd4] sm:$0xf] %vm732, %v657
  %787 = vst.msk [vmem:[%s3 + $0xd8] sm:$0xf] %vm732, %v658
  %788 = vst.msk [vmem:[%s3 + $0xdc] sm:$0xf] %vm732, %v659
  %789 = vst.msk [vmem:[%s3 + $0xe0] sm:$0xf] %vm732, %v660
  %790 = vst.msk [vmem:[%s3 + $0xe4] sm:$0xf] %vm732, %v661
  %791 = vst.msk [vmem:[%s3 + $0xe8] sm:$0xf] %vm732, %v662
  %792 = vst.msk [vmem:[%s3 + $0xec] sm:$0xf] %vm732, %v663
  %793 = vst.msk [vmem:[%s3 + $0xf0] sm:$0xf] %vm732, %v664
  %794 = vst.msk [vmem:[%s3 + $0xf4] sm:$0xf] %vm732, %v665
  %795 = vst.msk [vmem:[%s3 + $0xf8] sm:$0xf] %vm732, %v666
  %796 = vst.msk [vmem:[%s3 + $0xfc] sm:$0xf] %vm732, %v667
  // Predicated region
  $region14: #{discriminator128_forward.9} parent=0 // pred_check
    _
  $region15: #{discriminator128_forward.9} parent=0 // pred_check_branch
    %798 = sbr.rel (0) target = $region17
  $region16: #{discriminator128_forward.9} parent=0 // pred_region
    _
  $region17: #{discriminator128_forward.9} parent=0 // pred_fallthru
    _
  // Predicated region
  $region18: #{discriminator128_forward.9} parent=0 // pred_check
    _
  $region19: #{discriminator128_forward.9} parent=0 // pred_check_branch
    %800 = sbr.rel (0) target = $region21
  $region20: #{discriminator128_forward.9} parent=0 // pred_region
    _
  $region21: #{discriminator128_forward.9} parent=0 // pred_fallthru
    _

// kernel: discriminator128_forward.10
$region0: #{discriminator128_forward.10}
  #allocation0 [shape = 'u32[]', space=smem, size = 0x4, offset = 0x4, fixed_abs, tag = 'smem constant byte address 0x4 - core index']
  #allocation1 [shape = 'u32[144,128]{1,0:T(1,128)}', space=vmem, size = 0x12000, scoped, tag = 'internal scratch']
  #allocation2 [shape = 'f32[128,32]{1,0:T(8,128)}', space=vmem, size = 0x10000, scoped, tag = 'scratch operand']
  %s0 = inlined_call_operand.vmem [shape: bf16[128,256], index: 0, kind: input, shape index: {}]
  %s1 = inlined_call_operand.vmem [shape: bf16[256,32], index: 1, kind: input, shape index: {}]
  %s2 = inlined_call_operand.vmem [shape: bf16[128,32], index: 2, kind: output, shape index: {0}]
  %s3 = inlined_call_operand.vmem [shape: f32[1,32], index: 3, kind: output, shape index: {1}]
  %s4 = inlined_call_operand.vmem [shape: f32[1,32], index: 4, kind: output, shape index: {2}]
  %5 = xla_tuple %s2, %s3, %s4
  %s6 = sld [smem:[#allocation0]]
  $region46: #{discriminator128_forward.10} parent=0
    _
  %s8 = ssub.s32 1, %s6
  %s9 = scalar_select 0, %s8, %s6
  // Predicated region
  $region2: #{discriminator128_forward.10} parent=0 // pred_check
    _
  $region3: #{discriminator128_forward.10} parent=0 // pred_check_branch
    %11 = sbr.rel (0) target = $region5
  $region4: #{discriminator128_forward.10} parent=0 // pred_region
    _
  $region5: #{discriminator128_forward.10} parent=0 // pred_fallthru
    _
  // Predicated region
  $region6: #{discriminator128_forward.10} parent=0 // pred_check
    _
  $region7: #{discriminator128_forward.10} parent=0 // pred_check_branch
    %13 = sbr.rel (0) target = $region9
  $region8: #{discriminator128_forward.10} parent=0 // pred_region
    _
  $region9: #{discriminator128_forward.10} parent=0 // pred_fallthru
    _
  %p15 = scmp.eq.s32.totalorder 0, 0
  %p16 = scmp.eq.s32.totalorder 0, 0
  %p17 = pnand %p15, %p16
  %p18 = pneg %p17
  // Predicated region
  $region10: #{discriminator128_forward.10} parent=0 // pred_check
    _
  $region11: #{discriminator128_forward.10} parent=0 // pred_check_branch
    %20 = sbr.rel (%p17) target = $region13
  $region12: #{discriminator128_forward.10} parent=0 // pred_region
    %vm21 = vcmask 253952
    %22 = vst.msk [vmem:[%s3] sm:$0x1] %vm21, 0.0
    %23 = vst.msk [vmem:[%s4] sm:$0x1] %vm21, 0.0
  $region13: #{discriminator128_forward.10} parent=0 // pred_fallthru
    _
  // Predicated region
  $region14: #{discriminator128_forward.10} parent=0 // pred_check
    %p24 = pneg %p16
  $region15: #{discriminator128_forward.10} parent=0 // pred_check_branch
    %26 = sbr.rel (%p24) target = $region17
  $region16: #{discriminator128_forward.10} parent=0 // pred_region
    %vm27 = vcmask 261120
    %28 = vst.msk [vmem:[#allocation2] sm:$0xff] %vm27, 0.0
    %29 = vst.msk [vmem:[#allocation2 + $0x8] sm:$0xff] %vm27, 0.0
    %30 = vst.msk [vmem:[#allocation2 + $0x10] sm:$0xff] %vm27, 0.0
    %31 = vst.msk [vmem:[#allocation2 + $0x18] sm:$0xff] %vm27, 0.0
    %32 = vst.msk [vmem:[#allocation2 + $0x20] sm:$0xff] %vm27, 0.0
    %33 = vst.msk [vmem:[#allocation2 + $0x28] sm:$0xff] %vm27, 0.0
    %34 = vst.msk [vmem:[#allocation2 + $0x30] sm:$0xff] %vm27, 0.0
    %35 = vst.msk [vmem:[#allocation2 + $0x38] sm:$0xff] %vm27, 0.0
    %36 = vst.msk [vmem:[#allocation2 + $0x40] sm:$0xff] %vm27, 0.0
    %37 = vst.msk [vmem:[#allocation2 + $0x48] sm:$0xff] %vm27, 0.0
    %38 = vst.msk [vmem:[#allocation2 + $0x50] sm:$0xff] %vm27, 0.0
    %39 = vst.msk [vmem:[#allocation2 + $0x58] sm:$0xff] %vm27, 0.0
    %40 = vst.msk [vmem:[#allocation2 + $0x60] sm:$0xff] %vm27, 0.0
    %41 = vst.msk [vmem:[#allocation2 + $0x68] sm:$0xff] %vm27, 0.0
    %42 = vst.msk [vmem:[#allocation2 + $0x70] sm:$0xff] %vm27, 0.0
    %43 = vst.msk [vmem:[#allocation2 + $0x78] sm:$0xff] %vm27, 0.0
  $region17: #{discriminator128_forward.10} parent=0 // pred_fallthru
    _
  %v44 = vld [vmem:[#allocation2] sm:$0xff]
  %v45 = vld [vmem:[#allocation2 + $0x8] sm:$0xff]
  %v46 = vld [vmem:[#allocation2 + $0x10] sm:$0xff]
  %v47 = vld [vmem:[#allocation2 + $0x18] sm:$0xff]
  %v48 = vld [vmem:[#allocation2 + $0x20] sm:$0xff]
  %v49 = vld [vmem:[#allocation2 + $0x28] sm:$0xff]
  %v50 = vld [vmem:[#allocation2 + $0x30] sm:$0xff]
  %v51 = vld [vmem:[#allocation2 + $0x38] sm:$0xff]
  %v52 = vld [vmem:[#allocation2 + $0x40] sm:$0xff]
  %v53 = vld [vmem:[#allocation2 + $0x48] sm:$0xff]
  %v54 = vld [vmem:[#allocation2 + $0x50] sm:$0xff]
  %v55 = vld [vmem:[#allocation2 + $0x58] sm:$0xff]
  %v56 = vld [vmem:[#allocation2 + $0x60] sm:$0xff]
  %v57 = vld [vmem:[#allocation2 + $0x68] sm:$0xff]
  %v58 = vld [vmem:[#allocation2 + $0x70] sm:$0xff]
  %v59 = vld [vmem:[#allocation2 + $0x78] sm:$0xff]
  %v60 = vld [vmem:[%s0] sm:$0xff]
  %v61 = vld [vmem:[%s0 + $0x8] sm:$0xff]
  %v62 = vld [vmem:[%s0 + $0x10] sm:$0xff]
  %v63 = vld [vmem:[%s0 + $0x18] sm:$0xff]
  %v64 = vld [vmem:[%s0 + $0x20] sm:$0xff]
  %v65 = vld [vmem:[%s0 + $0x28] sm:$0xff]
  %v66 = vld [vmem:[%s0 + $0x30] sm:$0xff]
  %v67 = vld [vmem:[%s0 + $0x38] sm:$0xff]
  %v68 = vld [vmem:[%s0 + $0x40] sm:$0xff]
  %v69 = vld [vmem:[%s0 + $0x48] sm:$0xff]
  %v70 = vld [vmem:[%s0 + $0x50] sm:$0xff]
  %v71 = vld [vmem:[%s0 + $0x58] sm:$0xff]
  %v72 = vld [vmem:[%s0 + $0x60] sm:$0xff]
  %v73 = vld [vmem:[%s0 + $0x68] sm:$0xff]
  %v74 = vld [vmem:[%s0 + $0x70] sm:$0xff]
  %v75 = vld [vmem:[%s0 + $0x78] sm:$0xff]
  %v76 = vld [vmem:[%s1] sm:$0xf]
  %v77 = vld [vmem:[%s1 + $0x4] sm:$0xf]
  %v78 = vld [vmem:[%s1 + $0x8] sm:$0xf]
  %v79 = vld [vmem:[%s1 + $0xc] sm:$0xf]
  %v80 = vld [vmem:[%s1 + $0x10] sm:$0xf]
  %v81 = vld [vmem:[%s1 + $0x14] sm:$0xf]
  %v82 = vld [vmem:[%s1 + $0x18] sm:$0xf]
  %v83 = vld [vmem:[%s1 + $0x1c] sm:$0xf]
  %v84 = vld [vmem:[%s1 + $0x20] sm:$0xf]
  %v85 = vld [vmem:[%s1 + $0x24] sm:$0xf]
  %v86 = vld [vmem:[%s1 + $0x28] sm:$0xf]
  %v87 = vld [vmem:[%s1 + $0x2c] sm:$0xf]
  %v88 = vld [vmem:[%s1 + $0x30] sm:$0xf]
  %v89 = vld [vmem:[%s1 + $0x34] sm:$0xf]
  %v90 = vld [vmem:[%s1 + $0x38] sm:$0xf]
  %v91 = vld [vmem:[%s1 + $0x3c] sm:$0xf]
  %v92 = vld [vmem:[%s1 + $0x40] sm:$0xf]
  %v93 = vld [vmem:[%s1 + $0x44] sm:$0xf]
  %v94 = vld [vmem:[%s1 + $0x48] sm:$0xf]
  %v95 = vld [vmem:[%s1 + $0x4c] sm:$0xf]
  %v96 = vld [vmem:[%s1 + $0x50] sm:$0xf]
  %v97 = vld [vmem:[%s1 + $0x54] sm:$0xf]
  %v98 = vld [vmem:[%s1 + $0x58] sm:$0xf]
  %v99 = vld [vmem:[%s1 + $0x5c] sm:$0xf]
  %v100 = vld [vmem:[%s1 + $0x60] sm:$0xf]
  %v101 = vld [vmem:[%s1 + $0x64] sm:$0xf]
  %v102 = vld [vmem:[%s1 + $0x68] sm:$0xf]
  %v103 = vld [vmem:[%s1 + $0x6c] sm:$0xf]
  %v104 = vld [vmem:[%s1 + $0x70] sm:$0xf]
  %v105 = vld [vmem:[%s1 + $0x74] sm:$0xf]
  %v106 = vld [vmem:[%s1 + $0x78] sm:$0xf]
  %v107 = vld [vmem:[%s1 + $0x7c] sm:$0xf]
  %v124 = vunpack.c.l.b16 %v60
  %v125 = vunpack.c.h.b16 %v60
  %v126 = vunpack.c.l.b16 %v61
  %v127 = vunpack.c.h.b16 %v61
  %v128 = vunpack.c.l.b16 %v62
  %v129 = vunpack.c.h.b16 %v62
  %v130 = vunpack.c.l.b16 %v63
  %v131 = vunpack.c.h.b16 %v63
  %v132 = vunpack.c.l.b16 %v64
  %v133 = vunpack.c.h.b16 %v64
  %v134 = vunpack.c.l.b16 %v65
  %v135 = vunpack.c.h.b16 %v65
  %v136 = vunpack.c.l.b16 %v66
  %v137 = vunpack.c.h.b16 %v66
  %v138 = vunpack.c.l.b16 %v67
  %v139 = vunpack.c.h.b16 %v67
  %v140 = vunpack.c.l.b16 %v68
  %v141 = vunpack.c.h.b16 %v68
  %v142 = vunpack.c.l.b16 %v69
  %v143 = vunpack.c.h.b16 %v69
  %v144 = vunpack.c.l.b16 %v70
  %v145 = vunpack.c.h.b16 %v70
  %v146 = vunpack.c.l.b16 %v71
  %v147 = vunpack.c.h.b16 %v71
  %v148 = vunpack.c.l.b16 %v72
  %v149 = vunpack.c.h.b16 %v72
  %v150 = vunpack.c.l.b16 %v73
  %v151 = vunpack.c.h.b16 %v73
  %v152 = vunpack.c.l.b16 %v74
  %v153 = vunpack.c.h.b16 %v74
  %v154 = vunpack.c.l.b16 %v75
  %v155 = vunpack.c.h.b16 %v75
  %v156 = vpack.c.b16 %v126, %v124
  %v157 = vpack.c.b16 %v127, %v125
  %v158 = vpack.c.b16 %v130, %v128
  %v159 = vpack.c.b16 %v131, %v129
  %v160 = vpack.c.b16 %v134, %v132
  %v161 = vpack.c.b16 %v135, %v133
  %v162 = vpack.c.b16 %v138, %v136
  %v163 = vpack.c.b16 %v139, %v137
  %v164 = vpack.c.b16 %v142, %v140
  %v165 = vpack.c.b16 %v143, %v141
  %v166 = vpack.c.b16 %v146, %v144
  %v167 = vpack.c.b16 %v147, %v145
  %v168 = vpack.c.b16 %v150, %v148
  %v169 = vpack.c.b16 %v151, %v149
  %v170 = vpack.c.b16 %v154, %v152
  %v171 = vpack.c.b16 %v155, %v153
  %v220 = vunpack.c.l.b16 %v76
  %v221 = vunpack.c.l.b16 %v77
  %v222 = vunpack.c.l.b16 %v78
  %v223 = vunpack.c.l.b16 %v79
  %v224 = vunpack.c.l.b16 %v80
  %v225 = vunpack.c.l.b16 %v81
  %v226 = vunpack.c.l.b16 %v82
  %v227 = vunpack.c.l.b16 %v83
  %v228 = vunpack.c.l.b16 %v84
  %v229 = vunpack.c.l.b16 %v85
  %v230 = vunpack.c.l.b16 %v86
  %v231 = vunpack.c.l.b16 %v87
  %v232 = vunpack.c.l.b16 %v88
  %v233 = vunpack.c.l.b16 %v89
  %v234 = vunpack.c.l.b16 %v90
  %v235 = vunpack.c.l.b16 %v91
  %v236 = vunpack.c.l.b16 %v92
  %v237 = vunpack.c.l.b16 %v93
  %v238 = vunpack.c.l.b16 %v94
  %v239 = vunpack.c.l.b16 %v95
  %v240 = vunpack.c.l.b16 %v96
  %v241 = vunpack.c.l.b16 %v97
  %v242 = vunpack.c.l.b16 %v98
  %v243 = vunpack.c.l.b16 %v99
  %v244 = vunpack.c.l.b16 %v100
  %v245 = vunpack.c.l.b16 %v101
  %v246 = vunpack.c.l.b16 %v102
  %v247 = vunpack.c.l.b16 %v103
  %v248 = vunpack.c.l.b16 %v104
  %v249 = vunpack.c.l.b16 %v105
  %v250 = vunpack.c.l.b16 %v106
  %v251 = vunpack.c.l.b16 %v107
  %v252 = vpack.c.b16 %v221, %v220
  %v253 = vpack.c.b16 %v223, %v222
  %v254 = vpack.c.b16 %v225, %v224
  %v255 = vpack.c.b16 %v227, %v226
  %v256 = vpack.c.b16 %v229, %v228
  %v257 = vpack.c.b16 %v231, %v230
  %v258 = vpack.c.b16 %v233, %v232
  %v259 = vpack.c.b16 %v235, %v234
  %v260 = vpack.c.b16 %v237, %v236
  %v261 = vpack.c.b16 %v239, %v238
  %v262 = vpack.c.b16 %v241, %v240
  %v263 = vpack.c.b16 %v243, %v242
  %v264 = vpack.c.b16 %v245, %v244
  %v265 = vpack.c.b16 %v247, %v246
  %v266 = vpack.c.b16 %v249, %v248
  %v267 = vpack.c.b16 %v251, %v250
  %284 = vmatprep.subr.bf16.mxu0 0
  %285 = vmatpush1.bf16.msra.mxu0 %v259
  %286 = vmatprep.subr.bf16.mxu0 0
  %287 = vmatpush1.bf16.msra.mxu0 %v258
  %288 = vmatprep.subr.bf16.mxu0 0
  %289 = vmatpush1.bf16.msra.mxu0 %v257
  %290 = vmatprep.subr.bf16.mxu0 0
  %291 = vmatpush1.bf16.msra.mxu0 %v256
  %292 = vmatprep.subr.bf16.mxu0 0
  %293 = vmatpush1.bf16.msra.mxu0 %v255
  %294 = vmatprep.subr.bf16.mxu0 0
  %295 = vmatpush1.bf16.msra.mxu0 %v254
  %296 = vmatprep.subr.bf16.mxu0 0
  %297 = vmatpush1.bf16.msra.mxu0 %v253
  %298 = vmatprep.subr.bf16.mxu0 0
  %299 = vmatpush1.bf16.msra.mxu0 %v252
  %300 = vmatprep.subr.bf16.mxu0 0
  %301 = vmatpush2.bf16.msra.mxu0 %v267
  %302 = vmatprep.subr.bf16.mxu0 0
  %303 = vmatpush2.bf16.msra.mxu0 %v266
  %304 = vmatprep.subr.bf16.mxu0 0
  %305 = vmatpush2.bf16.msra.mxu0 %v265
  %306 = vmatprep.subr.bf16.mxu0 0
  %307 = vmatpush2.bf16.msra.mxu0 %v264
  %308 = vmatprep.subr.bf16.mxu0 0
  %309 = vmatpush2.bf16.msra.mxu0 %v263
  %310 = vmatprep.subr.bf16.mxu0 0
  %311 = vmatpush2.bf16.msra.mxu0 %v262
  %312 = vmatprep.subr.bf16.mxu0 0
  %313 = vmatpush2.bf16.msra.mxu0 %v261
  %314 = vmatprep.subr.bf16.mxu0 0
  %315 = vmatpush2.bf16.msra.mxu0 %v260
  %316 = vmatprep.mubr.bf16.mxu0 %v157
  %317 = vmatmul.mubr.bf16.gmra.mxu0 %v156
  %v318 = vpop.f32.mrf.mxu0
  %v319 = vadd.f32 0.0, %v318
  %v320 = vpop.f32.mrf.mxu0
  %v321 = vpop.f32.mrf.mxu0
  %v322 = vadd.f32 0.0, %v321
  %v323 = vpop.f32.mrf.mxu0
  %324 = vmatprep.mubr.bf16.mxu0 %v159
  %325 = vmatmul.mubr.bf16.gmra.mxu0 %v158
  %v326 = vpop.f32.mrf.mxu0
  %v327 = vadd.f32 0.0, %v326
  %v328 = vpop.f32.mrf.mxu0
  %v329 = vpop.f32.mrf.mxu0
  %v330 = vadd.f32 0.0, %v329
  %v331 = vpop.f32.mrf.mxu0
  %332 = vmatprep.mubr.bf16.mxu0 %v161
  %333 = vmatmul.mubr.bf16.gmra.mxu0 %v160
  %v334 = vpop.f32.mrf.mxu0
  %v335 = vadd.f32 0.0, %v334
  %v336 = vpop.f32.mrf.mxu0
  %v337 = vpop.f32.mrf.mxu0
  %v338 = vadd.f32 0.0, %v337
  %v339 = vpop.f32.mrf.mxu0
  %340 = vmatprep.mubr.bf16.mxu0 %v163
  %341 = vmatmul.mubr.bf16.gmra.mxu0 %v162
  %v342 = vpop.f32.mrf.mxu0
  %v343 = vadd.f32 0.0, %v342
  %v344 = vpop.f32.mrf.mxu0
  %v345 = vpop.f32.mrf.mxu0
  %v346 = vadd.f32 0.0, %v345
  %v347 = vpop.f32.mrf.mxu0
  %348 = vmatprep.mubr.bf16.mxu0 %v165
  %349 = vmatmul.mubr.bf16.gmra.mxu0 %v164
  %v350 = vpop.f32.mrf.mxu0
  %v351 = vadd.f32 0.0, %v350
  %v352 = vpop.f32.mrf.mxu0
  %v353 = vpop.f32.mrf.mxu0
  %v354 = vadd.f32 0.0, %v353
  %v355 = vpop.f32.mrf.mxu0
  %356 = vmatprep.mubr.bf16.mxu0 %v167
  %357 = vmatmul.mubr.bf16.gmra.mxu0 %v166
  %v358 = vpop.f32.mrf.mxu0
  %v359 = vadd.f32 0.0, %v358
  %v360 = vpop.f32.mrf.mxu0
  %v361 = vpop.f32.mrf.mxu0
  %v362 = vadd.f32 0.0, %v361
  %v363 = vpop.f32.mrf.mxu0
  %364 = vmatprep.mubr.bf16.mxu0 %v169
  %365 = vmatmul.mubr.bf16.gmra.mxu0 %v168
  %v366 = vpop.f32.mrf.mxu0
  %v367 = vadd.f32 0.0, %v366
  %v368 = vpop.f32.mrf.mxu0
  %v369 = vpop.f32.mrf.mxu0
  %v370 = vadd.f32 0.0, %v369
  %v371 = vpop.f32.mrf.mxu0
  %372 = vmatprep.mubr.bf16.mxu0 %v171
  %373 = vmatmul.mubr.bf16.gmra.mxu0 %v170
  %v374 = vpop.f32.mrf.mxu0
  %v375 = vadd.f32 0.0, %v374
  %v376 = vpop.f32.mrf.mxu0
  %v377 = vpop.f32.mrf.mxu0
  %v378 = vadd.f32 0.0, %v377
  %v379 = vpop.f32.mrf.mxu0
  %380 = vdwg.mxu0
  %v381 = vadd.f32 %v44, %v319
  %v382 = vadd.f32 %v45, %v322
  %v383 = vadd.f32 %v46, %v327
  %v384 = vadd.f32 %v47, %v330
  %v385 = vadd.f32 %v48, %v335
  %v386 = vadd.f32 %v49, %v338
  %v387 = vadd.f32 %v50, %v343
  %v388 = vadd.f32 %v51, %v346
  %v389 = vadd.f32 %v52, %v351
  %v390 = vadd.f32 %v53, %v354
  %v391 = vadd.f32 %v54, %v359
  %v392 = vadd.f32 %v55, %v362
  %v393 = vadd.f32 %v56, %v367
  %v394 = vadd.f32 %v57, %v370
  %v395 = vadd.f32 %v58, %v375
  %v396 = vadd.f32 %v59, %v378
  %vm397 = vcmask 261120
  %398 = vst.msk [vmem:[#allocation2] sm:$0xff] %vm397, %v381
  %399 = vst.msk [vmem:[#allocation2 + $0x8] sm:$0xff] %vm397, %v382
  %400 = vst.msk [vmem:[#allocation2 + $0x10] sm:$0xff] %vm397, %v383
  %401 = vst.msk [vmem:[#allocation2 + $0x18] sm:$0xff] %vm397, %v384
  %402 = vst.msk [vmem:[#allocation2 + $0x20] sm:$0xff] %vm397, %v385
  %403 = vst.msk [vmem:[#allocation2 + $0x28] sm:$0xff] %vm397, %v386
  %404 = vst.msk [vmem:[#allocation2 + $0x30] sm:$0xff] %vm397, %v387
  %405 = vst.msk [vmem:[#allocation2 + $0x38] sm:$0xff] %vm397, %v388
  %406 = vst.msk [vmem:[#allocation2 + $0x40] sm:$0xff] %vm397, %v389
  %407 = vst.msk [vmem:[#allocation2 + $0x48] sm:$0xff] %vm397, %v390
  %408 = vst.msk [vmem:[#allocation2 + $0x50] sm:$0xff] %vm397, %v391
  %409 = vst.msk [vmem:[#allocation2 + $0x58] sm:$0xff] %vm397, %v392
  %410 = vst.msk [vmem:[#allocation2 + $0x60] sm:$0xff] %vm397, %v393
  %411 = vst.msk [vmem:[#allocation2 + $0x68] sm:$0xff] %vm397, %v394
  %412 = vst.msk [vmem:[#allocation2 + $0x70] sm:$0xff] %vm397, %v395
  %413 = vst.msk [vmem:[#allocation2 + $0x78] sm:$0xff] %vm397, %v396
  // Predicated region
  $region18: #{discriminator128_forward.10} parent=0 // pred_check
    %p414 = pneg %p16
  $region19: #{discriminator128_forward.10} parent=0 // pred_check_branch
    %416 = sbr.rel (%p414) target = $region21
  $region20: #{discriminator128_forward.10} parent=0 // pred_region
    %v417 = vld [vmem:[#allocation2] sm:$0xff]
    %v418 = vld [vmem:[#allocation2 + $0x8] sm:$0xff]
    %v419 = vld [vmem:[#allocation2 + $0x10] sm:$0xff]
    %v420 = vld [vmem:[#allocation2 + $0x18] sm:$0xff]
    %v421 = vld [vmem:[#allocation2 + $0x20] sm:$0xff]
    %v422 = vld [vmem:[#allocation2 + $0x28] sm:$0xff]
    %v423 = vld [vmem:[#allocation2 + $0x30] sm:$0xff]
    %v424 = vld [vmem:[#allocation2 + $0x38] sm:$0xff]
    %v425 = vld [vmem:[#allocation2 + $0x40] sm:$0xff]
    %v426 = vld [vmem:[#allocation2 + $0x48] sm:$0xff]
    %v427 = vld [vmem:[#allocation2 + $0x50] sm:$0xff]
    %v428 = vld [vmem:[#allocation2 + $0x58] sm:$0xff]
    %v429 = vld [vmem:[#allocation2 + $0x60] sm:$0xff]
    %v430 = vld [vmem:[#allocation2 + $0x68] sm:$0xff]
    %v431 = vld [vmem:[#allocation2 + $0x70] sm:$0xff]
    %v432 = vld [vmem:[#allocation2 + $0x78] sm:$0xff]
    %v433 = vld [vmem:[%s3] sm:$0x1]
    %v434 = vsel %vm397, %v417, 0.0
    %v435 = vsel %vm397, %v418, 0.0
    %v436 = vadd.f32 %v434, %v435
    %v437 = vsel %vm397, %v419, 0.0
    %v438 = vadd.f32 %v436, %v437
    %v439 = vsel %vm397, %v420, 0.0
    %v440 = vadd.f32 %v438, %v439
    %v441 = vsel %vm397, %v421, 0.0
    %v442 = vadd.f32 %v440, %v441
    %v443 = vsel %vm397, %v422, 0.0
    %v444 = vadd.f32 %v442, %v443
    %v445 = vsel %vm397, %v423, 0.0
    %v446 = vadd.f32 %v444, %v445
    %v447 = vsel %vm397, %v424, 0.0
    %v448 = vadd.f32 %v446, %v447
    %v449 = vsel %vm397, %v425, 0.0
    %v450 = vadd.f32 %v448, %v449
    %v451 = vsel %vm397, %v426, 0.0
    %v452 = vadd.f32 %v450, %v451
    %v453 = vsel %vm397, %v427, 0.0
    %v454 = vadd.f32 %v452, %v453
    %v455 = vsel %vm397, %v428, 0.0
    %v456 = vadd.f32 %v454, %v455
    %v457 = vsel %vm397, %v429, 0.0
    %v458 = vadd.f32 %v456, %v457
    %v459 = vsel %vm397, %v430, 0.0
    %v460 = vadd.f32 %v458, %v459
    %v461 = vsel %vm397, %v431, 0.0
    %v462 = vadd.f32 %v460, %v461
    %v463 = vsel %vm397, %v432, 0.0
    %v464 = vadd.f32 %v462, %v463
    %v465 = vrot.slane %v464, 4
    %v466 = vadd.f32 %v464, %v465
    %v467 = vrot.slane %v466, 2
    %v468 = vadd.f32 %v466, %v467
    %v469 = vrot.slane %v468, 1
    %v470 = vadd.f32 %v468, %v469
    %v471 = vadd.f32 %v433, %v470
    %vm472 = vcmask 253952
    %473 = vst.msk [vmem:[%s3] sm:$0x1] %vm472, %v471
    %v474 = vld [vmem:[%s4] sm:$0x1]
    %v475 = vmul.f32 %v417, %v417
    %v476 = vmul.f32 %v418, %v418
    %v477 = vmul.f32 %v419, %v419
    %v478 = vmul.f32 %v420, %v420
    %v479 = vmul.f32 %v421, %v421
    %v480 = vmul.f32 %v422, %v422
    %v481 = vmul.f32 %v423, %v423
    %v482 = vmul.f32 %v424, %v424
    %v483 = vmul.f32 %v425, %v425
    %v484 = vmul.f32 %v426, %v426
    %v485 = vmul.f32 %v427, %v427
    %v486 = vmul.f32 %v428, %v428
    %v487 = vmul.f32 %v429, %v429
    %v488 = vmul.f32 %v430, %v430
    %v489 = vmul.f32 %v431, %v431
    %v490 = vmul.f32 %v432, %v432
    %v491 = vsel %vm397, %v475, 0.0
    %v492 = vsel %vm397, %v476, 0.0
    %v493 = vadd.f32 %v491, %v492
    %v494 = vsel %vm397, %v477, 0.0
    %v495 = vadd.f32 %v493, %v494
    %v496 = vsel %vm397, %v478, 0.0
    %v497 = vadd.f32 %v495, %v496
    %v498 = vsel %vm397, %v479, 0.0
    %v499 = vadd.f32 %v497, %v498
    %v500 = vsel %vm397, %v480, 0.0
    %v501 = vadd.f32 %v499, %v500
    %v502 = vsel %vm397, %v481, 0.0
    %v503 = vadd.f32 %v501, %v502
    %v504 = vsel %vm397, %v482, 0.0
    %v505 = vadd.f32 %v503, %v504
    %v506 = vsel %vm397, %v483, 0.0
    %v507 = vadd.f32 %v505, %v506
    %v508 = vsel %vm397, %v484, 0.0
    %v509 = vadd.f32 %v507, %v508
    %v510 = vsel %vm397, %v485, 0.0
    %v511 = vadd.f32 %v509, %v510
    %v512 = vsel %vm397, %v486, 0.0
    %v513 = vadd.f32 %v511, %v512
    %v514 = vsel %vm397, %v487, 0.0
    %v515 = vadd.f32 %v513, %v514
    %v516 = vsel %vm397, %v488, 0.0
    %v517 = vadd.f32 %v515, %v516
    %v518 = vsel %vm397, %v489, 0.0
    %v519 = vadd.f32 %v517, %v518
    %v520 = vsel %vm397, %v490, 0.0
    %v521 = vadd.f32 %v519, %v520
    %v522 = vrot.slane %v521, 4
    %v523 = vadd.f32 %v521, %v522
    %v524 = vrot.slane %v523, 2
    %v525 = vadd.f32 %v523, %v524
    %v526 = vrot.slane %v525, 1
    %v527 = vadd.f32 %v525, %v526
    %v528 = vadd.f32 %v474, %v527
    %529 = vst.msk [vmem:[%s4] sm:$0x1] %vm472, %v528
    %v530 = vpack.c.bf16 %v418, %v417
    %v531 = vpack.c.bf16 %v420, %v419
    %v532 = vpack.c.bf16 %v422, %v421
    %v533 = vpack.c.bf16 %v424, %v423
    %v534 = vpack.c.bf16 %v426, %v425
    %v535 = vpack.c.bf16 %v428, %v427
    %v536 = vpack.c.bf16 %v430, %v429
    %v537 = vpack.c.bf16 %v432, %v431
    %v546 = vunpack.c.l.b16 %v530
    %v547 = vunpack.c.h.b16 %v530
    %v548 = vunpack.c.l.b16 %v531
    %v549 = vunpack.c.h.b16 %v531
    %v550 = vunpack.c.l.b16 %v532
    %v551 = vunpack.c.h.b16 %v532
    %v552 = vunpack.c.l.b16 %v533
    %v553 = vunpack.c.h.b16 %v533
    %v554 = vunpack.c.l.b16 %v534
    %v555 = vunpack.c.h.b16 %v534
    %v556 = vunpack.c.l.b16 %v535
    %v557 = vunpack.c.h.b16 %v535
    %v558 = vunpack.c.l.b16 %v536
    %v559 = vunpack.c.h.b16 %v536
    %v560 = vunpack.c.l.b16 %v537
    %v561 = vunpack.c.h.b16 %v537
    %v562 = vpack.c.b16 %v546, %v546
    %v563 = vpack.c.b16 %v547, %v547
    %v564 = vpack.c.b16 %v548, %v548
    %v565 = vpack.c.b16 %v549, %v549
    %v566 = vpack.c.b16 %v550, %v550
    %v567 = vpack.c.b16 %v551, %v551
    %v568 = vpack.c.b16 %v552, %v552
    %v569 = vpack.c.b16 %v553, %v553
    %v570 = vpack.c.b16 %v554, %v554
    %v571 = vpack.c.b16 %v555, %v555
    %v572 = vpack.c.b16 %v556, %v556
    %v573 = vpack.c.b16 %v557, %v557
    %v574 = vpack.c.b16 %v558, %v558
    %v575 = vpack.c.b16 %v559, %v559
    %v576 = vpack.c.b16 %v560, %v560
    %v577 = vpack.c.b16 %v561, %v561
    %vm594 = vcmask 257024
    %595 = vst.msk [vmem:[%s2] sm:$0xf] %vm594, %v562
    %596 = vst.msk [vmem:[%s2 + $0x4] sm:$0xf] %vm594, %v563
    %597 = vst.msk [vmem:[%s2 + $0x8] sm:$0xf] %vm594, %v564
    %598 = vst.msk [vmem:[%s2 + $0xc] sm:$0xf] %vm594, %v565
    %599 = vst.msk [vmem:[%s2 + $0x10] sm:$0xf] %vm594, %v566
    %600 = vst.msk [vmem:[%s2 + $0x14] sm:$0xf] %vm594, %v567
    %601 = vst.msk [vmem:[%s2 + $0x18] sm:$0xf] %vm594, %v568
    %602 = vst.msk [vmem:[%s2 + $0x1c] sm:$0xf] %vm594, %v569
    %603 = vst.msk [vmem:[%s2 + $0x20] sm:$0xf] %vm594, %v570
    %604 = vst.msk [vmem:[%s2 + $0x24] sm:$0xf] %vm594, %v571
    %605 = vst.msk [vmem:[%s2 + $0x28] sm:$0xf] %vm594, %v572
    %606 = vst.msk [vmem:[%s2 + $0x2c] sm:$0xf] %vm594, %v573
    %607 = vst.msk [vmem:[%s2 + $0x30] sm:$0xf] %vm594, %v574
    %608 = vst.msk [vmem:[%s2 + $0x34] sm:$0xf] %vm594, %v575
    %609 = vst.msk [vmem:[%s2 + $0x38] sm:$0xf] %vm594, %v576
    %610 = vst.msk [vmem:[%s2 + $0x3c] sm:$0xf] %vm594, %v577
  $region21: #{discriminator128_forward.10} parent=0 // pred_fallthru
    _
  // Predicated region
  $region22: #{discriminator128_forward.10} parent=0 // pred_check
    _
  $region23: #{discriminator128_forward.10} parent=0 // pred_check_branch
    %612 = sbr.rel (0) target = $region25
  $region24: #{discriminator128_forward.10} parent=0 // pred_region
    _
  $region25: #{discriminator128_forward.10} parent=0 // pred_fallthru
    _
  // Predicated region
  $region26: #{discriminator128_forward.10} parent=0 // pred_check
    _
  $region27: #{discriminator128_forward.10} parent=0 // pred_check_branch
    %614 = sbr.rel (0) target = $region29
  $region28: #{discriminator128_forward.10} parent=0 // pred_region
    _
  $region29: #{discriminator128_forward.10} parent=0 // pred_fallthru
    _
  // Predicated region
  $region30: #{discriminator128_forward.10} parent=0 // pred_check
    _
  $region31: #{discriminator128_forward.10} parent=0 // pred_check_branch
    %616 = sbr.rel (0) target = $region33
  $region32: #{discriminator128_forward.10} parent=0 // pred_region
    _
  $region33: #{discriminator128_forward.10} parent=0 // pred_fallthru
    _
  // Predicated region
  $region34: #{discriminator128_forward.10} parent=0 // pred_check
    _
  $region35: #{discriminator128_forward.10} parent=0 // pred_check_branch
    %618 = sbr.rel (0) target = $region37
  $region36: #{discriminator128_forward.10} parent=0 // pred_region
    _
  $region37: #{discriminator128_forward.10} parent=0 // pred_fallthru
    _
  // Predicated region
  $region38: #{discriminator128_forward.10} parent=0 // pred_check
    _
  $region39: #{discriminator128_forward.10} parent=0 // pred_check_branch
    %620 = sbr.rel (0) target = $region41
  $region40: #{discriminator128_forward.10} parent=0 // pred_region
    _
  $region41: #{discriminator128_forward.10} parent=0 // pred_fallthru
    _
  // Predicated region
  $region42: #{discriminator128_forward.10} parent=0 // pred_check
    _
  $region43: #{discriminator128_forward.10} parent=0 // pred_check_branch
    %622 = sbr.rel (0) target = $region45
  $region44: #{discriminator128_forward.10} parent=0 // pred_region
    _
  $region45: #{discriminator128_forward.10} parent=0 // pred_fallthru
    _

// kernel: discriminator128_forward.11
$region0: #{discriminator128_forward.11}
  #allocation0 [shape = 'u32[]', space=smem, size = 0x4, offset = 0x4, fixed_abs, tag = 'smem constant byte address 0x4 - core index']
  #allocation1 [shape = 'u32[144,128]{1,0:T(1,128)}', space=vmem, size = 0x12000, scoped, tag = 'internal scratch']
  %s0 = inlined_call_operand.vmem [shape: bf16[128,32], index: 0, kind: input, shape index: {}]
  %s1 = inlined_call_operand.vmem [shape: f32[1,32], index: 1, kind: input, shape index: {}]
  %s2 = inlined_call_operand.vmem [shape: f32[1,32], index: 2, kind: input, shape index: {}]
  %s3 = inlined_call_operand.vmem [shape: bf16[128,32], index: 3, kind: output, shape index: {}]
  %s4 = sld [smem:[#allocation0]]
  $region22: #{discriminator128_forward.11} parent=0
    _
  %s6 = ssub.s32 1, %s4
  %s7 = scalar_select 0, %s6, %s4
  // Predicated region
  $region2: #{discriminator128_forward.11} parent=0 // pred_check
    _
  $region3: #{discriminator128_forward.11} parent=0 // pred_check_branch
    %9 = sbr.rel (0) target = $region5
  $region4: #{discriminator128_forward.11} parent=0 // pred_region
    _
  $region5: #{discriminator128_forward.11} parent=0 // pred_fallthru
    _
  // Predicated region
  $region6: #{discriminator128_forward.11} parent=0 // pred_check
    _
  $region7: #{discriminator128_forward.11} parent=0 // pred_check_branch
    %11 = sbr.rel (0) target = $region9
  $region8: #{discriminator128_forward.11} parent=0 // pred_region
    _
  $region9: #{discriminator128_forward.11} parent=0 // pred_fallthru
    _
  // Predicated region
  $region10: #{discriminator128_forward.11} parent=0 // pred_check
    _
  $region11: #{discriminator128_forward.11} parent=0 // pred_check_branch
    %13 = sbr.rel (0) target = $region13
  $region12: #{discriminator128_forward.11} parent=0 // pred_region
    _
  $region13: #{discriminator128_forward.11} parent=0 // pred_fallthru
    _
  %v14 = vld [vmem:[%s0] sm:$0xf]
  %v15 = vld [vmem:[%s0 + $0x4] sm:$0xf]
  %v16 = vld [vmem:[%s0 + $0x8] sm:$0xf]
  %v17 = vld [vmem:[%s0 + $0xc] sm:$0xf]
  %v18 = vld [vmem:[%s0 + $0x10] sm:$0xf]
  %v19 = vld [vmem:[%s0 + $0x14] sm:$0xf]
  %v20 = vld [vmem:[%s0 + $0x18] sm:$0xf]
  %v21 = vld [vmem:[%s0 + $0x1c] sm:$0xf]
  %v22 = vld [vmem:[%s0 + $0x20] sm:$0xf]
  %v23 = vld [vmem:[%s0 + $0x24] sm:$0xf]
  %v24 = vld [vmem:[%s0 + $0x28] sm:$0xf]
  %v25 = vld [vmem:[%s0 + $0x2c] sm:$0xf]
  %v26 = vld [vmem:[%s0 + $0x30] sm:$0xf]
  %v27 = vld [vmem:[%s0 + $0x34] sm:$0xf]
  %v28 = vld [vmem:[%s0 + $0x38] sm:$0xf]
  %v29 = vld [vmem:[%s0 + $0x3c] sm:$0xf]
  %v30 = vunpack.c.l.bf16 %v14
  %v31 = vunpack.c.l.bf16 %v15
  %v32 = vunpack.c.l.bf16 %v16
  %v33 = vunpack.c.l.bf16 %v17
  %v34 = vunpack.c.l.bf16 %v18
  %v35 = vunpack.c.l.bf16 %v19
  %v36 = vunpack.c.l.bf16 %v20
  %v37 = vunpack.c.l.bf16 %v21
  %v38 = vunpack.c.l.bf16 %v22
  %v39 = vunpack.c.l.bf16 %v23
  %v40 = vunpack.c.l.bf16 %v24
  %v41 = vunpack.c.l.bf16 %v25
  %v42 = vunpack.c.l.bf16 %v26
  %v43 = vunpack.c.l.bf16 %v27
  %v44 = vunpack.c.l.bf16 %v28
  %v45 = vunpack.c.l.bf16 %v29
  %v46 = vld [vmem:[%s1] sm:$0x1]
  %v48 = vlaneseq
  %v49 = vshrl.u32 %v48, 7
  %v50 = vsub.s32 0, %v49
  %v51 = vrot.slane %v46, %v50
  %v53 = vmul.f32 %v30, %v51
  %v54 = vmul.f32 %v31, %v51
  %v55 = vmul.f32 %v32, %v51
  %v56 = vmul.f32 %v33, %v51
  %v57 = vmul.f32 %v34, %v51
  %v58 = vmul.f32 %v35, %v51
  %v59 = vmul.f32 %v36, %v51
  %v60 = vmul.f32 %v37, %v51
  %v61 = vmul.f32 %v38, %v51
  %v62 = vmul.f32 %v39, %v51
  %v63 = vmul.f32 %v40, %v51
  %v64 = vmul.f32 %v41, %v51
  %v65 = vmul.f32 %v42, %v51
  %v66 = vmul.f32 %v43, %v51
  %v67 = vmul.f32 %v44, %v51
  %v68 = vmul.f32 %v45, %v51
  %v69 = vld [vmem:[%s2] sm:$0x1]
  %v71 = vlaneseq
  %v72 = vshrl.u32 %v71, 7
  %v73 = vsub.s32 0, %v72
  %v74 = vrot.slane %v69, %v73
  %v76 = vadd.f32 %v53, %v74
  %v77 = vadd.f32 %v54, %v74
  %v78 = vadd.f32 %v55, %v74
  %v79 = vadd.f32 %v56, %v74
  %v80 = vadd.f32 %v57, %v74
  %v81 = vadd.f32 %v58, %v74
  %v82 = vadd.f32 %v59, %v74
  %v83 = vadd.f32 %v60, %v74
  %v84 = vadd.f32 %v61, %v74
  %v85 = vadd.f32 %v62, %v74
  %v86 = vadd.f32 %v63, %v74
  %v87 = vadd.f32 %v64, %v74
  %v88 = vadd.f32 %v65, %v74
  %v89 = vadd.f32 %v66, %v74
  %v90 = vadd.f32 %v67, %v74
  %v91 = vadd.f32 %v68, %v74
  %vm92 = vcmp.gt.f32.partialorder %v76, 0.0
  %vm93 = vcmp.gt.f32.partialorder %v77, 0.0
  %vm94 = vcmp.gt.f32.partialorder %v78, 0.0
  %vm95 = vcmp.gt.f32.partialorder %v79, 0.0
  %vm96 = vcmp.gt.f32.partialorder %v80, 0.0
  %vm97 = vcmp.gt.f32.partialorder %v81, 0.0
  %vm98 = vcmp.gt.f32.partialorder %v82, 0.0
  %vm99 = vcmp.gt.f32.partialorder %v83, 0.0
  %vm100 = vcmp.gt.f32.partialorder %v84, 0.0
  %vm101 = vcmp.gt.f32.partialorder %v85, 0.0
  %vm102 = vcmp.gt.f32.partialorder %v86, 0.0
  %vm103 = vcmp.gt.f32.partialorder %v87, 0.0
  %vm104 = vcmp.gt.f32.partialorder %v88, 0.0
  %vm105 = vcmp.gt.f32.partialorder %v89, 0.0
  %vm106 = vcmp.gt.f32.partialorder %v90, 0.0
  %vm107 = vcmp.gt.f32.partialorder %v91, 0.0
  %v108 = vmul.f32 %v76, 0.2
  %v109 = vmul.f32 %v77, 0.2
  %v110 = vmul.f32 %v78, 0.2
  %v111 = vmul.f32 %v79, 0.2
  %v112 = vmul.f32 %v80, 0.2
  %v113 = vmul.f32 %v81, 0.2
  %v114 = vmul.f32 %v82, 0.2
  %v115 = vmul.f32 %v83, 0.2
  %v116 = vmul.f32 %v84, 0.2
  %v117 = vmul.f32 %v85, 0.2
  %v118 = vmul.f32 %v86, 0.2
  %v119 = vmul.f32 %v87, 0.2
  %v120 = vmul.f32 %v88, 0.2
  %v121 = vmul.f32 %v89, 0.2
  %v122 = vmul.f32 %v90, 0.2
  %v123 = vmul.f32 %v91, 0.2
  %v124 = vsel %vm92, %v76, %v108
  %v125 = vsel %vm93, %v77, %v109
  %v126 = vsel %vm94, %v78, %v110
  %v127 = vsel %vm95, %v79, %v111
  %v128 = vsel %vm96, %v80, %v112
  %v129 = vsel %vm97, %v81, %v113
  %v130 = vsel %vm98, %v82, %v114
  %v131 = vsel %vm99, %v83, %v115
  %v132 = vsel %vm100, %v84, %v116
  %v133 = vsel %vm101, %v85, %v117
  %v134 = vsel %vm102, %v86, %v118
  %v135 = vsel %vm103, %v87, %v119
  %v136 = vsel %vm104, %v88, %v120
  %v137 = vsel %vm105, %v89, %v121
  %v138 = vsel %vm106, %v90, %v122
  %v139 = vsel %vm107, %v91, %v123
  %v140 = vpack.c.bf16 %v125, %v124
  %v141 = vpack.c.bf16 %v127, %v126
  %v142 = vpack.c.bf16 %v129, %v128
  %v143 = vpack.c.bf16 %v131, %v130
  %v144 = vpack.c.bf16 %v133, %v132
  %v145 = vpack.c.bf16 %v135, %v134
  %v146 = vpack.c.bf16 %v137, %v136
  %v147 = vpack.c.bf16 %v139, %v138
  %v156 = vunpack.c.l.b16 %v140
  %v157 = vunpack.c.h.b16 %v140
  %v158 = vunpack.c.l.b16 %v141
  %v159 = vunpack.c.h.b16 %v141
  %v160 = vunpack.c.l.b16 %v142
  %v161 = vunpack.c.h.b16 %v142
  %v162 = vunpack.c.l.b16 %v143
  %v163 = vunpack.c.h.b16 %v143
  %v164 = vunpack.c.l.b16 %v144
  %v165 = vunpack.c.h.b16 %v144
  %v166 = vunpack.c.l.b16 %v145
  %v167 = vunpack.c.h.b16 %v145
  %v168 = vunpack.c.l.b16 %v146
  %v169 = vunpack.c.h.b16 %v146
  %v170 = vunpack.c.l.b16 %v147
  %v171 = vunpack.c.h.b16 %v147
  %v172 = vpack.c.b16 %v156, %v156
  %v173 = vpack.c.b16 %v157, %v157
  %v174 = vpack.c.b16 %v158, %v158
  %v175 = vpack.c.b16 %v159, %v159
  %v176 = vpack.c.b16 %v160, %v160
  %v177 = vpack.c.b16 %v161, %v161
  %v178 = vpack.c.b16 %v162, %v162
  %v179 = vpack.c.b16 %v163, %v163
  %v180 = vpack.c.b16 %v164, %v164
  %v181 = vpack.c.b16 %v165, %v165
  %v182 = vpack.c.b16 %v166, %v166
  %v183 = vpack.c.b16 %v167, %v167
  %v184 = vpack.c.b16 %v168, %v168
  %v185 = vpack.c.b16 %v169, %v169
  %v186 = vpack.c.b16 %v170, %v170
  %v187 = vpack.c.b16 %v171, %v171
  %vm204 = vcmask 257024
  %205 = vst.msk [vmem:[%s3] sm:$0xf] %vm204, %v172
  %206 = vst.msk [vmem:[%s3 + $0x4] sm:$0xf] %vm204, %v173
  %207 = vst.msk [vmem:[%s3 + $0x8] sm:$0xf] %vm204, %v174
  %208 = vst.msk [vmem:[%s3 + $0xc] sm:$0xf] %vm204, %v175
  %209 = vst.msk [vmem:[%s3 + $0x10] sm:$0xf] %vm204, %v176
  %210 = vst.msk [vmem:[%s3 + $0x14] sm:$0xf] %vm204, %v177
  %211 = vst.msk [vmem:[%s3 + $0x18] sm:$0xf] %vm204, %v178
  %212 = vst.msk [vmem:[%s3 + $0x1c] sm:$0xf] %vm204, %v179
  %213 = vst.msk [vmem:[%s3 + $0x20] sm:$0xf] %vm204, %v180
  %214 = vst.msk [vmem:[%s3 + $0x24] sm:$0xf] %vm204, %v181
  %215 = vst.msk [vmem:[%s3 + $0x28] sm:$0xf] %vm204, %v182
  %216 = vst.msk [vmem:[%s3 + $0x2c] sm:$0xf] %vm204, %v183
  %217 = vst.msk [vmem:[%s3 + $0x30] sm:$0xf] %vm204, %v184
  %218 = vst.msk [vmem:[%s3 + $0x34] sm:$0xf] %vm204, %v185
  %219 = vst.msk [vmem:[%s3 + $0x38] sm:$0xf] %vm204, %v186
  %220 = vst.msk [vmem:[%s3 + $0x3c] sm:$0xf] %vm204, %v187
  // Predicated region
  $region14: #{discriminator128_forward.11} parent=0 // pred_check
    _
  $region15: #{discriminator128_forward.11} parent=0 // pred_check_branch
    %222 = sbr.rel (0) target = $region17
  $region16: #{discriminator128_forward.11} parent=0 // pred_region
    _
  $region17: #{discriminator128_forward.11} parent=0 // pred_fallthru
    _
  // Predicated region
  $region18: #{discriminator128_forward.11} parent=0 // pred_check
    _
  $region19: #{discriminator128_forward.11} parent=0 // pred_check_branch
    %224 = sbr.rel (0) target = $region21
  $region20: #{discriminator128_forward.11} parent=0 // pred_region
    _
  $region21: #{discriminator128_forward.11} parent=0 // pred_fallthru
    _

// kernel: discriminator128_forward.12
$region0: #{discriminator128_forward.12}
  #allocation0 [shape = 'u32[]', space=smem, size = 0x4, offset = 0x4, fixed_abs, tag = 'smem constant byte address 0x4 - core index']
  #allocation1 [shape = 'u32[144,128]{1,0:T(1,128)}', space=vmem, size = 0x12000, scoped, tag = 'internal scratch']
  #allocation2 [shape = 'f32[32,64]{1,0:T(8,128)}', space=vmem, size = 0x4000, scoped, tag = 'scratch operand']
  %s0 = inlined_call_operand.vmem [shape: bf16[32,512], index: 0, kind: input, shape index: {}]
  %s1 = inlined_call_operand.vmem [shape: bf16[512,64], index: 1, kind: input, shape index: {}]
  %s2 = inlined_call_operand.vmem [shape: bf16[32,64], index: 2, kind: output, shape index: {0}]
  %s3 = inlined_call_operand.vmem [shape: f32[1,64], index: 3, kind: output, shape index: {1}]
  %s4 = inlined_call_operand.vmem [shape: f32[1,64], index: 4, kind: output, shape index: {2}]
  %5 = xla_tuple %s2, %s3, %s4
  %s6 = sld [smem:[#allocation0]]
  $region46: #{discriminator128_forward.12} parent=0
    _
  %s8 = ssub.s32 1, %s6
  %s9 = scalar_select 0, %s8, %s6
  // Predicated region
  $region2: #{discriminator128_forward.12} parent=0 // pred_check
    _
  $region3: #{discriminator128_forward.12} parent=0 // pred_check_branch
    %11 = sbr.rel (0) target = $region5
  $region4: #{discriminator128_forward.12} parent=0 // pred_region
    _
  $region5: #{discriminator128_forward.12} parent=0 // pred_fallthru
    _
  // Predicated region
  $region6: #{discriminator128_forward.12} parent=0 // pred_check
    _
  $region7: #{discriminator128_forward.12} parent=0 // pred_check_branch
    %13 = sbr.rel (0) target = $region9
  $region8: #{discriminator128_forward.12} parent=0 // pred_region
    _
  $region9: #{discriminator128_forward.12} parent=0 // pred_fallthru
    _
  %p15 = scmp.eq.s32.totalorder 0, 0
  %p16 = scmp.eq.s32.totalorder 0, 0
  %p17 = pnand %p15, %p16
  %p18 = pneg %p17
  // Predicated region
  $region10: #{discriminator128_forward.12} parent=0 // pred_check
    _
  $region11: #{discriminator128_forward.12} parent=0 // pred_check_branch
    %20 = sbr.rel (%p17) target = $region13
  $region12: #{discriminator128_forward.12} parent=0 // pred_region
    %vm21 = vcmask 516096
    %22 = vst.msk [vmem:[%s3] sm:$0x1] %vm21, 0.0
    %23 = vst.msk [vmem:[%s4] sm:$0x1] %vm21, 0.0
  $region13: #{discriminator128_forward.12} parent=0 // pred_fallthru
    _
  // Predicated region
  $region14: #{discriminator128_forward.12} parent=0 // pred_check
    %p24 = pneg %p16
  $region15: #{discriminator128_forward.12} parent=0 // pred_check_branch
    %26 = sbr.rel (%p24) target = $region17
  $region16: #{discriminator128_forward.12} parent=0 // pred_region
    %vm27 = vcmask 523264
    %28 = vst.msk [vmem:[#allocation2] sm:$0xff] %vm27, 0.0
    %29 = vst.msk [vmem:[#allocation2 + $0x8] sm:$0xff] %vm27, 0.0
    %30 = vst.msk [vmem:[#allocation2 + $0x10] sm:$0xff] %vm27, 0.0
    %31 = vst.msk [vmem:[#allocation2 + $0x18] sm:$0xff] %vm27, 0.0
  $region17: #{discriminator128_forward.12} parent=0 // pred_fallthru
    _
  %v32 = vld [vmem:[#allocation2] sm:$0xff]
  %v33 = vld [vmem:[#allocation2 + $0x8] sm:$0xff]
  %v34 = vld [vmem:[#allocation2 + $0x10] sm:$0xff]
  %v35 = vld [vmem:[#allocation2 + $0x18] sm:$0xff]
  %v36 = vld [vmem:[%s0] sm:$0xff]
  %v37 = vld [vmem:[%s0 + $0x8] sm:$0xff]
  %v38 = vld [vmem:[%s0 + $0x10] sm:$0xff]
  %v39 = vld [vmem:[%s0 + $0x18] sm:$0xff]
  %v40 = vld [vmem:[%s0 + $0x20] sm:$0xff]
  %v41 = vld [vmem:[%s0 + $0x28] sm:$0xff]
  %v42 = vld [vmem:[%s0 + $0x30] sm:$0xff]
  %v43 = vld [vmem:[%s0 + $0x38] sm:$0xff]
  %v44 = vld [vmem:[%s1] sm:$0xf]
  %v45 = vld [vmem:[%s1 + $0x4] sm:$0xf]
  %v46 = vld [vmem:[%s1 + $0x8] sm:$0xf]
  %v47 = vld [vmem:[%s1 + $0xc] sm:$0xf]
  %v48 = vld [vmem:[%s1 + $0x10] sm:$0xf]
  %v49 = vld [vmem:[%s1 + $0x14] sm:$0xf]
  %v50 = vld [vmem:[%s1 + $0x18] sm:$0xf]
  %v51 = vld [vmem:[%s1 + $0x1c] sm:$0xf]
  %v52 = vld [vmem:[%s1 + $0x20] sm:$0xf]
  %v53 = vld [vmem:[%s1 + $0x24] sm:$0xf]
  %v54 = vld [vmem:[%s1 + $0x28] sm:$0xf]
  %v55 = vld [vmem:[%s1 + $0x2c] sm:$0xf]
  %v56 = vld [vmem:[%s1 + $0x30] sm:$0xf]
  %v57 = vld [vmem:[%s1 + $0x34] sm:$0xf]
  %v58 = vld [vmem:[%s1 + $0x38] sm:$0xf]
  %v59 = vld [vmem:[%s1 + $0x3c] sm:$0xf]
  %v60 = vld [vmem:[%s1 + $0x40] sm:$0xf]
  %v61 = vld [vmem:[%s1 + $0x44] sm:$0xf]
  %v62 = vld [vmem:[%s1 + $0x48] sm:$0xf]
  %v63 = vld [vmem:[%s1 + $0x4c] sm:$0xf]
  %v64 = vld [vmem:[%s1 + $0x50] sm:$0xf]
  %v65 = vld [vmem:[%s1 + $0x54] sm:$0xf]
  %v66 = vld [vmem:[%s1 + $0x58] sm:$0xf]
  %v67 = vld [vmem:[%s1 + $0x5c] sm:$0xf]
  %v68 = vld [vmem:[%s1 + $0x60] sm:$0xf]
  %v69 = vld [vmem:[%s1 + $0x64] sm:$0xf]
  %v70 = vld [vmem:[%s1 + $0x68] sm:$0xf]
  %v71 = vld [vmem:[%s1 + $0x6c] sm:$0xf]
  %v72 = vld [vmem:[%s1 + $0x70] sm:$0xf]
  %v73 = vld [vmem:[%s1 + $0x74] sm:$0xf]
  %v74 = vld [vmem:[%s1 + $0x78] sm:$0xf]
  %v75 = vld [vmem:[%s1 + $0x7c] sm:$0xf]
  %v76 = vld [vmem:[%s1 + $0x80] sm:$0xf]
  %v77 = vld [vmem:[%s1 + $0x84] sm:$0xf]
  %v78 = vld [vmem:[%s1 + $0x88] sm:$0xf]
  %v79 = vld [vmem:[%s1 + $0x8c] sm:$0xf]
  %v80 = vld [vmem:[%s1 + $0x90] sm:$0xf]
  %v81 = vld [vmem:[%s1 + $0x94] sm:$0xf]
  %v82 = vld [vmem:[%s1 + $0x98] sm:$0xf]
  %v83 = vld [vmem:[%s1 + $0x9c] sm:$0xf]
  %v84 = vld [vmem:[%s1 + $0xa0] sm:$0xf]
  %v85 = vld [vmem:[%s1 + $0xa4] sm:$0xf]
  %v86 = vld [vmem:[%s1 + $0xa8] sm:$0xf]
  %v87 = vld [vmem:[%s1 + $0xac] sm:$0xf]
  %v88 = vld [vmem:[%s1 + $0xb0] sm:$0xf]
  %v89 = vld [vmem:[%s1 + $0xb4] sm:$0xf]
  %v90 = vld [vmem:[%s1 + $0xb8] sm:$0xf]
  %v91 = vld [vmem:[%s1 + $0xbc] sm:$0xf]
  %v92 = vld [vmem:[%s1 + $0xc0] sm:$0xf]
  %v93 = vld [vmem:[%s1 + $0xc4] sm:$0xf]
  %v94 = vld [vmem:[%s1 + $0xc8] sm:$0xf]
  %v95 = vld [vmem:[%s1 + $0xcc] sm:$0xf]
  %v96 = vld [vmem:[%s1 + $0xd0] sm:$0xf]
  %v97 = vld [vmem:[%s1 + $0xd4] sm:$0xf]
  %v98 = vld [vmem:[%s1 + $0xd8] sm:$0xf]
  %v99 = vld [vmem:[%s1 + $0xdc] sm:$0xf]
  %v100 = vld [vmem:[%s1 + $0xe0] sm:$0xf]
  %v101 = vld [vmem:[%s1 + $0xe4] sm:$0xf]
  %v102 = vld [vmem:[%s1 + $0xe8] sm:$0xf]
  %v103 = vld [vmem:[%s1 + $0xec] sm:$0xf]
  %v104 = vld [vmem:[%s1 + $0xf0] sm:$0xf]
  %v105 = vld [vmem:[%s1 + $0xf4] sm:$0xf]
  %v106 = vld [vmem:[%s1 + $0xf8] sm:$0xf]
  %v107 = vld [vmem:[%s1 + $0xfc] sm:$0xf]
  %v116 = vunpack.c.l.b16 %v36
  %v117 = vunpack.c.h.b16 %v36
  %v118 = vunpack.c.l.b16 %v37
  %v119 = vunpack.c.h.b16 %v37
  %v120 = vunpack.c.l.b16 %v38
  %v121 = vunpack.c.h.b16 %v38
  %v122 = vunpack.c.l.b16 %v39
  %v123 = vunpack.c.h.b16 %v39
  %v124 = vunpack.c.l.b16 %v40
  %v125 = vunpack.c.h.b16 %v40
  %v126 = vunpack.c.l.b16 %v41
  %v127 = vunpack.c.h.b16 %v41
  %v128 = vunpack.c.l.b16 %v42
  %v129 = vunpack.c.h.b16 %v42
  %v130 = vunpack.c.l.b16 %v43
  %v131 = vunpack.c.h.b16 %v43
  %v132 = vpack.c.b16 %v120, %v116
  %v133 = vpack.c.b16 %v121, %v117
  %v134 = vpack.c.b16 %v122, %v118
  %v135 = vpack.c.b16 %v123, %v119
  %v136 = vpack.c.b16 %v128, %v124
  %v137 = vpack.c.b16 %v129, %v125
  %v138 = vpack.c.b16 %v130, %v126
  %v139 = vpack.c.b16 %v131, %v127
  %v212 = vunpack.c.l.b16 %v44
  %v213 = vunpack.c.l.b16 %v45
  %v214 = vunpack.c.l.b16 %v46
  %v215 = vunpack.c.l.b16 %v47
  %v216 = vunpack.c.l.b16 %v48
  %v217 = vunpack.c.l.b16 %v49
  %v218 = vunpack.c.l.b16 %v50
  %v219 = vunpack.c.l.b16 %v51
  %v220 = vunpack.c.l.b16 %v52
  %v221 = vunpack.c.l.b16 %v53
  %v222 = vunpack.c.l.b16 %v54
  %v223 = vunpack.c.l.b16 %v55
  %v224 = vunpack.c.l.b16 %v56
  %v225 = vunpack.c.l.b16 %v57
  %v226 = vunpack.c.l.b16 %v58
  %v227 = vunpack.c.l.b16 %v59
  %v228 = vunpack.c.l.b16 %v60
  %v229 = vunpack.c.l.b16 %v61
  %v230 = vunpack.c.l.b16 %v62
  %v231 = vunpack.c.l.b16 %v63
  %v232 = vunpack.c.l.b16 %v64
  %v233 = vunpack.c.l.b16 %v65
  %v234 = vunpack.c.l.b16 %v66
  %v235 = vunpack.c.l.b16 %v67
  %v236 = vunpack.c.l.b16 %v68
  %v237 = vunpack.c.l.b16 %v69
  %v238 = vunpack.c.l.b16 %v70
  %v239 = vunpack.c.l.b16 %v71
  %v240 = vunpack.c.l.b16 %v72
  %v241 = vunpack.c.l.b16 %v73
  %v242 = vunpack.c.l.b16 %v74
  %v243 = vunpack.c.l.b16 %v75
  %v244 = vunpack.c.l.b16 %v76
  %v245 = vunpack.c.l.b16 %v77
  %v246 = vunpack.c.l.b16 %v78
  %v247 = vunpack.c.l.b16 %v79
  %v248 = vunpack.c.l.b16 %v80
  %v249 = vunpack.c.l.b16 %v81
  %v250 = vunpack.c.l.b16 %v82
  %v251 = vunpack.c.l.b16 %v83
  %v252 = vunpack.c.l.b16 %v84
  %v253 = vunpack.c.l.b16 %v85
  %v254 = vunpack.c.l.b16 %v86
  %v255 = vunpack.c.l.b16 %v87
  %v256 = vunpack.c.l.b16 %v88
  %v257 = vunpack.c.l.b16 %v89
  %v258 = vunpack.c.l.b16 %v90
  %v259 = vunpack.c.l.b16 %v91
  %v260 = vunpack.c.l.b16 %v92
  %v261 = vunpack.c.l.b16 %v93
  %v262 = vunpack.c.l.b16 %v94
  %v263 = vunpack.c.l.b16 %v95
  %v264 = vunpack.c.l.b16 %v96
  %v265 = vunpack.c.l.b16 %v97
  %v266 = vunpack.c.l.b16 %v98
  %v267 = vunpack.c.l.b16 %v99
  %v268 = vunpack.c.l.b16 %v100
  %v269 = vunpack.c.l.b16 %v101
  %v270 = vunpack.c.l.b16 %v102
  %v271 = vunpack.c.l.b16 %v103
  %v272 = vunpack.c.l.b16 %v104
  %v273 = vunpack.c.l.b16 %v105
  %v274 = vunpack.c.l.b16 %v106
  %v275 = vunpack.c.l.b16 %v107
  %v276 = vpack.c.b16 %v213, %v212
  %v277 = vpack.c.b16 %v215, %v214
  %v278 = vpack.c.b16 %v217, %v216
  %v279 = vpack.c.b16 %v219, %v218
  %v280 = vpack.c.b16 %v221, %v220
  %v281 = vpack.c.b16 %v223, %v222
  %v282 = vpack.c.b16 %v225, %v224
  %v283 = vpack.c.b16 %v227, %v226
  %v284 = vpack.c.b16 %v229, %v228
  %v285 = vpack.c.b16 %v231, %v230
  %v286 = vpack.c.b16 %v233, %v232
  %v287 = vpack.c.b16 %v235, %v234
  %v288 = vpack.c.b16 %v237, %v236
  %v289 = vpack.c.b16 %v239, %v238
  %v290 = vpack.c.b16 %v241, %v240
  %v291 = vpack.c.b16 %v243, %v242
  %v292 = vpack.c.b16 %v245, %v244
  %v293 = vpack.c.b16 %v247, %v246
  %v294 = vpack.c.b16 %v249, %v248
  %v295 = vpack.c.b16 %v251, %v250
  %v296 = vpack.c.b16 %v253, %v252
  %v297 = vpack.c.b16 %v255, %v254
  %v298 = vpack.c.b16 %v257, %v256
  %v299 = vpack.c.b16 %v259, %v258
  %v300 = vpack.c.b16 %v261, %v260
  %v301 = vpack.c.b16 %v263, %v262
  %v302 = vpack.c.b16 %v265, %v264
  %v303 = vpack.c.b16 %v267, %v266
  %v304 = vpack.c.b16 %v269, %v268
  %v305 = vpack.c.b16 %v271, %v270
  %v306 = vpack.c.b16 %v273, %v272
  %v307 = vpack.c.b16 %v275, %v274
  %340 = vmatprep.subr.bf16.mxu0 0
  %341 = vmatpush1.bf16.msra.mxu0 %v283
  %342 = vmatprep.subr.bf16.mxu0 0
  %343 = vmatpush1.bf16.msra.mxu0 %v282
  %344 = vmatprep.subr.bf16.mxu0 0
  %345 = vmatpush1.bf16.msra.mxu0 %v281
  %346 = vmatprep.subr.bf16.mxu0 0
  %347 = vmatpush1.bf16.msra.mxu0 %v280
  %348 = vmatprep.subr.bf16.mxu0 0
  %349 = vmatpush1.bf16.msra.mxu0 %v279
  %350 = vmatprep.subr.bf16.mxu0 0
  %351 = vmatpush1.bf16.msra.mxu0 %v278
  %352 = vmatprep.subr.bf16.mxu0 0
  %353 = vmatpush1.bf16.msra.mxu0 %v277
  %354 = vmatprep.subr.bf16.mxu0 0
  %355 = vmatpush1.bf16.msra.mxu0 %v276
  %356 = vmatprep.subr.bf16.mxu0 0
  %357 = vmatpush2.bf16.msra.mxu0 %v291
  %358 = vmatprep.subr.bf16.mxu0 0
  %359 = vmatpush2.bf16.msra.mxu0 %v290
  %360 = vmatprep.subr.bf16.mxu0 0
  %361 = vmatpush2.bf16.msra.mxu0 %v289
  %362 = vmatprep.subr.bf16.mxu0 0
  %363 = vmatpush2.bf16.msra.mxu0 %v288
  %364 = vmatprep.subr.bf16.mxu0 0
  %365 = vmatpush2.bf16.msra.mxu0 %v287
  %366 = vmatprep.subr.bf16.mxu0 0
  %367 = vmatpush2.bf16.msra.mxu0 %v286
  %368 = vmatprep.subr.bf16.mxu0 0
  %369 = vmatpush2.bf16.msra.mxu0 %v285
  %370 = vmatprep.subr.bf16.mxu0 0
  %371 = vmatpush2.bf16.msra.mxu0 %v284
  %372 = vmatprep.mubr.bf16.mxu0 %v133
  %373 = vmatmul.mubr.bf16.gmra.mxu0 %v132
  %v374 = vpop.f32.mrf.mxu0
  %v375 = vadd.f32 0.0, %v374
  %v376 = vpop.f32.mrf.mxu0
  %v377 = vpop.f32.mrf.mxu0
  %v378 = vadd.f32 0.0, %v377
  %v379 = vpop.f32.mrf.mxu0
  %380 = vmatprep.mubr.bf16.mxu0 %v137
  %381 = vmatmul.mubr.bf16.gmra.mxu0 %v136
  %v382 = vpop.f32.mrf.mxu0
  %v383 = vadd.f32 0.0, %v382
  %v384 = vpop.f32.mrf.mxu0
  %v385 = vpop.f32.mrf.mxu0
  %v386 = vadd.f32 0.0, %v385
  %v387 = vpop.f32.mrf.mxu0
  %388 = vdwg.mxu0
  %389 = vmatprep.subr.bf16.mxu0 0
  %390 = vmatpush1.bf16.msra.mxu0 %v299
  %391 = vmatprep.subr.bf16.mxu0 0
  %392 = vmatpush1.bf16.msra.mxu0 %v298
  %393 = vmatprep.subr.bf16.mxu0 0
  %394 = vmatpush1.bf16.msra.mxu0 %v297
  %395 = vmatprep.subr.bf16.mxu0 0
  %396 = vmatpush1.bf16.msra.mxu0 %v296
  %397 = vmatprep.subr.bf16.mxu0 0
  %398 = vmatpush1.bf16.msra.mxu0 %v295
  %399 = vmatprep.subr.bf16.mxu0 0
  %400 = vmatpush1.bf16.msra.mxu0 %v294
  %401 = vmatprep.subr.bf16.mxu0 0
  %402 = vmatpush1.bf16.msra.mxu0 %v293
  %403 = vmatprep.subr.bf16.mxu0 0
  %404 = vmatpush1.bf16.msra.mxu0 %v292
  %405 = vmatprep.subr.bf16.mxu0 0
  %406 = vmatpush2.bf16.msra.mxu0 %v307
  %407 = vmatprep.subr.bf16.mxu0 0
  %408 = vmatpush2.bf16.msra.mxu0 %v306
  %409 = vmatprep.subr.bf16.mxu0 0
  %410 = vmatpush2.bf16.msra.mxu0 %v305
  %411 = vmatprep.subr.bf16.mxu0 0
  %412 = vmatpush2.bf16.msra.mxu0 %v304
  %413 = vmatprep.subr.bf16.mxu0 0
  %414 = vmatpush2.bf16.msra.mxu0 %v303
  %415 = vmatprep.subr.bf16.mxu0 0
  %416 = vmatpush2.bf16.msra.mxu0 %v302
  %417 = vmatprep.subr.bf16.mxu0 0
  %418 = vmatpush2.bf16.msra.mxu0 %v301
  %419 = vmatprep.subr.bf16.mxu0 0
  %420 = vmatpush2.bf16.msra.mxu0 %v300
  %421 = vmatprep.mubr.bf16.mxu0 %v135
  %422 = vmatmul.mubr.bf16.gmra.mxu0 %v134
  %v423 = vpop.f32.mrf.mxu0
  %v424 = vadd.f32 %v375, %v423
  %v425 = vpop.f32.mrf.mxu0
  %v426 = vpop.f32.mrf.mxu0
  %v427 = vadd.f32 %v378, %v426
  %v428 = vpop.f32.mrf.mxu0
  %429 = vmatprep.mubr.bf16.mxu0 %v139
  %430 = vmatmul.mubr.bf16.gmra.mxu0 %v138
  %v431 = vpop.f32.mrf.mxu0
  %v432 = vadd.f32 %v383, %v431
  %v433 = vpop.f32.mrf.mxu0
  %v434 = vpop.f32.mrf.mxu0
  %v435 = vadd.f32 %v386, %v434
  %v436 = vpop.f32.mrf.mxu0
  %437 = vdwg.mxu0
  %v438 = vadd.f32 %v32, %v424
  %v439 = vadd.f32 %v33, %v427
  %v440 = vadd.f32 %v34, %v432
  %v441 = vadd.f32 %v35, %v435
  %vm442 = vcmask 523264
  %443 = vst.msk [vmem:[#allocation2] sm:$0xff] %vm442, %v438
  %444 = vst.msk [vmem:[#allocation2 + $0x8] sm:$0xff] %vm442, %v439
  %445 = vst.msk [vmem:[#allocation2 + $0x10] sm:$0xff] %vm442, %v440
  %446 = vst.msk [vmem:[#allocation2 + $0x18] sm:$0xff] %vm442, %v441
  // Predicated region
  $region18: #{discriminator128_forward.12} parent=0 // pred_check
    %p447 = pneg %p16
  $region19: #{discriminator128_forward.12} parent=0 // pred_check_branch
    %449 = sbr.rel (%p447) target = $region21
  $region20: #{discriminator128_forward.12} parent=0 // pred_region
    %v450 = vld [vmem:[#allocation2] sm:$0xff]
    %v451 = vld [vmem:[#allocation2 + $0x8] sm:$0xff]
    %v452 = vld [vmem:[#allocation2 + $0x10] sm:$0xff]
    %v453 = vld [vmem:[#allocation2 + $0x18] sm:$0xff]
    %v454 = vld [vmem:[%s3] sm:$0x1]
    %v455 = vsel %vm442, %v450, 0.0
    %v456 = vsel %vm442, %v451, 0.0
    %v457 = vadd.f32 %v455, %v456
    %v458 = vsel %vm442, %v452, 0.0
    %v459 = vadd.f32 %v457, %v458
    %v460 = vsel %vm442, %v453, 0.0
    %v461 = vadd.f32 %v459, %v460
    %v462 = vrot.slane %v461, 4
    %v463 = vadd.f32 %v461, %v462
    %v464 = vrot.slane %v463, 2
    %v465 = vadd.f32 %v463, %v464
    %v466 = vrot.slane %v465, 1
    %v467 = vadd.f32 %v465, %v466
    %v468 = vadd.f32 %v454, %v467
    %vm469 = vcmask 516096
    %470 = vst.msk [vmem:[%s3] sm:$0x1] %vm469, %v468
    %v471 = vld [vmem:[%s4] sm:$0x1]
    %v472 = vmul.f32 %v450, %v450
    %v473 = vmul.f32 %v451, %v451
    %v474 = vmul.f32 %v452, %v452
    %v475 = vmul.f32 %v453, %v453
    %v476 = vsel %vm442, %v472, 0.0
    %v477 = vsel %vm442, %v473, 0.0
    %v478 = vadd.f32 %v476, %v477
    %v479 = vsel %vm442, %v474, 0.0
    %v480 = vadd.f32 %v478, %v479
    %v481 = vsel %vm442, %v475, 0.0
    %v482 = vadd.f32 %v480, %v481
    %v483 = vrot.slane %v482, 4
    %v484 = vadd.f32 %v482, %v483
    %v485 = vrot.slane %v484, 2
    %v486 = vadd.f32 %v484, %v485
    %v487 = vrot.slane %v486, 1
    %v488 = vadd.f32 %v486, %v487
    %v489 = vadd.f32 %v471, %v488
    %490 = vst.msk [vmem:[%s4] sm:$0x1] %vm469, %v489
    %v491 = vpack.c.bf16 %v451, %v450
    %v492 = vpack.c.bf16 %v453, %v452
    %v495 = vunpack.c.l.b16 %v491
    %v496 = vunpack.c.h.b16 %v491
    %v497 = vunpack.c.l.b16 %v492
    %v498 = vunpack.c.h.b16 %v492
    %v499 = vpack.c.b16 %v495, %v495
    %v500 = vpack.c.b16 %v496, %v496
    %v501 = vpack.c.b16 %v497, %v497
    %v502 = vpack.c.b16 %v498, %v498
    %vm507 = vcmask 519168
    %508 = vst.msk [vmem:[%s2] sm:$0xf] %vm507, %v499
    %509 = vst.msk [vmem:[%s2 + $0x4] sm:$0xf] %vm507, %v500
    %510 = vst.msk [vmem:[%s2 + $0x8] sm:$0xf] %vm507, %v501
    %511 = vst.msk [vmem:[%s2 + $0xc] sm:$0xf] %vm507, %v502
  $region21: #{discriminator128_forward.12} parent=0 // pred_fallthru
    _
  // Predicated region
  $region22: #{discriminator128_forward.12} parent=0 // pred_check
    _
  $region23: #{discriminator128_forward.12} parent=0 // pred_check_branch
    %513 = sbr.rel (0) target = $region25
  $region24: #{discriminator128_forward.12} parent=0 // pred_region
    _
  $region25: #{discriminator128_forward.12} parent=0 // pred_fallthru
    _
  // Predicated region
  $region26: #{discriminator128_forward.12} parent=0 // pred_check
    _
  $region27: #{discriminator128_forward.12} parent=0 // pred_check_branch
    %515 = sbr.rel (0) target = $region29
  $region28: #{discriminator128_forward.12} parent=0 // pred_region
    _
  $region29: #{discriminator128_forward.12} parent=0 // pred_fallthru
    _
  // Predicated region
  $region30: #{discriminator128_forward.12} parent=0 // pred_check
    _
  $region31: #{discriminator128_forward.12} parent=0 // pred_check_branch
    %517 = sbr.rel (0) target = $region33
  $region32: #{discriminator128_forward.12} parent=0 // pred_region
    _
  $region33: #{discriminator128_forward.12} parent=0 // pred_fallthru
    _
  // Predicated region
  $region34: #{discriminator128_forward.12} parent=0 // pred_check
    _
  $region35: #{discriminator128_forward.12} parent=0 // pred_check_branch
    %519 = sbr.rel (0) target = $region37
  $region36: #{discriminator128_forward.12} parent=0 // pred_region
    _
  $region37: #{discriminator128_forward.12} parent=0 // pred_fallthru
    _
  // Predicated region
  $region38: #{discriminator128_forward.12} parent=0 // pred_check
    _
  $region39: #{discriminator128_forward.12} parent=0 // pred_check_branch
    %521 = sbr.rel (0) target = $region41
  $region40: #{discriminator128_forward.12} parent=0 // pred_region
    _
  $region41: #{discriminator128_forward.12} parent=0 // pred_fallthru
    _
  // Predicated region
  $region42: #{discriminator128_forward.12} parent=0 // pred_check
    _
  $region43: #{discriminator128_forward.12} parent=0 // pred_check_branch
    %523 = sbr.rel (0) target = $region45
  $region44: #{discriminator128_forward.12} parent=0 // pred_region
    _
  $region45: #{discriminator128_forward.12} parent=0 // pred_fallthru
    _

// kernel: discriminator128_forward.13
$region0: #{discriminator128_forward.13}
  #allocation0 [shape = 'u32[]', space=smem, size = 0x4, offset = 0x4, fixed_abs, tag = 'smem constant byte address 0x4 - core index']
  #allocation1 [shape = 'u32[144,128]{1,0:T(1,128)}', space=vmem, size = 0x12000, scoped, tag = 'internal scratch']
  %s0 = inlined_call_operand.vmem [shape: bf16[32,64], index: 0, kind: input, shape index: {}]
  %s1 = inlined_call_operand.vmem [shape: f32[1,64], index: 1, kind: input, shape index: {}]
  %s2 = inlined_call_operand.vmem [shape: f32[1,64], index: 2, kind: input, shape index: {}]
  %s3 = inlined_call_operand.vmem [shape: bf16[32,64], index: 3, kind: output, shape index: {}]
  %s4 = sld [smem:[#allocation0]]
  $region22: #{discriminator128_forward.13} parent=0
    _
  %s6 = ssub.s32 1, %s4
  %s7 = scalar_select 0, %s6, %s4
  // Predicated region
  $region2: #{discriminator128_forward.13} parent=0 // pred_check
    _
  $region3: #{discriminator128_forward.13} parent=0 // pred_check_branch
    %9 = sbr.rel (0) target = $region5
  $region4: #{discriminator128_forward.13} parent=0 // pred_region
    _
  $region5: #{discriminator128_forward.13} parent=0 // pred_fallthru
    _
  // Predicated region
  $region6: #{discriminator128_forward.13} parent=0 // pred_check
    _
  $region7: #{discriminator128_forward.13} parent=0 // pred_check_branch
    %11 = sbr.rel (0) target = $region9
  $region8: #{discriminator128_forward.13} parent=0 // pred_region
    _
  $region9: #{discriminator128_forward.13} parent=0 // pred_fallthru
    _
  // Predicated region
  $region10: #{discriminator128_forward.13} parent=0 // pred_check
    _
  $region11: #{discriminator128_forward.13} parent=0 // pred_check_branch
    %13 = sbr.rel (0) target = $region13
  $region12: #{discriminator128_forward.13} parent=0 // pred_region
    _
  $region13: #{discriminator128_forward.13} parent=0 // pred_fallthru
    _
  %v14 = vld [vmem:[%s0] sm:$0xf]
  %v15 = vld [vmem:[%s0 + $0x4] sm:$0xf]
  %v16 = vld [vmem:[%s0 + $0x8] sm:$0xf]
  %v17 = vld [vmem:[%s0 + $0xc] sm:$0xf]
  %v18 = vunpack.c.l.bf16 %v14
  %v19 = vunpack.c.l.bf16 %v15
  %v20 = vunpack.c.l.bf16 %v16
  %v21 = vunpack.c.l.bf16 %v17
  %v22 = vld [vmem:[%s1] sm:$0x1]
  %v24 = vlaneseq
  %v25 = vshrl.u32 %v24, 7
  %v26 = vsub.s32 0, %v25
  %v27 = vrot.slane %v22, %v26
  %v29 = vmul.f32 %v18, %v27
  %v30 = vmul.f32 %v19, %v27
  %v31 = vmul.f32 %v20, %v27
  %v32 = vmul.f32 %v21, %v27
  %v33 = vld [vmem:[%s2] sm:$0x1]
  %v35 = vlaneseq
  %v36 = vshrl.u32 %v35, 7
  %v37 = vsub.s32 0, %v36
  %v38 = vrot.slane %v33, %v37
  %v40 = vadd.f32 %v29, %v38
  %v41 = vadd.f32 %v30, %v38
  %v42 = vadd.f32 %v31, %v38
  %v43 = vadd.f32 %v32, %v38
  %vm44 = vcmp.gt.f32.partialorder %v40, 0.0
  %vm45 = vcmp.gt.f32.partialorder %v41, 0.0
  %vm46 = vcmp.gt.f32.partialorder %v42, 0.0
  %vm47 = vcmp.gt.f32.partialorder %v43, 0.0
  %v48 = vmul.f32 %v40, 0.2
  %v49 = vmul.f32 %v41, 0.2
  %v50 = vmul.f32 %v42, 0.2
  %v51 = vmul.f32 %v43, 0.2
  %v52 = vsel %vm44, %v40, %v48
  %v53 = vsel %vm45, %v41, %v49
  %v54 = vsel %vm46, %v42, %v50
  %v55 = vsel %vm47, %v43, %v51
  %v56 = vpack.c.bf16 %v53, %v52
  %v57 = vpack.c.bf16 %v55, %v54
  %v60 = vunpack.c.l.b16 %v56
  %v61 = vunpack.c.h.b16 %v56
  %v62 = vunpack.c.l.b16 %v57
  %v63 = vunpack.c.h.b16 %v57
  %v64 = vpack.c.b16 %v60, %v60
  %v65 = vpack.c.b16 %v61, %v61
  %v66 = vpack.c.b16 %v62, %v62
  %v67 = vpack.c.b16 %v63, %v63
  %vm72 = vcmask 519168
  %73 = vst.msk [vmem:[%s3] sm:$0xf] %vm72, %v64
  %74 = vst.msk [vmem:[%s3 + $0x4] sm:$0xf] %vm72, %v65
  %75 = vst.msk [vmem:[%s3 + $0x8] sm:$0xf] %vm72, %v66
  %76 = vst.msk [vmem:[%s3 + $0xc] sm:$0xf] %vm72, %v67
  // Predicated region
  $region14: #{discriminator128_forward.13} parent=0 // pred_check
    _
  $region15: #{discriminator128_forward.13} parent=0 // pred_check_branch
    %78 = sbr.rel (0) target = $region17
  $region16: #{discriminator128_forward.13} parent=0 // pred_region
    _
  $region17: #{discriminator128_forward.13} parent=0 // pred_fallthru
    _
  // Predicated region
  $region18: #{discriminator128_forward.13} parent=0 // pred_check
    _
  $region19: #{discriminator128_forward.13} parent=0 // pred_check_branch
    %80 = sbr.rel (0) target = $region21
  $region20: #{discriminator128_forward.13} parent=0 // pred_region
    _
  $region21: #{discriminator128_forward.13} parent=0 // pred_fallthru
    _

</llo_original>
